<compile_context>
chip_gen: v6e
topology: v6e:2x2x1
jax: 0.10.0
libtpu: 0.0.40
codegen_flags: <defaults>
</compile_context>

<pallas_src>
import functools

import jax
import jax.numpy as jnp
from jax.experimental import pallas as pl
from jax.experimental.pallas import tpu as pltpu


def _conv_block_kernel(x_ref, xres_ref, w_ref, gb_ref, o_ref,
                       sum_ref, sq_ref, scsh_ref, *,
                       N, Cin, Cout, D, H, W, KT, KH, KW, Wp, PPp,
                       eps, residual):
    # x_ref   : (Cin, Dp, PPp)     padded input for batch n, plane flattened on
    #                              lanes and padded to a multiple of 128
    # xres_ref: (N*Cin, D, H*W)    unpadded input (residual source), resident
    # w_ref   : SMEM (Cout*Cin, KT*KH*KW) conv weights (scalar reads)
    # gb_ref  : SMEM (2, Cout)     gamma / beta
    # o_ref   : (N*Cout, D, H*W)   output, resident in VMEM for the whole grid
    # sum_ref : VMEM (Cout, H*W)   per-channel partial Sigma(x)  (lane vectors)
    # sq_ref  : VMEM (Cout, H*W)   per-channel partial Sigma(x^2)
    # scsh_ref: SMEM (2, Cout)     finalized BN scale / shift
    phase = pl.program_id(0)          # 0 = conv + stats, 1 = normalize + relu
    n = pl.program_id(1)              # batch index
    HW = H * W

    # -------------------- phase 0: conv + BN partial sums --------------------
    @pl.when(phase == 0)
    def _conv():
        @pl.when(n == 0)
        def _init():
            sum_ref[...] = jnp.zeros_like(sum_ref)
            sq_ref[...] = jnp.zeros_like(sq_ref)

        # TODO(synk): at larger Cout/D the fully unrolled tap nest exceeds the
        # 64-vreg file; bound live ranges with lax.fori_loop / D sub-tiling.
        accs = [jnp.zeros((D, PPp), jnp.float32) for _ in range(Cout)]
        for ci in range(Cin):
            for kt in range(KT):
                base = x_ref[ci, kt:kt + D, :]                     # (D, PPp)
                for kh in range(KH):
                    for kw in range(KW):
                        off = kh * Wp + kw
                        tap = kt * (KH * KW) + kh * KW + kw
                        # XLU lane rotate: shifted[:, p] = base[:, p + off]
                        # (wraparound only touches lanes past the valid crop).
                        shifted = base if off == 0 else pltpu.roll(
                            base, shift=(PPp - off) % PPp, axis=1)
                        for co in range(Cout):
                            accs[co] = accs[co] + w_ref[co * Cin + ci, tap] * shifted

        # Dense (lane-compact, 256-wide) crop exactly once per (n, co), at the
        # store into the resident output block (no separate conv scratch).
        denses = []
        for co in range(Cout):
            dense = jnp.concatenate(
                [accs[co][:, h * Wp:h * Wp + W] for h in range(H)], axis=-1)
            o_ref[n * Cout + co] = dense
            denses.append(dense)

        # Vectorized BN partials: sublane-reduce now, lane-reduce once later.
        ps = jnp.concatenate(
            [jnp.sum(d, axis=0, keepdims=True) for d in denses], axis=0)
        pss = jnp.concatenate(
            [jnp.sum(d * d, axis=0, keepdims=True) for d in denses], axis=0)
        sum_ref[...] = sum_ref[...] + ps
        sq_ref[...] = sq_ref[...] + pss

    # ----------- phase 1: finalize BN, normalize in place, +res, ReLU --------
    @pl.when(phase == 1)
    def _bn_residual_relu():
        @pl.when(n == 0)
        def _finalize():
            inv_cnt = 1.0 / float(N * D * HW)
            for co in range(Cout):
                s = jnp.sum(sum_ref[co:co + 1, :])
                ss = jnp.sum(sq_ref[co:co + 1, :])
                mean = s * inv_cnt
                # Clamp: single-pass E[x^2]-mean^2 can go slightly negative.
                var = jnp.maximum(ss * inv_cnt - mean * mean, 0.0)
                scale = jax.lax.rsqrt(var + eps) * gb_ref[0, co]
                scsh_ref[0, co] = scale
                scsh_ref[1, co] = gb_ref[1, co] - mean * scale

        for co in range(Cout):
            y = o_ref[n * Cout + co] * scsh_ref[0, co] + scsh_ref[1, co]
            if residual:
                y = y + xres_ref[n * Cin + co]
            o_ref[n * Cout + co] = jnp.maximum(y, 0.0)


def conv_block_3d(x, weight, gamma, beta, *, residual=True, eps=1e-5):
    """ConvBlock3D forward (no downsampling): conv3d(stride 1, 'same', no bias)
    -> BatchNorm3d (training-mode batch statistics) -> (+ inputs) -> ReLU.
    x: (N, Cin, D, H, W), weight: (Cout, Cin, KT, KH, KW). Returns NCDHW."""
    N, Cin, D, H, W = x.shape
    Cout, Cin2, KT, KH, KW = weight.shape
    assert Cin2 == Cin
    assert KT % 2 == 1 and KH % 2 == 1 and KW % 2 == 1, "odd kernels only"
    if residual:
        assert Cin == Cout, "residual connection requires in_channels == out_channels"
    pt, ph, pw = KT // 2, KH // 2, KW // 2
    Dp, Hp, Wp = D + 2 * pt, H + 2 * ph, W + 2 * pw
    HW = H * W
    PP = Hp * Wp
    PPp = ((PP + 127) // 128) * 128        # lane-tile aligned => clean rolls

    x32 = x if x.dtype == jnp.float32 else x.astype(jnp.float32)
    # TODO(synk): fold the 'same' padding into the kernel (zero-init VMEM slab +
    # interior DMA) to drop this extra XLA pad pass; keep bf16 input on v6e/v7x.
    xp = jnp.pad(x32, ((0, 0), (0, 0), (pt, pt), (ph, ph), (pw, pw)))
    xp = xp.reshape(N, Cin, Dp, PP)
    if PPp != PP:
        xp = jnp.pad(xp, ((0, 0), (0, 0), (0, 0), (0, PPp - PP)))
    xres = x32.reshape(N * Cin, D, HW)

    w_smem = weight.reshape(Cout * Cin, KT * KH * KW).astype(jnp.float32)
    gb_smem = jnp.stack([gamma, beta]).astype(jnp.float32)          # (2, Cout)

    # Resident-in-VMEM design: explicit budget so the constant-index-map output
    # doesn't silently regress on v7x (64 MiB physical / 32 MiB scoped VMEM).
    # TODO(synk): tiled (Cout / D) fallback with a non-constant out index_map
    # for shapes that exceed this budget.
    resident_bytes = 4 * (2 * N * Cout * D * HW     # output block (dbl-buffer)
                          + 2 * N * Cin * D * HW    # residual input block
                          + 2 * Cin * Dp * PPp      # padded-x block
                          + 2 * Cout * HW)          # BN stats scratch
    vmem_limit = 32 * 1024 * 1024
    assert resident_bytes < vmem_limit - (4 << 20), (
        f"resident VMEM footprint {resident_bytes}B too large for the "
        "single-resident-block kernel; needs the tiled fallback")

    kernel = functools.partial(
        _conv_block_kernel,
        N=N, Cin=Cin, Cout=Cout, D=D, H=H, W=W,
        KT=KT, KH=KH, KW=KW, Wp=Wp, PPp=PPp, eps=eps, residual=residual)

    out = pl.pallas_call(
        kernel,
        out_shape=jax.ShapeDtypeStruct((N * Cout, D, HW), jnp.float32),
        grid_spec=pltpu.PrefetchScalarGridSpec(
            num_scalar_prefetch=0,
            grid=(2, N),                  # (phase, batch); phase 0 finishes first
            in_specs=[
                # Padded input: one batch per phase-0 step; during phase 1 the
                # index_map parks on the last block => no redundant re-DMAs.
                pl.BlockSpec((None, Cin, Dp, PPp),
                             lambda p, n: (n * (1 - p) + (N - 1) * p, 0, 0, 0)),
                # Unpadded input (residual source): constant index_map =>
                # fetched once, resident, no in-kernel crop needed in phase 1.
                pl.BlockSpec((N * Cin, D, HW), lambda p, n: (0, 0, 0)),
                pl.BlockSpec(memory_space=pltpu.MemorySpace.SMEM),   # weights
                pl.BlockSpec(memory_space=pltpu.MemorySpace.SMEM),   # gamma/beta
            ],
            # Whole (small) output stays resident in VMEM for the entire grid,
            # is normalized in place, and is written back to HBM exactly once
            # with full-width (256-lane) stores.
            out_specs=pl.BlockSpec((N * Cout, D, HW), lambda p, n: (0, 0, 0)),
            scratch_shapes=[
                pltpu.VMEM((Cout, HW), jnp.float32),   # Sigma x   (vector partials)
                pltpu.VMEM((Cout, HW), jnp.float32),   # Sigma x^2 (vector partials)
                pltpu.SMEM((2, Cout), jnp.float32),    # finalized BN scale/shift
            ],
        ),
        compiler_params=pltpu.CompilerParams(
            # BN batch statistics couple every batch, so the grid must run
            # sequentially on one core (both axes "arbitrary").
            dimension_semantics=("arbitrary", "arbitrary"),
            vmem_limit_bytes=vmem_limit),
    )(xp, xres, w_smem, gb_smem)

    return out.reshape(N, Cout, D, H, W)


# Pure-JAX reference (same semantics as the PyTorch forward, training-mode BN).
def reference(x, weight, gamma, beta, eps=1e-5):
    pt, ph, pw = weight.shape[2] // 2, weight.shape[3] // 2, weight.shape[4] // 2
    y = jax.lax.conv_general_dilated(
        x, weight, window_strides=(1, 1, 1),
        padding=[(pt, pt), (ph, ph), (pw, pw)],
        dimension_numbers=("NCDHW", "OIDHW", "NCDHW"),
        precision=jax.lax.Precision.HIGHEST)
    mean = y.mean(axis=(0, 2, 3, 4), keepdims=True)
    var = ((y - mean) ** 2).mean(axis=(0, 2, 3, 4), keepdims=True)
    yhat = (y - mean) * jax.lax.rsqrt(var + eps)
    yhat = yhat * gamma.reshape(1, -1, 1, 1, 1) + beta.reshape(1, -1, 1, 1, 1)
    return jnp.maximum(yhat + x, 0.0)


if __name__ == "__main__":
    # Small shapes: batch=2, channels=4 (in==out for the residual), D=8,
    # H=W=16, kernel 3x3x3, no downsampling.
    N, C, D, H, W = 2, 4, 8, 16, 16
    key = jax.random.PRNGKey(0)
    kx, kw = jax.random.split(key)
    x = jax.random.normal(kx, (N, C, D, H, W), dtype=jnp.float32)
    conv_w = jax.random.normal(kw, (C, C, 3, 3, 3), dtype=jnp.float32) * 0.1
    gamma = jnp.ones((C,), jnp.float32)   # nn.BatchNorm3d default init
    beta = jnp.zeros((C,), jnp.float32)

    fwd = jax.jit(functools.partial(conv_block_3d, residual=True))
    out = fwd(x, conv_w, gamma, beta)
    out = jax.block_until_ready(out)

    ref = reference(x, conv_w, gamma, beta)
    max_diff = float(jnp.max(jnp.abs(out - ref)))
    if max_diff > 2e-3:
        raise AssertionError(f"mismatch vs reference, max abs diff = {max_diff}")

    print("KERNEL_OK")
</pallas_src>

<mosaic_0001>
module attributes {stable_mosaic.version = 11 : i64} {
  func.func @_conv_block_kernel(%arg0: i32, %arg1: i32, %arg2: memref<1x4x10x384xf32, #tpu.memory_space<vmem>>, %arg3: memref<8x8x256xf32, #tpu.memory_space<vmem>>, %arg4: memref<16x27xf32, #tpu.memory_space<smem>>, %arg5: memref<2x4xf32, #tpu.memory_space<smem>>, %arg6: memref<8x8x256xf32, #tpu.memory_space<vmem>>, %arg7: memref<4x256xf32, #tpu.memory_space<vmem>>, %arg8: memref<4x256xf32, #tpu.memory_space<vmem>>, %arg9: memref<2x4xf32, #tpu.memory_space<smem>>) attributes {dimension_semantics = [#tpu.dimension_semantics<arbitrary>, #tpu.dimension_semantics<arbitrary>], iteration_bounds = array<i64: 2, 2>, scalar_prefetch = 0 : i64, scratch_operands = 3 : i64, tpu.core_type = #tpu.core_type<tc>, window_params = [{transform_indices = @transform_0, window_bounds = array<i64: 1, 4, 10, 384>}, {pipeline_mode = #tpu.pipeline_mode<synchronous>, transform_indices = @transform_1, window_bounds = array<i64: 8, 8, 256>}, {transform_indices = @transform_2, window_bounds = array<i64: 16, 27>}, {transform_indices = @transform_3, window_bounds = array<i64: 2, 4>}, {pipeline_mode = #tpu.pipeline_mode<synchronous>, transform_indices = @transform_4, window_bounds = array<i64: 8, 8, 256>}]} {
    %c0_i32 = arith.constant 0 : i32
    %0 = arith.cmpi eq, %arg0, %c0_i32 : i32
    %1 = arith.extui %0 : i1 to i32
    %c0_i32_0 = arith.constant 0 : i32
    %2 = arith.cmpi ne, %1, %c0_i32_0 : i32
    scf.if %2 {
      %c0_i32_2 = arith.constant 0 : i32
      %6 = arith.cmpi eq, %arg1, %c0_i32_2 : i32
      %7 = arith.extui %6 : i1 to i32
      %c0_i32_3 = arith.constant 0 : i32
      %8 = arith.cmpi ne, %7, %c0_i32_3 : i32
      scf.if %8 {
        %cst_1009 = arith.constant 0.000000e+00 : f32
        %1981 = vector.broadcast %cst_1009 : f32 to vector<4x256xf32>
        %c0_1010 = arith.constant 0 : index
        %c0_1011 = arith.constant 0 : index
        %1982 = vector.load %arg7[%c0_1010, %c0_1011] : memref<4x256xf32, #tpu.memory_space<vmem>>, vector<4x256xf32>
        tpu.vector_store %arg7[%c0_1010, %c0_1011], %1981 {strides = array<i32>} : memref<4x256xf32, #tpu.memory_space<vmem>>, vector<4x256xf32>,
        %cst_1012 = arith.constant 0.000000e+00 : f32
        %1983 = vector.broadcast %cst_1012 : f32 to vector<4x256xf32>
        %c0_1013 = arith.constant 0 : index
        %c0_1014 = arith.constant 0 : index
        %1984 = vector.load %arg8[%c0_1013, %c0_1014] : memref<4x256xf32, #tpu.memory_space<vmem>>, vector<4x256xf32>
        tpu.vector_store %arg8[%c0_1013, %c0_1014], %1983 {strides = array<i32>} : memref<4x256xf32, #tpu.memory_space<vmem>>, vector<4x256xf32>,
      } else {
      }
      %cst = arith.constant 0.000000e+00 : f32
      %9 = vector.broadcast %cst : f32 to vector<8x384xf32>
      %cst_4 = arith.constant 0.000000e+00 : f32
      %10 = vector.broadcast %cst_4 : f32 to vector<8x384xf32>
      %cst_5 = arith.constant 0.000000e+00 : f32
      %11 = vector.broadcast %cst_5 : f32 to vector<8x384xf32>
      %cst_6 = arith.constant 0.000000e+00 : f32
      %12 = vector.broadcast %cst_6 : f32 to vector<8x384xf32>
      %c0 = arith.constant 0 : index
      %c0_7 = arith.constant 0 : index
      %c0_8 = arith.constant 0 : index
      %c0_9 = arith.constant 0 : index
      %13 = vector.load %arg2[%c0, %c0_7, %c0_8, %c0_9] : memref<1x4x10x384xf32, #tpu.memory_space<vmem>>, vector<1x1x8x384xf32>
      %14 = vector.shape_cast %13 : vector<1x1x8x384xf32> to vector<8x384xf32>
      %c0_10 = arith.constant 0 : index
      %c0_11 = arith.constant 0 : index
      %15 = memref.load %arg4[%c0_10, %c0_11] : memref<16x27xf32, #tpu.memory_space<smem>>
      %16 = vector.broadcast %15 : f32 to vector<8x384xf32>
      %17 = arith.mulf %16, %14 : vector<8x384xf32>
      %18 = arith.addf %9, %17 : vector<8x384xf32>
      %c4 = arith.constant 4 : index
      %c0_12 = arith.constant 0 : index
      %19 = memref.load %arg4[%c4, %c0_12] : memref<16x27xf32, #tpu.memory_space<smem>>
      %20 = vector.broadcast %19 : f32 to vector<8x384xf32>
      %21 = arith.mulf %20, %14 : vector<8x384xf32>
      %22 = arith.addf %10, %21 : vector<8x384xf32>
      %c8 = arith.constant 8 : index
      %c0_13 = arith.constant 0 : index
      %23 = memref.load %arg4[%c8, %c0_13] : memref<16x27xf32, #tpu.memory_space<smem>>
      %24 = vector.broadcast %23 : f32 to vector<8x384xf32>
      %25 = arith.mulf %24, %14 : vector<8x384xf32>
      %26 = arith.addf %11, %25 : vector<8x384xf32>
      %c12 = arith.constant 12 : index
      %c0_14 = arith.constant 0 : index
      %27 = memref.load %arg4[%c12, %c0_14] : memref<16x27xf32, #tpu.memory_space<smem>>
      %28 = vector.broadcast %27 : f32 to vector<8x384xf32>
      %29 = arith.mulf %28, %14 : vector<8x384xf32>
      %30 = arith.addf %12, %29 : vector<8x384xf32>
      %c383_i32 = arith.constant 383 : i32
      %31 = tpu.dynamic_rotate %14 by %c383_i32 dim 1 : vector<8x384xf32>, i32 -> vector<8x384xf32>
      %c0_15 = arith.constant 0 : index
      %c1 = arith.constant 1 : index
      %32 = memref.load %arg4[%c0_15, %c1] : memref<16x27xf32, #tpu.memory_space<smem>>
      %33 = vector.broadcast %32 : f32 to vector<8x384xf32>
      %34 = arith.mulf %33, %31 : vector<8x384xf32>
      %35 = arith.addf %18, %34 : vector<8x384xf32>
      %c4_16 = arith.constant 4 : index
      %c1_17 = arith.constant 1 : index
      %36 = memref.load %arg4[%c4_16, %c1_17] : memref<16x27xf32, #tpu.memory_space<smem>>
      %37 = vector.broadcast %36 : f32 to vector<8x384xf32>
      %38 = arith.mulf %37, %31 : vector<8x384xf32>
      %39 = arith.addf %22, %38 : vector<8x384xf32>
      %c8_18 = arith.constant 8 : index
      %c1_19 = arith.constant 1 : index
      %40 = memref.load %arg4[%c8_18, %c1_19] : memref<16x27xf32, #tpu.memory_space<smem>>
      %41 = vector.broadcast %40 : f32 to vector<8x384xf32>
      %42 = arith.mulf %41, %31 : vector<8x384xf32>
      %43 = arith.addf %26, %42 : vector<8x384xf32>
      %c12_20 = arith.constant 12 : index
      %c1_21 = arith.constant 1 : index
      %44 = memref.load %arg4[%c12_20, %c1_21] : memref<16x27xf32, #tpu.memory_space<smem>>
      %45 = vector.broadcast %44 : f32 to vector<8x384xf32>
      %46 = arith.mulf %45, %31 : vector<8x384xf32>
      %47 = arith.addf %30, %46 : vector<8x384xf32>
      %c382_i32 = arith.constant 382 : i32
      %48 = tpu.dynamic_rotate %14 by %c382_i32 dim 1 : vector<8x384xf32>, i32 -> vector<8x384xf32>
      %c0_22 = arith.constant 0 : index
      %c2 = arith.constant 2 : index
      %49 = memref.load %arg4[%c0_22, %c2] : memref<16x27xf32, #tpu.memory_space<smem>>
      %50 = vector.broadcast %49 : f32 to vector<8x384xf32>
      %51 = arith.mulf %50, %48 : vector<8x384xf32>
      %52 = arith.addf %35, %51 : vector<8x384xf32>
      %c4_23 = arith.constant 4 : index
      %c2_24 = arith.constant 2 : index
      %53 = memref.load %arg4[%c4_23, %c2_24] : memref<16x27xf32, #tpu.memory_space<smem>>
      %54 = vector.broadcast %53 : f32 to vector<8x384xf32>
      %55 = arith.mulf %54, %48 : vector<8x384xf32>
      %56 = arith.addf %39, %55 : vector<8x384xf32>
      %c8_25 = arith.constant 8 : index
      %c2_26 = arith.constant 2 : index
      %57 = memref.load %arg4[%c8_25, %c2_26] : memref<16x27xf32, #tpu.memory_space<smem>>
      %58 = vector.broadcast %57 : f32 to vector<8x384xf32>
      %59 = arith.mulf %58, %48 : vector<8x384xf32>
      %60 = arith.addf %43, %59 : vector<8x384xf32>
      %c12_27 = arith.constant 12 : index
      %c2_28 = arith.constant 2 : index
      %61 = memref.load %arg4[%c12_27, %c2_28] : memref<16x27xf32, #tpu.memory_space<smem>>
      %62 = vector.broadcast %61 : f32 to vector<8x384xf32>
      %63 = arith.mulf %62, %48 : vector<8x384xf32>
      %64 = arith.addf %47, %63 : vector<8x384xf32>
      %c366_i32 = arith.constant 366 : i32
      %65 = tpu.dynamic_rotate %14 by %c366_i32 dim 1 : vector<8x384xf32>, i32 -> vector<8x384xf32>
      %c0_29 = arith.constant 0 : index
      %c3 = arith.constant 3 : index
      %66 = memref.load %arg4[%c0_29, %c3] : memref<16x27xf32, #tpu.memory_space<smem>>
      %67 = vector.broadcast %66 : f32 to vector<8x384xf32>
      %68 = arith.mulf %67, %65 : vector<8x384xf32>
      %69 = arith.addf %52, %68 : vector<8x384xf32>
      %c4_30 = arith.constant 4 : index
      %c3_31 = arith.constant 3 : index
      %70 = memref.load %arg4[%c4_30, %c3_31] : memref<16x27xf32, #tpu.memory_space<smem>>
      %71 = vector.broadcast %70 : f32 to vector<8x384xf32>
      %72 = arith.mulf %71, %65 : vector<8x384xf32>
      %73 = arith.addf %56, %72 : vector<8x384xf32>
      %c8_32 = arith.constant 8 : index
      %c3_33 = arith.constant 3 : index
      %74 = memref.load %arg4[%c8_32, %c3_33] : memref<16x27xf32, #tpu.memory_space<smem>>
      %75 = vector.broadcast %74 : f32 to vector<8x384xf32>
      %76 = arith.mulf %75, %65 : vector<8x384xf32>
      %77 = arith.addf %60, %76 : vector<8x384xf32>
      %c12_34 = arith.constant 12 : index
      %c3_35 = arith.constant 3 : index
      %78 = memref.load %arg4[%c12_34, %c3_35] : memref<16x27xf32, #tpu.memory_space<smem>>
      %79 = vector.broadcast %78 : f32 to vector<8x384xf32>
      %80 = arith.mulf %79, %65 : vector<8x384xf32>
      %81 = arith.addf %64, %80 : vector<8x384xf32>
      %c365_i32 = arith.constant 365 : i32
      %82 = tpu.dynamic_rotate %14 by %c365_i32 dim 1 : vector<8x384xf32>, i32 -> vector<8x384xf32>
      %c0_36 = arith.constant 0 : index
      %c4_37 = arith.constant 4 : index
      %83 = memref.load %arg4[%c0_36, %c4_37] : memref<16x27xf32, #tpu.memory_space<smem>>
      %84 = vector.broadcast %83 : f32 to vector<8x384xf32>
      %85 = arith.mulf %84, %82 : vector<8x384xf32>
      %86 = arith.addf %69, %85 : vector<8x384xf32>
      %c4_38 = arith.constant 4 : index
      %c4_39 = arith.constant 4 : index
      %87 = memref.load %arg4[%c4_38, %c4_39] : memref<16x27xf32, #tpu.memory_space<smem>>
      %88 = vector.broadcast %87 : f32 to vector<8x384xf32>
      %89 = arith.mulf %88, %82 : vector<8x384xf32>
      %90 = arith.addf %73, %89 : vector<8x384xf32>
      %c8_40 = arith.constant 8 : index
      %c4_41 = arith.constant 4 : index
      %91 = memref.load %arg4[%c8_40, %c4_41] : memref<16x27xf32, #tpu.memory_space<smem>>
      %92 = vector.broadcast %91 : f32 to vector<8x384xf32>
      %93 = arith.mulf %92, %82 : vector<8x384xf32>
      %94 = arith.addf %77, %93 : vector<8x384xf32>
      %c12_42 = arith.constant 12 : index
      %c4_43 = arith.constant 4 : index
      %95 = memref.load %arg4[%c12_42, %c4_43] : memref<16x27xf32, #tpu.memory_space<smem>>
      %96 = vector.broadcast %95 : f32 to vector<8x384xf32>
      %97 = arith.mulf %96, %82 : vector<8x384xf32>
      %98 = arith.addf %81, %97 : vector<8x384xf32>
      %c364_i32 = arith.constant 364 : i32
      %99 = tpu.dynamic_rotate %14 by %c364_i32 dim 1 : vector<8x384xf32>, i32 -> vector<8x384xf32>
      %c0_44 = arith.constant 0 : index
      %c5 = arith.constant 5 : index
      %100 = memref.load %arg4[%c0_44, %c5] : memref<16x27xf32, #tpu.memory_space<smem>>
      %101 = vector.broadcast %100 : f32 to vector<8x384xf32>
      %102 = arith.mulf %101, %99 : vector<8x384xf32>
      %103 = arith.addf %86, %102 : vector<8x384xf32>
      %c4_45 = arith.constant 4 : index
      %c5_46 = arith.constant 5 : index
      %104 = memref.load %arg4[%c4_45, %c5_46] : memref<16x27xf32, #tpu.memory_space<smem>>
      %105 = vector.broadcast %104 : f32 to vector<8x384xf32>
      %106 = arith.mulf %105, %99 : vector<8x384xf32>
      %107 = arith.addf %90, %106 : vector<8x384xf32>
      %c8_47 = arith.constant 8 : index
      %c5_48 = arith.constant 5 : index
      %108 = memref.load %arg4[%c8_47, %c5_48] : memref<16x27xf32, #tpu.memory_space<smem>>
      %109 = vector.broadcast %108 : f32 to vector<8x384xf32>
      %110 = arith.mulf %109, %99 : vector<8x384xf32>
      %111 = arith.addf %94, %110 : vector<8x384xf32>
      %c12_49 = arith.constant 12 : index
      %c5_50 = arith.constant 5 : index
      %112 = memref.load %arg4[%c12_49, %c5_50] : memref<16x27xf32, #tpu.memory_space<smem>>
      %113 = vector.broadcast %112 : f32 to vector<8x384xf32>
      %114 = arith.mulf %113, %99 : vector<8x384xf32>
      %115 = arith.addf %98, %114 : vector<8x384xf32>
      %c348_i32 = arith.constant 348 : i32
      %116 = tpu.dynamic_rotate %14 by %c348_i32 dim 1 : vector<8x384xf32>, i32 -> vector<8x384xf32>
      %c0_51 = arith.constant 0 : index
      %c6 = arith.constant 6 : index
      %117 = memref.load %arg4[%c0_51, %c6] : memref<16x27xf32, #tpu.memory_space<smem>>
      %118 = vector.broadcast %117 : f32 to vector<8x384xf32>
      %119 = arith.mulf %118, %116 : vector<8x384xf32>
      %120 = arith.addf %103, %119 : vector<8x384xf32>
      %c4_52 = arith.constant 4 : index
      %c6_53 = arith.constant 6 : index
      %121 = memref.load %arg4[%c4_52, %c6_53] : memref<16x27xf32, #tpu.memory_space<smem>>
      %122 = vector.broadcast %121 : f32 to vector<8x384xf32>
      %123 = arith.mulf %122, %116 : vector<8x384xf32>
      %124 = arith.addf %107, %123 : vector<8x384xf32>
      %c8_54 = arith.constant 8 : index
      %c6_55 = arith.constant 6 : index
      %125 = memref.load %arg4[%c8_54, %c6_55] : memref<16x27xf32, #tpu.memory_space<smem>>
      %126 = vector.broadcast %125 : f32 to vector<8x384xf32>
      %127 = arith.mulf %126, %116 : vector<8x384xf32>
      %128 = arith.addf %111, %127 : vector<8x384xf32>
      %c12_56 = arith.constant 12 : index
      %c6_57 = arith.constant 6 : index
      %129 = memref.load %arg4[%c12_56, %c6_57] : memref<16x27xf32, #tpu.memory_space<smem>>
      %130 = vector.broadcast %129 : f32 to vector<8x384xf32>
      %131 = arith.mulf %130, %116 : vector<8x384xf32>
      %132 = arith.addf %115, %131 : vector<8x384xf32>
      %c347_i32 = arith.constant 347 : i32
      %133 = tpu.dynamic_rotate %14 by %c347_i32 dim 1 : vector<8x384xf32>, i32 -> vector<8x384xf32>
      %c0_58 = arith.constant 0 : index
      %c7 = arith.constant 7 : index
      %134 = memref.load %arg4[%c0_58, %c7] : memref<16x27xf32, #tpu.memory_space<smem>>
      %135 = vector.broadcast %134 : f32 to vector<8x384xf32>
      %136 = arith.mulf %135, %133 : vector<8x384xf32>
      %137 = arith.addf %120, %136 : vector<8x384xf32>
      %c4_59 = arith.constant 4 : index
      %c7_60 = arith.constant 7 : index
      %138 = memref.load %arg4[%c4_59, %c7_60] : memref<16x27xf32, #tpu.memory_space<smem>>
      %139 = vector.broadcast %138 : f32 to vector<8x384xf32>
      %140 = arith.mulf %139, %133 : vector<8x384xf32>
      %141 = arith.addf %124, %140 : vector<8x384xf32>
      %c8_61 = arith.constant 8 : index
      %c7_62 = arith.constant 7 : index
      %142 = memref.load %arg4[%c8_61, %c7_62] : memref<16x27xf32, #tpu.memory_space<smem>>
      %143 = vector.broadcast %142 : f32 to vector<8x384xf32>
      %144 = arith.mulf %143, %133 : vector<8x384xf32>
      %145 = arith.addf %128, %144 : vector<8x384xf32>
      %c12_63 = arith.constant 12 : index
      %c7_64 = arith.constant 7 : index
      %146 = memref.load %arg4[%c12_63, %c7_64] : memref<16x27xf32, #tpu.memory_space<smem>>
      %147 = vector.broadcast %146 : f32 to vector<8x384xf32>
      %148 = arith.mulf %147, %133 : vector<8x384xf32>
      %149 = arith.addf %132, %148 : vector<8x384xf32>
      %c346_i32 = arith.constant 346 : i32
      %150 = tpu.dynamic_rotate %14 by %c346_i32 dim 1 : vector<8x384xf32>, i32 -> vector<8x384xf32>
      %c0_65 = arith.constant 0 : index
      %c8_66 = arith.constant 8 : index
      %151 = memref.load %arg4[%c0_65, %c8_66] : memref<16x27xf32, #tpu.memory_space<smem>>
      %152 = vector.broadcast %151 : f32 to vector<8x384xf32>
      %153 = arith.mulf %152, %150 : vector<8x384xf32>
      %154 = arith.addf %137, %153 : vector<8x384xf32>
      %c4_67 = arith.constant 4 : index
      %c8_68 = arith.constant 8 : index
      %155 = memref.load %arg4[%c4_67, %c8_68] : memref<16x27xf32, #tpu.memory_space<smem>>
      %156 = vector.broadcast %155 : f32 to vector<8x384xf32>
      %157 = arith.mulf %156, %150 : vector<8x384xf32>
      %158 = arith.addf %141, %157 : vector<8x384xf32>
      %c8_69 = arith.constant 8 : index
      %c8_70 = arith.constant 8 : index
      %159 = memref.load %arg4[%c8_69, %c8_70] : memref<16x27xf32, #tpu.memory_space<smem>>
      %160 = vector.broadcast %159 : f32 to vector<8x384xf32>
      %161 = arith.mulf %160, %150 : vector<8x384xf32>
      %162 = arith.addf %145, %161 : vector<8x384xf32>
      %c12_71 = arith.constant 12 : index
      %c8_72 = arith.constant 8 : index
      %163 = memref.load %arg4[%c12_71, %c8_72] : memref<16x27xf32, #tpu.memory_space<smem>>
      %164 = vector.broadcast %163 : f32 to vector<8x384xf32>
      %165 = arith.mulf %164, %150 : vector<8x384xf32>
      %166 = arith.addf %149, %165 : vector<8x384xf32>
      %c0_73 = arith.constant 0 : index
      %c0_74 = arith.constant 0 : index
      %c1_75 = arith.constant 1 : index
      %c0_76 = arith.constant 0 : index
      %167 = vector.load %arg2[%c0_73, %c0_74, %c1_75, %c0_76] : memref<1x4x10x384xf32, #tpu.memory_space<vmem>>, vector<1x1x8x384xf32>
      %168 = vector.shape_cast %167 : vector<1x1x8x384xf32> to vector<8x384xf32>
      %c0_77 = arith.constant 0 : index
      %c9 = arith.constant 9 : index
      %169 = memref.load %arg4[%c0_77, %c9] : memref<16x27xf32, #tpu.memory_space<smem>>
      %170 = vector.broadcast %169 : f32 to vector<8x384xf32>
      %171 = arith.mulf %170, %168 : vector<8x384xf32>
      %172 = arith.addf %154, %171 : vector<8x384xf32>
      %c4_78 = arith.constant 4 : index
      %c9_79 = arith.constant 9 : index
      %173 = memref.load %arg4[%c4_78, %c9_79] : memref<16x27xf32, #tpu.memory_space<smem>>
      %174 = vector.broadcast %173 : f32 to vector<8x384xf32>
      %175 = arith.mulf %174, %168 : vector<8x384xf32>
      %176 = arith.addf %158, %175 : vector<8x384xf32>
      %c8_80 = arith.constant 8 : index
      %c9_81 = arith.constant 9 : index
      %177 = memref.load %arg4[%c8_80, %c9_81] : memref<16x27xf32, #tpu.memory_space<smem>>
      %178 = vector.broadcast %177 : f32 to vector<8x384xf32>
      %179 = arith.mulf %178, %168 : vector<8x384xf32>
      %180 = arith.addf %162, %179 : vector<8x384xf32>
      %c12_82 = arith.constant 12 : index
      %c9_83 = arith.constant 9 : index
      %181 = memref.load %arg4[%c12_82, %c9_83] : memref<16x27xf32, #tpu.memory_space<smem>>
      %182 = vector.broadcast %181 : f32 to vector<8x384xf32>
      %183 = arith.mulf %182, %168 : vector<8x384xf32>
      %184 = arith.addf %166, %183 : vector<8x384xf32>
      %c383_i32_84 = arith.constant 383 : i32
      %185 = tpu.dynamic_rotate %168 by %c383_i32_84 dim 1 : vector<8x384xf32>, i32 -> vector<8x384xf32>
      %c0_85 = arith.constant 0 : index
      %c10 = arith.constant 10 : index
      %186 = memref.load %arg4[%c0_85, %c10] : memref<16x27xf32, #tpu.memory_space<smem>>
      %187 = vector.broadcast %186 : f32 to vector<8x384xf32>
      %188 = arith.mulf %187, %185 : vector<8x384xf32>
      %189 = arith.addf %172, %188 : vector<8x384xf32>
      %c4_86 = arith.constant 4 : index
      %c10_87 = arith.constant 10 : index
      %190 = memref.load %arg4[%c4_86, %c10_87] : memref<16x27xf32, #tpu.memory_space<smem>>
      %191 = vector.broadcast %190 : f32 to vector<8x384xf32>
      %192 = arith.mulf %191, %185 : vector<8x384xf32>
      %193 = arith.addf %176, %192 : vector<8x384xf32>
      %c8_88 = arith.constant 8 : index
      %c10_89 = arith.constant 10 : index
      %194 = memref.load %arg4[%c8_88, %c10_89] : memref<16x27xf32, #tpu.memory_space<smem>>
      %195 = vector.broadcast %194 : f32 to vector<8x384xf32>
      %196 = arith.mulf %195, %185 : vector<8x384xf32>
      %197 = arith.addf %180, %196 : vector<8x384xf32>
      %c12_90 = arith.constant 12 : index
      %c10_91 = arith.constant 10 : index
      %198 = memref.load %arg4[%c12_90, %c10_91] : memref<16x27xf32, #tpu.memory_space<smem>>
      %199 = vector.broadcast %198 : f32 to vector<8x384xf32>
      %200 = arith.mulf %199, %185 : vector<8x384xf32>
      %201 = arith.addf %184, %200 : vector<8x384xf32>
      %c382_i32_92 = arith.constant 382 : i32
      %202 = tpu.dynamic_rotate %168 by %c382_i32_92 dim 1 : vector<8x384xf32>, i32 -> vector<8x384xf32>
      %c0_93 = arith.constant 0 : index
      %c11 = arith.constant 11 : index
      %203 = memref.load %arg4[%c0_93, %c11] : memref<16x27xf32, #tpu.memory_space<smem>>
      %204 = vector.broadcast %203 : f32 to vector<8x384xf32>
      %205 = arith.mulf %204, %202 : vector<8x384xf32>
      %206 = arith.addf %189, %205 : vector<8x384xf32>
      %c4_94 = arith.constant 4 : index
      %c11_95 = arith.constant 11 : index
      %207 = memref.load %arg4[%c4_94, %c11_95] : memref<16x27xf32, #tpu.memory_space<smem>>
      %208 = vector.broadcast %207 : f32 to vector<8x384xf32>
      %209 = arith.mulf %208, %202 : vector<8x384xf32>
      %210 = arith.addf %193, %209 : vector<8x384xf32>
      %c8_96 = arith.constant 8 : index
      %c11_97 = arith.constant 11 : index
      %211 = memref.load %arg4[%c8_96, %c11_97] : memref<16x27xf32, #tpu.memory_space<smem>>
      %212 = vector.broadcast %211 : f32 to vector<8x384xf32>
      %213 = arith.mulf %212, %202 : vector<8x384xf32>
      %214 = arith.addf %197, %213 : vector<8x384xf32>
      %c12_98 = arith.constant 12 : index
      %c11_99 = arith.constant 11 : index
      %215 = memref.load %arg4[%c12_98, %c11_99] : memref<16x27xf32, #tpu.memory_space<smem>>
      %216 = vector.broadcast %215 : f32 to vector<8x384xf32>
      %217 = arith.mulf %216, %202 : vector<8x384xf32>
      %218 = arith.addf %201, %217 : vector<8x384xf32>
      %c366_i32_100 = arith.constant 366 : i32
      %219 = tpu.dynamic_rotate %168 by %c366_i32_100 dim 1 : vector<8x384xf32>, i32 -> vector<8x384xf32>
      %c0_101 = arith.constant 0 : index
      %c12_102 = arith.constant 12 : index
      %220 = memref.load %arg4[%c0_101, %c12_102] : memref<16x27xf32, #tpu.memory_space<smem>>
      %221 = vector.broadcast %220 : f32 to vector<8x384xf32>
      %222 = arith.mulf %221, %219 : vector<8x384xf32>
      %223 = arith.addf %206, %222 : vector<8x384xf32>
      %c4_103 = arith.constant 4 : index
      %c12_104 = arith.constant 12 : index
      %224 = memref.load %arg4[%c4_103, %c12_104] : memref<16x27xf32, #tpu.memory_space<smem>>
      %225 = vector.broadcast %224 : f32 to vector<8x384xf32>
      %226 = arith.mulf %225, %219 : vector<8x384xf32>
      %227 = arith.addf %210, %226 : vector<8x384xf32>
      %c8_105 = arith.constant 8 : index
      %c12_106 = arith.constant 12 : index
      %228 = memref.load %arg4[%c8_105, %c12_106] : memref<16x27xf32, #tpu.memory_space<smem>>
      %229 = vector.broadcast %228 : f32 to vector<8x384xf32>
      %230 = arith.mulf %229, %219 : vector<8x384xf32>
      %231 = arith.addf %214, %230 : vector<8x384xf32>
      %c12_107 = arith.constant 12 : index
      %c12_108 = arith.constant 12 : index
      %232 = memref.load %arg4[%c12_107, %c12_108] : memref<16x27xf32, #tpu.memory_space<smem>>
      %233 = vector.broadcast %232 : f32 to vector<8x384xf32>
      %234 = arith.mulf %233, %219 : vector<8x384xf32>
      %235 = arith.addf %218, %234 : vector<8x384xf32>
      %c365_i32_109 = arith.constant 365 : i32
      %236 = tpu.dynamic_rotate %168 by %c365_i32_109 dim 1 : vector<8x384xf32>, i32 -> vector<8x384xf32>
      %c0_110 = arith.constant 0 : index
      %c13 = arith.constant 13 : index
      %237 = memref.load %arg4[%c0_110, %c13] : memref<16x27xf32, #tpu.memory_space<smem>>
      %238 = vector.broadcast %237 : f32 to vector<8x384xf32>
      %239 = arith.mulf %238, %236 : vector<8x384xf32>
      %240 = arith.addf %223, %239 : vector<8x384xf32>
      %c4_111 = arith.constant 4 : index
      %c13_112 = arith.constant 13 : index
      %241 = memref.load %arg4[%c4_111, %c13_112] : memref<16x27xf32, #tpu.memory_space<smem>>
      %242 = vector.broadcast %241 : f32 to vector<8x384xf32>
      %243 = arith.mulf %242, %236 : vector<8x384xf32>
      %244 = arith.addf %227, %243 : vector<8x384xf32>
      %c8_113 = arith.constant 8 : index
      %c13_114 = arith.constant 13 : index
      %245 = memref.load %arg4[%c8_113, %c13_114] : memref<16x27xf32, #tpu.memory_space<smem>>
      %246 = vector.broadcast %245 : f32 to vector<8x384xf32>
      %247 = arith.mulf %246, %236 : vector<8x384xf32>
      %248 = arith.addf %231, %247 : vector<8x384xf32>
      %c12_115 = arith.constant 12 : index
      %c13_116 = arith.constant 13 : index
      %249 = memref.load %arg4[%c12_115, %c13_116] : memref<16x27xf32, #tpu.memory_space<smem>>
      %250 = vector.broadcast %249 : f32 to vector<8x384xf32>
      %251 = arith.mulf %250, %236 : vector<8x384xf32>
      %252 = arith.addf %235, %251 : vector<8x384xf32>
      %c364_i32_117 = arith.constant 364 : i32
      %253 = tpu.dynamic_rotate %168 by %c364_i32_117 dim 1 : vector<8x384xf32>, i32 -> vector<8x384xf32>
      %c0_118 = arith.constant 0 : index
      %c14 = arith.constant 14 : index
      %254 = memref.load %arg4[%c0_118, %c14] : memref<16x27xf32, #tpu.memory_space<smem>>
      %255 = vector.broadcast %254 : f32 to vector<8x384xf32>
      %256 = arith.mulf %255, %253 : vector<8x384xf32>
      %257 = arith.addf %240, %256 : vector<8x384xf32>
      %c4_119 = arith.constant 4 : index
      %c14_120 = arith.constant 14 : index
      %258 = memref.load %arg4[%c4_119, %c14_120] : memref<16x27xf32, #tpu.memory_space<smem>>
      %259 = vector.broadcast %258 : f32 to vector<8x384xf32>
      %260 = arith.mulf %259, %253 : vector<8x384xf32>
      %261 = arith.addf %244, %260 : vector<8x384xf32>
      %c8_121 = arith.constant 8 : index
      %c14_122 = arith.constant 14 : index
      %262 = memref.load %arg4[%c8_121, %c14_122] : memref<16x27xf32, #tpu.memory_space<smem>>
      %263 = vector.broadcast %262 : f32 to vector<8x384xf32>
      %264 = arith.mulf %263, %253 : vector<8x384xf32>
      %265 = arith.addf %248, %264 : vector<8x384xf32>
      %c12_123 = arith.constant 12 : index
      %c14_124 = arith.constant 14 : index
      %266 = memref.load %arg4[%c12_123, %c14_124] : memref<16x27xf32, #tpu.memory_space<smem>>
      %267 = vector.broadcast %266 : f32 to vector<8x384xf32>
      %268 = arith.mulf %267, %253 : vector<8x384xf32>
      %269 = arith.addf %252, %268 : vector<8x384xf32>
      %c348_i32_125 = arith.constant 348 : i32
      %270 = tpu.dynamic_rotate %168 by %c348_i32_125 dim 1 : vector<8x384xf32>, i32 -> vector<8x384xf32>
      %c0_126 = arith.constant 0 : index
      %c15 = arith.constant 15 : index
      %271 = memref.load %arg4[%c0_126, %c15] : memref<16x27xf32, #tpu.memory_space<smem>>
      %272 = vector.broadcast %271 : f32 to vector<8x384xf32>
      %273 = arith.mulf %272, %270 : vector<8x384xf32>
      %274 = arith.addf %257, %273 : vector<8x384xf32>
      %c4_127 = arith.constant 4 : index
      %c15_128 = arith.constant 15 : index
      %275 = memref.load %arg4[%c4_127, %c15_128] : memref<16x27xf32, #tpu.memory_space<smem>>
      %276 = vector.broadcast %275 : f32 to vector<8x384xf32>
      %277 = arith.mulf %276, %270 : vector<8x384xf32>
      %278 = arith.addf %261, %277 : vector<8x384xf32>
      %c8_129 = arith.constant 8 : index
      %c15_130 = arith.constant 15 : index
      %279 = memref.load %arg4[%c8_129, %c15_130] : memref<16x27xf32, #tpu.memory_space<smem>>
      %280 = vector.broadcast %279 : f32 to vector<8x384xf32>
      %281 = arith.mulf %280, %270 : vector<8x384xf32>
      %282 = arith.addf %265, %281 : vector<8x384xf32>
      %c12_131 = arith.constant 12 : index
      %c15_132 = arith.constant 15 : index
      %283 = memref.load %arg4[%c12_131, %c15_132] : memref<16x27xf32, #tpu.memory_space<smem>>
      %284 = vector.broadcast %283 : f32 to vector<8x384xf32>
      %285 = arith.mulf %284, %270 : vector<8x384xf32>
      %286 = arith.addf %269, %285 : vector<8x384xf32>
      %c347_i32_133 = arith.constant 347 : i32
      %287 = tpu.dynamic_rotate %168 by %c347_i32_133 dim 1 : vector<8x384xf32>, i32 -> vector<8x384xf32>
      %c0_134 = arith.constant 0 : index
      %c16 = arith.constant 16 : index
      %288 = memref.load %arg4[%c0_134, %c16] : memref<16x27xf32, #tpu.memory_space<smem>>
      %289 = vector.broadcast %288 : f32 to vector<8x384xf32>
      %290 = arith.mulf %289, %287 : vector<8x384xf32>
      %291 = arith.addf %274, %290 : vector<8x384xf32>
      %c4_135 = arith.constant 4 : index
      %c16_136 = arith.constant 16 : index
      %292 = memref.load %arg4[%c4_135, %c16_136] : memref<16x27xf32, #tpu.memory_space<smem>>
      %293 = vector.broadcast %292 : f32 to vector<8x384xf32>
      %294 = arith.mulf %293, %287 : vector<8x384xf32>
      %295 = arith.addf %278, %294 : vector<8x384xf32>
      %c8_137 = arith.constant 8 : index
      %c16_138 = arith.constant 16 : index
      %296 = memref.load %arg4[%c8_137, %c16_138] : memref<16x27xf32, #tpu.memory_space<smem>>
      %297 = vector.broadcast %296 : f32 to vector<8x384xf32>
      %298 = arith.mulf %297, %287 : vector<8x384xf32>
      %299 = arith.addf %282, %298 : vector<8x384xf32>
      %c12_139 = arith.constant 12 : index
      %c16_140 = arith.constant 16 : index
      %300 = memref.load %arg4[%c12_139, %c16_140] : memref<16x27xf32, #tpu.memory_space<smem>>
      %301 = vector.broadcast %300 : f32 to vector<8x384xf32>
      %302 = arith.mulf %301, %287 : vector<8x384xf32>
      %303 = arith.addf %286, %302 : vector<8x384xf32>
      %c346_i32_141 = arith.constant 346 : i32
      %304 = tpu.dynamic_rotate %168 by %c346_i32_141 dim 1 : vector<8x384xf32>, i32 -> vector<8x384xf32>
      %c0_142 = arith.constant 0 : index
      %c17 = arith.constant 17 : index
      %305 = memref.load %arg4[%c0_142, %c17] : memref<16x27xf32, #tpu.memory_space<smem>>
      %306 = vector.broadcast %305 : f32 to vector<8x384xf32>
      %307 = arith.mulf %306, %304 : vector<8x384xf32>
      %308 = arith.addf %291, %307 : vector<8x384xf32>
      %c4_143 = arith.constant 4 : index
      %c17_144 = arith.constant 17 : index
      %309 = memref.load %arg4[%c4_143, %c17_144] : memref<16x27xf32, #tpu.memory_space<smem>>
      %310 = vector.broadcast %309 : f32 to vector<8x384xf32>
      %311 = arith.mulf %310, %304 : vector<8x384xf32>
      %312 = arith.addf %295, %311 : vector<8x384xf32>
      %c8_145 = arith.constant 8 : index
      %c17_146 = arith.constant 17 : index
      %313 = memref.load %arg4[%c8_145, %c17_146] : memref<16x27xf32, #tpu.memory_space<smem>>
      %314 = vector.broadcast %313 : f32 to vector<8x384xf32>
      %315 = arith.mulf %314, %304 : vector<8x384xf32>
      %316 = arith.addf %299, %315 : vector<8x384xf32>
      %c12_147 = arith.constant 12 : index
      %c17_148 = arith.constant 17 : index
      %317 = memref.load %arg4[%c12_147, %c17_148] : memref<16x27xf32, #tpu.memory_space<smem>>
      %318 = vector.broadcast %317 : f32 to vector<8x384xf32>
      %319 = arith.mulf %318, %304 : vector<8x384xf32>
      %320 = arith.addf %303, %319 : vector<8x384xf32>
      %c0_149 = arith.constant 0 : index
      %c0_150 = arith.constant 0 : index
      %c2_151 = arith.constant 2 : index
      %c0_152 = arith.constant 0 : index
      %321 = vector.load %arg2[%c0_149, %c0_150, %c2_151, %c0_152] : memref<1x4x10x384xf32, #tpu.memory_space<vmem>>, vector<1x1x8x384xf32>
      %322 = vector.shape_cast %321 : vector<1x1x8x384xf32> to vector<8x384xf32>
      %c0_153 = arith.constant 0 : index
      %c18 = arith.constant 18 : index
      %323 = memref.load %arg4[%c0_153, %c18] : memref<16x27xf32, #tpu.memory_space<smem>>
      %324 = vector.broadcast %323 : f32 to vector<8x384xf32>
      %325 = arith.mulf %324, %322 : vector<8x384xf32>
      %326 = arith.addf %308, %325 : vector<8x384xf32>
      %c4_154 = arith.constant 4 : index
      %c18_155 = arith.constant 18 : index
      %327 = memref.load %arg4[%c4_154, %c18_155] : memref<16x27xf32, #tpu.memory_space<smem>>
      %328 = vector.broadcast %327 : f32 to vector<8x384xf32>
      %329 = arith.mulf %328, %322 : vector<8x384xf32>
      %330 = arith.addf %312, %329 : vector<8x384xf32>
      %c8_156 = arith.constant 8 : index
      %c18_157 = arith.constant 18 : index
      %331 = memref.load %arg4[%c8_156, %c18_157] : memref<16x27xf32, #tpu.memory_space<smem>>
      %332 = vector.broadcast %331 : f32 to vector<8x384xf32>
      %333 = arith.mulf %332, %322 : vector<8x384xf32>
      %334 = arith.addf %316, %333 : vector<8x384xf32>
      %c12_158 = arith.constant 12 : index
      %c18_159 = arith.constant 18 : index
      %335 = memref.load %arg4[%c12_158, %c18_159] : memref<16x27xf32, #tpu.memory_space<smem>>
      %336 = vector.broadcast %335 : f32 to vector<8x384xf32>
      %337 = arith.mulf %336, %322 : vector<8x384xf32>
      %338 = arith.addf %320, %337 : vector<8x384xf32>
      %c383_i32_160 = arith.constant 383 : i32
      %339 = tpu.dynamic_rotate %322 by %c383_i32_160 dim 1 : vector<8x384xf32>, i32 -> vector<8x384xf32>
      %c0_161 = arith.constant 0 : index
      %c19 = arith.constant 19 : index
      %340 = memref.load %arg4[%c0_161, %c19] : memref<16x27xf32, #tpu.memory_space<smem>>
      %341 = vector.broadcast %340 : f32 to vector<8x384xf32>
      %342 = arith.mulf %341, %339 : vector<8x384xf32>
      %343 = arith.addf %326, %342 : vector<8x384xf32>
      %c4_162 = arith.constant 4 : index
      %c19_163 = arith.constant 19 : index
      %344 = memref.load %arg4[%c4_162, %c19_163] : memref<16x27xf32, #tpu.memory_space<smem>>
      %345 = vector.broadcast %344 : f32 to vector<8x384xf32>
      %346 = arith.mulf %345, %339 : vector<8x384xf32>
      %347 = arith.addf %330, %346 : vector<8x384xf32>
      %c8_164 = arith.constant 8 : index
      %c19_165 = arith.constant 19 : index
      %348 = memref.load %arg4[%c8_164, %c19_165] : memref<16x27xf32, #tpu.memory_space<smem>>
      %349 = vector.broadcast %348 : f32 to vector<8x384xf32>
      %350 = arith.mulf %349, %339 : vector<8x384xf32>
      %351 = arith.addf %334, %350 : vector<8x384xf32>
      %c12_166 = arith.constant 12 : index
      %c19_167 = arith.constant 19 : index
      %352 = memref.load %arg4[%c12_166, %c19_167] : memref<16x27xf32, #tpu.memory_space<smem>>
      %353 = vector.broadcast %352 : f32 to vector<8x384xf32>
      %354 = arith.mulf %353, %339 : vector<8x384xf32>
      %355 = arith.addf %338, %354 : vector<8x384xf32>
      %c382_i32_168 = arith.constant 382 : i32
      %356 = tpu.dynamic_rotate %322 by %c382_i32_168 dim 1 : vector<8x384xf32>, i32 -> vector<8x384xf32>
      %c0_169 = arith.constant 0 : index
      %c20 = arith.constant 20 : index
      %357 = memref.load %arg4[%c0_169, %c20] : memref<16x27xf32, #tpu.memory_space<smem>>
      %358 = vector.broadcast %357 : f32 to vector<8x384xf32>
      %359 = arith.mulf %358, %356 : vector<8x384xf32>
      %360 = arith.addf %343, %359 : vector<8x384xf32>
      %c4_170 = arith.constant 4 : index
      %c20_171 = arith.constant 20 : index
      %361 = memref.load %arg4[%c4_170, %c20_171] : memref<16x27xf32, #tpu.memory_space<smem>>
      %362 = vector.broadcast %361 : f32 to vector<8x384xf32>
      %363 = arith.mulf %362, %356 : vector<8x384xf32>
      %364 = arith.addf %347, %363 : vector<8x384xf32>
      %c8_172 = arith.constant 8 : index
      %c20_173 = arith.constant 20 : index
      %365 = memref.load %arg4[%c8_172, %c20_173] : memref<16x27xf32, #tpu.memory_space<smem>>
      %366 = vector.broadcast %365 : f32 to vector<8x384xf32>
      %367 = arith.mulf %366, %356 : vector<8x384xf32>
      %368 = arith.addf %351, %367 : vector<8x384xf32>
      %c12_174 = arith.constant 12 : index
      %c20_175 = arith.constant 20 : index
      %369 = memref.load %arg4[%c12_174, %c20_175] : memref<16x27xf32, #tpu.memory_space<smem>>
      %370 = vector.broadcast %369 : f32 to vector<8x384xf32>
      %371 = arith.mulf %370, %356 : vector<8x384xf32>
      %372 = arith.addf %355, %371 : vector<8x384xf32>
      %c366_i32_176 = arith.constant 366 : i32
      %373 = tpu.dynamic_rotate %322 by %c366_i32_176 dim 1 : vector<8x384xf32>, i32 -> vector<8x384xf32>
      %c0_177 = arith.constant 0 : index
      %c21 = arith.constant 21 : index
      %374 = memref.load %arg4[%c0_177, %c21] : memref<16x27xf32, #tpu.memory_space<smem>>
      %375 = vector.broadcast %374 : f32 to vector<8x384xf32>
      %376 = arith.mulf %375, %373 : vector<8x384xf32>
      %377 = arith.addf %360, %376 : vector<8x384xf32>
      %c4_178 = arith.constant 4 : index
      %c21_179 = arith.constant 21 : index
      %378 = memref.load %arg4[%c4_178, %c21_179] : memref<16x27xf32, #tpu.memory_space<smem>>
      %379 = vector.broadcast %378 : f32 to vector<8x384xf32>
      %380 = arith.mulf %379, %373 : vector<8x384xf32>
      %381 = arith.addf %364, %380 : vector<8x384xf32>
      %c8_180 = arith.constant 8 : index
      %c21_181 = arith.constant 21 : index
      %382 = memref.load %arg4[%c8_180, %c21_181] : memref<16x27xf32, #tpu.memory_space<smem>>
      %383 = vector.broadcast %382 : f32 to vector<8x384xf32>
      %384 = arith.mulf %383, %373 : vector<8x384xf32>
      %385 = arith.addf %368, %384 : vector<8x384xf32>
      %c12_182 = arith.constant 12 : index
      %c21_183 = arith.constant 21 : index
      %386 = memref.load %arg4[%c12_182, %c21_183] : memref<16x27xf32, #tpu.memory_space<smem>>
      %387 = vector.broadcast %386 : f32 to vector<8x384xf32>
      %388 = arith.mulf %387, %373 : vector<8x384xf32>
      %389 = arith.addf %372, %388 : vector<8x384xf32>
      %c365_i32_184 = arith.constant 365 : i32
      %390 = tpu.dynamic_rotate %322 by %c365_i32_184 dim 1 : vector<8x384xf32>, i32 -> vector<8x384xf32>
      %c0_185 = arith.constant 0 : index
      %c22 = arith.constant 22 : index
      %391 = memref.load %arg4[%c0_185, %c22] : memref<16x27xf32, #tpu.memory_space<smem>>
      %392 = vector.broadcast %391 : f32 to vector<8x384xf32>
      %393 = arith.mulf %392, %390 : vector<8x384xf32>
      %394 = arith.addf %377, %393 : vector<8x384xf32>
      %c4_186 = arith.constant 4 : index
      %c22_187 = arith.constant 22 : index
      %395 = memref.load %arg4[%c4_186, %c22_187] : memref<16x27xf32, #tpu.memory_space<smem>>
      %396 = vector.broadcast %395 : f32 to vector<8x384xf32>
      %397 = arith.mulf %396, %390 : vector<8x384xf32>
      %398 = arith.addf %381, %397 : vector<8x384xf32>
      %c8_188 = arith.constant 8 : index
      %c22_189 = arith.constant 22 : index
      %399 = memref.load %arg4[%c8_188, %c22_189] : memref<16x27xf32, #tpu.memory_space<smem>>
      %400 = vector.broadcast %399 : f32 to vector<8x384xf32>
      %401 = arith.mulf %400, %390 : vector<8x384xf32>
      %402 = arith.addf %385, %401 : vector<8x384xf32>
      %c12_190 = arith.constant 12 : index
      %c22_191 = arith.constant 22 : index
      %403 = memref.load %arg4[%c12_190, %c22_191] : memref<16x27xf32, #tpu.memory_space<smem>>
      %404 = vector.broadcast %403 : f32 to vector<8x384xf32>
      %405 = arith.mulf %404, %390 : vector<8x384xf32>
      %406 = arith.addf %389, %405 : vector<8x384xf32>
      %c364_i32_192 = arith.constant 364 : i32
      %407 = tpu.dynamic_rotate %322 by %c364_i32_192 dim 1 : vector<8x384xf32>, i32 -> vector<8x384xf32>
      %c0_193 = arith.constant 0 : index
      %c23 = arith.constant 23 : index
      %408 = memref.load %arg4[%c0_193, %c23] : memref<16x27xf32, #tpu.memory_space<smem>>
      %409 = vector.broadcast %408 : f32 to vector<8x384xf32>
      %410 = arith.mulf %409, %407 : vector<8x384xf32>
      %411 = arith.addf %394, %410 : vector<8x384xf32>
      %c4_194 = arith.constant 4 : index
      %c23_195 = arith.constant 23 : index
      %412 = memref.load %arg4[%c4_194, %c23_195] : memref<16x27xf32, #tpu.memory_space<smem>>
      %413 = vector.broadcast %412 : f32 to vector<8x384xf32>
      %414 = arith.mulf %413, %407 : vector<8x384xf32>
      %415 = arith.addf %398, %414 : vector<8x384xf32>
      %c8_196 = arith.constant 8 : index
      %c23_197 = arith.constant 23 : index
      %416 = memref.load %arg4[%c8_196, %c23_197] : memref<16x27xf32, #tpu.memory_space<smem>>
      %417 = vector.broadcast %416 : f32 to vector<8x384xf32>
      %418 = arith.mulf %417, %407 : vector<8x384xf32>
      %419 = arith.addf %402, %418 : vector<8x384xf32>
      %c12_198 = arith.constant 12 : index
      %c23_199 = arith.constant 23 : index
      %420 = memref.load %arg4[%c12_198, %c23_199] : memref<16x27xf32, #tpu.memory_space<smem>>
      %421 = vector.broadcast %420 : f32 to vector<8x384xf32>
      %422 = arith.mulf %421, %407 : vector<8x384xf32>
      %423 = arith.addf %406, %422 : vector<8x384xf32>
      %c348_i32_200 = arith.constant 348 : i32
      %424 = tpu.dynamic_rotate %322 by %c348_i32_200 dim 1 : vector<8x384xf32>, i32 -> vector<8x384xf32>
      %c0_201 = arith.constant 0 : index
      %c24 = arith.constant 24 : index
      %425 = memref.load %arg4[%c0_201, %c24] : memref<16x27xf32, #tpu.memory_space<smem>>
      %426 = vector.broadcast %425 : f32 to vector<8x384xf32>
      %427 = arith.mulf %426, %424 : vector<8x384xf32>
      %428 = arith.addf %411, %427 : vector<8x384xf32>
      %c4_202 = arith.constant 4 : index
      %c24_203 = arith.constant 24 : index
      %429 = memref.load %arg4[%c4_202, %c24_203] : memref<16x27xf32, #tpu.memory_space<smem>>
      %430 = vector.broadcast %429 : f32 to vector<8x384xf32>
      %431 = arith.mulf %430, %424 : vector<8x384xf32>
      %432 = arith.addf %415, %431 : vector<8x384xf32>
      %c8_204 = arith.constant 8 : index
      %c24_205 = arith.constant 24 : index
      %433 = memref.load %arg4[%c8_204, %c24_205] : memref<16x27xf32, #tpu.memory_space<smem>>
      %434 = vector.broadcast %433 : f32 to vector<8x384xf32>
      %435 = arith.mulf %434, %424 : vector<8x384xf32>
      %436 = arith.addf %419, %435 : vector<8x384xf32>
      %c12_206 = arith.constant 12 : index
      %c24_207 = arith.constant 24 : index
      %437 = memref.load %arg4[%c12_206, %c24_207] : memref<16x27xf32, #tpu.memory_space<smem>>
      %438 = vector.broadcast %437 : f32 to vector<8x384xf32>
      %439 = arith.mulf %438, %424 : vector<8x384xf32>
      %440 = arith.addf %423, %439 : vector<8x384xf32>
      %c347_i32_208 = arith.constant 347 : i32
      %441 = tpu.dynamic_rotate %322 by %c347_i32_208 dim 1 : vector<8x384xf32>, i32 -> vector<8x384xf32>
      %c0_209 = arith.constant 0 : index
      %c25 = arith.constant 25 : index
      %442 = memref.load %arg4[%c0_209, %c25] : memref<16x27xf32, #tpu.memory_space<smem>>
      %443 = vector.broadcast %442 : f32 to vector<8x384xf32>
      %444 = arith.mulf %443, %441 : vector<8x384xf32>
      %445 = arith.addf %428, %444 : vector<8x384xf32>
      %c4_210 = arith.constant 4 : index
      %c25_211 = arith.constant 25 : index
      %446 = memref.load %arg4[%c4_210, %c25_211] : memref<16x27xf32, #tpu.memory_space<smem>>
      %447 = vector.broadcast %446 : f32 to vector<8x384xf32>
      %448 = arith.mulf %447, %441 : vector<8x384xf32>
      %449 = arith.addf %432, %448 : vector<8x384xf32>
      %c8_212 = arith.constant 8 : index
      %c25_213 = arith.constant 25 : index
      %450 = memref.load %arg4[%c8_212, %c25_213] : memref<16x27xf32, #tpu.memory_space<smem>>
      %451 = vector.broadcast %450 : f32 to vector<8x384xf32>
      %452 = arith.mulf %451, %441 : vector<8x384xf32>
      %453 = arith.addf %436, %452 : vector<8x384xf32>
      %c12_214 = arith.constant 12 : index
      %c25_215 = arith.constant 25 : index
      %454 = memref.load %arg4[%c12_214, %c25_215] : memref<16x27xf32, #tpu.memory_space<smem>>
      %455 = vector.broadcast %454 : f32 to vector<8x384xf32>
      %456 = arith.mulf %455, %441 : vector<8x384xf32>
      %457 = arith.addf %440, %456 : vector<8x384xf32>
      %c346_i32_216 = arith.constant 346 : i32
      %458 = tpu.dynamic_rotate %322 by %c346_i32_216 dim 1 : vector<8x384xf32>, i32 -> vector<8x384xf32>
      %c0_217 = arith.constant 0 : index
      %c26 = arith.constant 26 : index
      %459 = memref.load %arg4[%c0_217, %c26] : memref<16x27xf32, #tpu.memory_space<smem>>
      %460 = vector.broadcast %459 : f32 to vector<8x384xf32>
      %461 = arith.mulf %460, %458 : vector<8x384xf32>
      %462 = arith.addf %445, %461 : vector<8x384xf32>
      %c4_218 = arith.constant 4 : index
      %c26_219 = arith.constant 26 : index
      %463 = memref.load %arg4[%c4_218, %c26_219] : memref<16x27xf32, #tpu.memory_space<smem>>
      %464 = vector.broadcast %463 : f32 to vector<8x384xf32>
      %465 = arith.mulf %464, %458 : vector<8x384xf32>
      %466 = arith.addf %449, %465 : vector<8x384xf32>
      %c8_220 = arith.constant 8 : index
      %c26_221 = arith.constant 26 : index
      %467 = memref.load %arg4[%c8_220, %c26_221] : memref<16x27xf32, #tpu.memory_space<smem>>
      %468 = vector.broadcast %467 : f32 to vector<8x384xf32>
      %469 = arith.mulf %468, %458 : vector<8x384xf32>
      %470 = arith.addf %453, %469 : vector<8x384xf32>
      %c12_222 = arith.constant 12 : index
      %c26_223 = arith.constant 26 : index
      %471 = memref.load %arg4[%c12_222, %c26_223] : memref<16x27xf32, #tpu.memory_space<smem>>
      %472 = vector.broadcast %471 : f32 to vector<8x384xf32>
      %473 = arith.mulf %472, %458 : vector<8x384xf32>
      %474 = arith.addf %457, %473 : vector<8x384xf32>
      %c0_224 = arith.constant 0 : index
      %c1_225 = arith.constant 1 : index
      %c0_226 = arith.constant 0 : index
      %c0_227 = arith.constant 0 : index
      %475 = vector.load %arg2[%c0_224, %c1_225, %c0_226, %c0_227] : memref<1x4x10x384xf32, #tpu.memory_space<vmem>>, vector<1x1x8x384xf32>
      %476 = vector.shape_cast %475 : vector<1x1x8x384xf32> to vector<8x384xf32>
      %c1_228 = arith.constant 1 : index
      %c0_229 = arith.constant 0 : index
      %477 = memref.load %arg4[%c1_228, %c0_229] : memref<16x27xf32, #tpu.memory_space<smem>>
      %478 = vector.broadcast %477 : f32 to vector<8x384xf32>
      %479 = arith.mulf %478, %476 : vector<8x384xf32>
      %480 = arith.addf %462, %479 : vector<8x384xf32>
      %c5_230 = arith.constant 5 : index
      %c0_231 = arith.constant 0 : index
      %481 = memref.load %arg4[%c5_230, %c0_231] : memref<16x27xf32, #tpu.memory_space<smem>>
      %482 = vector.broadcast %481 : f32 to vector<8x384xf32>
      %483 = arith.mulf %482, %476 : vector<8x384xf32>
      %484 = arith.addf %466, %483 : vector<8x384xf32>
      %c9_232 = arith.constant 9 : index
      %c0_233 = arith.constant 0 : index
      %485 = memref.load %arg4[%c9_232, %c0_233] : memref<16x27xf32, #tpu.memory_space<smem>>
      %486 = vector.broadcast %485 : f32 to vector<8x384xf32>
      %487 = arith.mulf %486, %476 : vector<8x384xf32>
      %488 = arith.addf %470, %487 : vector<8x384xf32>
      %c13_234 = arith.constant 13 : index
      %c0_235 = arith.constant 0 : index
      %489 = memref.load %arg4[%c13_234, %c0_235] : memref<16x27xf32, #tpu.memory_space<smem>>
      %490 = vector.broadcast %489 : f32 to vector<8x384xf32>
      %491 = arith.mulf %490, %476 : vector<8x384xf32>
      %492 = arith.addf %474, %491 : vector<8x384xf32>
      %c383_i32_236 = arith.constant 383 : i32
      %493 = tpu.dynamic_rotate %476 by %c383_i32_236 dim 1 : vector<8x384xf32>, i32 -> vector<8x384xf32>
      %c1_237 = arith.constant 1 : index
      %c1_238 = arith.constant 1 : index
      %494 = memref.load %arg4[%c1_237, %c1_238] : memref<16x27xf32, #tpu.memory_space<smem>>
      %495 = vector.broadcast %494 : f32 to vector<8x384xf32>
      %496 = arith.mulf %495, %493 : vector<8x384xf32>
      %497 = arith.addf %480, %496 : vector<8x384xf32>
      %c5_239 = arith.constant 5 : index
      %c1_240 = arith.constant 1 : index
      %498 = memref.load %arg4[%c5_239, %c1_240] : memref<16x27xf32, #tpu.memory_space<smem>>
      %499 = vector.broadcast %498 : f32 to vector<8x384xf32>
      %500 = arith.mulf %499, %493 : vector<8x384xf32>
      %501 = arith.addf %484, %500 : vector<8x384xf32>
      %c9_241 = arith.constant 9 : index
      %c1_242 = arith.constant 1 : index
      %502 = memref.load %arg4[%c9_241, %c1_242] : memref<16x27xf32, #tpu.memory_space<smem>>
      %503 = vector.broadcast %502 : f32 to vector<8x384xf32>
      %504 = arith.mulf %503, %493 : vector<8x384xf32>
      %505 = arith.addf %488, %504 : vector<8x384xf32>
      %c13_243 = arith.constant 13 : index
      %c1_244 = arith.constant 1 : index
      %506 = memref.load %arg4[%c13_243, %c1_244] : memref<16x27xf32, #tpu.memory_space<smem>>
      %507 = vector.broadcast %506 : f32 to vector<8x384xf32>
      %508 = arith.mulf %507, %493 : vector<8x384xf32>
      %509 = arith.addf %492, %508 : vector<8x384xf32>
      %c382_i32_245 = arith.constant 382 : i32
      %510 = tpu.dynamic_rotate %476 by %c382_i32_245 dim 1 : vector<8x384xf32>, i32 -> vector<8x384xf32>
      %c1_246 = arith.constant 1 : index
      %c2_247 = arith.constant 2 : index
      %511 = memref.load %arg4[%c1_246, %c2_247] : memref<16x27xf32, #tpu.memory_space<smem>>
      %512 = vector.broadcast %511 : f32 to vector<8x384xf32>
      %513 = arith.mulf %512, %510 : vector<8x384xf32>
      %514 = arith.addf %497, %513 : vector<8x384xf32>
      %c5_248 = arith.constant 5 : index
      %c2_249 = arith.constant 2 : index
      %515 = memref.load %arg4[%c5_248, %c2_249] : memref<16x27xf32, #tpu.memory_space<smem>>
      %516 = vector.broadcast %515 : f32 to vector<8x384xf32>
      %517 = arith.mulf %516, %510 : vector<8x384xf32>
      %518 = arith.addf %501, %517 : vector<8x384xf32>
      %c9_250 = arith.constant 9 : index
      %c2_251 = arith.constant 2 : index
      %519 = memref.load %arg4[%c9_250, %c2_251] : memref<16x27xf32, #tpu.memory_space<smem>>
      %520 = vector.broadcast %519 : f32 to vector<8x384xf32>
      %521 = arith.mulf %520, %510 : vector<8x384xf32>
      %522 = arith.addf %505, %521 : vector<8x384xf32>
      %c13_252 = arith.constant 13 : index
      %c2_253 = arith.constant 2 : index
      %523 = memref.load %arg4[%c13_252, %c2_253] : memref<16x27xf32, #tpu.memory_space<smem>>
      %524 = vector.broadcast %523 : f32 to vector<8x384xf32>
      %525 = arith.mulf %524, %510 : vector<8x384xf32>
      %526 = arith.addf %509, %525 : vector<8x384xf32>
      %c366_i32_254 = arith.constant 366 : i32
      %527 = tpu.dynamic_rotate %476 by %c366_i32_254 dim 1 : vector<8x384xf32>, i32 -> vector<8x384xf32>
      %c1_255 = arith.constant 1 : index
      %c3_256 = arith.constant 3 : index
      %528 = memref.load %arg4[%c1_255, %c3_256] : memref<16x27xf32, #tpu.memory_space<smem>>
      %529 = vector.broadcast %528 : f32 to vector<8x384xf32>
      %530 = arith.mulf %529, %527 : vector<8x384xf32>
      %531 = arith.addf %514, %530 : vector<8x384xf32>
      %c5_257 = arith.constant 5 : index
      %c3_258 = arith.constant 3 : index
      %532 = memref.load %arg4[%c5_257, %c3_258] : memref<16x27xf32, #tpu.memory_space<smem>>
      %533 = vector.broadcast %532 : f32 to vector<8x384xf32>
      %534 = arith.mulf %533, %527 : vector<8x384xf32>
      %535 = arith.addf %518, %534 : vector<8x384xf32>
      %c9_259 = arith.constant 9 : index
      %c3_260 = arith.constant 3 : index
      %536 = memref.load %arg4[%c9_259, %c3_260] : memref<16x27xf32, #tpu.memory_space<smem>>
      %537 = vector.broadcast %536 : f32 to vector<8x384xf32>
      %538 = arith.mulf %537, %527 : vector<8x384xf32>
      %539 = arith.addf %522, %538 : vector<8x384xf32>
      %c13_261 = arith.constant 13 : index
      %c3_262 = arith.constant 3 : index
      %540 = memref.load %arg4[%c13_261, %c3_262] : memref<16x27xf32, #tpu.memory_space<smem>>
      %541 = vector.broadcast %540 : f32 to vector<8x384xf32>
      %542 = arith.mulf %541, %527 : vector<8x384xf32>
      %543 = arith.addf %526, %542 : vector<8x384xf32>
      %c365_i32_263 = arith.constant 365 : i32
      %544 = tpu.dynamic_rotate %476 by %c365_i32_263 dim 1 : vector<8x384xf32>, i32 -> vector<8x384xf32>
      %c1_264 = arith.constant 1 : index
      %c4_265 = arith.constant 4 : index
      %545 = memref.load %arg4[%c1_264, %c4_265] : memref<16x27xf32, #tpu.memory_space<smem>>
      %546 = vector.broadcast %545 : f32 to vector<8x384xf32>
      %547 = arith.mulf %546, %544 : vector<8x384xf32>
      %548 = arith.addf %531, %547 : vector<8x384xf32>
      %c5_266 = arith.constant 5 : index
      %c4_267 = arith.constant 4 : index
      %549 = memref.load %arg4[%c5_266, %c4_267] : memref<16x27xf32, #tpu.memory_space<smem>>
      %550 = vector.broadcast %549 : f32 to vector<8x384xf32>
      %551 = arith.mulf %550, %544 : vector<8x384xf32>
      %552 = arith.addf %535, %551 : vector<8x384xf32>
      %c9_268 = arith.constant 9 : index
      %c4_269 = arith.constant 4 : index
      %553 = memref.load %arg4[%c9_268, %c4_269] : memref<16x27xf32, #tpu.memory_space<smem>>
      %554 = vector.broadcast %553 : f32 to vector<8x384xf32>
      %555 = arith.mulf %554, %544 : vector<8x384xf32>
      %556 = arith.addf %539, %555 : vector<8x384xf32>
      %c13_270 = arith.constant 13 : index
      %c4_271 = arith.constant 4 : index
      %557 = memref.load %arg4[%c13_270, %c4_271] : memref<16x27xf32, #tpu.memory_space<smem>>
      %558 = vector.broadcast %557 : f32 to vector<8x384xf32>
      %559 = arith.mulf %558, %544 : vector<8x384xf32>
      %560 = arith.addf %543, %559 : vector<8x384xf32>
      %c364_i32_272 = arith.constant 364 : i32
      %561 = tpu.dynamic_rotate %476 by %c364_i32_272 dim 1 : vector<8x384xf32>, i32 -> vector<8x384xf32>
      %c1_273 = arith.constant 1 : index
      %c5_274 = arith.constant 5 : index
      %562 = memref.load %arg4[%c1_273, %c5_274] : memref<16x27xf32, #tpu.memory_space<smem>>
      %563 = vector.broadcast %562 : f32 to vector<8x384xf32>
      %564 = arith.mulf %563, %561 : vector<8x384xf32>
      %565 = arith.addf %548, %564 : vector<8x384xf32>
      %c5_275 = arith.constant 5 : index
      %c5_276 = arith.constant 5 : index
      %566 = memref.load %arg4[%c5_275, %c5_276] : memref<16x27xf32, #tpu.memory_space<smem>>
      %567 = vector.broadcast %566 : f32 to vector<8x384xf32>
      %568 = arith.mulf %567, %561 : vector<8x384xf32>
      %569 = arith.addf %552, %568 : vector<8x384xf32>
      %c9_277 = arith.constant 9 : index
      %c5_278 = arith.constant 5 : index
      %570 = memref.load %arg4[%c9_277, %c5_278] : memref<16x27xf32, #tpu.memory_space<smem>>
      %571 = vector.broadcast %570 : f32 to vector<8x384xf32>
      %572 = arith.mulf %571, %561 : vector<8x384xf32>
      %573 = arith.addf %556, %572 : vector<8x384xf32>
      %c13_279 = arith.constant 13 : index
      %c5_280 = arith.constant 5 : index
      %574 = memref.load %arg4[%c13_279, %c5_280] : memref<16x27xf32, #tpu.memory_space<smem>>
      %575 = vector.broadcast %574 : f32 to vector<8x384xf32>
      %576 = arith.mulf %575, %561 : vector<8x384xf32>
      %577 = arith.addf %560, %576 : vector<8x384xf32>
      %c348_i32_281 = arith.constant 348 : i32
      %578 = tpu.dynamic_rotate %476 by %c348_i32_281 dim 1 : vector<8x384xf32>, i32 -> vector<8x384xf32>
      %c1_282 = arith.constant 1 : index
      %c6_283 = arith.constant 6 : index
      %579 = memref.load %arg4[%c1_282, %c6_283] : memref<16x27xf32, #tpu.memory_space<smem>>
      %580 = vector.broadcast %579 : f32 to vector<8x384xf32>
      %581 = arith.mulf %580, %578 : vector<8x384xf32>
      %582 = arith.addf %565, %581 : vector<8x384xf32>
      %c5_284 = arith.constant 5 : index
      %c6_285 = arith.constant 6 : index
      %583 = memref.load %arg4[%c5_284, %c6_285] : memref<16x27xf32, #tpu.memory_space<smem>>
      %584 = vector.broadcast %583 : f32 to vector<8x384xf32>
      %585 = arith.mulf %584, %578 : vector<8x384xf32>
      %586 = arith.addf %569, %585 : vector<8x384xf32>
      %c9_286 = arith.constant 9 : index
      %c6_287 = arith.constant 6 : index
      %587 = memref.load %arg4[%c9_286, %c6_287] : memref<16x27xf32, #tpu.memory_space<smem>>
      %588 = vector.broadcast %587 : f32 to vector<8x384xf32>
      %589 = arith.mulf %588, %578 : vector<8x384xf32>
      %590 = arith.addf %573, %589 : vector<8x384xf32>
      %c13_288 = arith.constant 13 : index
      %c6_289 = arith.constant 6 : index
      %591 = memref.load %arg4[%c13_288, %c6_289] : memref<16x27xf32, #tpu.memory_space<smem>>
      %592 = vector.broadcast %591 : f32 to vector<8x384xf32>
      %593 = arith.mulf %592, %578 : vector<8x384xf32>
      %594 = arith.addf %577, %593 : vector<8x384xf32>
      %c347_i32_290 = arith.constant 347 : i32
      %595 = tpu.dynamic_rotate %476 by %c347_i32_290 dim 1 : vector<8x384xf32>, i32 -> vector<8x384xf32>
      %c1_291 = arith.constant 1 : index
      %c7_292 = arith.constant 7 : index
      %596 = memref.load %arg4[%c1_291, %c7_292] : memref<16x27xf32, #tpu.memory_space<smem>>
      %597 = vector.broadcast %596 : f32 to vector<8x384xf32>
      %598 = arith.mulf %597, %595 : vector<8x384xf32>
      %599 = arith.addf %582, %598 : vector<8x384xf32>
      %c5_293 = arith.constant 5 : index
      %c7_294 = arith.constant 7 : index
      %600 = memref.load %arg4[%c5_293, %c7_294] : memref<16x27xf32, #tpu.memory_space<smem>>
      %601 = vector.broadcast %600 : f32 to vector<8x384xf32>
      %602 = arith.mulf %601, %595 : vector<8x384xf32>
      %603 = arith.addf %586, %602 : vector<8x384xf32>
      %c9_295 = arith.constant 9 : index
      %c7_296 = arith.constant 7 : index
      %604 = memref.load %arg4[%c9_295, %c7_296] : memref<16x27xf32, #tpu.memory_space<smem>>
      %605 = vector.broadcast %604 : f32 to vector<8x384xf32>
      %606 = arith.mulf %605, %595 : vector<8x384xf32>
      %607 = arith.addf %590, %606 : vector<8x384xf32>
      %c13_297 = arith.constant 13 : index
      %c7_298 = arith.constant 7 : index
      %608 = memref.load %arg4[%c13_297, %c7_298] : memref<16x27xf32, #tpu.memory_space<smem>>
      %609 = vector.broadcast %608 : f32 to vector<8x384xf32>
      %610 = arith.mulf %609, %595 : vector<8x384xf32>
      %611 = arith.addf %594, %610 : vector<8x384xf32>
      %c346_i32_299 = arith.constant 346 : i32
      %612 = tpu.dynamic_rotate %476 by %c346_i32_299 dim 1 : vector<8x384xf32>, i32 -> vector<8x384xf32>
      %c1_300 = arith.constant 1 : index
      %c8_301 = arith.constant 8 : index
      %613 = memref.load %arg4[%c1_300, %c8_301] : memref<16x27xf32, #tpu.memory_space<smem>>
      %614 = vector.broadcast %613 : f32 to vector<8x384xf32>
      %615 = arith.mulf %614, %612 : vector<8x384xf32>
      %616 = arith.addf %599, %615 : vector<8x384xf32>
      %c5_302 = arith.constant 5 : index
      %c8_303 = arith.constant 8 : index
      %617 = memref.load %arg4[%c5_302, %c8_303] : memref<16x27xf32, #tpu.memory_space<smem>>
      %618 = vector.broadcast %617 : f32 to vector<8x384xf32>
      %619 = arith.mulf %618, %612 : vector<8x384xf32>
      %620 = arith.addf %603, %619 : vector<8x384xf32>
      %c9_304 = arith.constant 9 : index
      %c8_305 = arith.constant 8 : index
      %621 = memref.load %arg4[%c9_304, %c8_305] : memref<16x27xf32, #tpu.memory_space<smem>>
      %622 = vector.broadcast %621 : f32 to vector<8x384xf32>
      %623 = arith.mulf %622, %612 : vector<8x384xf32>
      %624 = arith.addf %607, %623 : vector<8x384xf32>
      %c13_306 = arith.constant 13 : index
      %c8_307 = arith.constant 8 : index
      %625 = memref.load %arg4[%c13_306, %c8_307] : memref<16x27xf32, #tpu.memory_space<smem>>
      %626 = vector.broadcast %625 : f32 to vector<8x384xf32>
      %627 = arith.mulf %626, %612 : vector<8x384xf32>
      %628 = arith.addf %611, %627 : vector<8x384xf32>
      %c0_308 = arith.constant 0 : index
      %c1_309 = arith.constant 1 : index
      %c1_310 = arith.constant 1 : index
      %c0_311 = arith.constant 0 : index
      %629 = vector.load %arg2[%c0_308, %c1_309, %c1_310, %c0_311] : memref<1x4x10x384xf32, #tpu.memory_space<vmem>>, vector<1x1x8x384xf32>
      %630 = vector.shape_cast %629 : vector<1x1x8x384xf32> to vector<8x384xf32>
      %c1_312 = arith.constant 1 : index
      %c9_313 = arith.constant 9 : index
      %631 = memref.load %arg4[%c1_312, %c9_313] : memref<16x27xf32, #tpu.memory_space<smem>>
      %632 = vector.broadcast %631 : f32 to vector<8x384xf32>
      %633 = arith.mulf %632, %630 : vector<8x384xf32>
      %634 = arith.addf %616, %633 : vector<8x384xf32>
      %c5_314 = arith.constant 5 : index
      %c9_315 = arith.constant 9 : index
      %635 = memref.load %arg4[%c5_314, %c9_315] : memref<16x27xf32, #tpu.memory_space<smem>>
      %636 = vector.broadcast %635 : f32 to vector<8x384xf32>
      %637 = arith.mulf %636, %630 : vector<8x384xf32>
      %638 = arith.addf %620, %637 : vector<8x384xf32>
      %c9_316 = arith.constant 9 : index
      %c9_317 = arith.constant 9 : index
      %639 = memref.load %arg4[%c9_316, %c9_317] : memref<16x27xf32, #tpu.memory_space<smem>>
      %640 = vector.broadcast %639 : f32 to vector<8x384xf32>
      %641 = arith.mulf %640, %630 : vector<8x384xf32>
      %642 = arith.addf %624, %641 : vector<8x384xf32>
      %c13_318 = arith.constant 13 : index
      %c9_319 = arith.constant 9 : index
      %643 = memref.load %arg4[%c13_318, %c9_319] : memref<16x27xf32, #tpu.memory_space<smem>>
      %644 = vector.broadcast %643 : f32 to vector<8x384xf32>
      %645 = arith.mulf %644, %630 : vector<8x384xf32>
      %646 = arith.addf %628, %645 : vector<8x384xf32>
      %c383_i32_320 = arith.constant 383 : i32
      %647 = tpu.dynamic_rotate %630 by %c383_i32_320 dim 1 : vector<8x384xf32>, i32 -> vector<8x384xf32>
      %c1_321 = arith.constant 1 : index
      %c10_322 = arith.constant 10 : index
      %648 = memref.load %arg4[%c1_321, %c10_322] : memref<16x27xf32, #tpu.memory_space<smem>>
      %649 = vector.broadcast %648 : f32 to vector<8x384xf32>
      %650 = arith.mulf %649, %647 : vector<8x384xf32>
      %651 = arith.addf %634, %650 : vector<8x384xf32>
      %c5_323 = arith.constant 5 : index
      %c10_324 = arith.constant 10 : index
      %652 = memref.load %arg4[%c5_323, %c10_324] : memref<16x27xf32, #tpu.memory_space<smem>>
      %653 = vector.broadcast %652 : f32 to vector<8x384xf32>
      %654 = arith.mulf %653, %647 : vector<8x384xf32>
      %655 = arith.addf %638, %654 : vector<8x384xf32>
      %c9_325 = arith.constant 9 : index
      %c10_326 = arith.constant 10 : index
      %656 = memref.load %arg4[%c9_325, %c10_326] : memref<16x27xf32, #tpu.memory_space<smem>>
      %657 = vector.broadcast %656 : f32 to vector<8x384xf32>
      %658 = arith.mulf %657, %647 : vector<8x384xf32>
      %659 = arith.addf %642, %658 : vector<8x384xf32>
      %c13_327 = arith.constant 13 : index
      %c10_328 = arith.constant 10 : index
      %660 = memref.load %arg4[%c13_327, %c10_328] : memref<16x27xf32, #tpu.memory_space<smem>>
      %661 = vector.broadcast %660 : f32 to vector<8x384xf32>
      %662 = arith.mulf %661, %647 : vector<8x384xf32>
      %663 = arith.addf %646, %662 : vector<8x384xf32>
      %c382_i32_329 = arith.constant 382 : i32
      %664 = tpu.dynamic_rotate %630 by %c382_i32_329 dim 1 : vector<8x384xf32>, i32 -> vector<8x384xf32>
      %c1_330 = arith.constant 1 : index
      %c11_331 = arith.constant 11 : index
      %665 = memref.load %arg4[%c1_330, %c11_331] : memref<16x27xf32, #tpu.memory_space<smem>>
      %666 = vector.broadcast %665 : f32 to vector<8x384xf32>
      %667 = arith.mulf %666, %664 : vector<8x384xf32>
      %668 = arith.addf %651, %667 : vector<8x384xf32>
      %c5_332 = arith.constant 5 : index
      %c11_333 = arith.constant 11 : index
      %669 = memref.load %arg4[%c5_332, %c11_333] : memref<16x27xf32, #tpu.memory_space<smem>>
      %670 = vector.broadcast %669 : f32 to vector<8x384xf32>
      %671 = arith.mulf %670, %664 : vector<8x384xf32>
      %672 = arith.addf %655, %671 : vector<8x384xf32>
      %c9_334 = arith.constant 9 : index
      %c11_335 = arith.constant 11 : index
      %673 = memref.load %arg4[%c9_334, %c11_335] : memref<16x27xf32, #tpu.memory_space<smem>>
      %674 = vector.broadcast %673 : f32 to vector<8x384xf32>
      %675 = arith.mulf %674, %664 : vector<8x384xf32>
      %676 = arith.addf %659, %675 : vector<8x384xf32>
      %c13_336 = arith.constant 13 : index
      %c11_337 = arith.constant 11 : index
      %677 = memref.load %arg4[%c13_336, %c11_337] : memref<16x27xf32, #tpu.memory_space<smem>>
      %678 = vector.broadcast %677 : f32 to vector<8x384xf32>
      %679 = arith.mulf %678, %664 : vector<8x384xf32>
      %680 = arith.addf %663, %679 : vector<8x384xf32>
      %c366_i32_338 = arith.constant 366 : i32
      %681 = tpu.dynamic_rotate %630 by %c366_i32_338 dim 1 : vector<8x384xf32>, i32 -> vector<8x384xf32>
      %c1_339 = arith.constant 1 : index
      %c12_340 = arith.constant 12 : index
      %682 = memref.load %arg4[%c1_339, %c12_340] : memref<16x27xf32, #tpu.memory_space<smem>>
      %683 = vector.broadcast %682 : f32 to vector<8x384xf32>
      %684 = arith.mulf %683, %681 : vector<8x384xf32>
      %685 = arith.addf %668, %684 : vector<8x384xf32>
      %c5_341 = arith.constant 5 : index
      %c12_342 = arith.constant 12 : index
      %686 = memref.load %arg4[%c5_341, %c12_342] : memref<16x27xf32, #tpu.memory_space<smem>>
      %687 = vector.broadcast %686 : f32 to vector<8x384xf32>
      %688 = arith.mulf %687, %681 : vector<8x384xf32>
      %689 = arith.addf %672, %688 : vector<8x384xf32>
      %c9_343 = arith.constant 9 : index
      %c12_344 = arith.constant 12 : index
      %690 = memref.load %arg4[%c9_343, %c12_344] : memref<16x27xf32, #tpu.memory_space<smem>>
      %691 = vector.broadcast %690 : f32 to vector<8x384xf32>
      %692 = arith.mulf %691, %681 : vector<8x384xf32>
      %693 = arith.addf %676, %692 : vector<8x384xf32>
      %c13_345 = arith.constant 13 : index
      %c12_346 = arith.constant 12 : index
      %694 = memref.load %arg4[%c13_345, %c12_346] : memref<16x27xf32, #tpu.memory_space<smem>>
      %695 = vector.broadcast %694 : f32 to vector<8x384xf32>
      %696 = arith.mulf %695, %681 : vector<8x384xf32>
      %697 = arith.addf %680, %696 : vector<8x384xf32>
      %c365_i32_347 = arith.constant 365 : i32
      %698 = tpu.dynamic_rotate %630 by %c365_i32_347 dim 1 : vector<8x384xf32>, i32 -> vector<8x384xf32>
      %c1_348 = arith.constant 1 : index
      %c13_349 = arith.constant 13 : index
      %699 = memref.load %arg4[%c1_348, %c13_349] : memref<16x27xf32, #tpu.memory_space<smem>>
      %700 = vector.broadcast %699 : f32 to vector<8x384xf32>
      %701 = arith.mulf %700, %698 : vector<8x384xf32>
      %702 = arith.addf %685, %701 : vector<8x384xf32>
      %c5_350 = arith.constant 5 : index
      %c13_351 = arith.constant 13 : index
      %703 = memref.load %arg4[%c5_350, %c13_351] : memref<16x27xf32, #tpu.memory_space<smem>>
      %704 = vector.broadcast %703 : f32 to vector<8x384xf32>
      %705 = arith.mulf %704, %698 : vector<8x384xf32>
      %706 = arith.addf %689, %705 : vector<8x384xf32>
      %c9_352 = arith.constant 9 : index
      %c13_353 = arith.constant 13 : index
      %707 = memref.load %arg4[%c9_352, %c13_353] : memref<16x27xf32, #tpu.memory_space<smem>>
      %708 = vector.broadcast %707 : f32 to vector<8x384xf32>
      %709 = arith.mulf %708, %698 : vector<8x384xf32>
      %710 = arith.addf %693, %709 : vector<8x384xf32>
      %c13_354 = arith.constant 13 : index
      %c13_355 = arith.constant 13 : index
      %711 = memref.load %arg4[%c13_354, %c13_355] : memref<16x27xf32, #tpu.memory_space<smem>>
      %712 = vector.broadcast %711 : f32 to vector<8x384xf32>
      %713 = arith.mulf %712, %698 : vector<8x384xf32>
      %714 = arith.addf %697, %713 : vector<8x384xf32>
      %c364_i32_356 = arith.constant 364 : i32
      %715 = tpu.dynamic_rotate %630 by %c364_i32_356 dim 1 : vector<8x384xf32>, i32 -> vector<8x384xf32>
      %c1_357 = arith.constant 1 : index
      %c14_358 = arith.constant 14 : index
      %716 = memref.load %arg4[%c1_357, %c14_358] : memref<16x27xf32, #tpu.memory_space<smem>>
      %717 = vector.broadcast %716 : f32 to vector<8x384xf32>
      %718 = arith.mulf %717, %715 : vector<8x384xf32>
      %719 = arith.addf %702, %718 : vector<8x384xf32>
      %c5_359 = arith.constant 5 : index
      %c14_360 = arith.constant 14 : index
      %720 = memref.load %arg4[%c5_359, %c14_360] : memref<16x27xf32, #tpu.memory_space<smem>>
      %721 = vector.broadcast %720 : f32 to vector<8x384xf32>
      %722 = arith.mulf %721, %715 : vector<8x384xf32>
      %723 = arith.addf %706, %722 : vector<8x384xf32>
      %c9_361 = arith.constant 9 : index
      %c14_362 = arith.constant 14 : index
      %724 = memref.load %arg4[%c9_361, %c14_362] : memref<16x27xf32, #tpu.memory_space<smem>>
      %725 = vector.broadcast %724 : f32 to vector<8x384xf32>
      %726 = arith.mulf %725, %715 : vector<8x384xf32>
      %727 = arith.addf %710, %726 : vector<8x384xf32>
      %c13_363 = arith.constant 13 : index
      %c14_364 = arith.constant 14 : index
      %728 = memref.load %arg4[%c13_363, %c14_364] : memref<16x27xf32, #tpu.memory_space<smem>>
      %729 = vector.broadcast %728 : f32 to vector<8x384xf32>
      %730 = arith.mulf %729, %715 : vector<8x384xf32>
      %731 = arith.addf %714, %730 : vector<8x384xf32>
      %c348_i32_365 = arith.constant 348 : i32
      %732 = tpu.dynamic_rotate %630 by %c348_i32_365 dim 1 : vector<8x384xf32>, i32 -> vector<8x384xf32>
      %c1_366 = arith.constant 1 : index
      %c15_367 = arith.constant 15 : index
      %733 = memref.load %arg4[%c1_366, %c15_367] : memref<16x27xf32, #tpu.memory_space<smem>>
      %734 = vector.broadcast %733 : f32 to vector<8x384xf32>
      %735 = arith.mulf %734, %732 : vector<8x384xf32>
      %736 = arith.addf %719, %735 : vector<8x384xf32>
      %c5_368 = arith.constant 5 : index
      %c15_369 = arith.constant 15 : index
      %737 = memref.load %arg4[%c5_368, %c15_369] : memref<16x27xf32, #tpu.memory_space<smem>>
      %738 = vector.broadcast %737 : f32 to vector<8x384xf32>
      %739 = arith.mulf %738, %732 : vector<8x384xf32>
      %740 = arith.addf %723, %739 : vector<8x384xf32>
      %c9_370 = arith.constant 9 : index
      %c15_371 = arith.constant 15 : index
      %741 = memref.load %arg4[%c9_370, %c15_371] : memref<16x27xf32, #tpu.memory_space<smem>>
      %742 = vector.broadcast %741 : f32 to vector<8x384xf32>
      %743 = arith.mulf %742, %732 : vector<8x384xf32>
      %744 = arith.addf %727, %743 : vector<8x384xf32>
      %c13_372 = arith.constant 13 : index
      %c15_373 = arith.constant 15 : index
      %745 = memref.load %arg4[%c13_372, %c15_373] : memref<16x27xf32, #tpu.memory_space<smem>>
      %746 = vector.broadcast %745 : f32 to vector<8x384xf32>
      %747 = arith.mulf %746, %732 : vector<8x384xf32>
      %748 = arith.addf %731, %747 : vector<8x384xf32>
      %c347_i32_374 = arith.constant 347 : i32
      %749 = tpu.dynamic_rotate %630 by %c347_i32_374 dim 1 : vector<8x384xf32>, i32 -> vector<8x384xf32>
      %c1_375 = arith.constant 1 : index
      %c16_376 = arith.constant 16 : index
      %750 = memref.load %arg4[%c1_375, %c16_376] : memref<16x27xf32, #tpu.memory_space<smem>>
      %751 = vector.broadcast %750 : f32 to vector<8x384xf32>
      %752 = arith.mulf %751, %749 : vector<8x384xf32>
      %753 = arith.addf %736, %752 : vector<8x384xf32>
      %c5_377 = arith.constant 5 : index
      %c16_378 = arith.constant 16 : index
      %754 = memref.load %arg4[%c5_377, %c16_378] : memref<16x27xf32, #tpu.memory_space<smem>>
      %755 = vector.broadcast %754 : f32 to vector<8x384xf32>
      %756 = arith.mulf %755, %749 : vector<8x384xf32>
      %757 = arith.addf %740, %756 : vector<8x384xf32>
      %c9_379 = arith.constant 9 : index
      %c16_380 = arith.constant 16 : index
      %758 = memref.load %arg4[%c9_379, %c16_380] : memref<16x27xf32, #tpu.memory_space<smem>>
      %759 = vector.broadcast %758 : f32 to vector<8x384xf32>
      %760 = arith.mulf %759, %749 : vector<8x384xf32>
      %761 = arith.addf %744, %760 : vector<8x384xf32>
      %c13_381 = arith.constant 13 : index
      %c16_382 = arith.constant 16 : index
      %762 = memref.load %arg4[%c13_381, %c16_382] : memref<16x27xf32, #tpu.memory_space<smem>>
      %763 = vector.broadcast %762 : f32 to vector<8x384xf32>
      %764 = arith.mulf %763, %749 : vector<8x384xf32>
      %765 = arith.addf %748, %764 : vector<8x384xf32>
      %c346_i32_383 = arith.constant 346 : i32
      %766 = tpu.dynamic_rotate %630 by %c346_i32_383 dim 1 : vector<8x384xf32>, i32 -> vector<8x384xf32>
      %c1_384 = arith.constant 1 : index
      %c17_385 = arith.constant 17 : index
      %767 = memref.load %arg4[%c1_384, %c17_385] : memref<16x27xf32, #tpu.memory_space<smem>>
      %768 = vector.broadcast %767 : f32 to vector<8x384xf32>
      %769 = arith.mulf %768, %766 : vector<8x384xf32>
      %770 = arith.addf %753, %769 : vector<8x384xf32>
      %c5_386 = arith.constant 5 : index
      %c17_387 = arith.constant 17 : index
      %771 = memref.load %arg4[%c5_386, %c17_387] : memref<16x27xf32, #tpu.memory_space<smem>>
      %772 = vector.broadcast %771 : f32 to vector<8x384xf32>
      %773 = arith.mulf %772, %766 : vector<8x384xf32>
      %774 = arith.addf %757, %773 : vector<8x384xf32>
      %c9_388 = arith.constant 9 : index
      %c17_389 = arith.constant 17 : index
      %775 = memref.load %arg4[%c9_388, %c17_389] : memref<16x27xf32, #tpu.memory_space<smem>>
      %776 = vector.broadcast %775 : f32 to vector<8x384xf32>
      %777 = arith.mulf %776, %766 : vector<8x384xf32>
      %778 = arith.addf %761, %777 : vector<8x384xf32>
      %c13_390 = arith.constant 13 : index
      %c17_391 = arith.constant 17 : index
      %779 = memref.load %arg4[%c13_390, %c17_391] : memref<16x27xf32, #tpu.memory_space<smem>>
      %780 = vector.broadcast %779 : f32 to vector<8x384xf32>
      %781 = arith.mulf %780, %766 : vector<8x384xf32>
      %782 = arith.addf %765, %781 : vector<8x384xf32>
      %c0_392 = arith.constant 0 : index
      %c1_393 = arith.constant 1 : index
      %c2_394 = arith.constant 2 : index
      %c0_395 = arith.constant 0 : index
      %783 = vector.load %arg2[%c0_392, %c1_393, %c2_394, %c0_395] : memref<1x4x10x384xf32, #tpu.memory_space<vmem>>, vector<1x1x8x384xf32>
      %784 = vector.shape_cast %783 : vector<1x1x8x384xf32> to vector<8x384xf32>
      %c1_396 = arith.constant 1 : index
      %c18_397 = arith.constant 18 : index
      %785 = memref.load %arg4[%c1_396, %c18_397] : memref<16x27xf32, #tpu.memory_space<smem>>
      %786 = vector.broadcast %785 : f32 to vector<8x384xf32>
      %787 = arith.mulf %786, %784 : vector<8x384xf32>
      %788 = arith.addf %770, %787 : vector<8x384xf32>
      %c5_398 = arith.constant 5 : index
      %c18_399 = arith.constant 18 : index
      %789 = memref.load %arg4[%c5_398, %c18_399] : memref<16x27xf32, #tpu.memory_space<smem>>
      %790 = vector.broadcast %789 : f32 to vector<8x384xf32>
      %791 = arith.mulf %790, %784 : vector<8x384xf32>
      %792 = arith.addf %774, %791 : vector<8x384xf32>
      %c9_400 = arith.constant 9 : index
      %c18_401 = arith.constant 18 : index
      %793 = memref.load %arg4[%c9_400, %c18_401] : memref<16x27xf32, #tpu.memory_space<smem>>
      %794 = vector.broadcast %793 : f32 to vector<8x384xf32>
      %795 = arith.mulf %794, %784 : vector<8x384xf32>
      %796 = arith.addf %778, %795 : vector<8x384xf32>
      %c13_402 = arith.constant 13 : index
      %c18_403 = arith.constant 18 : index
      %797 = memref.load %arg4[%c13_402, %c18_403] : memref<16x27xf32, #tpu.memory_space<smem>>
      %798 = vector.broadcast %797 : f32 to vector<8x384xf32>
      %799 = arith.mulf %798, %784 : vector<8x384xf32>
      %800 = arith.addf %782, %799 : vector<8x384xf32>
      %c383_i32_404 = arith.constant 383 : i32
      %801 = tpu.dynamic_rotate %784 by %c383_i32_404 dim 1 : vector<8x384xf32>, i32 -> vector<8x384xf32>
      %c1_405 = arith.constant 1 : index
      %c19_406 = arith.constant 19 : index
      %802 = memref.load %arg4[%c1_405, %c19_406] : memref<16x27xf32, #tpu.memory_space<smem>>
      %803 = vector.broadcast %802 : f32 to vector<8x384xf32>
      %804 = arith.mulf %803, %801 : vector<8x384xf32>
      %805 = arith.addf %788, %804 : vector<8x384xf32>
      %c5_407 = arith.constant 5 : index
      %c19_408 = arith.constant 19 : index
      %806 = memref.load %arg4[%c5_407, %c19_408] : memref<16x27xf32, #tpu.memory_space<smem>>
      %807 = vector.broadcast %806 : f32 to vector<8x384xf32>
      %808 = arith.mulf %807, %801 : vector<8x384xf32>
      %809 = arith.addf %792, %808 : vector<8x384xf32>
      %c9_409 = arith.constant 9 : index
      %c19_410 = arith.constant 19 : index
      %810 = memref.load %arg4[%c9_409, %c19_410] : memref<16x27xf32, #tpu.memory_space<smem>>
      %811 = vector.broadcast %810 : f32 to vector<8x384xf32>
      %812 = arith.mulf %811, %801 : vector<8x384xf32>
      %813 = arith.addf %796, %812 : vector<8x384xf32>
      %c13_411 = arith.constant 13 : index
      %c19_412 = arith.constant 19 : index
      %814 = memref.load %arg4[%c13_411, %c19_412] : memref<16x27xf32, #tpu.memory_space<smem>>
      %815 = vector.broadcast %814 : f32 to vector<8x384xf32>
      %816 = arith.mulf %815, %801 : vector<8x384xf32>
      %817 = arith.addf %800, %816 : vector<8x384xf32>
      %c382_i32_413 = arith.constant 382 : i32
      %818 = tpu.dynamic_rotate %784 by %c382_i32_413 dim 1 : vector<8x384xf32>, i32 -> vector<8x384xf32>
      %c1_414 = arith.constant 1 : index
      %c20_415 = arith.constant 20 : index
      %819 = memref.load %arg4[%c1_414, %c20_415] : memref<16x27xf32, #tpu.memory_space<smem>>
      %820 = vector.broadcast %819 : f32 to vector<8x384xf32>
      %821 = arith.mulf %820, %818 : vector<8x384xf32>
      %822 = arith.addf %805, %821 : vector<8x384xf32>
      %c5_416 = arith.constant 5 : index
      %c20_417 = arith.constant 20 : index
      %823 = memref.load %arg4[%c5_416, %c20_417] : memref<16x27xf32, #tpu.memory_space<smem>>
      %824 = vector.broadcast %823 : f32 to vector<8x384xf32>
      %825 = arith.mulf %824, %818 : vector<8x384xf32>
      %826 = arith.addf %809, %825 : vector<8x384xf32>
      %c9_418 = arith.constant 9 : index
      %c20_419 = arith.constant 20 : index
      %827 = memref.load %arg4[%c9_418, %c20_419] : memref<16x27xf32, #tpu.memory_space<smem>>
      %828 = vector.broadcast %827 : f32 to vector<8x384xf32>
      %829 = arith.mulf %828, %818 : vector<8x384xf32>
      %830 = arith.addf %813, %829 : vector<8x384xf32>
      %c13_420 = arith.constant 13 : index
      %c20_421 = arith.constant 20 : index
      %831 = memref.load %arg4[%c13_420, %c20_421] : memref<16x27xf32, #tpu.memory_space<smem>>
      %832 = vector.broadcast %831 : f32 to vector<8x384xf32>
      %833 = arith.mulf %832, %818 : vector<8x384xf32>
      %834 = arith.addf %817, %833 : vector<8x384xf32>
      %c366_i32_422 = arith.constant 366 : i32
      %835 = tpu.dynamic_rotate %784 by %c366_i32_422 dim 1 : vector<8x384xf32>, i32 -> vector<8x384xf32>
      %c1_423 = arith.constant 1 : index
      %c21_424 = arith.constant 21 : index
      %836 = memref.load %arg4[%c1_423, %c21_424] : memref<16x27xf32, #tpu.memory_space<smem>>
      %837 = vector.broadcast %836 : f32 to vector<8x384xf32>
      %838 = arith.mulf %837, %835 : vector<8x384xf32>
      %839 = arith.addf %822, %838 : vector<8x384xf32>
      %c5_425 = arith.constant 5 : index
      %c21_426 = arith.constant 21 : index
      %840 = memref.load %arg4[%c5_425, %c21_426] : memref<16x27xf32, #tpu.memory_space<smem>>
      %841 = vector.broadcast %840 : f32 to vector<8x384xf32>
      %842 = arith.mulf %841, %835 : vector<8x384xf32>
      %843 = arith.addf %826, %842 : vector<8x384xf32>
      %c9_427 = arith.constant 9 : index
      %c21_428 = arith.constant 21 : index
      %844 = memref.load %arg4[%c9_427, %c21_428] : memref<16x27xf32, #tpu.memory_space<smem>>
      %845 = vector.broadcast %844 : f32 to vector<8x384xf32>
      %846 = arith.mulf %845, %835 : vector<8x384xf32>
      %847 = arith.addf %830, %846 : vector<8x384xf32>
      %c13_429 = arith.constant 13 : index
      %c21_430 = arith.constant 21 : index
      %848 = memref.load %arg4[%c13_429, %c21_430] : memref<16x27xf32, #tpu.memory_space<smem>>
      %849 = vector.broadcast %848 : f32 to vector<8x384xf32>
      %850 = arith.mulf %849, %835 : vector<8x384xf32>
      %851 = arith.addf %834, %850 : vector<8x384xf32>
      %c365_i32_431 = arith.constant 365 : i32
      %852 = tpu.dynamic_rotate %784 by %c365_i32_431 dim 1 : vector<8x384xf32>, i32 -> vector<8x384xf32>
      %c1_432 = arith.constant 1 : index
      %c22_433 = arith.constant 22 : index
      %853 = memref.load %arg4[%c1_432, %c22_433] : memref<16x27xf32, #tpu.memory_space<smem>>
      %854 = vector.broadcast %853 : f32 to vector<8x384xf32>
      %855 = arith.mulf %854, %852 : vector<8x384xf32>
      %856 = arith.addf %839, %855 : vector<8x384xf32>
      %c5_434 = arith.constant 5 : index
      %c22_435 = arith.constant 22 : index
      %857 = memref.load %arg4[%c5_434, %c22_435] : memref<16x27xf32, #tpu.memory_space<smem>>
      %858 = vector.broadcast %857 : f32 to vector<8x384xf32>
      %859 = arith.mulf %858, %852 : vector<8x384xf32>
      %860 = arith.addf %843, %859 : vector<8x384xf32>
      %c9_436 = arith.constant 9 : index
      %c22_437 = arith.constant 22 : index
      %861 = memref.load %arg4[%c9_436, %c22_437] : memref<16x27xf32, #tpu.memory_space<smem>>
      %862 = vector.broadcast %861 : f32 to vector<8x384xf32>
      %863 = arith.mulf %862, %852 : vector<8x384xf32>
      %864 = arith.addf %847, %863 : vector<8x384xf32>
      %c13_438 = arith.constant 13 : index
      %c22_439 = arith.constant 22 : index
      %865 = memref.load %arg4[%c13_438, %c22_439] : memref<16x27xf32, #tpu.memory_space<smem>>
      %866 = vector.broadcast %865 : f32 to vector<8x384xf32>
      %867 = arith.mulf %866, %852 : vector<8x384xf32>
      %868 = arith.addf %851, %867 : vector<8x384xf32>
      %c364_i32_440 = arith.constant 364 : i32
      %869 = tpu.dynamic_rotate %784 by %c364_i32_440 dim 1 : vector<8x384xf32>, i32 -> vector<8x384xf32>
      %c1_441 = arith.constant 1 : index
      %c23_442 = arith.constant 23 : index
      %870 = memref.load %arg4[%c1_441, %c23_442] : memref<16x27xf32, #tpu.memory_space<smem>>
      %871 = vector.broadcast %870 : f32 to vector<8x384xf32>
      %872 = arith.mulf %871, %869 : vector<8x384xf32>
      %873 = arith.addf %856, %872 : vector<8x384xf32>
      %c5_443 = arith.constant 5 : index
      %c23_444 = arith.constant 23 : index
      %874 = memref.load %arg4[%c5_443, %c23_444] : memref<16x27xf32, #tpu.memory_space<smem>>
      %875 = vector.broadcast %874 : f32 to vector<8x384xf32>
      %876 = arith.mulf %875, %869 : vector<8x384xf32>
      %877 = arith.addf %860, %876 : vector<8x384xf32>
      %c9_445 = arith.constant 9 : index
      %c23_446 = arith.constant 23 : index
      %878 = memref.load %arg4[%c9_445, %c23_446] : memref<16x27xf32, #tpu.memory_space<smem>>
      %879 = vector.broadcast %878 : f32 to vector<8x384xf32>
      %880 = arith.mulf %879, %869 : vector<8x384xf32>
      %881 = arith.addf %864, %880 : vector<8x384xf32>
      %c13_447 = arith.constant 13 : index
      %c23_448 = arith.constant 23 : index
      %882 = memref.load %arg4[%c13_447, %c23_448] : memref<16x27xf32, #tpu.memory_space<smem>>
      %883 = vector.broadcast %882 : f32 to vector<8x384xf32>
      %884 = arith.mulf %883, %869 : vector<8x384xf32>
      %885 = arith.addf %868, %884 : vector<8x384xf32>
      %c348_i32_449 = arith.constant 348 : i32
      %886 = tpu.dynamic_rotate %784 by %c348_i32_449 dim 1 : vector<8x384xf32>, i32 -> vector<8x384xf32>
      %c1_450 = arith.constant 1 : index
      %c24_451 = arith.constant 24 : index
      %887 = memref.load %arg4[%c1_450, %c24_451] : memref<16x27xf32, #tpu.memory_space<smem>>
      %888 = vector.broadcast %887 : f32 to vector<8x384xf32>
      %889 = arith.mulf %888, %886 : vector<8x384xf32>
      %890 = arith.addf %873, %889 : vector<8x384xf32>
      %c5_452 = arith.constant 5 : index
      %c24_453 = arith.constant 24 : index
      %891 = memref.load %arg4[%c5_452, %c24_453] : memref<16x27xf32, #tpu.memory_space<smem>>
      %892 = vector.broadcast %891 : f32 to vector<8x384xf32>
      %893 = arith.mulf %892, %886 : vector<8x384xf32>
      %894 = arith.addf %877, %893 : vector<8x384xf32>
      %c9_454 = arith.constant 9 : index
      %c24_455 = arith.constant 24 : index
      %895 = memref.load %arg4[%c9_454, %c24_455] : memref<16x27xf32, #tpu.memory_space<smem>>
      %896 = vector.broadcast %895 : f32 to vector<8x384xf32>
      %897 = arith.mulf %896, %886 : vector<8x384xf32>
      %898 = arith.addf %881, %897 : vector<8x384xf32>
      %c13_456 = arith.constant 13 : index
      %c24_457 = arith.constant 24 : index
      %899 = memref.load %arg4[%c13_456, %c24_457] : memref<16x27xf32, #tpu.memory_space<smem>>
      %900 = vector.broadcast %899 : f32 to vector<8x384xf32>
      %901 = arith.mulf %900, %886 : vector<8x384xf32>
      %902 = arith.addf %885, %901 : vector<8x384xf32>
      %c347_i32_458 = arith.constant 347 : i32
      %903 = tpu.dynamic_rotate %784 by %c347_i32_458 dim 1 : vector<8x384xf32>, i32 -> vector<8x384xf32>
      %c1_459 = arith.constant 1 : index
      %c25_460 = arith.constant 25 : index
      %904 = memref.load %arg4[%c1_459, %c25_460] : memref<16x27xf32, #tpu.memory_space<smem>>
      %905 = vector.broadcast %904 : f32 to vector<8x384xf32>
      %906 = arith.mulf %905, %903 : vector<8x384xf32>
      %907 = arith.addf %890, %906 : vector<8x384xf32>
      %c5_461 = arith.constant 5 : index
      %c25_462 = arith.constant 25 : index
      %908 = memref.load %arg4[%c5_461, %c25_462] : memref<16x27xf32, #tpu.memory_space<smem>>
      %909 = vector.broadcast %908 : f32 to vector<8x384xf32>
      %910 = arith.mulf %909, %903 : vector<8x384xf32>
      %911 = arith.addf %894, %910 : vector<8x384xf32>
      %c9_463 = arith.constant 9 : index
      %c25_464 = arith.constant 25 : index
      %912 = memref.load %arg4[%c9_463, %c25_464] : memref<16x27xf32, #tpu.memory_space<smem>>
      %913 = vector.broadcast %912 : f32 to vector<8x384xf32>
      %914 = arith.mulf %913, %903 : vector<8x384xf32>
      %915 = arith.addf %898, %914 : vector<8x384xf32>
      %c13_465 = arith.constant 13 : index
      %c25_466 = arith.constant 25 : index
      %916 = memref.load %arg4[%c13_465, %c25_466] : memref<16x27xf32, #tpu.memory_space<smem>>
      %917 = vector.broadcast %916 : f32 to vector<8x384xf32>
      %918 = arith.mulf %917, %903 : vector<8x384xf32>
      %919 = arith.addf %902, %918 : vector<8x384xf32>
      %c346_i32_467 = arith.constant 346 : i32
      %920 = tpu.dynamic_rotate %784 by %c346_i32_467 dim 1 : vector<8x384xf32>, i32 -> vector<8x384xf32>
      %c1_468 = arith.constant 1 : index
      %c26_469 = arith.constant 26 : index
      %921 = memref.load %arg4[%c1_468, %c26_469] : memref<16x27xf32, #tpu.memory_space<smem>>
      %922 = vector.broadcast %921 : f32 to vector<8x384xf32>
      %923 = arith.mulf %922, %920 : vector<8x384xf32>
      %924 = arith.addf %907, %923 : vector<8x384xf32>
      %c5_470 = arith.constant 5 : index
      %c26_471 = arith.constant 26 : index
      %925 = memref.load %arg4[%c5_470, %c26_471] : memref<16x27xf32, #tpu.memory_space<smem>>
      %926 = vector.broadcast %925 : f32 to vector<8x384xf32>
      %927 = arith.mulf %926, %920 : vector<8x384xf32>
      %928 = arith.addf %911, %927 : vector<8x384xf32>
      %c9_472 = arith.constant 9 : index
      %c26_473 = arith.constant 26 : index
      %929 = memref.load %arg4[%c9_472, %c26_473] : memref<16x27xf32, #tpu.memory_space<smem>>
      %930 = vector.broadcast %929 : f32 to vector<8x384xf32>
      %931 = arith.mulf %930, %920 : vector<8x384xf32>
      %932 = arith.addf %915, %931 : vector<8x384xf32>
      %c13_474 = arith.constant 13 : index
      %c26_475 = arith.constant 26 : index
      %933 = memref.load %arg4[%c13_474, %c26_475] : memref<16x27xf32, #tpu.memory_space<smem>>
      %934 = vector.broadcast %933 : f32 to vector<8x384xf32>
      %935 = arith.mulf %934, %920 : vector<8x384xf32>
      %936 = arith.addf %919, %935 : vector<8x384xf32>
      %c0_476 = arith.constant 0 : index
      %c2_477 = arith.constant 2 : index
      %c0_478 = arith.constant 0 : index
      %c0_479 = arith.constant 0 : index
      %937 = vector.load %arg2[%c0_476, %c2_477, %c0_478, %c0_479] : memref<1x4x10x384xf32, #tpu.memory_space<vmem>>, vector<1x1x8x384xf32>
      %938 = vector.shape_cast %937 : vector<1x1x8x384xf32> to vector<8x384xf32>
      %c2_480 = arith.constant 2 : index
      %c0_481 = arith.constant 0 : index
      %939 = memref.load %arg4[%c2_480, %c0_481] : memref<16x27xf32, #tpu.memory_space<smem>>
      %940 = vector.broadcast %939 : f32 to vector<8x384xf32>
      %941 = arith.mulf %940, %938 : vector<8x384xf32>
      %942 = arith.addf %924, %941 : vector<8x384xf32>
      %c6_482 = arith.constant 6 : index
      %c0_483 = arith.constant 0 : index
      %943 = memref.load %arg4[%c6_482, %c0_483] : memref<16x27xf32, #tpu.memory_space<smem>>
      %944 = vector.broadcast %943 : f32 to vector<8x384xf32>
      %945 = arith.mulf %944, %938 : vector<8x384xf32>
      %946 = arith.addf %928, %945 : vector<8x384xf32>
      %c10_484 = arith.constant 10 : index
      %c0_485 = arith.constant 0 : index
      %947 = memref.load %arg4[%c10_484, %c0_485] : memref<16x27xf32, #tpu.memory_space<smem>>
      %948 = vector.broadcast %947 : f32 to vector<8x384xf32>
      %949 = arith.mulf %948, %938 : vector<8x384xf32>
      %950 = arith.addf %932, %949 : vector<8x384xf32>
      %c14_486 = arith.constant 14 : index
      %c0_487 = arith.constant 0 : index
      %951 = memref.load %arg4[%c14_486, %c0_487] : memref<16x27xf32, #tpu.memory_space<smem>>
      %952 = vector.broadcast %951 : f32 to vector<8x384xf32>
      %953 = arith.mulf %952, %938 : vector<8x384xf32>
      %954 = arith.addf %936, %953 : vector<8x384xf32>
      %c383_i32_488 = arith.constant 383 : i32
      %955 = tpu.dynamic_rotate %938 by %c383_i32_488 dim 1 : vector<8x384xf32>, i32 -> vector<8x384xf32>
      %c2_489 = arith.constant 2 : index
      %c1_490 = arith.constant 1 : index
      %956 = memref.load %arg4[%c2_489, %c1_490] : memref<16x27xf32, #tpu.memory_space<smem>>
      %957 = vector.broadcast %956 : f32 to vector<8x384xf32>
      %958 = arith.mulf %957, %955 : vector<8x384xf32>
      %959 = arith.addf %942, %958 : vector<8x384xf32>
      %c6_491 = arith.constant 6 : index
      %c1_492 = arith.constant 1 : index
      %960 = memref.load %arg4[%c6_491, %c1_492] : memref<16x27xf32, #tpu.memory_space<smem>>
      %961 = vector.broadcast %960 : f32 to vector<8x384xf32>
      %962 = arith.mulf %961, %955 : vector<8x384xf32>
      %963 = arith.addf %946, %962 : vector<8x384xf32>
      %c10_493 = arith.constant 10 : index
      %c1_494 = arith.constant 1 : index
      %964 = memref.load %arg4[%c10_493, %c1_494] : memref<16x27xf32, #tpu.memory_space<smem>>
      %965 = vector.broadcast %964 : f32 to vector<8x384xf32>
      %966 = arith.mulf %965, %955 : vector<8x384xf32>
      %967 = arith.addf %950, %966 : vector<8x384xf32>
      %c14_495 = arith.constant 14 : index
      %c1_496 = arith.constant 1 : index
      %968 = memref.load %arg4[%c14_495, %c1_496] : memref<16x27xf32, #tpu.memory_space<smem>>
      %969 = vector.broadcast %968 : f32 to vector<8x384xf32>
      %970 = arith.mulf %969, %955 : vector<8x384xf32>
      %971 = arith.addf %954, %970 : vector<8x384xf32>
      %c382_i32_497 = arith.constant 382 : i32
      %972 = tpu.dynamic_rotate %938 by %c382_i32_497 dim 1 : vector<8x384xf32>, i32 -> vector<8x384xf32>
      %c2_498 = arith.constant 2 : index
      %c2_499 = arith.constant 2 : index
      %973 = memref.load %arg4[%c2_498, %c2_499] : memref<16x27xf32, #tpu.memory_space<smem>>
      %974 = vector.broadcast %973 : f32 to vector<8x384xf32>
      %975 = arith.mulf %974, %972 : vector<8x384xf32>
      %976 = arith.addf %959, %975 : vector<8x384xf32>
      %c6_500 = arith.constant 6 : index
      %c2_501 = arith.constant 2 : index
      %977 = memref.load %arg4[%c6_500, %c2_501] : memref<16x27xf32, #tpu.memory_space<smem>>
      %978 = vector.broadcast %977 : f32 to vector<8x384xf32>
      %979 = arith.mulf %978, %972 : vector<8x384xf32>
      %980 = arith.addf %963, %979 : vector<8x384xf32>
      %c10_502 = arith.constant 10 : index
      %c2_503 = arith.constant 2 : index
      %981 = memref.load %arg4[%c10_502, %c2_503] : memref<16x27xf32, #tpu.memory_space<smem>>
      %982 = vector.broadcast %981 : f32 to vector<8x384xf32>
      %983 = arith.mulf %982, %972 : vector<8x384xf32>
      %984 = arith.addf %967, %983 : vector<8x384xf32>
      %c14_504 = arith.constant 14 : index
      %c2_505 = arith.constant 2 : index
      %985 = memref.load %arg4[%c14_504, %c2_505] : memref<16x27xf32, #tpu.memory_space<smem>>
      %986 = vector.broadcast %985 : f32 to vector<8x384xf32>
      %987 = arith.mulf %986, %972 : vector<8x384xf32>
      %988 = arith.addf %971, %987 : vector<8x384xf32>
      %c366_i32_506 = arith.constant 366 : i32
      %989 = tpu.dynamic_rotate %938 by %c366_i32_506 dim 1 : vector<8x384xf32>, i32 -> vector<8x384xf32>
      %c2_507 = arith.constant 2 : index
      %c3_508 = arith.constant 3 : index
      %990 = memref.load %arg4[%c2_507, %c3_508] : memref<16x27xf32, #tpu.memory_space<smem>>
      %991 = vector.broadcast %990 : f32 to vector<8x384xf32>
      %992 = arith.mulf %991, %989 : vector<8x384xf32>
      %993 = arith.addf %976, %992 : vector<8x384xf32>
      %c6_509 = arith.constant 6 : index
      %c3_510 = arith.constant 3 : index
      %994 = memref.load %arg4[%c6_509, %c3_510] : memref<16x27xf32, #tpu.memory_space<smem>>
      %995 = vector.broadcast %994 : f32 to vector<8x384xf32>
      %996 = arith.mulf %995, %989 : vector<8x384xf32>
      %997 = arith.addf %980, %996 : vector<8x384xf32>
      %c10_511 = arith.constant 10 : index
      %c3_512 = arith.constant 3 : index
      %998 = memref.load %arg4[%c10_511, %c3_512] : memref<16x27xf32, #tpu.memory_space<smem>>
      %999 = vector.broadcast %998 : f32 to vector<8x384xf32>
      %1000 = arith.mulf %999, %989 : vector<8x384xf32>
      %1001 = arith.addf %984, %1000 : vector<8x384xf32>
      %c14_513 = arith.constant 14 : index
      %c3_514 = arith.constant 3 : index
      %1002 = memref.load %arg4[%c14_513, %c3_514] : memref<16x27xf32, #tpu.memory_space<smem>>
      %1003 = vector.broadcast %1002 : f32 to vector<8x384xf32>
      %1004 = arith.mulf %1003, %989 : vector<8x384xf32>
      %1005 = arith.addf %988, %1004 : vector<8x384xf32>
      %c365_i32_515 = arith.constant 365 : i32
      %1006 = tpu.dynamic_rotate %938 by %c365_i32_515 dim 1 : vector<8x384xf32>, i32 -> vector<8x384xf32>
      %c2_516 = arith.constant 2 : index
      %c4_517 = arith.constant 4 : index
      %1007 = memref.load %arg4[%c2_516, %c4_517] : memref<16x27xf32, #tpu.memory_space<smem>>
      %1008 = vector.broadcast %1007 : f32 to vector<8x384xf32>
      %1009 = arith.mulf %1008, %1006 : vector<8x384xf32>
      %1010 = arith.addf %993, %1009 : vector<8x384xf32>
      %c6_518 = arith.constant 6 : index
      %c4_519 = arith.constant 4 : index
      %1011 = memref.load %arg4[%c6_518, %c4_519] : memref<16x27xf32, #tpu.memory_space<smem>>
      %1012 = vector.broadcast %1011 : f32 to vector<8x384xf32>
      %1013 = arith.mulf %1012, %1006 : vector<8x384xf32>
      %1014 = arith.addf %997, %1013 : vector<8x384xf32>
      %c10_520 = arith.constant 10 : index
      %c4_521 = arith.constant 4 : index
      %1015 = memref.load %arg4[%c10_520, %c4_521] : memref<16x27xf32, #tpu.memory_space<smem>>
      %1016 = vector.broadcast %1015 : f32 to vector<8x384xf32>
      %1017 = arith.mulf %1016, %1006 : vector<8x384xf32>
      %1018 = arith.addf %1001, %1017 : vector<8x384xf32>
      %c14_522 = arith.constant 14 : index
      %c4_523 = arith.constant 4 : index
      %1019 = memref.load %arg4[%c14_522, %c4_523] : memref<16x27xf32, #tpu.memory_space<smem>>
      %1020 = vector.broadcast %1019 : f32 to vector<8x384xf32>
      %1021 = arith.mulf %1020, %1006 : vector<8x384xf32>
      %1022 = arith.addf %1005, %1021 : vector<8x384xf32>
      %c364_i32_524 = arith.constant 364 : i32
      %1023 = tpu.dynamic_rotate %938 by %c364_i32_524 dim 1 : vector<8x384xf32>, i32 -> vector<8x384xf32>
      %c2_525 = arith.constant 2 : index
      %c5_526 = arith.constant 5 : index
      %1024 = memref.load %arg4[%c2_525, %c5_526] : memref<16x27xf32, #tpu.memory_space<smem>>
      %1025 = vector.broadcast %1024 : f32 to vector<8x384xf32>
      %1026 = arith.mulf %1025, %1023 : vector<8x384xf32>
      %1027 = arith.addf %1010, %1026 : vector<8x384xf32>
      %c6_527 = arith.constant 6 : index
      %c5_528 = arith.constant 5 : index
      %1028 = memref.load %arg4[%c6_527, %c5_528] : memref<16x27xf32, #tpu.memory_space<smem>>
      %1029 = vector.broadcast %1028 : f32 to vector<8x384xf32>
      %1030 = arith.mulf %1029, %1023 : vector<8x384xf32>
      %1031 = arith.addf %1014, %1030 : vector<8x384xf32>
      %c10_529 = arith.constant 10 : index
      %c5_530 = arith.constant 5 : index
      %1032 = memref.load %arg4[%c10_529, %c5_530] : memref<16x27xf32, #tpu.memory_space<smem>>
      %1033 = vector.broadcast %1032 : f32 to vector<8x384xf32>
      %1034 = arith.mulf %1033, %1023 : vector<8x384xf32>
      %1035 = arith.addf %1018, %1034 : vector<8x384xf32>
      %c14_531 = arith.constant 14 : index
      %c5_532 = arith.constant 5 : index
      %1036 = memref.load %arg4[%c14_531, %c5_532] : memref<16x27xf32, #tpu.memory_space<smem>>
      %1037 = vector.broadcast %1036 : f32 to vector<8x384xf32>
      %1038 = arith.mulf %1037, %1023 : vector<8x384xf32>
      %1039 = arith.addf %1022, %1038 : vector<8x384xf32>
      %c348_i32_533 = arith.constant 348 : i32
      %1040 = tpu.dynamic_rotate %938 by %c348_i32_533 dim 1 : vector<8x384xf32>, i32 -> vector<8x384xf32>
      %c2_534 = arith.constant 2 : index
      %c6_535 = arith.constant 6 : index
      %1041 = memref.load %arg4[%c2_534, %c6_535] : memref<16x27xf32, #tpu.memory_space<smem>>
      %1042 = vector.broadcast %1041 : f32 to vector<8x384xf32>
      %1043 = arith.mulf %1042, %1040 : vector<8x384xf32>
      %1044 = arith.addf %1027, %1043 : vector<8x384xf32>
      %c6_536 = arith.constant 6 : index
      %c6_537 = arith.constant 6 : index
      %1045 = memref.load %arg4[%c6_536, %c6_537] : memref<16x27xf32, #tpu.memory_space<smem>>
      %1046 = vector.broadcast %1045 : f32 to vector<8x384xf32>
      %1047 = arith.mulf %1046, %1040 : vector<8x384xf32>
      %1048 = arith.addf %1031, %1047 : vector<8x384xf32>
      %c10_538 = arith.constant 10 : index
      %c6_539 = arith.constant 6 : index
      %1049 = memref.load %arg4[%c10_538, %c6_539] : memref<16x27xf32, #tpu.memory_space<smem>>
      %1050 = vector.broadcast %1049 : f32 to vector<8x384xf32>
      %1051 = arith.mulf %1050, %1040 : vector<8x384xf32>
      %1052 = arith.addf %1035, %1051 : vector<8x384xf32>
      %c14_540 = arith.constant 14 : index
      %c6_541 = arith.constant 6 : index
      %1053 = memref.load %arg4[%c14_540, %c6_541] : memref<16x27xf32, #tpu.memory_space<smem>>
      %1054 = vector.broadcast %1053 : f32 to vector<8x384xf32>
      %1055 = arith.mulf %1054, %1040 : vector<8x384xf32>
      %1056 = arith.addf %1039, %1055 : vector<8x384xf32>
      %c347_i32_542 = arith.constant 347 : i32
      %1057 = tpu.dynamic_rotate %938 by %c347_i32_542 dim 1 : vector<8x384xf32>, i32 -> vector<8x384xf32>
      %c2_543 = arith.constant 2 : index
      %c7_544 = arith.constant 7 : index
      %1058 = memref.load %arg4[%c2_543, %c7_544] : memref<16x27xf32, #tpu.memory_space<smem>>
      %1059 = vector.broadcast %1058 : f32 to vector<8x384xf32>
      %1060 = arith.mulf %1059, %1057 : vector<8x384xf32>
      %1061 = arith.addf %1044, %1060 : vector<8x384xf32>
      %c6_545 = arith.constant 6 : index
      %c7_546 = arith.constant 7 : index
      %1062 = memref.load %arg4[%c6_545, %c7_546] : memref<16x27xf32, #tpu.memory_space<smem>>
      %1063 = vector.broadcast %1062 : f32 to vector<8x384xf32>
      %1064 = arith.mulf %1063, %1057 : vector<8x384xf32>
      %1065 = arith.addf %1048, %1064 : vector<8x384xf32>
      %c10_547 = arith.constant 10 : index
      %c7_548 = arith.constant 7 : index
      %1066 = memref.load %arg4[%c10_547, %c7_548] : memref<16x27xf32, #tpu.memory_space<smem>>
      %1067 = vector.broadcast %1066 : f32 to vector<8x384xf32>
      %1068 = arith.mulf %1067, %1057 : vector<8x384xf32>
      %1069 = arith.addf %1052, %1068 : vector<8x384xf32>
      %c14_549 = arith.constant 14 : index
      %c7_550 = arith.constant 7 : index
      %1070 = memref.load %arg4[%c14_549, %c7_550] : memref<16x27xf32, #tpu.memory_space<smem>>
      %1071 = vector.broadcast %1070 : f32 to vector<8x384xf32>
      %1072 = arith.mulf %1071, %1057 : vector<8x384xf32>
      %1073 = arith.addf %1056, %1072 : vector<8x384xf32>
      %c346_i32_551 = arith.constant 346 : i32
      %1074 = tpu.dynamic_rotate %938 by %c346_i32_551 dim 1 : vector<8x384xf32>, i32 -> vector<8x384xf32>
      %c2_552 = arith.constant 2 : index
      %c8_553 = arith.constant 8 : index
      %1075 = memref.load %arg4[%c2_552, %c8_553] : memref<16x27xf32, #tpu.memory_space<smem>>
      %1076 = vector.broadcast %1075 : f32 to vector<8x384xf32>
      %1077 = arith.mulf %1076, %1074 : vector<8x384xf32>
      %1078 = arith.addf %1061, %1077 : vector<8x384xf32>
      %c6_554 = arith.constant 6 : index
      %c8_555 = arith.constant 8 : index
      %1079 = memref.load %arg4[%c6_554, %c8_555] : memref<16x27xf32, #tpu.memory_space<smem>>
      %1080 = vector.broadcast %1079 : f32 to vector<8x384xf32>
      %1081 = arith.mulf %1080, %1074 : vector<8x384xf32>
      %1082 = arith.addf %1065, %1081 : vector<8x384xf32>
      %c10_556 = arith.constant 10 : index
      %c8_557 = arith.constant 8 : index
      %1083 = memref.load %arg4[%c10_556, %c8_557] : memref<16x27xf32, #tpu.memory_space<smem>>
      %1084 = vector.broadcast %1083 : f32 to vector<8x384xf32>
      %1085 = arith.mulf %1084, %1074 : vector<8x384xf32>
      %1086 = arith.addf %1069, %1085 : vector<8x384xf32>
      %c14_558 = arith.constant 14 : index
      %c8_559 = arith.constant 8 : index
      %1087 = memref.load %arg4[%c14_558, %c8_559] : memref<16x27xf32, #tpu.memory_space<smem>>
      %1088 = vector.broadcast %1087 : f32 to vector<8x384xf32>
      %1089 = arith.mulf %1088, %1074 : vector<8x384xf32>
      %1090 = arith.addf %1073, %1089 : vector<8x384xf32>
      %c0_560 = arith.constant 0 : index
      %c2_561 = arith.constant 2 : index
      %c1_562 = arith.constant 1 : index
      %c0_563 = arith.constant 0 : index
      %1091 = vector.load %arg2[%c0_560, %c2_561, %c1_562, %c0_563] : memref<1x4x10x384xf32, #tpu.memory_space<vmem>>, vector<1x1x8x384xf32>
      %1092 = vector.shape_cast %1091 : vector<1x1x8x384xf32> to vector<8x384xf32>
      %c2_564 = arith.constant 2 : index
      %c9_565 = arith.constant 9 : index
      %1093 = memref.load %arg4[%c2_564, %c9_565] : memref<16x27xf32, #tpu.memory_space<smem>>
      %1094 = vector.broadcast %1093 : f32 to vector<8x384xf32>
      %1095 = arith.mulf %1094, %1092 : vector<8x384xf32>
      %1096 = arith.addf %1078, %1095 : vector<8x384xf32>
      %c6_566 = arith.constant 6 : index
      %c9_567 = arith.constant 9 : index
      %1097 = memref.load %arg4[%c6_566, %c9_567] : memref<16x27xf32, #tpu.memory_space<smem>>
      %1098 = vector.broadcast %1097 : f32 to vector<8x384xf32>
      %1099 = arith.mulf %1098, %1092 : vector<8x384xf32>
      %1100 = arith.addf %1082, %1099 : vector<8x384xf32>
      %c10_568 = arith.constant 10 : index
      %c9_569 = arith.constant 9 : index
      %1101 = memref.load %arg4[%c10_568, %c9_569] : memref<16x27xf32, #tpu.memory_space<smem>>
      %1102 = vector.broadcast %1101 : f32 to vector<8x384xf32>
      %1103 = arith.mulf %1102, %1092 : vector<8x384xf32>
      %1104 = arith.addf %1086, %1103 : vector<8x384xf32>
      %c14_570 = arith.constant 14 : index
      %c9_571 = arith.constant 9 : index
      %1105 = memref.load %arg4[%c14_570, %c9_571] : memref<16x27xf32, #tpu.memory_space<smem>>
      %1106 = vector.broadcast %1105 : f32 to vector<8x384xf32>
      %1107 = arith.mulf %1106, %1092 : vector<8x384xf32>
      %1108 = arith.addf %1090, %1107 : vector<8x384xf32>
      %c383_i32_572 = arith.constant 383 : i32
      %1109 = tpu.dynamic_rotate %1092 by %c383_i32_572 dim 1 : vector<8x384xf32>, i32 -> vector<8x384xf32>
      %c2_573 = arith.constant 2 : index
      %c10_574 = arith.constant 10 : index
      %1110 = memref.load %arg4[%c2_573, %c10_574] : memref<16x27xf32, #tpu.memory_space<smem>>
      %1111 = vector.broadcast %1110 : f32 to vector<8x384xf32>
      %1112 = arith.mulf %1111, %1109 : vector<8x384xf32>
      %1113 = arith.addf %1096, %1112 : vector<8x384xf32>
      %c6_575 = arith.constant 6 : index
      %c10_576 = arith.constant 10 : index
      %1114 = memref.load %arg4[%c6_575, %c10_576] : memref<16x27xf32, #tpu.memory_space<smem>>
      %1115 = vector.broadcast %1114 : f32 to vector<8x384xf32>
      %1116 = arith.mulf %1115, %1109 : vector<8x384xf32>
      %1117 = arith.addf %1100, %1116 : vector<8x384xf32>
      %c10_577 = arith.constant 10 : index
      %c10_578 = arith.constant 10 : index
      %1118 = memref.load %arg4[%c10_577, %c10_578] : memref<16x27xf32, #tpu.memory_space<smem>>
      %1119 = vector.broadcast %1118 : f32 to vector<8x384xf32>
      %1120 = arith.mulf %1119, %1109 : vector<8x384xf32>
      %1121 = arith.addf %1104, %1120 : vector<8x384xf32>
      %c14_579 = arith.constant 14 : index
      %c10_580 = arith.constant 10 : index
      %1122 = memref.load %arg4[%c14_579, %c10_580] : memref<16x27xf32, #tpu.memory_space<smem>>
      %1123 = vector.broadcast %1122 : f32 to vector<8x384xf32>
      %1124 = arith.mulf %1123, %1109 : vector<8x384xf32>
      %1125 = arith.addf %1108, %1124 : vector<8x384xf32>
      %c382_i32_581 = arith.constant 382 : i32
      %1126 = tpu.dynamic_rotate %1092 by %c382_i32_581 dim 1 : vector<8x384xf32>, i32 -> vector<8x384xf32>
      %c2_582 = arith.constant 2 : index
      %c11_583 = arith.constant 11 : index
      %1127 = memref.load %arg4[%c2_582, %c11_583] : memref<16x27xf32, #tpu.memory_space<smem>>
      %1128 = vector.broadcast %1127 : f32 to vector<8x384xf32>
      %1129 = arith.mulf %1128, %1126 : vector<8x384xf32>
      %1130 = arith.addf %1113, %1129 : vector<8x384xf32>
      %c6_584 = arith.constant 6 : index
      %c11_585 = arith.constant 11 : index
      %1131 = memref.load %arg4[%c6_584, %c11_585] : memref<16x27xf32, #tpu.memory_space<smem>>
      %1132 = vector.broadcast %1131 : f32 to vector<8x384xf32>
      %1133 = arith.mulf %1132, %1126 : vector<8x384xf32>
      %1134 = arith.addf %1117, %1133 : vector<8x384xf32>
      %c10_586 = arith.constant 10 : index
      %c11_587 = arith.constant 11 : index
      %1135 = memref.load %arg4[%c10_586, %c11_587] : memref<16x27xf32, #tpu.memory_space<smem>>
      %1136 = vector.broadcast %1135 : f32 to vector<8x384xf32>
      %1137 = arith.mulf %1136, %1126 : vector<8x384xf32>
      %1138 = arith.addf %1121, %1137 : vector<8x384xf32>
      %c14_588 = arith.constant 14 : index
      %c11_589 = arith.constant 11 : index
      %1139 = memref.load %arg4[%c14_588, %c11_589] : memref<16x27xf32, #tpu.memory_space<smem>>
      %1140 = vector.broadcast %1139 : f32 to vector<8x384xf32>
      %1141 = arith.mulf %1140, %1126 : vector<8x384xf32>
      %1142 = arith.addf %1125, %1141 : vector<8x384xf32>
      %c366_i32_590 = arith.constant 366 : i32
      %1143 = tpu.dynamic_rotate %1092 by %c366_i32_590 dim 1 : vector<8x384xf32>, i32 -> vector<8x384xf32>
      %c2_591 = arith.constant 2 : index
      %c12_592 = arith.constant 12 : index
      %1144 = memref.load %arg4[%c2_591, %c12_592] : memref<16x27xf32, #tpu.memory_space<smem>>
      %1145 = vector.broadcast %1144 : f32 to vector<8x384xf32>
      %1146 = arith.mulf %1145, %1143 : vector<8x384xf32>
      %1147 = arith.addf %1130, %1146 : vector<8x384xf32>
      %c6_593 = arith.constant 6 : index
      %c12_594 = arith.constant 12 : index
      %1148 = memref.load %arg4[%c6_593, %c12_594] : memref<16x27xf32, #tpu.memory_space<smem>>
      %1149 = vector.broadcast %1148 : f32 to vector<8x384xf32>
      %1150 = arith.mulf %1149, %1143 : vector<8x384xf32>
      %1151 = arith.addf %1134, %1150 : vector<8x384xf32>
      %c10_595 = arith.constant 10 : index
      %c12_596 = arith.constant 12 : index
      %1152 = memref.load %arg4[%c10_595, %c12_596] : memref<16x27xf32, #tpu.memory_space<smem>>
      %1153 = vector.broadcast %1152 : f32 to vector<8x384xf32>
      %1154 = arith.mulf %1153, %1143 : vector<8x384xf32>
      %1155 = arith.addf %1138, %1154 : vector<8x384xf32>
      %c14_597 = arith.constant 14 : index
      %c12_598 = arith.constant 12 : index
      %1156 = memref.load %arg4[%c14_597, %c12_598] : memref<16x27xf32, #tpu.memory_space<smem>>
      %1157 = vector.broadcast %1156 : f32 to vector<8x384xf32>
      %1158 = arith.mulf %1157, %1143 : vector<8x384xf32>
      %1159 = arith.addf %1142, %1158 : vector<8x384xf32>
      %c365_i32_599 = arith.constant 365 : i32
      %1160 = tpu.dynamic_rotate %1092 by %c365_i32_599 dim 1 : vector<8x384xf32>, i32 -> vector<8x384xf32>
      %c2_600 = arith.constant 2 : index
      %c13_601 = arith.constant 13 : index
      %1161 = memref.load %arg4[%c2_600, %c13_601] : memref<16x27xf32, #tpu.memory_space<smem>>
      %1162 = vector.broadcast %1161 : f32 to vector<8x384xf32>
      %1163 = arith.mulf %1162, %1160 : vector<8x384xf32>
      %1164 = arith.addf %1147, %1163 : vector<8x384xf32>
      %c6_602 = arith.constant 6 : index
      %c13_603 = arith.constant 13 : index
      %1165 = memref.load %arg4[%c6_602, %c13_603] : memref<16x27xf32, #tpu.memory_space<smem>>
      %1166 = vector.broadcast %1165 : f32 to vector<8x384xf32>
      %1167 = arith.mulf %1166, %1160 : vector<8x384xf32>
      %1168 = arith.addf %1151, %1167 : vector<8x384xf32>
      %c10_604 = arith.constant 10 : index
      %c13_605 = arith.constant 13 : index
      %1169 = memref.load %arg4[%c10_604, %c13_605] : memref<16x27xf32, #tpu.memory_space<smem>>
      %1170 = vector.broadcast %1169 : f32 to vector<8x384xf32>
      %1171 = arith.mulf %1170, %1160 : vector<8x384xf32>
      %1172 = arith.addf %1155, %1171 : vector<8x384xf32>
      %c14_606 = arith.constant 14 : index
      %c13_607 = arith.constant 13 : index
      %1173 = memref.load %arg4[%c14_606, %c13_607] : memref<16x27xf32, #tpu.memory_space<smem>>
      %1174 = vector.broadcast %1173 : f32 to vector<8x384xf32>
      %1175 = arith.mulf %1174, %1160 : vector<8x384xf32>
      %1176 = arith.addf %1159, %1175 : vector<8x384xf32>
      %c364_i32_608 = arith.constant 364 : i32
      %1177 = tpu.dynamic_rotate %1092 by %c364_i32_608 dim 1 : vector<8x384xf32>, i32 -> vector<8x384xf32>
      %c2_609 = arith.constant 2 : index
      %c14_610 = arith.constant 14 : index
      %1178 = memref.load %arg4[%c2_609, %c14_610] : memref<16x27xf32, #tpu.memory_space<smem>>
      %1179 = vector.broadcast %1178 : f32 to vector<8x384xf32>
      %1180 = arith.mulf %1179, %1177 : vector<8x384xf32>
      %1181 = arith.addf %1164, %1180 : vector<8x384xf32>
      %c6_611 = arith.constant 6 : index
      %c14_612 = arith.constant 14 : index
      %1182 = memref.load %arg4[%c6_611, %c14_612] : memref<16x27xf32, #tpu.memory_space<smem>>
      %1183 = vector.broadcast %1182 : f32 to vector<8x384xf32>
      %1184 = arith.mulf %1183, %1177 : vector<8x384xf32>
      %1185 = arith.addf %1168, %1184 : vector<8x384xf32>
      %c10_613 = arith.constant 10 : index
      %c14_614 = arith.constant 14 : index
      %1186 = memref.load %arg4[%c10_613, %c14_614] : memref<16x27xf32, #tpu.memory_space<smem>>
      %1187 = vector.broadcast %1186 : f32 to vector<8x384xf32>
      %1188 = arith.mulf %1187, %1177 : vector<8x384xf32>
      %1189 = arith.addf %1172, %1188 : vector<8x384xf32>
      %c14_615 = arith.constant 14 : index
      %c14_616 = arith.constant 14 : index
      %1190 = memref.load %arg4[%c14_615, %c14_616] : memref<16x27xf32, #tpu.memory_space<smem>>
      %1191 = vector.broadcast %1190 : f32 to vector<8x384xf32>
      %1192 = arith.mulf %1191, %1177 : vector<8x384xf32>
      %1193 = arith.addf %1176, %1192 : vector<8x384xf32>
      %c348_i32_617 = arith.constant 348 : i32
      %1194 = tpu.dynamic_rotate %1092 by %c348_i32_617 dim 1 : vector<8x384xf32>, i32 -> vector<8x384xf32>
      %c2_618 = arith.constant 2 : index
      %c15_619 = arith.constant 15 : index
      %1195 = memref.load %arg4[%c2_618, %c15_619] : memref<16x27xf32, #tpu.memory_space<smem>>
      %1196 = vector.broadcast %1195 : f32 to vector<8x384xf32>
      %1197 = arith.mulf %1196, %1194 : vector<8x384xf32>
      %1198 = arith.addf %1181, %1197 : vector<8x384xf32>
      %c6_620 = arith.constant 6 : index
      %c15_621 = arith.constant 15 : index
      %1199 = memref.load %arg4[%c6_620, %c15_621] : memref<16x27xf32, #tpu.memory_space<smem>>
      %1200 = vector.broadcast %1199 : f32 to vector<8x384xf32>
      %1201 = arith.mulf %1200, %1194 : vector<8x384xf32>
      %1202 = arith.addf %1185, %1201 : vector<8x384xf32>
      %c10_622 = arith.constant 10 : index
      %c15_623 = arith.constant 15 : index
      %1203 = memref.load %arg4[%c10_622, %c15_623] : memref<16x27xf32, #tpu.memory_space<smem>>
      %1204 = vector.broadcast %1203 : f32 to vector<8x384xf32>
      %1205 = arith.mulf %1204, %1194 : vector<8x384xf32>
      %1206 = arith.addf %1189, %1205 : vector<8x384xf32>
      %c14_624 = arith.constant 14 : index
      %c15_625 = arith.constant 15 : index
      %1207 = memref.load %arg4[%c14_624, %c15_625] : memref<16x27xf32, #tpu.memory_space<smem>>
      %1208 = vector.broadcast %1207 : f32 to vector<8x384xf32>
      %1209 = arith.mulf %1208, %1194 : vector<8x384xf32>
      %1210 = arith.addf %1193, %1209 : vector<8x384xf32>
      %c347_i32_626 = arith.constant 347 : i32
      %1211 = tpu.dynamic_rotate %1092 by %c347_i32_626 dim 1 : vector<8x384xf32>, i32 -> vector<8x384xf32>
      %c2_627 = arith.constant 2 : index
      %c16_628 = arith.constant 16 : index
      %1212 = memref.load %arg4[%c2_627, %c16_628] : memref<16x27xf32, #tpu.memory_space<smem>>
      %1213 = vector.broadcast %1212 : f32 to vector<8x384xf32>
      %1214 = arith.mulf %1213, %1211 : vector<8x384xf32>
      %1215 = arith.addf %1198, %1214 : vector<8x384xf32>
      %c6_629 = arith.constant 6 : index
      %c16_630 = arith.constant 16 : index
      %1216 = memref.load %arg4[%c6_629, %c16_630] : memref<16x27xf32, #tpu.memory_space<smem>>
      %1217 = vector.broadcast %1216 : f32 to vector<8x384xf32>
      %1218 = arith.mulf %1217, %1211 : vector<8x384xf32>
      %1219 = arith.addf %1202, %1218 : vector<8x384xf32>
      %c10_631 = arith.constant 10 : index
      %c16_632 = arith.constant 16 : index
      %1220 = memref.load %arg4[%c10_631, %c16_632] : memref<16x27xf32, #tpu.memory_space<smem>>
      %1221 = vector.broadcast %1220 : f32 to vector<8x384xf32>
      %1222 = arith.mulf %1221, %1211 : vector<8x384xf32>
      %1223 = arith.addf %1206, %1222 : vector<8x384xf32>
      %c14_633 = arith.constant 14 : index
      %c16_634 = arith.constant 16 : index
      %1224 = memref.load %arg4[%c14_633, %c16_634] : memref<16x27xf32, #tpu.memory_space<smem>>
      %1225 = vector.broadcast %1224 : f32 to vector<8x384xf32>
      %1226 = arith.mulf %1225, %1211 : vector<8x384xf32>
      %1227 = arith.addf %1210, %1226 : vector<8x384xf32>
      %c346_i32_635 = arith.constant 346 : i32
      %1228 = tpu.dynamic_rotate %1092 by %c346_i32_635 dim 1 : vector<8x384xf32>, i32 -> vector<8x384xf32>
      %c2_636 = arith.constant 2 : index
      %c17_637 = arith.constant 17 : index
      %1229 = memref.load %arg4[%c2_636, %c17_637] : memref<16x27xf32, #tpu.memory_space<smem>>
      %1230 = vector.broadcast %1229 : f32 to vector<8x384xf32>
      %1231 = arith.mulf %1230, %1228 : vector<8x384xf32>
      %1232 = arith.addf %1215, %1231 : vector<8x384xf32>
      %c6_638 = arith.constant 6 : index
      %c17_639 = arith.constant 17 : index
      %1233 = memref.load %arg4[%c6_638, %c17_639] : memref<16x27xf32, #tpu.memory_space<smem>>
      %1234 = vector.broadcast %1233 : f32 to vector<8x384xf32>
      %1235 = arith.mulf %1234, %1228 : vector<8x384xf32>
      %1236 = arith.addf %1219, %1235 : vector<8x384xf32>
      %c10_640 = arith.constant 10 : index
      %c17_641 = arith.constant 17 : index
      %1237 = memref.load %arg4[%c10_640, %c17_641] : memref<16x27xf32, #tpu.memory_space<smem>>
      %1238 = vector.broadcast %1237 : f32 to vector<8x384xf32>
      %1239 = arith.mulf %1238, %1228 : vector<8x384xf32>
      %1240 = arith.addf %1223, %1239 : vector<8x384xf32>
      %c14_642 = arith.constant 14 : index
      %c17_643 = arith.constant 17 : index
      %1241 = memref.load %arg4[%c14_642, %c17_643] : memref<16x27xf32, #tpu.memory_space<smem>>
      %1242 = vector.broadcast %1241 : f32 to vector<8x384xf32>
      %1243 = arith.mulf %1242, %1228 : vector<8x384xf32>
      %1244 = arith.addf %1227, %1243 : vector<8x384xf32>
      %c0_644 = arith.constant 0 : index
      %c2_645 = arith.constant 2 : index
      %c2_646 = arith.constant 2 : index
      %c0_647 = arith.constant 0 : index
      %1245 = vector.load %arg2[%c0_644, %c2_645, %c2_646, %c0_647] : memref<1x4x10x384xf32, #tpu.memory_space<vmem>>, vector<1x1x8x384xf32>
      %1246 = vector.shape_cast %1245 : vector<1x1x8x384xf32> to vector<8x384xf32>
      %c2_648 = arith.constant 2 : index
      %c18_649 = arith.constant 18 : index
      %1247 = memref.load %arg4[%c2_648, %c18_649] : memref<16x27xf32, #tpu.memory_space<smem>>
      %1248 = vector.broadcast %1247 : f32 to vector<8x384xf32>
      %1249 = arith.mulf %1248, %1246 : vector<8x384xf32>
      %1250 = arith.addf %1232, %1249 : vector<8x384xf32>
      %c6_650 = arith.constant 6 : index
      %c18_651 = arith.constant 18 : index
      %1251 = memref.load %arg4[%c6_650, %c18_651] : memref<16x27xf32, #tpu.memory_space<smem>>
      %1252 = vector.broadcast %1251 : f32 to vector<8x384xf32>
      %1253 = arith.mulf %1252, %1246 : vector<8x384xf32>
      %1254 = arith.addf %1236, %1253 : vector<8x384xf32>
      %c10_652 = arith.constant 10 : index
      %c18_653 = arith.constant 18 : index
      %1255 = memref.load %arg4[%c10_652, %c18_653] : memref<16x27xf32, #tpu.memory_space<smem>>
      %1256 = vector.broadcast %1255 : f32 to vector<8x384xf32>
      %1257 = arith.mulf %1256, %1246 : vector<8x384xf32>
      %1258 = arith.addf %1240, %1257 : vector<8x384xf32>
      %c14_654 = arith.constant 14 : index
      %c18_655 = arith.constant 18 : index
      %1259 = memref.load %arg4[%c14_654, %c18_655] : memref<16x27xf32, #tpu.memory_space<smem>>
      %1260 = vector.broadcast %1259 : f32 to vector<8x384xf32>
      %1261 = arith.mulf %1260, %1246 : vector<8x384xf32>
      %1262 = arith.addf %1244, %1261 : vector<8x384xf32>
      %c383_i32_656 = arith.constant 383 : i32
      %1263 = tpu.dynamic_rotate %1246 by %c383_i32_656 dim 1 : vector<8x384xf32>, i32 -> vector<8x384xf32>
      %c2_657 = arith.constant 2 : index
      %c19_658 = arith.constant 19 : index
      %1264 = memref.load %arg4[%c2_657, %c19_658] : memref<16x27xf32, #tpu.memory_space<smem>>
      %1265 = vector.broadcast %1264 : f32 to vector<8x384xf32>
      %1266 = arith.mulf %1265, %1263 : vector<8x384xf32>
      %1267 = arith.addf %1250, %1266 : vector<8x384xf32>
      %c6_659 = arith.constant 6 : index
      %c19_660 = arith.constant 19 : index
      %1268 = memref.load %arg4[%c6_659, %c19_660] : memref<16x27xf32, #tpu.memory_space<smem>>
      %1269 = vector.broadcast %1268 : f32 to vector<8x384xf32>
      %1270 = arith.mulf %1269, %1263 : vector<8x384xf32>
      %1271 = arith.addf %1254, %1270 : vector<8x384xf32>
      %c10_661 = arith.constant 10 : index
      %c19_662 = arith.constant 19 : index
      %1272 = memref.load %arg4[%c10_661, %c19_662] : memref<16x27xf32, #tpu.memory_space<smem>>
      %1273 = vector.broadcast %1272 : f32 to vector<8x384xf32>
      %1274 = arith.mulf %1273, %1263 : vector<8x384xf32>
      %1275 = arith.addf %1258, %1274 : vector<8x384xf32>
      %c14_663 = arith.constant 14 : index
      %c19_664 = arith.constant 19 : index
      %1276 = memref.load %arg4[%c14_663, %c19_664] : memref<16x27xf32, #tpu.memory_space<smem>>
      %1277 = vector.broadcast %1276 : f32 to vector<8x384xf32>
      %1278 = arith.mulf %1277, %1263 : vector<8x384xf32>
      %1279 = arith.addf %1262, %1278 : vector<8x384xf32>
      %c382_i32_665 = arith.constant 382 : i32
      %1280 = tpu.dynamic_rotate %1246 by %c382_i32_665 dim 1 : vector<8x384xf32>, i32 -> vector<8x384xf32>
      %c2_666 = arith.constant 2 : index
      %c20_667 = arith.constant 20 : index
      %1281 = memref.load %arg4[%c2_666, %c20_667] : memref<16x27xf32, #tpu.memory_space<smem>>
      %1282 = vector.broadcast %1281 : f32 to vector<8x384xf32>
      %1283 = arith.mulf %1282, %1280 : vector<8x384xf32>
      %1284 = arith.addf %1267, %1283 : vector<8x384xf32>
      %c6_668 = arith.constant 6 : index
      %c20_669 = arith.constant 20 : index
      %1285 = memref.load %arg4[%c6_668, %c20_669] : memref<16x27xf32, #tpu.memory_space<smem>>
      %1286 = vector.broadcast %1285 : f32 to vector<8x384xf32>
      %1287 = arith.mulf %1286, %1280 : vector<8x384xf32>
      %1288 = arith.addf %1271, %1287 : vector<8x384xf32>
      %c10_670 = arith.constant 10 : index
      %c20_671 = arith.constant 20 : index
      %1289 = memref.load %arg4[%c10_670, %c20_671] : memref<16x27xf32, #tpu.memory_space<smem>>
      %1290 = vector.broadcast %1289 : f32 to vector<8x384xf32>
      %1291 = arith.mulf %1290, %1280 : vector<8x384xf32>
      %1292 = arith.addf %1275, %1291 : vector<8x384xf32>
      %c14_672 = arith.constant 14 : index
      %c20_673 = arith.constant 20 : index
      %1293 = memref.load %arg4[%c14_672, %c20_673] : memref<16x27xf32, #tpu.memory_space<smem>>
      %1294 = vector.broadcast %1293 : f32 to vector<8x384xf32>
      %1295 = arith.mulf %1294, %1280 : vector<8x384xf32>
      %1296 = arith.addf %1279, %1295 : vector<8x384xf32>
      %c366_i32_674 = arith.constant 366 : i32
      %1297 = tpu.dynamic_rotate %1246 by %c366_i32_674 dim 1 : vector<8x384xf32>, i32 -> vector<8x384xf32>
      %c2_675 = arith.constant 2 : index
      %c21_676 = arith.constant 21 : index
      %1298 = memref.load %arg4[%c2_675, %c21_676] : memref<16x27xf32, #tpu.memory_space<smem>>
      %1299 = vector.broadcast %1298 : f32 to vector<8x384xf32>
      %1300 = arith.mulf %1299, %1297 : vector<8x384xf32>
      %1301 = arith.addf %1284, %1300 : vector<8x384xf32>
      %c6_677 = arith.constant 6 : index
      %c21_678 = arith.constant 21 : index
      %1302 = memref.load %arg4[%c6_677, %c21_678] : memref<16x27xf32, #tpu.memory_space<smem>>
      %1303 = vector.broadcast %1302 : f32 to vector<8x384xf32>
      %1304 = arith.mulf %1303, %1297 : vector<8x384xf32>
      %1305 = arith.addf %1288, %1304 : vector<8x384xf32>
      %c10_679 = arith.constant 10 : index
      %c21_680 = arith.constant 21 : index
      %1306 = memref.load %arg4[%c10_679, %c21_680] : memref<16x27xf32, #tpu.memory_space<smem>>
      %1307 = vector.broadcast %1306 : f32 to vector<8x384xf32>
      %1308 = arith.mulf %1307, %1297 : vector<8x384xf32>
      %1309 = arith.addf %1292, %1308 : vector<8x384xf32>
      %c14_681 = arith.constant 14 : index
      %c21_682 = arith.constant 21 : index
      %1310 = memref.load %arg4[%c14_681, %c21_682] : memref<16x27xf32, #tpu.memory_space<smem>>
      %1311 = vector.broadcast %1310 : f32 to vector<8x384xf32>
      %1312 = arith.mulf %1311, %1297 : vector<8x384xf32>
      %1313 = arith.addf %1296, %1312 : vector<8x384xf32>
      %c365_i32_683 = arith.constant 365 : i32
      %1314 = tpu.dynamic_rotate %1246 by %c365_i32_683 dim 1 : vector<8x384xf32>, i32 -> vector<8x384xf32>
      %c2_684 = arith.constant 2 : index
      %c22_685 = arith.constant 22 : index
      %1315 = memref.load %arg4[%c2_684, %c22_685] : memref<16x27xf32, #tpu.memory_space<smem>>
      %1316 = vector.broadcast %1315 : f32 to vector<8x384xf32>
      %1317 = arith.mulf %1316, %1314 : vector<8x384xf32>
      %1318 = arith.addf %1301, %1317 : vector<8x384xf32>
      %c6_686 = arith.constant 6 : index
      %c22_687 = arith.constant 22 : index
      %1319 = memref.load %arg4[%c6_686, %c22_687] : memref<16x27xf32, #tpu.memory_space<smem>>
      %1320 = vector.broadcast %1319 : f32 to vector<8x384xf32>
      %1321 = arith.mulf %1320, %1314 : vector<8x384xf32>
      %1322 = arith.addf %1305, %1321 : vector<8x384xf32>
      %c10_688 = arith.constant 10 : index
      %c22_689 = arith.constant 22 : index
      %1323 = memref.load %arg4[%c10_688, %c22_689] : memref<16x27xf32, #tpu.memory_space<smem>>
      %1324 = vector.broadcast %1323 : f32 to vector<8x384xf32>
      %1325 = arith.mulf %1324, %1314 : vector<8x384xf32>
      %1326 = arith.addf %1309, %1325 : vector<8x384xf32>
      %c14_690 = arith.constant 14 : index
      %c22_691 = arith.constant 22 : index
      %1327 = memref.load %arg4[%c14_690, %c22_691] : memref<16x27xf32, #tpu.memory_space<smem>>
      %1328 = vector.broadcast %1327 : f32 to vector<8x384xf32>
      %1329 = arith.mulf %1328, %1314 : vector<8x384xf32>
      %1330 = arith.addf %1313, %1329 : vector<8x384xf32>
      %c364_i32_692 = arith.constant 364 : i32
      %1331 = tpu.dynamic_rotate %1246 by %c364_i32_692 dim 1 : vector<8x384xf32>, i32 -> vector<8x384xf32>
      %c2_693 = arith.constant 2 : index
      %c23_694 = arith.constant 23 : index
      %1332 = memref.load %arg4[%c2_693, %c23_694] : memref<16x27xf32, #tpu.memory_space<smem>>
      %1333 = vector.broadcast %1332 : f32 to vector<8x384xf32>
      %1334 = arith.mulf %1333, %1331 : vector<8x384xf32>
      %1335 = arith.addf %1318, %1334 : vector<8x384xf32>
      %c6_695 = arith.constant 6 : index
      %c23_696 = arith.constant 23 : index
      %1336 = memref.load %arg4[%c6_695, %c23_696] : memref<16x27xf32, #tpu.memory_space<smem>>
      %1337 = vector.broadcast %1336 : f32 to vector<8x384xf32>
      %1338 = arith.mulf %1337, %1331 : vector<8x384xf32>
      %1339 = arith.addf %1322, %1338 : vector<8x384xf32>
      %c10_697 = arith.constant 10 : index
      %c23_698 = arith.constant 23 : index
      %1340 = memref.load %arg4[%c10_697, %c23_698] : memref<16x27xf32, #tpu.memory_space<smem>>
      %1341 = vector.broadcast %1340 : f32 to vector<8x384xf32>
      %1342 = arith.mulf %1341, %1331 : vector<8x384xf32>
      %1343 = arith.addf %1326, %1342 : vector<8x384xf32>
      %c14_699 = arith.constant 14 : index
      %c23_700 = arith.constant 23 : index
      %1344 = memref.load %arg4[%c14_699, %c23_700] : memref<16x27xf32, #tpu.memory_space<smem>>
      %1345 = vector.broadcast %1344 : f32 to vector<8x384xf32>
      %1346 = arith.mulf %1345, %1331 : vector<8x384xf32>
      %1347 = arith.addf %1330, %1346 : vector<8x384xf32>
      %c348_i32_701 = arith.constant 348 : i32
      %1348 = tpu.dynamic_rotate %1246 by %c348_i32_701 dim 1 : vector<8x384xf32>, i32 -> vector<8x384xf32>
      %c2_702 = arith.constant 2 : index
      %c24_703 = arith.constant 24 : index
      %1349 = memref.load %arg4[%c2_702, %c24_703] : memref<16x27xf32, #tpu.memory_space<smem>>
      %1350 = vector.broadcast %1349 : f32 to vector<8x384xf32>
      %1351 = arith.mulf %1350, %1348 : vector<8x384xf32>
      %1352 = arith.addf %1335, %1351 : vector<8x384xf32>
      %c6_704 = arith.constant 6 : index
      %c24_705 = arith.constant 24 : index
      %1353 = memref.load %arg4[%c6_704, %c24_705] : memref<16x27xf32, #tpu.memory_space<smem>>
      %1354 = vector.broadcast %1353 : f32 to vector<8x384xf32>
      %1355 = arith.mulf %1354, %1348 : vector<8x384xf32>
      %1356 = arith.addf %1339, %1355 : vector<8x384xf32>
      %c10_706 = arith.constant 10 : index
      %c24_707 = arith.constant 24 : index
      %1357 = memref.load %arg4[%c10_706, %c24_707] : memref<16x27xf32, #tpu.memory_space<smem>>
      %1358 = vector.broadcast %1357 : f32 to vector<8x384xf32>
      %1359 = arith.mulf %1358, %1348 : vector<8x384xf32>
      %1360 = arith.addf %1343, %1359 : vector<8x384xf32>
      %c14_708 = arith.constant 14 : index
      %c24_709 = arith.constant 24 : index
      %1361 = memref.load %arg4[%c14_708, %c24_709] : memref<16x27xf32, #tpu.memory_space<smem>>
      %1362 = vector.broadcast %1361 : f32 to vector<8x384xf32>
      %1363 = arith.mulf %1362, %1348 : vector<8x384xf32>
      %1364 = arith.addf %1347, %1363 : vector<8x384xf32>
      %c347_i32_710 = arith.constant 347 : i32
      %1365 = tpu.dynamic_rotate %1246 by %c347_i32_710 dim 1 : vector<8x384xf32>, i32 -> vector<8x384xf32>
      %c2_711 = arith.constant 2 : index
      %c25_712 = arith.constant 25 : index
      %1366 = memref.load %arg4[%c2_711, %c25_712] : memref<16x27xf32, #tpu.memory_space<smem>>
      %1367 = vector.broadcast %1366 : f32 to vector<8x384xf32>
      %1368 = arith.mulf %1367, %1365 : vector<8x384xf32>
      %1369 = arith.addf %1352, %1368 : vector<8x384xf32>
      %c6_713 = arith.constant 6 : index
      %c25_714 = arith.constant 25 : index
      %1370 = memref.load %arg4[%c6_713, %c25_714] : memref<16x27xf32, #tpu.memory_space<smem>>
      %1371 = vector.broadcast %1370 : f32 to vector<8x384xf32>
      %1372 = arith.mulf %1371, %1365 : vector<8x384xf32>
      %1373 = arith.addf %1356, %1372 : vector<8x384xf32>
      %c10_715 = arith.constant 10 : index
      %c25_716 = arith.constant 25 : index
      %1374 = memref.load %arg4[%c10_715, %c25_716] : memref<16x27xf32, #tpu.memory_space<smem>>
      %1375 = vector.broadcast %1374 : f32 to vector<8x384xf32>
      %1376 = arith.mulf %1375, %1365 : vector<8x384xf32>
      %1377 = arith.addf %1360, %1376 : vector<8x384xf32>
      %c14_717 = arith.constant 14 : index
      %c25_718 = arith.constant 25 : index
      %1378 = memref.load %arg4[%c14_717, %c25_718] : memref<16x27xf32, #tpu.memory_space<smem>>
      %1379 = vector.broadcast %1378 : f32 to vector<8x384xf32>
      %1380 = arith.mulf %1379, %1365 : vector<8x384xf32>
      %1381 = arith.addf %1364, %1380 : vector<8x384xf32>
      %c346_i32_719 = arith.constant 346 : i32
      %1382 = tpu.dynamic_rotate %1246 by %c346_i32_719 dim 1 : vector<8x384xf32>, i32 -> vector<8x384xf32>
      %c2_720 = arith.constant 2 : index
      %c26_721 = arith.constant 26 : index
      %1383 = memref.load %arg4[%c2_720, %c26_721] : memref<16x27xf32, #tpu.memory_space<smem>>
      %1384 = vector.broadcast %1383 : f32 to vector<8x384xf32>
      %1385 = arith.mulf %1384, %1382 : vector<8x384xf32>
      %1386 = arith.addf %1369, %1385 : vector<8x384xf32>
      %c6_722 = arith.constant 6 : index
      %c26_723 = arith.constant 26 : index
      %1387 = memref.load %arg4[%c6_722, %c26_723] : memref<16x27xf32, #tpu.memory_space<smem>>
      %1388 = vector.broadcast %1387 : f32 to vector<8x384xf32>
      %1389 = arith.mulf %1388, %1382 : vector<8x384xf32>
      %1390 = arith.addf %1373, %1389 : vector<8x384xf32>
      %c10_724 = arith.constant 10 : index
      %c26_725 = arith.constant 26 : index
      %1391 = memref.load %arg4[%c10_724, %c26_725] : memref<16x27xf32, #tpu.memory_space<smem>>
      %1392 = vector.broadcast %1391 : f32 to vector<8x384xf32>
      %1393 = arith.mulf %1392, %1382 : vector<8x384xf32>
      %1394 = arith.addf %1377, %1393 : vector<8x384xf32>
      %c14_726 = arith.constant 14 : index
      %c26_727 = arith.constant 26 : index
      %1395 = memref.load %arg4[%c14_726, %c26_727] : memref<16x27xf32, #tpu.memory_space<smem>>
      %1396 = vector.broadcast %1395 : f32 to vector<8x384xf32>
      %1397 = arith.mulf %1396, %1382 : vector<8x384xf32>
      %1398 = arith.addf %1381, %1397 : vector<8x384xf32>
      %c0_728 = arith.constant 0 : index
      %c3_729 = arith.constant 3 : index
      %c0_730 = arith.constant 0 : index
      %c0_731 = arith.constant 0 : index
      %1399 = vector.load %arg2[%c0_728, %c3_729, %c0_730, %c0_731] : memref<1x4x10x384xf32, #tpu.memory_space<vmem>>, vector<1x1x8x384xf32>
      %1400 = vector.shape_cast %1399 : vector<1x1x8x384xf32> to vector<8x384xf32>
      %c3_732 = arith.constant 3 : index
      %c0_733 = arith.constant 0 : index
      %1401 = memref.load %arg4[%c3_732, %c0_733] : memref<16x27xf32, #tpu.memory_space<smem>>
      %1402 = vector.broadcast %1401 : f32 to vector<8x384xf32>
      %1403 = arith.mulf %1402, %1400 : vector<8x384xf32>
      %1404 = arith.addf %1386, %1403 : vector<8x384xf32>
      %c7_734 = arith.constant 7 : index
      %c0_735 = arith.constant 0 : index
      %1405 = memref.load %arg4[%c7_734, %c0_735] : memref<16x27xf32, #tpu.memory_space<smem>>
      %1406 = vector.broadcast %1405 : f32 to vector<8x384xf32>
      %1407 = arith.mulf %1406, %1400 : vector<8x384xf32>
      %1408 = arith.addf %1390, %1407 : vector<8x384xf32>
      %c11_736 = arith.constant 11 : index
      %c0_737 = arith.constant 0 : index
      %1409 = memref.load %arg4[%c11_736, %c0_737] : memref<16x27xf32, #tpu.memory_space<smem>>
      %1410 = vector.broadcast %1409 : f32 to vector<8x384xf32>
      %1411 = arith.mulf %1410, %1400 : vector<8x384xf32>
      %1412 = arith.addf %1394, %1411 : vector<8x384xf32>
      %c15_738 = arith.constant 15 : index
      %c0_739 = arith.constant 0 : index
      %1413 = memref.load %arg4[%c15_738, %c0_739] : memref<16x27xf32, #tpu.memory_space<smem>>
      %1414 = vector.broadcast %1413 : f32 to vector<8x384xf32>
      %1415 = arith.mulf %1414, %1400 : vector<8x384xf32>
      %1416 = arith.addf %1398, %1415 : vector<8x384xf32>
      %c383_i32_740 = arith.constant 383 : i32
      %1417 = tpu.dynamic_rotate %1400 by %c383_i32_740 dim 1 : vector<8x384xf32>, i32 -> vector<8x384xf32>
      %c3_741 = arith.constant 3 : index
      %c1_742 = arith.constant 1 : index
      %1418 = memref.load %arg4[%c3_741, %c1_742] : memref<16x27xf32, #tpu.memory_space<smem>>
      %1419 = vector.broadcast %1418 : f32 to vector<8x384xf32>
      %1420 = arith.mulf %1419, %1417 : vector<8x384xf32>
      %1421 = arith.addf %1404, %1420 : vector<8x384xf32>
      %c7_743 = arith.constant 7 : index
      %c1_744 = arith.constant 1 : index
      %1422 = memref.load %arg4[%c7_743, %c1_744] : memref<16x27xf32, #tpu.memory_space<smem>>
      %1423 = vector.broadcast %1422 : f32 to vector<8x384xf32>
      %1424 = arith.mulf %1423, %1417 : vector<8x384xf32>
      %1425 = arith.addf %1408, %1424 : vector<8x384xf32>
      %c11_745 = arith.constant 11 : index
      %c1_746 = arith.constant 1 : index
      %1426 = memref.load %arg4[%c11_745, %c1_746] : memref<16x27xf32, #tpu.memory_space<smem>>
      %1427 = vector.broadcast %1426 : f32 to vector<8x384xf32>
      %1428 = arith.mulf %1427, %1417 : vector<8x384xf32>
      %1429 = arith.addf %1412, %1428 : vector<8x384xf32>
      %c15_747 = arith.constant 15 : index
      %c1_748 = arith.constant 1 : index
      %1430 = memref.load %arg4[%c15_747, %c1_748] : memref<16x27xf32, #tpu.memory_space<smem>>
      %1431 = vector.broadcast %1430 : f32 to vector<8x384xf32>
      %1432 = arith.mulf %1431, %1417 : vector<8x384xf32>
      %1433 = arith.addf %1416, %1432 : vector<8x384xf32>
      %c382_i32_749 = arith.constant 382 : i32
      %1434 = tpu.dynamic_rotate %1400 by %c382_i32_749 dim 1 : vector<8x384xf32>, i32 -> vector<8x384xf32>
      %c3_750 = arith.constant 3 : index
      %c2_751 = arith.constant 2 : index
      %1435 = memref.load %arg4[%c3_750, %c2_751] : memref<16x27xf32, #tpu.memory_space<smem>>
      %1436 = vector.broadcast %1435 : f32 to vector<8x384xf32>
      %1437 = arith.mulf %1436, %1434 : vector<8x384xf32>
      %1438 = arith.addf %1421, %1437 : vector<8x384xf32>
      %c7_752 = arith.constant 7 : index
      %c2_753 = arith.constant 2 : index
      %1439 = memref.load %arg4[%c7_752, %c2_753] : memref<16x27xf32, #tpu.memory_space<smem>>
      %1440 = vector.broadcast %1439 : f32 to vector<8x384xf32>
      %1441 = arith.mulf %1440, %1434 : vector<8x384xf32>
      %1442 = arith.addf %1425, %1441 : vector<8x384xf32>
      %c11_754 = arith.constant 11 : index
      %c2_755 = arith.constant 2 : index
      %1443 = memref.load %arg4[%c11_754, %c2_755] : memref<16x27xf32, #tpu.memory_space<smem>>
      %1444 = vector.broadcast %1443 : f32 to vector<8x384xf32>
      %1445 = arith.mulf %1444, %1434 : vector<8x384xf32>
      %1446 = arith.addf %1429, %1445 : vector<8x384xf32>
      %c15_756 = arith.constant 15 : index
      %c2_757 = arith.constant 2 : index
      %1447 = memref.load %arg4[%c15_756, %c2_757] : memref<16x27xf32, #tpu.memory_space<smem>>
      %1448 = vector.broadcast %1447 : f32 to vector<8x384xf32>
      %1449 = arith.mulf %1448, %1434 : vector<8x384xf32>
      %1450 = arith.addf %1433, %1449 : vector<8x384xf32>
      %c366_i32_758 = arith.constant 366 : i32
      %1451 = tpu.dynamic_rotate %1400 by %c366_i32_758 dim 1 : vector<8x384xf32>, i32 -> vector<8x384xf32>
      %c3_759 = arith.constant 3 : index
      %c3_760 = arith.constant 3 : index
      %1452 = memref.load %arg4[%c3_759, %c3_760] : memref<16x27xf32, #tpu.memory_space<smem>>
      %1453 = vector.broadcast %1452 : f32 to vector<8x384xf32>
      %1454 = arith.mulf %1453, %1451 : vector<8x384xf32>
      %1455 = arith.addf %1438, %1454 : vector<8x384xf32>
      %c7_761 = arith.constant 7 : index
      %c3_762 = arith.constant 3 : index
      %1456 = memref.load %arg4[%c7_761, %c3_762] : memref<16x27xf32, #tpu.memory_space<smem>>
      %1457 = vector.broadcast %1456 : f32 to vector<8x384xf32>
      %1458 = arith.mulf %1457, %1451 : vector<8x384xf32>
      %1459 = arith.addf %1442, %1458 : vector<8x384xf32>
      %c11_763 = arith.constant 11 : index
      %c3_764 = arith.constant 3 : index
      %1460 = memref.load %arg4[%c11_763, %c3_764] : memref<16x27xf32, #tpu.memory_space<smem>>
      %1461 = vector.broadcast %1460 : f32 to vector<8x384xf32>
      %1462 = arith.mulf %1461, %1451 : vector<8x384xf32>
      %1463 = arith.addf %1446, %1462 : vector<8x384xf32>
      %c15_765 = arith.constant 15 : index
      %c3_766 = arith.constant 3 : index
      %1464 = memref.load %arg4[%c15_765, %c3_766] : memref<16x27xf32, #tpu.memory_space<smem>>
      %1465 = vector.broadcast %1464 : f32 to vector<8x384xf32>
      %1466 = arith.mulf %1465, %1451 : vector<8x384xf32>
      %1467 = arith.addf %1450, %1466 : vector<8x384xf32>
      %c365_i32_767 = arith.constant 365 : i32
      %1468 = tpu.dynamic_rotate %1400 by %c365_i32_767 dim 1 : vector<8x384xf32>, i32 -> vector<8x384xf32>
      %c3_768 = arith.constant 3 : index
      %c4_769 = arith.constant 4 : index
      %1469 = memref.load %arg4[%c3_768, %c4_769] : memref<16x27xf32, #tpu.memory_space<smem>>
      %1470 = vector.broadcast %1469 : f32 to vector<8x384xf32>
      %1471 = arith.mulf %1470, %1468 : vector<8x384xf32>
      %1472 = arith.addf %1455, %1471 : vector<8x384xf32>
      %c7_770 = arith.constant 7 : index
      %c4_771 = arith.constant 4 : index
      %1473 = memref.load %arg4[%c7_770, %c4_771] : memref<16x27xf32, #tpu.memory_space<smem>>
      %1474 = vector.broadcast %1473 : f32 to vector<8x384xf32>
      %1475 = arith.mulf %1474, %1468 : vector<8x384xf32>
      %1476 = arith.addf %1459, %1475 : vector<8x384xf32>
      %c11_772 = arith.constant 11 : index
      %c4_773 = arith.constant 4 : index
      %1477 = memref.load %arg4[%c11_772, %c4_773] : memref<16x27xf32, #tpu.memory_space<smem>>
      %1478 = vector.broadcast %1477 : f32 to vector<8x384xf32>
      %1479 = arith.mulf %1478, %1468 : vector<8x384xf32>
      %1480 = arith.addf %1463, %1479 : vector<8x384xf32>
      %c15_774 = arith.constant 15 : index
      %c4_775 = arith.constant 4 : index
      %1481 = memref.load %arg4[%c15_774, %c4_775] : memref<16x27xf32, #tpu.memory_space<smem>>
      %1482 = vector.broadcast %1481 : f32 to vector<8x384xf32>
      %1483 = arith.mulf %1482, %1468 : vector<8x384xf32>
      %1484 = arith.addf %1467, %1483 : vector<8x384xf32>
      %c364_i32_776 = arith.constant 364 : i32
      %1485 = tpu.dynamic_rotate %1400 by %c364_i32_776 dim 1 : vector<8x384xf32>, i32 -> vector<8x384xf32>
      %c3_777 = arith.constant 3 : index
      %c5_778 = arith.constant 5 : index
      %1486 = memref.load %arg4[%c3_777, %c5_778] : memref<16x27xf32, #tpu.memory_space<smem>>
      %1487 = vector.broadcast %1486 : f32 to vector<8x384xf32>
      %1488 = arith.mulf %1487, %1485 : vector<8x384xf32>
      %1489 = arith.addf %1472, %1488 : vector<8x384xf32>
      %c7_779 = arith.constant 7 : index
      %c5_780 = arith.constant 5 : index
      %1490 = memref.load %arg4[%c7_779, %c5_780] : memref<16x27xf32, #tpu.memory_space<smem>>
      %1491 = vector.broadcast %1490 : f32 to vector<8x384xf32>
      %1492 = arith.mulf %1491, %1485 : vector<8x384xf32>
      %1493 = arith.addf %1476, %1492 : vector<8x384xf32>
      %c11_781 = arith.constant 11 : index
      %c5_782 = arith.constant 5 : index
      %1494 = memref.load %arg4[%c11_781, %c5_782] : memref<16x27xf32, #tpu.memory_space<smem>>
      %1495 = vector.broadcast %1494 : f32 to vector<8x384xf32>
      %1496 = arith.mulf %1495, %1485 : vector<8x384xf32>
      %1497 = arith.addf %1480, %1496 : vector<8x384xf32>
      %c15_783 = arith.constant 15 : index
      %c5_784 = arith.constant 5 : index
      %1498 = memref.load %arg4[%c15_783, %c5_784] : memref<16x27xf32, #tpu.memory_space<smem>>
      %1499 = vector.broadcast %1498 : f32 to vector<8x384xf32>
      %1500 = arith.mulf %1499, %1485 : vector<8x384xf32>
      %1501 = arith.addf %1484, %1500 : vector<8x384xf32>
      %c348_i32_785 = arith.constant 348 : i32
      %1502 = tpu.dynamic_rotate %1400 by %c348_i32_785 dim 1 : vector<8x384xf32>, i32 -> vector<8x384xf32>
      %c3_786 = arith.constant 3 : index
      %c6_787 = arith.constant 6 : index
      %1503 = memref.load %arg4[%c3_786, %c6_787] : memref<16x27xf32, #tpu.memory_space<smem>>
      %1504 = vector.broadcast %1503 : f32 to vector<8x384xf32>
      %1505 = arith.mulf %1504, %1502 : vector<8x384xf32>
      %1506 = arith.addf %1489, %1505 : vector<8x384xf32>
      %c7_788 = arith.constant 7 : index
      %c6_789 = arith.constant 6 : index
      %1507 = memref.load %arg4[%c7_788, %c6_789] : memref<16x27xf32, #tpu.memory_space<smem>>
      %1508 = vector.broadcast %1507 : f32 to vector<8x384xf32>
      %1509 = arith.mulf %1508, %1502 : vector<8x384xf32>
      %1510 = arith.addf %1493, %1509 : vector<8x384xf32>
      %c11_790 = arith.constant 11 : index
      %c6_791 = arith.constant 6 : index
      %1511 = memref.load %arg4[%c11_790, %c6_791] : memref<16x27xf32, #tpu.memory_space<smem>>
      %1512 = vector.broadcast %1511 : f32 to vector<8x384xf32>
      %1513 = arith.mulf %1512, %1502 : vector<8x384xf32>
      %1514 = arith.addf %1497, %1513 : vector<8x384xf32>
      %c15_792 = arith.constant 15 : index
      %c6_793 = arith.constant 6 : index
      %1515 = memref.load %arg4[%c15_792, %c6_793] : memref<16x27xf32, #tpu.memory_space<smem>>
      %1516 = vector.broadcast %1515 : f32 to vector<8x384xf32>
      %1517 = arith.mulf %1516, %1502 : vector<8x384xf32>
      %1518 = arith.addf %1501, %1517 : vector<8x384xf32>
      %c347_i32_794 = arith.constant 347 : i32
      %1519 = tpu.dynamic_rotate %1400 by %c347_i32_794 dim 1 : vector<8x384xf32>, i32 -> vector<8x384xf32>
      %c3_795 = arith.constant 3 : index
      %c7_796 = arith.constant 7 : index
      %1520 = memref.load %arg4[%c3_795, %c7_796] : memref<16x27xf32, #tpu.memory_space<smem>>
      %1521 = vector.broadcast %1520 : f32 to vector<8x384xf32>
      %1522 = arith.mulf %1521, %1519 : vector<8x384xf32>
      %1523 = arith.addf %1506, %1522 : vector<8x384xf32>
      %c7_797 = arith.constant 7 : index
      %c7_798 = arith.constant 7 : index
      %1524 = memref.load %arg4[%c7_797, %c7_798] : memref<16x27xf32, #tpu.memory_space<smem>>
      %1525 = vector.broadcast %1524 : f32 to vector<8x384xf32>
      %1526 = arith.mulf %1525, %1519 : vector<8x384xf32>
      %1527 = arith.addf %1510, %1526 : vector<8x384xf32>
      %c11_799 = arith.constant 11 : index
      %c7_800 = arith.constant 7 : index
      %1528 = memref.load %arg4[%c11_799, %c7_800] : memref<16x27xf32, #tpu.memory_space<smem>>
      %1529 = vector.broadcast %1528 : f32 to vector<8x384xf32>
      %1530 = arith.mulf %1529, %1519 : vector<8x384xf32>
      %1531 = arith.addf %1514, %1530 : vector<8x384xf32>
      %c15_801 = arith.constant 15 : index
      %c7_802 = arith.constant 7 : index
      %1532 = memref.load %arg4[%c15_801, %c7_802] : memref<16x27xf32, #tpu.memory_space<smem>>
      %1533 = vector.broadcast %1532 : f32 to vector<8x384xf32>
      %1534 = arith.mulf %1533, %1519 : vector<8x384xf32>
      %1535 = arith.addf %1518, %1534 : vector<8x384xf32>
      %c346_i32_803 = arith.constant 346 : i32
      %1536 = tpu.dynamic_rotate %1400 by %c346_i32_803 dim 1 : vector<8x384xf32>, i32 -> vector<8x384xf32>
      %c3_804 = arith.constant 3 : index
      %c8_805 = arith.constant 8 : index
      %1537 = memref.load %arg4[%c3_804, %c8_805] : memref<16x27xf32, #tpu.memory_space<smem>>
      %1538 = vector.broadcast %1537 : f32 to vector<8x384xf32>
      %1539 = arith.mulf %1538, %1536 : vector<8x384xf32>
      %1540 = arith.addf %1523, %1539 : vector<8x384xf32>
      %c7_806 = arith.constant 7 : index
      %c8_807 = arith.constant 8 : index
      %1541 = memref.load %arg4[%c7_806, %c8_807] : memref<16x27xf32, #tpu.memory_space<smem>>
      %1542 = vector.broadcast %1541 : f32 to vector<8x384xf32>
      %1543 = arith.mulf %1542, %1536 : vector<8x384xf32>
      %1544 = arith.addf %1527, %1543 : vector<8x384xf32>
      %c11_808 = arith.constant 11 : index
      %c8_809 = arith.constant 8 : index
      %1545 = memref.load %arg4[%c11_808, %c8_809] : memref<16x27xf32, #tpu.memory_space<smem>>
      %1546 = vector.broadcast %1545 : f32 to vector<8x384xf32>
      %1547 = arith.mulf %1546, %1536 : vector<8x384xf32>
      %1548 = arith.addf %1531, %1547 : vector<8x384xf32>
      %c15_810 = arith.constant 15 : index
      %c8_811 = arith.constant 8 : index
      %1549 = memref.load %arg4[%c15_810, %c8_811] : memref<16x27xf32, #tpu.memory_space<smem>>
      %1550 = vector.broadcast %1549 : f32 to vector<8x384xf32>
      %1551 = arith.mulf %1550, %1536 : vector<8x384xf32>
      %1552 = arith.addf %1535, %1551 : vector<8x384xf32>
      %c0_812 = arith.constant 0 : index
      %c3_813 = arith.constant 3 : index
      %c1_814 = arith.constant 1 : index
      %c0_815 = arith.constant 0 : index
      %1553 = vector.load %arg2[%c0_812, %c3_813, %c1_814, %c0_815] : memref<1x4x10x384xf32, #tpu.memory_space<vmem>>, vector<1x1x8x384xf32>
      %1554 = vector.shape_cast %1553 : vector<1x1x8x384xf32> to vector<8x384xf32>
      %c3_816 = arith.constant 3 : index
      %c9_817 = arith.constant 9 : index
      %1555 = memref.load %arg4[%c3_816, %c9_817] : memref<16x27xf32, #tpu.memory_space<smem>>
      %1556 = vector.broadcast %1555 : f32 to vector<8x384xf32>
      %1557 = arith.mulf %1556, %1554 : vector<8x384xf32>
      %1558 = arith.addf %1540, %1557 : vector<8x384xf32>
      %c7_818 = arith.constant 7 : index
      %c9_819 = arith.constant 9 : index
      %1559 = memref.load %arg4[%c7_818, %c9_819] : memref<16x27xf32, #tpu.memory_space<smem>>
      %1560 = vector.broadcast %1559 : f32 to vector<8x384xf32>
      %1561 = arith.mulf %1560, %1554 : vector<8x384xf32>
      %1562 = arith.addf %1544, %1561 : vector<8x384xf32>
      %c11_820 = arith.constant 11 : index
      %c9_821 = arith.constant 9 : index
      %1563 = memref.load %arg4[%c11_820, %c9_821] : memref<16x27xf32, #tpu.memory_space<smem>>
      %1564 = vector.broadcast %1563 : f32 to vector<8x384xf32>
      %1565 = arith.mulf %1564, %1554 : vector<8x384xf32>
      %1566 = arith.addf %1548, %1565 : vector<8x384xf32>
      %c15_822 = arith.constant 15 : index
      %c9_823 = arith.constant 9 : index
      %1567 = memref.load %arg4[%c15_822, %c9_823] : memref<16x27xf32, #tpu.memory_space<smem>>
      %1568 = vector.broadcast %1567 : f32 to vector<8x384xf32>
      %1569 = arith.mulf %1568, %1554 : vector<8x384xf32>
      %1570 = arith.addf %1552, %1569 : vector<8x384xf32>
      %c383_i32_824 = arith.constant 383 : i32
      %1571 = tpu.dynamic_rotate %1554 by %c383_i32_824 dim 1 : vector<8x384xf32>, i32 -> vector<8x384xf32>
      %c3_825 = arith.constant 3 : index
      %c10_826 = arith.constant 10 : index
      %1572 = memref.load %arg4[%c3_825, %c10_826] : memref<16x27xf32, #tpu.memory_space<smem>>
      %1573 = vector.broadcast %1572 : f32 to vector<8x384xf32>
      %1574 = arith.mulf %1573, %1571 : vector<8x384xf32>
      %1575 = arith.addf %1558, %1574 : vector<8x384xf32>
      %c7_827 = arith.constant 7 : index
      %c10_828 = arith.constant 10 : index
      %1576 = memref.load %arg4[%c7_827, %c10_828] : memref<16x27xf32, #tpu.memory_space<smem>>
      %1577 = vector.broadcast %1576 : f32 to vector<8x384xf32>
      %1578 = arith.mulf %1577, %1571 : vector<8x384xf32>
      %1579 = arith.addf %1562, %1578 : vector<8x384xf32>
      %c11_829 = arith.constant 11 : index
      %c10_830 = arith.constant 10 : index
      %1580 = memref.load %arg4[%c11_829, %c10_830] : memref<16x27xf32, #tpu.memory_space<smem>>
      %1581 = vector.broadcast %1580 : f32 to vector<8x384xf32>
      %1582 = arith.mulf %1581, %1571 : vector<8x384xf32>
      %1583 = arith.addf %1566, %1582 : vector<8x384xf32>
      %c15_831 = arith.constant 15 : index
      %c10_832 = arith.constant 10 : index
      %1584 = memref.load %arg4[%c15_831, %c10_832] : memref<16x27xf32, #tpu.memory_space<smem>>
      %1585 = vector.broadcast %1584 : f32 to vector<8x384xf32>
      %1586 = arith.mulf %1585, %1571 : vector<8x384xf32>
      %1587 = arith.addf %1570, %1586 : vector<8x384xf32>
      %c382_i32_833 = arith.constant 382 : i32
      %1588 = tpu.dynamic_rotate %1554 by %c382_i32_833 dim 1 : vector<8x384xf32>, i32 -> vector<8x384xf32>
      %c3_834 = arith.constant 3 : index
      %c11_835 = arith.constant 11 : index
      %1589 = memref.load %arg4[%c3_834, %c11_835] : memref<16x27xf32, #tpu.memory_space<smem>>
      %1590 = vector.broadcast %1589 : f32 to vector<8x384xf32>
      %1591 = arith.mulf %1590, %1588 : vector<8x384xf32>
      %1592 = arith.addf %1575, %1591 : vector<8x384xf32>
      %c7_836 = arith.constant 7 : index
      %c11_837 = arith.constant 11 : index
      %1593 = memref.load %arg4[%c7_836, %c11_837] : memref<16x27xf32, #tpu.memory_space<smem>>
      %1594 = vector.broadcast %1593 : f32 to vector<8x384xf32>
      %1595 = arith.mulf %1594, %1588 : vector<8x384xf32>
      %1596 = arith.addf %1579, %1595 : vector<8x384xf32>
      %c11_838 = arith.constant 11 : index
      %c11_839 = arith.constant 11 : index
      %1597 = memref.load %arg4[%c11_838, %c11_839] : memref<16x27xf32, #tpu.memory_space<smem>>
      %1598 = vector.broadcast %1597 : f32 to vector<8x384xf32>
      %1599 = arith.mulf %1598, %1588 : vector<8x384xf32>
      %1600 = arith.addf %1583, %1599 : vector<8x384xf32>
      %c15_840 = arith.constant 15 : index
      %c11_841 = arith.constant 11 : index
      %1601 = memref.load %arg4[%c15_840, %c11_841] : memref<16x27xf32, #tpu.memory_space<smem>>
      %1602 = vector.broadcast %1601 : f32 to vector<8x384xf32>
      %1603 = arith.mulf %1602, %1588 : vector<8x384xf32>
      %1604 = arith.addf %1587, %1603 : vector<8x384xf32>
      %c366_i32_842 = arith.constant 366 : i32
      %1605 = tpu.dynamic_rotate %1554 by %c366_i32_842 dim 1 : vector<8x384xf32>, i32 -> vector<8x384xf32>
      %c3_843 = arith.constant 3 : index
      %c12_844 = arith.constant 12 : index
      %1606 = memref.load %arg4[%c3_843, %c12_844] : memref<16x27xf32, #tpu.memory_space<smem>>
      %1607 = vector.broadcast %1606 : f32 to vector<8x384xf32>
      %1608 = arith.mulf %1607, %1605 : vector<8x384xf32>
      %1609 = arith.addf %1592, %1608 : vector<8x384xf32>
      %c7_845 = arith.constant 7 : index
      %c12_846 = arith.constant 12 : index
      %1610 = memref.load %arg4[%c7_845, %c12_846] : memref<16x27xf32, #tpu.memory_space<smem>>
      %1611 = vector.broadcast %1610 : f32 to vector<8x384xf32>
      %1612 = arith.mulf %1611, %1605 : vector<8x384xf32>
      %1613 = arith.addf %1596, %1612 : vector<8x384xf32>
      %c11_847 = arith.constant 11 : index
      %c12_848 = arith.constant 12 : index
      %1614 = memref.load %arg4[%c11_847, %c12_848] : memref<16x27xf32, #tpu.memory_space<smem>>
      %1615 = vector.broadcast %1614 : f32 to vector<8x384xf32>
      %1616 = arith.mulf %1615, %1605 : vector<8x384xf32>
      %1617 = arith.addf %1600, %1616 : vector<8x384xf32>
      %c15_849 = arith.constant 15 : index
      %c12_850 = arith.constant 12 : index
      %1618 = memref.load %arg4[%c15_849, %c12_850] : memref<16x27xf32, #tpu.memory_space<smem>>
      %1619 = vector.broadcast %1618 : f32 to vector<8x384xf32>
      %1620 = arith.mulf %1619, %1605 : vector<8x384xf32>
      %1621 = arith.addf %1604, %1620 : vector<8x384xf32>
      %c365_i32_851 = arith.constant 365 : i32
      %1622 = tpu.dynamic_rotate %1554 by %c365_i32_851 dim 1 : vector<8x384xf32>, i32 -> vector<8x384xf32>
      %c3_852 = arith.constant 3 : index
      %c13_853 = arith.constant 13 : index
      %1623 = memref.load %arg4[%c3_852, %c13_853] : memref<16x27xf32, #tpu.memory_space<smem>>
      %1624 = vector.broadcast %1623 : f32 to vector<8x384xf32>
      %1625 = arith.mulf %1624, %1622 : vector<8x384xf32>
      %1626 = arith.addf %1609, %1625 : vector<8x384xf32>
      %c7_854 = arith.constant 7 : index
      %c13_855 = arith.constant 13 : index
      %1627 = memref.load %arg4[%c7_854, %c13_855] : memref<16x27xf32, #tpu.memory_space<smem>>
      %1628 = vector.broadcast %1627 : f32 to vector<8x384xf32>
      %1629 = arith.mulf %1628, %1622 : vector<8x384xf32>
      %1630 = arith.addf %1613, %1629 : vector<8x384xf32>
      %c11_856 = arith.constant 11 : index
      %c13_857 = arith.constant 13 : index
      %1631 = memref.load %arg4[%c11_856, %c13_857] : memref<16x27xf32, #tpu.memory_space<smem>>
      %1632 = vector.broadcast %1631 : f32 to vector<8x384xf32>
      %1633 = arith.mulf %1632, %1622 : vector<8x384xf32>
      %1634 = arith.addf %1617, %1633 : vector<8x384xf32>
      %c15_858 = arith.constant 15 : index
      %c13_859 = arith.constant 13 : index
      %1635 = memref.load %arg4[%c15_858, %c13_859] : memref<16x27xf32, #tpu.memory_space<smem>>
      %1636 = vector.broadcast %1635 : f32 to vector<8x384xf32>
      %1637 = arith.mulf %1636, %1622 : vector<8x384xf32>
      %1638 = arith.addf %1621, %1637 : vector<8x384xf32>
      %c364_i32_860 = arith.constant 364 : i32
      %1639 = tpu.dynamic_rotate %1554 by %c364_i32_860 dim 1 : vector<8x384xf32>, i32 -> vector<8x384xf32>
      %c3_861 = arith.constant 3 : index
      %c14_862 = arith.constant 14 : index
      %1640 = memref.load %arg4[%c3_861, %c14_862] : memref<16x27xf32, #tpu.memory_space<smem>>
      %1641 = vector.broadcast %1640 : f32 to vector<8x384xf32>
      %1642 = arith.mulf %1641, %1639 : vector<8x384xf32>
      %1643 = arith.addf %1626, %1642 : vector<8x384xf32>
      %c7_863 = arith.constant 7 : index
      %c14_864 = arith.constant 14 : index
      %1644 = memref.load %arg4[%c7_863, %c14_864] : memref<16x27xf32, #tpu.memory_space<smem>>
      %1645 = vector.broadcast %1644 : f32 to vector<8x384xf32>
      %1646 = arith.mulf %1645, %1639 : vector<8x384xf32>
      %1647 = arith.addf %1630, %1646 : vector<8x384xf32>
      %c11_865 = arith.constant 11 : index
      %c14_866 = arith.constant 14 : index
      %1648 = memref.load %arg4[%c11_865, %c14_866] : memref<16x27xf32, #tpu.memory_space<smem>>
      %1649 = vector.broadcast %1648 : f32 to vector<8x384xf32>
      %1650 = arith.mulf %1649, %1639 : vector<8x384xf32>
      %1651 = arith.addf %1634, %1650 : vector<8x384xf32>
      %c15_867 = arith.constant 15 : index
      %c14_868 = arith.constant 14 : index
      %1652 = memref.load %arg4[%c15_867, %c14_868] : memref<16x27xf32, #tpu.memory_space<smem>>
      %1653 = vector.broadcast %1652 : f32 to vector<8x384xf32>
      %1654 = arith.mulf %1653, %1639 : vector<8x384xf32>
      %1655 = arith.addf %1638, %1654 : vector<8x384xf32>
      %c348_i32_869 = arith.constant 348 : i32
      %1656 = tpu.dynamic_rotate %1554 by %c348_i32_869 dim 1 : vector<8x384xf32>, i32 -> vector<8x384xf32>
      %c3_870 = arith.constant 3 : index
      %c15_871 = arith.constant 15 : index
      %1657 = memref.load %arg4[%c3_870, %c15_871] : memref<16x27xf32, #tpu.memory_space<smem>>
      %1658 = vector.broadcast %1657 : f32 to vector<8x384xf32>
      %1659 = arith.mulf %1658, %1656 : vector<8x384xf32>
      %1660 = arith.addf %1643, %1659 : vector<8x384xf32>
      %c7_872 = arith.constant 7 : index
      %c15_873 = arith.constant 15 : index
      %1661 = memref.load %arg4[%c7_872, %c15_873] : memref<16x27xf32, #tpu.memory_space<smem>>
      %1662 = vector.broadcast %1661 : f32 to vector<8x384xf32>
      %1663 = arith.mulf %1662, %1656 : vector<8x384xf32>
      %1664 = arith.addf %1647, %1663 : vector<8x384xf32>
      %c11_874 = arith.constant 11 : index
      %c15_875 = arith.constant 15 : index
      %1665 = memref.load %arg4[%c11_874, %c15_875] : memref<16x27xf32, #tpu.memory_space<smem>>
      %1666 = vector.broadcast %1665 : f32 to vector<8x384xf32>
      %1667 = arith.mulf %1666, %1656 : vector<8x384xf32>
      %1668 = arith.addf %1651, %1667 : vector<8x384xf32>
      %c15_876 = arith.constant 15 : index
      %c15_877 = arith.constant 15 : index
      %1669 = memref.load %arg4[%c15_876, %c15_877] : memref<16x27xf32, #tpu.memory_space<smem>>
      %1670 = vector.broadcast %1669 : f32 to vector<8x384xf32>
      %1671 = arith.mulf %1670, %1656 : vector<8x384xf32>
      %1672 = arith.addf %1655, %1671 : vector<8x384xf32>
      %c347_i32_878 = arith.constant 347 : i32
      %1673 = tpu.dynamic_rotate %1554 by %c347_i32_878 dim 1 : vector<8x384xf32>, i32 -> vector<8x384xf32>
      %c3_879 = arith.constant 3 : index
      %c16_880 = arith.constant 16 : index
      %1674 = memref.load %arg4[%c3_879, %c16_880] : memref<16x27xf32, #tpu.memory_space<smem>>
      %1675 = vector.broadcast %1674 : f32 to vector<8x384xf32>
      %1676 = arith.mulf %1675, %1673 : vector<8x384xf32>
      %1677 = arith.addf %1660, %1676 : vector<8x384xf32>
      %c7_881 = arith.constant 7 : index
      %c16_882 = arith.constant 16 : index
      %1678 = memref.load %arg4[%c7_881, %c16_882] : memref<16x27xf32, #tpu.memory_space<smem>>
      %1679 = vector.broadcast %1678 : f32 to vector<8x384xf32>
      %1680 = arith.mulf %1679, %1673 : vector<8x384xf32>
      %1681 = arith.addf %1664, %1680 : vector<8x384xf32>
      %c11_883 = arith.constant 11 : index
      %c16_884 = arith.constant 16 : index
      %1682 = memref.load %arg4[%c11_883, %c16_884] : memref<16x27xf32, #tpu.memory_space<smem>>
      %1683 = vector.broadcast %1682 : f32 to vector<8x384xf32>
      %1684 = arith.mulf %1683, %1673 : vector<8x384xf32>
      %1685 = arith.addf %1668, %1684 : vector<8x384xf32>
      %c15_885 = arith.constant 15 : index
      %c16_886 = arith.constant 16 : index
      %1686 = memref.load %arg4[%c15_885, %c16_886] : memref<16x27xf32, #tpu.memory_space<smem>>
      %1687 = vector.broadcast %1686 : f32 to vector<8x384xf32>
      %1688 = arith.mulf %1687, %1673 : vector<8x384xf32>
      %1689 = arith.addf %1672, %1688 : vector<8x384xf32>
      %c346_i32_887 = arith.constant 346 : i32
      %1690 = tpu.dynamic_rotate %1554 by %c346_i32_887 dim 1 : vector<8x384xf32>, i32 -> vector<8x384xf32>
      %c3_888 = arith.constant 3 : index
      %c17_889 = arith.constant 17 : index
      %1691 = memref.load %arg4[%c3_888, %c17_889] : memref<16x27xf32, #tpu.memory_space<smem>>
      %1692 = vector.broadcast %1691 : f32 to vector<8x384xf32>
      %1693 = arith.mulf %1692, %1690 : vector<8x384xf32>
      %1694 = arith.addf %1677, %1693 : vector<8x384xf32>
      %c7_890 = arith.constant 7 : index
      %c17_891 = arith.constant 17 : index
      %1695 = memref.load %arg4[%c7_890, %c17_891] : memref<16x27xf32, #tpu.memory_space<smem>>
      %1696 = vector.broadcast %1695 : f32 to vector<8x384xf32>
      %1697 = arith.mulf %1696, %1690 : vector<8x384xf32>
      %1698 = arith.addf %1681, %1697 : vector<8x384xf32>
      %c11_892 = arith.constant 11 : index
      %c17_893 = arith.constant 17 : index
      %1699 = memref.load %arg4[%c11_892, %c17_893] : memref<16x27xf32, #tpu.memory_space<smem>>
      %1700 = vector.broadcast %1699 : f32 to vector<8x384xf32>
      %1701 = arith.mulf %1700, %1690 : vector<8x384xf32>
      %1702 = arith.addf %1685, %1701 : vector<8x384xf32>
      %c15_894 = arith.constant 15 : index
      %c17_895 = arith.constant 17 : index
      %1703 = memref.load %arg4[%c15_894, %c17_895] : memref<16x27xf32, #tpu.memory_space<smem>>
      %1704 = vector.broadcast %1703 : f32 to vector<8x384xf32>
      %1705 = arith.mulf %1704, %1690 : vector<8x384xf32>
      %1706 = arith.addf %1689, %1705 : vector<8x384xf32>
      %c0_896 = arith.constant 0 : index
      %c3_897 = arith.constant 3 : index
      %c2_898 = arith.constant 2 : index
      %c0_899 = arith.constant 0 : index
      %1707 = vector.load %arg2[%c0_896, %c3_897, %c2_898, %c0_899] : memref<1x4x10x384xf32, #tpu.memory_space<vmem>>, vector<1x1x8x384xf32>
      %1708 = vector.shape_cast %1707 : vector<1x1x8x384xf32> to vector<8x384xf32>
      %c3_900 = arith.constant 3 : index
      %c18_901 = arith.constant 18 : index
      %1709 = memref.load %arg4[%c3_900, %c18_901] : memref<16x27xf32, #tpu.memory_space<smem>>
      %1710 = vector.broadcast %1709 : f32 to vector<8x384xf32>
      %1711 = arith.mulf %1710, %1708 : vector<8x384xf32>
      %1712 = arith.addf %1694, %1711 : vector<8x384xf32>
      %c7_902 = arith.constant 7 : index
      %c18_903 = arith.constant 18 : index
      %1713 = memref.load %arg4[%c7_902, %c18_903] : memref<16x27xf32, #tpu.memory_space<smem>>
      %1714 = vector.broadcast %1713 : f32 to vector<8x384xf32>
      %1715 = arith.mulf %1714, %1708 : vector<8x384xf32>
      %1716 = arith.addf %1698, %1715 : vector<8x384xf32>
      %c11_904 = arith.constant 11 : index
      %c18_905 = arith.constant 18 : index
      %1717 = memref.load %arg4[%c11_904, %c18_905] : memref<16x27xf32, #tpu.memory_space<smem>>
      %1718 = vector.broadcast %1717 : f32 to vector<8x384xf32>
      %1719 = arith.mulf %1718, %1708 : vector<8x384xf32>
      %1720 = arith.addf %1702, %1719 : vector<8x384xf32>
      %c15_906 = arith.constant 15 : index
      %c18_907 = arith.constant 18 : index
      %1721 = memref.load %arg4[%c15_906, %c18_907] : memref<16x27xf32, #tpu.memory_space<smem>>
      %1722 = vector.broadcast %1721 : f32 to vector<8x384xf32>
      %1723 = arith.mulf %1722, %1708 : vector<8x384xf32>
      %1724 = arith.addf %1706, %1723 : vector<8x384xf32>
      %c383_i32_908 = arith.constant 383 : i32
      %1725 = tpu.dynamic_rotate %1708 by %c383_i32_908 dim 1 : vector<8x384xf32>, i32 -> vector<8x384xf32>
      %c3_909 = arith.constant 3 : index
      %c19_910 = arith.constant 19 : index
      %1726 = memref.load %arg4[%c3_909, %c19_910] : memref<16x27xf32, #tpu.memory_space<smem>>
      %1727 = vector.broadcast %1726 : f32 to vector<8x384xf32>
      %1728 = arith.mulf %1727, %1725 : vector<8x384xf32>
      %1729 = arith.addf %1712, %1728 : vector<8x384xf32>
      %c7_911 = arith.constant 7 : index
      %c19_912 = arith.constant 19 : index
      %1730 = memref.load %arg4[%c7_911, %c19_912] : memref<16x27xf32, #tpu.memory_space<smem>>
      %1731 = vector.broadcast %1730 : f32 to vector<8x384xf32>
      %1732 = arith.mulf %1731, %1725 : vector<8x384xf32>
      %1733 = arith.addf %1716, %1732 : vector<8x384xf32>
      %c11_913 = arith.constant 11 : index
      %c19_914 = arith.constant 19 : index
      %1734 = memref.load %arg4[%c11_913, %c19_914] : memref<16x27xf32, #tpu.memory_space<smem>>
      %1735 = vector.broadcast %1734 : f32 to vector<8x384xf32>
      %1736 = arith.mulf %1735, %1725 : vector<8x384xf32>
      %1737 = arith.addf %1720, %1736 : vector<8x384xf32>
      %c15_915 = arith.constant 15 : index
      %c19_916 = arith.constant 19 : index
      %1738 = memref.load %arg4[%c15_915, %c19_916] : memref<16x27xf32, #tpu.memory_space<smem>>
      %1739 = vector.broadcast %1738 : f32 to vector<8x384xf32>
      %1740 = arith.mulf %1739, %1725 : vector<8x384xf32>
      %1741 = arith.addf %1724, %1740 : vector<8x384xf32>
      %c382_i32_917 = arith.constant 382 : i32
      %1742 = tpu.dynamic_rotate %1708 by %c382_i32_917 dim 1 : vector<8x384xf32>, i32 -> vector<8x384xf32>
      %c3_918 = arith.constant 3 : index
      %c20_919 = arith.constant 20 : index
      %1743 = memref.load %arg4[%c3_918, %c20_919] : memref<16x27xf32, #tpu.memory_space<smem>>
      %1744 = vector.broadcast %1743 : f32 to vector<8x384xf32>
      %1745 = arith.mulf %1744, %1742 : vector<8x384xf32>
      %1746 = arith.addf %1729, %1745 : vector<8x384xf32>
      %c7_920 = arith.constant 7 : index
      %c20_921 = arith.constant 20 : index
      %1747 = memref.load %arg4[%c7_920, %c20_921] : memref<16x27xf32, #tpu.memory_space<smem>>
      %1748 = vector.broadcast %1747 : f32 to vector<8x384xf32>
      %1749 = arith.mulf %1748, %1742 : vector<8x384xf32>
      %1750 = arith.addf %1733, %1749 : vector<8x384xf32>
      %c11_922 = arith.constant 11 : index
      %c20_923 = arith.constant 20 : index
      %1751 = memref.load %arg4[%c11_922, %c20_923] : memref<16x27xf32, #tpu.memory_space<smem>>
      %1752 = vector.broadcast %1751 : f32 to vector<8x384xf32>
      %1753 = arith.mulf %1752, %1742 : vector<8x384xf32>
      %1754 = arith.addf %1737, %1753 : vector<8x384xf32>
      %c15_924 = arith.constant 15 : index
      %c20_925 = arith.constant 20 : index
      %1755 = memref.load %arg4[%c15_924, %c20_925] : memref<16x27xf32, #tpu.memory_space<smem>>
      %1756 = vector.broadcast %1755 : f32 to vector<8x384xf32>
      %1757 = arith.mulf %1756, %1742 : vector<8x384xf32>
      %1758 = arith.addf %1741, %1757 : vector<8x384xf32>
      %c366_i32_926 = arith.constant 366 : i32
      %1759 = tpu.dynamic_rotate %1708 by %c366_i32_926 dim 1 : vector<8x384xf32>, i32 -> vector<8x384xf32>
      %c3_927 = arith.constant 3 : index
      %c21_928 = arith.constant 21 : index
      %1760 = memref.load %arg4[%c3_927, %c21_928] : memref<16x27xf32, #tpu.memory_space<smem>>
      %1761 = vector.broadcast %1760 : f32 to vector<8x384xf32>
      %1762 = arith.mulf %1761, %1759 : vector<8x384xf32>
      %1763 = arith.addf %1746, %1762 : vector<8x384xf32>
      %c7_929 = arith.constant 7 : index
      %c21_930 = arith.constant 21 : index
      %1764 = memref.load %arg4[%c7_929, %c21_930] : memref<16x27xf32, #tpu.memory_space<smem>>
      %1765 = vector.broadcast %1764 : f32 to vector<8x384xf32>
      %1766 = arith.mulf %1765, %1759 : vector<8x384xf32>
      %1767 = arith.addf %1750, %1766 : vector<8x384xf32>
      %c11_931 = arith.constant 11 : index
      %c21_932 = arith.constant 21 : index
      %1768 = memref.load %arg4[%c11_931, %c21_932] : memref<16x27xf32, #tpu.memory_space<smem>>
      %1769 = vector.broadcast %1768 : f32 to vector<8x384xf32>
      %1770 = arith.mulf %1769, %1759 : vector<8x384xf32>
      %1771 = arith.addf %1754, %1770 : vector<8x384xf32>
      %c15_933 = arith.constant 15 : index
      %c21_934 = arith.constant 21 : index
      %1772 = memref.load %arg4[%c15_933, %c21_934] : memref<16x27xf32, #tpu.memory_space<smem>>
      %1773 = vector.broadcast %1772 : f32 to vector<8x384xf32>
      %1774 = arith.mulf %1773, %1759 : vector<8x384xf32>
      %1775 = arith.addf %1758, %1774 : vector<8x384xf32>
      %c365_i32_935 = arith.constant 365 : i32
      %1776 = tpu.dynamic_rotate %1708 by %c365_i32_935 dim 1 : vector<8x384xf32>, i32 -> vector<8x384xf32>
      %c3_936 = arith.constant 3 : index
      %c22_937 = arith.constant 22 : index
      %1777 = memref.load %arg4[%c3_936, %c22_937] : memref<16x27xf32, #tpu.memory_space<smem>>
      %1778 = vector.broadcast %1777 : f32 to vector<8x384xf32>
      %1779 = arith.mulf %1778, %1776 : vector<8x384xf32>
      %1780 = arith.addf %1763, %1779 : vector<8x384xf32>
      %c7_938 = arith.constant 7 : index
      %c22_939 = arith.constant 22 : index
      %1781 = memref.load %arg4[%c7_938, %c22_939] : memref<16x27xf32, #tpu.memory_space<smem>>
      %1782 = vector.broadcast %1781 : f32 to vector<8x384xf32>
      %1783 = arith.mulf %1782, %1776 : vector<8x384xf32>
      %1784 = arith.addf %1767, %1783 : vector<8x384xf32>
      %c11_940 = arith.constant 11 : index
      %c22_941 = arith.constant 22 : index
      %1785 = memref.load %arg4[%c11_940, %c22_941] : memref<16x27xf32, #tpu.memory_space<smem>>
      %1786 = vector.broadcast %1785 : f32 to vector<8x384xf32>
      %1787 = arith.mulf %1786, %1776 : vector<8x384xf32>
      %1788 = arith.addf %1771, %1787 : vector<8x384xf32>
      %c15_942 = arith.constant 15 : index
      %c22_943 = arith.constant 22 : index
      %1789 = memref.load %arg4[%c15_942, %c22_943] : memref<16x27xf32, #tpu.memory_space<smem>>
      %1790 = vector.broadcast %1789 : f32 to vector<8x384xf32>
      %1791 = arith.mulf %1790, %1776 : vector<8x384xf32>
      %1792 = arith.addf %1775, %1791 : vector<8x384xf32>
      %c364_i32_944 = arith.constant 364 : i32
      %1793 = tpu.dynamic_rotate %1708 by %c364_i32_944 dim 1 : vector<8x384xf32>, i32 -> vector<8x384xf32>
      %c3_945 = arith.constant 3 : index
      %c23_946 = arith.constant 23 : index
      %1794 = memref.load %arg4[%c3_945, %c23_946] : memref<16x27xf32, #tpu.memory_space<smem>>
      %1795 = vector.broadcast %1794 : f32 to vector<8x384xf32>
      %1796 = arith.mulf %1795, %1793 : vector<8x384xf32>
      %1797 = arith.addf %1780, %1796 : vector<8x384xf32>
      %c7_947 = arith.constant 7 : index
      %c23_948 = arith.constant 23 : index
      %1798 = memref.load %arg4[%c7_947, %c23_948] : memref<16x27xf32, #tpu.memory_space<smem>>
      %1799 = vector.broadcast %1798 : f32 to vector<8x384xf32>
      %1800 = arith.mulf %1799, %1793 : vector<8x384xf32>
      %1801 = arith.addf %1784, %1800 : vector<8x384xf32>
      %c11_949 = arith.constant 11 : index
      %c23_950 = arith.constant 23 : index
      %1802 = memref.load %arg4[%c11_949, %c23_950] : memref<16x27xf32, #tpu.memory_space<smem>>
      %1803 = vector.broadcast %1802 : f32 to vector<8x384xf32>
      %1804 = arith.mulf %1803, %1793 : vector<8x384xf32>
      %1805 = arith.addf %1788, %1804 : vector<8x384xf32>
      %c15_951 = arith.constant 15 : index
      %c23_952 = arith.constant 23 : index
      %1806 = memref.load %arg4[%c15_951, %c23_952] : memref<16x27xf32, #tpu.memory_space<smem>>
      %1807 = vector.broadcast %1806 : f32 to vector<8x384xf32>
      %1808 = arith.mulf %1807, %1793 : vector<8x384xf32>
      %1809 = arith.addf %1792, %1808 : vector<8x384xf32>
      %c348_i32_953 = arith.constant 348 : i32
      %1810 = tpu.dynamic_rotate %1708 by %c348_i32_953 dim 1 : vector<8x384xf32>, i32 -> vector<8x384xf32>
      %c3_954 = arith.constant 3 : index
      %c24_955 = arith.constant 24 : index
      %1811 = memref.load %arg4[%c3_954, %c24_955] : memref<16x27xf32, #tpu.memory_space<smem>>
      %1812 = vector.broadcast %1811 : f32 to vector<8x384xf32>
      %1813 = arith.mulf %1812, %1810 : vector<8x384xf32>
      %1814 = arith.addf %1797, %1813 : vector<8x384xf32>
      %c7_956 = arith.constant 7 : index
      %c24_957 = arith.constant 24 : index
      %1815 = memref.load %arg4[%c7_956, %c24_957] : memref<16x27xf32, #tpu.memory_space<smem>>
      %1816 = vector.broadcast %1815 : f32 to vector<8x384xf32>
      %1817 = arith.mulf %1816, %1810 : vector<8x384xf32>
      %1818 = arith.addf %1801, %1817 : vector<8x384xf32>
      %c11_958 = arith.constant 11 : index
      %c24_959 = arith.constant 24 : index
      %1819 = memref.load %arg4[%c11_958, %c24_959] : memref<16x27xf32, #tpu.memory_space<smem>>
      %1820 = vector.broadcast %1819 : f32 to vector<8x384xf32>
      %1821 = arith.mulf %1820, %1810 : vector<8x384xf32>
      %1822 = arith.addf %1805, %1821 : vector<8x384xf32>
      %c15_960 = arith.constant 15 : index
      %c24_961 = arith.constant 24 : index
      %1823 = memref.load %arg4[%c15_960, %c24_961] : memref<16x27xf32, #tpu.memory_space<smem>>
      %1824 = vector.broadcast %1823 : f32 to vector<8x384xf32>
      %1825 = arith.mulf %1824, %1810 : vector<8x384xf32>
      %1826 = arith.addf %1809, %1825 : vector<8x384xf32>
      %c347_i32_962 = arith.constant 347 : i32
      %1827 = tpu.dynamic_rotate %1708 by %c347_i32_962 dim 1 : vector<8x384xf32>, i32 -> vector<8x384xf32>
      %c3_963 = arith.constant 3 : index
      %c25_964 = arith.constant 25 : index
      %1828 = memref.load %arg4[%c3_963, %c25_964] : memref<16x27xf32, #tpu.memory_space<smem>>
      %1829 = vector.broadcast %1828 : f32 to vector<8x384xf32>
      %1830 = arith.mulf %1829, %1827 : vector<8x384xf32>
      %1831 = arith.addf %1814, %1830 : vector<8x384xf32>
      %c7_965 = arith.constant 7 : index
      %c25_966 = arith.constant 25 : index
      %1832 = memref.load %arg4[%c7_965, %c25_966] : memref<16x27xf32, #tpu.memory_space<smem>>
      %1833 = vector.broadcast %1832 : f32 to vector<8x384xf32>
      %1834 = arith.mulf %1833, %1827 : vector<8x384xf32>
      %1835 = arith.addf %1818, %1834 : vector<8x384xf32>
      %c11_967 = arith.constant 11 : index
      %c25_968 = arith.constant 25 : index
      %1836 = memref.load %arg4[%c11_967, %c25_968] : memref<16x27xf32, #tpu.memory_space<smem>>
      %1837 = vector.broadcast %1836 : f32 to vector<8x384xf32>
      %1838 = arith.mulf %1837, %1827 : vector<8x384xf32>
      %1839 = arith.addf %1822, %1838 : vector<8x384xf32>
      %c15_969 = arith.constant 15 : index
      %c25_970 = arith.constant 25 : index
      %1840 = memref.load %arg4[%c15_969, %c25_970] : memref<16x27xf32, #tpu.memory_space<smem>>
      %1841 = vector.broadcast %1840 : f32 to vector<8x384xf32>
      %1842 = arith.mulf %1841, %1827 : vector<8x384xf32>
      %1843 = arith.addf %1826, %1842 : vector<8x384xf32>
      %c346_i32_971 = arith.constant 346 : i32
      %1844 = tpu.dynamic_rotate %1708 by %c346_i32_971 dim 1 : vector<8x384xf32>, i32 -> vector<8x384xf32>
      %c3_972 = arith.constant 3 : index
      %c26_973 = arith.constant 26 : index
      %1845 = memref.load %arg4[%c3_972, %c26_973] : memref<16x27xf32, #tpu.memory_space<smem>>
      %1846 = vector.broadcast %1845 : f32 to vector<8x384xf32>
      %1847 = arith.mulf %1846, %1844 : vector<8x384xf32>
      %1848 = arith.addf %1831, %1847 : vector<8x384xf32>
      %c7_974 = arith.constant 7 : index
      %c26_975 = arith.constant 26 : index
      %1849 = memref.load %arg4[%c7_974, %c26_975] : memref<16x27xf32, #tpu.memory_space<smem>>
      %1850 = vector.broadcast %1849 : f32 to vector<8x384xf32>
      %1851 = arith.mulf %1850, %1844 : vector<8x384xf32>
      %1852 = arith.addf %1835, %1851 : vector<8x384xf32>
      %c11_976 = arith.constant 11 : index
      %c26_977 = arith.constant 26 : index
      %1853 = memref.load %arg4[%c11_976, %c26_977] : memref<16x27xf32, #tpu.memory_space<smem>>
      %1854 = vector.broadcast %1853 : f32 to vector<8x384xf32>
      %1855 = arith.mulf %1854, %1844 : vector<8x384xf32>
      %1856 = arith.addf %1839, %1855 : vector<8x384xf32>
      %c15_978 = arith.constant 15 : index
      %c26_979 = arith.constant 26 : index
      %1857 = memref.load %arg4[%c15_978, %c26_979] : memref<16x27xf32, #tpu.memory_space<smem>>
      %1858 = vector.broadcast %1857 : f32 to vector<8x384xf32>
      %1859 = arith.mulf %1858, %1844 : vector<8x384xf32>
      %1860 = arith.addf %1843, %1859 : vector<8x384xf32>
      %1861 = vector.extract_strided_slice %1848 {offsets = [0, 0], sizes = [8, 16], strides = [1, 1]} : vector<8x384xf32> to vector<8x16xf32>
      %1862 = vector.extract_strided_slice %1848 {offsets = [0, 18], sizes = [8, 16], strides = [1, 1]} : vector<8x384xf32> to vector<8x16xf32>
      %1863 = vector.extract_strided_slice %1848 {offsets = [0, 36], sizes = [8, 16], strides = [1, 1]} : vector<8x384xf32> to vector<8x16xf32>
      %1864 = vector.extract_strided_slice %1848 {offsets = [0, 54], sizes = [8, 16], strides = [1, 1]} : vector<8x384xf32> to vector<8x16xf32>
      %1865 = vector.extract_strided_slice %1848 {offsets = [0, 72], sizes = [8, 16], strides = [1, 1]} : vector<8x384xf32> to vector<8x16xf32>
      %1866 = vector.extract_strided_slice %1848 {offsets = [0, 90], sizes = [8, 16], strides = [1, 1]} : vector<8x384xf32> to vector<8x16xf32>
      %1867 = vector.extract_strided_slice %1848 {offsets = [0, 108], sizes = [8, 16], strides = [1, 1]} : vector<8x384xf32> to vector<8x16xf32>
      %1868 = vector.extract_strided_slice %1848 {offsets = [0, 126], sizes = [8, 16], strides = [1, 1]} : vector<8x384xf32> to vector<8x16xf32>
      %1869 = vector.extract_strided_slice %1848 {offsets = [0, 144], sizes = [8, 16], strides = [1, 1]} : vector<8x384xf32> to vector<8x16xf32>
      %1870 = vector.extract_strided_slice %1848 {offsets = [0, 162], sizes = [8, 16], strides = [1, 1]} : vector<8x384xf32> to vector<8x16xf32>
      %1871 = vector.extract_strided_slice %1848 {offsets = [0, 180], sizes = [8, 16], strides = [1, 1]} : vector<8x384xf32> to vector<8x16xf32>
      %1872 = vector.extract_strided_slice %1848 {offsets = [0, 198], sizes = [8, 16], strides = [1, 1]} : vector<8x384xf32> to vector<8x16xf32>
      %1873 = vector.extract_strided_slice %1848 {offsets = [0, 216], sizes = [8, 16], strides = [1, 1]} : vector<8x384xf32> to vector<8x16xf32>
      %1874 = vector.extract_strided_slice %1848 {offsets = [0, 234], sizes = [8, 16], strides = [1, 1]} : vector<8x384xf32> to vector<8x16xf32>
      %1875 = vector.extract_strided_slice %1848 {offsets = [0, 252], sizes = [8, 16], strides = [1, 1]} : vector<8x384xf32> to vector<8x16xf32>
      %1876 = vector.extract_strided_slice %1848 {offsets = [0, 270], sizes = [8, 16], strides = [1, 1]} : vector<8x384xf32> to vector<8x16xf32>
      %1877 = tpu.concatenate %1861, %1862, %1863, %1864, %1865, %1866, %1867, %1868, %1869, %1870, %1871, %1872, %1873, %1874, %1875, %1876 in 1 : vector<8x16xf32>, vector<8x16xf32>, vector<8x16xf32>, vector<8x16xf32>, vector<8x16xf32>, vector<8x16xf32>, vector<8x16xf32>, vector<8x16xf32>, vector<8x16xf32>, vector<8x16xf32>, vector<8x16xf32>, vector<8x16xf32>, vector<8x16xf32>, vector<8x16xf32>, vector<8x16xf32>, vector<8x16xf32> -> vector<8x256xf32>
      %c4_i32 = arith.constant 4 : i32
      %1878 = arith.muli %arg1, %c4_i32 : i32
      %c0_i32_980 = arith.constant 0 : i32
      %1879 = arith.addi %1878, %c0_i32_980 : i32
      %1880 = arith.index_cast %1879 : i32 to index
      %c0_981 = arith.constant 0 : index
      %c0_982 = arith.constant 0 : index
      %1881 = vector.load %arg6[%1880, %c0_981, %c0_982] : memref<8x8x256xf32, #tpu.memory_space<vmem>>, vector<1x8x256xf32>
      %1882 = vector.shape_cast %1881 : vector<1x8x256xf32> to vector<8x256xf32>
      %1883 = vector.shape_cast %1877 : vector<8x256xf32> to vector<1x8x256xf32>
      tpu.vector_store %arg6[%1880, %c0_981, %c0_982], %1883 {strides = array<i32>} : memref<8x8x256xf32, #tpu.memory_space<vmem>>, vector<1x8x256xf32>,
      %1884 = vector.extract_strided_slice %1852 {offsets = [0, 0], sizes = [8, 16], strides = [1, 1]} : vector<8x384xf32> to vector<8x16xf32>
      %1885 = vector.extract_strided_slice %1852 {offsets = [0, 18], sizes = [8, 16], strides = [1, 1]} : vector<8x384xf32> to vector<8x16xf32>
      %1886 = vector.extract_strided_slice %1852 {offsets = [0, 36], sizes = [8, 16], strides = [1, 1]} : vector<8x384xf32> to vector<8x16xf32>
      %1887 = vector.extract_strided_slice %1852 {offsets = [0, 54], sizes = [8, 16], strides = [1, 1]} : vector<8x384xf32> to vector<8x16xf32>
      %1888 = vector.extract_strided_slice %1852 {offsets = [0, 72], sizes = [8, 16], strides = [1, 1]} : vector<8x384xf32> to vector<8x16xf32>
      %1889 = vector.extract_strided_slice %1852 {offsets = [0, 90], sizes = [8, 16], strides = [1, 1]} : vector<8x384xf32> to vector<8x16xf32>
      %1890 = vector.extract_strided_slice %1852 {offsets = [0, 108], sizes = [8, 16], strides = [1, 1]} : vector<8x384xf32> to vector<8x16xf32>
      %1891 = vector.extract_strided_slice %1852 {offsets = [0, 126], sizes = [8, 16], strides = [1, 1]} : vector<8x384xf32> to vector<8x16xf32>
      %1892 = vector.extract_strided_slice %1852 {offsets = [0, 144], sizes = [8, 16], strides = [1, 1]} : vector<8x384xf32> to vector<8x16xf32>
      %1893 = vector.extract_strided_slice %1852 {offsets = [0, 162], sizes = [8, 16], strides = [1, 1]} : vector<8x384xf32> to vector<8x16xf32>
      %1894 = vector.extract_strided_slice %1852 {offsets = [0, 180], sizes = [8, 16], strides = [1, 1]} : vector<8x384xf32> to vector<8x16xf32>
      %1895 = vector.extract_strided_slice %1852 {offsets = [0, 198], sizes = [8, 16], strides = [1, 1]} : vector<8x384xf32> to vector<8x16xf32>
      %1896 = vector.extract_strided_slice %1852 {offsets = [0, 216], sizes = [8, 16], strides = [1, 1]} : vector<8x384xf32> to vector<8x16xf32>
      %1897 = vector.extract_strided_slice %1852 {offsets = [0, 234], sizes = [8, 16], strides = [1, 1]} : vector<8x384xf32> to vector<8x16xf32>
      %1898 = vector.extract_strided_slice %1852 {offsets = [0, 252], sizes = [8, 16], strides = [1, 1]} : vector<8x384xf32> to vector<8x16xf32>
      %1899 = vector.extract_strided_slice %1852 {offsets = [0, 270], sizes = [8, 16], strides = [1, 1]} : vector<8x384xf32> to vector<8x16xf32>
      %1900 = tpu.concatenate %1884, %1885, %1886, %1887, %1888, %1889, %1890, %1891, %1892, %1893, %1894, %1895, %1896, %1897, %1898, %1899 in 1 : vector<8x16xf32>, vector<8x16xf32>, vector<8x16xf32>, vector<8x16xf32>, vector<8x16xf32>, vector<8x16xf32>, vector<8x16xf32>, vector<8x16xf32>, vector<8x16xf32>, vector<8x16xf32>, vector<8x16xf32>, vector<8x16xf32>, vector<8x16xf32>, vector<8x16xf32>, vector<8x16xf32>, vector<8x16xf32> -> vector<8x256xf32>
      %c4_i32_983 = arith.constant 4 : i32
      %1901 = arith.muli %arg1, %c4_i32_983 : i32
      %c1_i32_984 = arith.constant 1 : i32
      %1902 = arith.addi %1901, %c1_i32_984 : i32
      %1903 = arith.index_cast %1902 : i32 to index
      %c0_985 = arith.constant 0 : index
      %c0_986 = arith.constant 0 : index
      %1904 = vector.load %arg6[%1903, %c0_985, %c0_986] : memref<8x8x256xf32, #tpu.memory_space<vmem>>, vector<1x8x256xf32>
      %1905 = vector.shape_cast %1904 : vector<1x8x256xf32> to vector<8x256xf32>
      %1906 = vector.shape_cast %1900 : vector<8x256xf32> to vector<1x8x256xf32>
      tpu.vector_store %arg6[%1903, %c0_985, %c0_986], %1906 {strides = array<i32>} : memref<8x8x256xf32, #tpu.memory_space<vmem>>, vector<1x8x256xf32>,
      %1907 = vector.extract_strided_slice %1856 {offsets = [0, 0], sizes = [8, 16], strides = [1, 1]} : vector<8x384xf32> to vector<8x16xf32>
      %1908 = vector.extract_strided_slice %1856 {offsets = [0, 18], sizes = [8, 16], strides = [1, 1]} : vector<8x384xf32> to vector<8x16xf32>
      %1909 = vector.extract_strided_slice %1856 {offsets = [0, 36], sizes = [8, 16], strides = [1, 1]} : vector<8x384xf32> to vector<8x16xf32>
      %1910 = vector.extract_strided_slice %1856 {offsets = [0, 54], sizes = [8, 16], strides = [1, 1]} : vector<8x384xf32> to vector<8x16xf32>
      %1911 = vector.extract_strided_slice %1856 {offsets = [0, 72], sizes = [8, 16], strides = [1, 1]} : vector<8x384xf32> to vector<8x16xf32>
      %1912 = vector.extract_strided_slice %1856 {offsets = [0, 90], sizes = [8, 16], strides = [1, 1]} : vector<8x384xf32> to vector<8x16xf32>
      %1913 = vector.extract_strided_slice %1856 {offsets = [0, 108], sizes = [8, 16], strides = [1, 1]} : vector<8x384xf32> to vector<8x16xf32>
      %1914 = vector.extract_strided_slice %1856 {offsets = [0, 126], sizes = [8, 16], strides = [1, 1]} : vector<8x384xf32> to vector<8x16xf32>
      %1915 = vector.extract_strided_slice %1856 {offsets = [0, 144], sizes = [8, 16], strides = [1, 1]} : vector<8x384xf32> to vector<8x16xf32>
      %1916 = vector.extract_strided_slice %1856 {offsets = [0, 162], sizes = [8, 16], strides = [1, 1]} : vector<8x384xf32> to vector<8x16xf32>
      %1917 = vector.extract_strided_slice %1856 {offsets = [0, 180], sizes = [8, 16], strides = [1, 1]} : vector<8x384xf32> to vector<8x16xf32>
      %1918 = vector.extract_strided_slice %1856 {offsets = [0, 198], sizes = [8, 16], strides = [1, 1]} : vector<8x384xf32> to vector<8x16xf32>
      %1919 = vector.extract_strided_slice %1856 {offsets = [0, 216], sizes = [8, 16], strides = [1, 1]} : vector<8x384xf32> to vector<8x16xf32>
      %1920 = vector.extract_strided_slice %1856 {offsets = [0, 234], sizes = [8, 16], strides = [1, 1]} : vector<8x384xf32> to vector<8x16xf32>
      %1921 = vector.extract_strided_slice %1856 {offsets = [0, 252], sizes = [8, 16], strides = [1, 1]} : vector<8x384xf32> to vector<8x16xf32>
      %1922 = vector.extract_strided_slice %1856 {offsets = [0, 270], sizes = [8, 16], strides = [1, 1]} : vector<8x384xf32> to vector<8x16xf32>
      %1923 = tpu.concatenate %1907, %1908, %1909, %1910, %1911, %1912, %1913, %1914, %1915, %1916, %1917, %1918, %1919, %1920, %1921, %1922 in 1 : vector<8x16xf32>, vector<8x16xf32>, vector<8x16xf32>, vector<8x16xf32>, vector<8x16xf32>, vector<8x16xf32>, vector<8x16xf32>, vector<8x16xf32>, vector<8x16xf32>, vector<8x16xf32>, vector<8x16xf32>, vector<8x16xf32>, vector<8x16xf32>, vector<8x16xf32>, vector<8x16xf32>, vector<8x16xf32> -> vector<8x256xf32>
      %c4_i32_987 = arith.constant 4 : i32
      %1924 = arith.muli %arg1, %c4_i32_987 : i32
      %c2_i32 = arith.constant 2 : i32
      %1925 = arith.addi %1924, %c2_i32 : i32
      %1926 = arith.index_cast %1925 : i32 to index
      %c0_988 = arith.constant 0 : index
      %c0_989 = arith.constant 0 : index
      %1927 = vector.load %arg6[%1926, %c0_988, %c0_989] : memref<8x8x256xf32, #tpu.memory_space<vmem>>, vector<1x8x256xf32>
      %1928 = vector.shape_cast %1927 : vector<1x8x256xf32> to vector<8x256xf32>
      %1929 = vector.shape_cast %1923 : vector<8x256xf32> to vector<1x8x256xf32>
      tpu.vector_store %arg6[%1926, %c0_988, %c0_989], %1929 {strides = array<i32>} : memref<8x8x256xf32, #tpu.memory_space<vmem>>, vector<1x8x256xf32>,
      %1930 = vector.extract_strided_slice %1860 {offsets = [0, 0], sizes = [8, 16], strides = [1, 1]} : vector<8x384xf32> to vector<8x16xf32>
      %1931 = vector.extract_strided_slice %1860 {offsets = [0, 18], sizes = [8, 16], strides = [1, 1]} : vector<8x384xf32> to vector<8x16xf32>
      %1932 = vector.extract_strided_slice %1860 {offsets = [0, 36], sizes = [8, 16], strides = [1, 1]} : vector<8x384xf32> to vector<8x16xf32>
      %1933 = vector.extract_strided_slice %1860 {offsets = [0, 54], sizes = [8, 16], strides = [1, 1]} : vector<8x384xf32> to vector<8x16xf32>
      %1934 = vector.extract_strided_slice %1860 {offsets = [0, 72], sizes = [8, 16], strides = [1, 1]} : vector<8x384xf32> to vector<8x16xf32>
      %1935 = vector.extract_strided_slice %1860 {offsets = [0, 90], sizes = [8, 16], strides = [1, 1]} : vector<8x384xf32> to vector<8x16xf32>
      %1936 = vector.extract_strided_slice %1860 {offsets = [0, 108], sizes = [8, 16], strides = [1, 1]} : vector<8x384xf32> to vector<8x16xf32>
      %1937 = vector.extract_strided_slice %1860 {offsets = [0, 126], sizes = [8, 16], strides = [1, 1]} : vector<8x384xf32> to vector<8x16xf32>
      %1938 = vector.extract_strided_slice %1860 {offsets = [0, 144], sizes = [8, 16], strides = [1, 1]} : vector<8x384xf32> to vector<8x16xf32>
      %1939 = vector.extract_strided_slice %1860 {offsets = [0, 162], sizes = [8, 16], strides = [1, 1]} : vector<8x384xf32> to vector<8x16xf32>
      %1940 = vector.extract_strided_slice %1860 {offsets = [0, 180], sizes = [8, 16], strides = [1, 1]} : vector<8x384xf32> to vector<8x16xf32>
      %1941 = vector.extract_strided_slice %1860 {offsets = [0, 198], sizes = [8, 16], strides = [1, 1]} : vector<8x384xf32> to vector<8x16xf32>
      %1942 = vector.extract_strided_slice %1860 {offsets = [0, 216], sizes = [8, 16], strides = [1, 1]} : vector<8x384xf32> to vector<8x16xf32>
      %1943 = vector.extract_strided_slice %1860 {offsets = [0, 234], sizes = [8, 16], strides = [1, 1]} : vector<8x384xf32> to vector<8x16xf32>
      %1944 = vector.extract_strided_slice %1860 {offsets = [0, 252], sizes = [8, 16], strides = [1, 1]} : vector<8x384xf32> to vector<8x16xf32>
      %1945 = vector.extract_strided_slice %1860 {offsets = [0, 270], sizes = [8, 16], strides = [1, 1]} : vector<8x384xf32> to vector<8x16xf32>
      %1946 = tpu.concatenate %1930, %1931, %1932, %1933, %1934, %1935, %1936, %1937, %1938, %1939, %1940, %1941, %1942, %1943, %1944, %1945 in 1 : vector<8x16xf32>, vector<8x16xf32>, vector<8x16xf32>, vector<8x16xf32>, vector<8x16xf32>, vector<8x16xf32>, vector<8x16xf32>, vector<8x16xf32>, vector<8x16xf32>, vector<8x16xf32>, vector<8x16xf32>, vector<8x16xf32>, vector<8x16xf32>, vector<8x16xf32>, vector<8x16xf32>, vector<8x16xf32> -> vector<8x256xf32>
      %c4_i32_990 = arith.constant 4 : i32
      %1947 = arith.muli %arg1, %c4_i32_990 : i32
      %c3_i32 = arith.constant 3 : i32
      %1948 = arith.addi %1947, %c3_i32 : i32
      %1949 = arith.index_cast %1948 : i32 to index
      %c0_991 = arith.constant 0 : index
      %c0_992 = arith.constant 0 : index
      %1950 = vector.load %arg6[%1949, %c0_991, %c0_992] : memref<8x8x256xf32, #tpu.memory_space<vmem>>, vector<1x8x256xf32>
      %1951 = vector.shape_cast %1950 : vector<1x8x256xf32> to vector<8x256xf32>
      %1952 = vector.shape_cast %1946 : vector<8x256xf32> to vector<1x8x256xf32>
      tpu.vector_store %arg6[%1949, %c0_991, %c0_992], %1952 {strides = array<i32>} : memref<8x8x256xf32, #tpu.memory_space<vmem>>, vector<1x8x256xf32>,
      %cst_993 = arith.constant dense<0.000000e+00> : vector<256xf32>
      %1953 = vector.multi_reduction <add>, %1877, %cst_993 [0] : vector<8x256xf32> to vector<256xf32>
      %1954 = vector.shape_cast %1953 : vector<256xf32> to vector<1x256xf32>
      %cst_994 = arith.constant dense<0.000000e+00> : vector<256xf32>
      %1955 = vector.multi_reduction <add>, %1900, %cst_994 [0] : vector<8x256xf32> to vector<256xf32>
      %1956 = vector.shape_cast %1955 : vector<256xf32> to vector<1x256xf32>
      %cst_995 = arith.constant dense<0.000000e+00> : vector<256xf32>
      %1957 = vector.multi_reduction <add>, %1923, %cst_995 [0] : vector<8x256xf32> to vector<256xf32>
      %1958 = vector.shape_cast %1957 : vector<256xf32> to vector<1x256xf32>
      %cst_996 = arith.constant dense<0.000000e+00> : vector<256xf32>
      %1959 = vector.multi_reduction <add>, %1946, %cst_996 [0] : vector<8x256xf32> to vector<256xf32>
      %1960 = vector.shape_cast %1959 : vector<256xf32> to vector<1x256xf32>
      %1961 = tpu.concatenate %1954, %1956, %1958, %1960 in 0 : vector<1x256xf32>, vector<1x256xf32>, vector<1x256xf32>, vector<1x256xf32> -> vector<4x256xf32>
      %1962 = arith.mulf %1877, %1877 : vector<8x256xf32>
      %cst_997 = arith.constant dense<0.000000e+00> : vector<256xf32>
      %1963 = vector.multi_reduction <add>, %1962, %cst_997 [0] : vector<8x256xf32> to vector<256xf32>
      %1964 = vector.shape_cast %1963 : vector<256xf32> to vector<1x256xf32>
      %1965 = arith.mulf %1900, %1900 : vector<8x256xf32>
      %cst_998 = arith.constant dense<0.000000e+00> : vector<256xf32>
      %1966 = vector.multi_reduction <add>, %1965, %cst_998 [0] : vector<8x256xf32> to vector<256xf32>
      %1967 = vector.shape_cast %1966 : vector<256xf32> to vector<1x256xf32>
      %1968 = arith.mulf %1923, %1923 : vector<8x256xf32>
      %cst_999 = arith.constant dense<0.000000e+00> : vector<256xf32>
      %1969 = vector.multi_reduction <add>, %1968, %cst_999 [0] : vector<8x256xf32> to vector<256xf32>
      %1970 = vector.shape_cast %1969 : vector<256xf32> to vector<1x256xf32>
      %1971 = arith.mulf %1946, %1946 : vector<8x256xf32>
      %cst_1000 = arith.constant dense<0.000000e+00> : vector<256xf32>
      %1972 = vector.multi_reduction <add>, %1971, %cst_1000 [0] : vector<8x256xf32> to vector<256xf32>
      %1973 = vector.shape_cast %1972 : vector<256xf32> to vector<1x256xf32>
      %1974 = tpu.concatenate %1964, %1967, %1970, %1973 in 0 : vector<1x256xf32>, vector<1x256xf32>, vector<1x256xf32>, vector<1x256xf32> -> vector<4x256xf32>
      %c0_1001 = arith.constant 0 : index
      %c0_1002 = arith.constant 0 : index
      %1975 = vector.load %arg7[%c0_1001, %c0_1002] : memref<4x256xf32, #tpu.memory_space<vmem>>, vector<4x256xf32>
      %1976 = arith.addf %1975, %1961 : vector<4x256xf32>
      %c0_1003 = arith.constant 0 : index
      %c0_1004 = arith.constant 0 : index
      %1977 = vector.load %arg7[%c0_1003, %c0_1004] : memref<4x256xf32, #tpu.memory_space<vmem>>, vector<4x256xf32>
      tpu.vector_store %arg7[%c0_1003, %c0_1004], %1976 {strides = array<i32>} : memref<4x256xf32, #tpu.memory_space<vmem>>, vector<4x256xf32>,
      %c0_1005 = arith.constant 0 : index
      %c0_1006 = arith.constant 0 : index
      %1978 = vector.load %arg8[%c0_1005, %c0_1006] : memref<4x256xf32, #tpu.memory_space<vmem>>, vector<4x256xf32>
      %1979 = arith.addf %1978, %1974 : vector<4x256xf32>
      %c0_1007 = arith.constant 0 : index
      %c0_1008 = arith.constant 0 : index
      %1980 = vector.load %arg8[%c0_1007, %c0_1008] : memref<4x256xf32, #tpu.memory_space<vmem>>, vector<4x256xf32>
      tpu.vector_store %arg8[%c0_1007, %c0_1008], %1979 {strides = array<i32>} : memref<4x256xf32, #tpu.memory_space<vmem>>, vector<4x256xf32>,
    } else {
    }
    %c1_i32 = arith.constant 1 : i32
    %3 = arith.cmpi eq, %arg0, %c1_i32 : i32
    %4 = arith.extui %3 : i1 to i32
    %c0_i32_1 = arith.constant 0 : i32
    %5 = arith.cmpi ne, %4, %c0_i32_1 : i32
    scf.if %5 {
      %c0_i32_2 = arith.constant 0 : i32
      %6 = arith.cmpi eq, %arg1, %c0_i32_2 : i32
      %7 = arith.extui %6 : i1 to i32
      %c0_i32_3 = arith.constant 0 : i32
      %8 = arith.cmpi ne, %7, %c0_i32_3 : i32
      scf.if %8 {
        %c0_64 = arith.constant 0 : index
        %c0_65 = arith.constant 0 : index
        %109 = vector.load %arg7[%c0_64, %c0_65] : memref<4x256xf32, #tpu.memory_space<vmem>>, vector<1x256xf32>
        %110 = vector.shape_cast %109 : vector<1x256xf32> to vector<1x1x256xf32>
        %cst_66 = arith.constant dense<0.000000e+00> : vector<1xf32>
        %111 = vector.multi_reduction <add>, %110, %cst_66 [1, 2] : vector<1x1x256xf32> to vector<1xf32>
        %112 = vector.shape_cast %111 : vector<1xf32> to vector<1x1x1xf32>
        %113 = vector.extract %112[0, 0, 0] : f32 from vector<1x1x1xf32>
        %c0_67 = arith.constant 0 : index
        %c0_68 = arith.constant 0 : index
        %114 = vector.load %arg8[%c0_67, %c0_68] : memref<4x256xf32, #tpu.memory_space<vmem>>, vector<1x256xf32>
        %115 = vector.shape_cast %114 : vector<1x256xf32> to vector<1x1x256xf32>
        %cst_69 = arith.constant dense<0.000000e+00> : vector<1xf32>
        %116 = vector.multi_reduction <add>, %115, %cst_69 [1, 2] : vector<1x1x256xf32> to vector<1xf32>
        %117 = vector.shape_cast %116 : vector<1xf32> to vector<1x1x1xf32>
        %118 = vector.extract %117[0, 0, 0] : f32 from vector<1x1x1xf32>
        %cst_70 = arith.constant 2.44140625E-4 : f32
        %119 = arith.mulf %113, %cst_70 : f32
        %cst_71 = arith.constant 2.44140625E-4 : f32
        %120 = arith.mulf %118, %cst_71 : f32
        %121 = arith.mulf %119, %119 : f32
        %122 = arith.subf %120, %121 : f32
        %cst_72 = arith.constant 0.000000e+00 : f32
        %123 = arith.maximumf %122, %cst_72 : f32
        %cst_73 = arith.constant 9.99999974E-6 : f32
        %124 = arith.addf %123, %cst_73 : f32
        %125 = math.rsqrt %124 : f32
        %c0_74 = arith.constant 0 : index
        %c0_75 = arith.constant 0 : index
        %126 = memref.load %arg5[%c0_74, %c0_75] : memref<2x4xf32, #tpu.memory_space<smem>>
        %127 = arith.mulf %125, %126 : f32
        %c0_76 = arith.constant 0 : index
        %c0_77 = arith.constant 0 : index
        %128 = memref.load %arg9[%c0_76, %c0_77] : memref<2x4xf32, #tpu.memory_space<smem>>
        memref.store %127, %arg9[%c0_76, %c0_77] : memref<2x4xf32, #tpu.memory_space<smem>>
        %c1_78 = arith.constant 1 : index
        %c0_79 = arith.constant 0 : index
        %129 = memref.load %arg5[%c1_78, %c0_79] : memref<2x4xf32, #tpu.memory_space<smem>>
        %130 = arith.mulf %119, %127 : f32
        %131 = arith.subf %129, %130 : f32
        %c1_80 = arith.constant 1 : index
        %c0_81 = arith.constant 0 : index
        %132 = memref.load %arg9[%c1_80, %c0_81] : memref<2x4xf32, #tpu.memory_space<smem>>
        memref.store %131, %arg9[%c1_80, %c0_81] : memref<2x4xf32, #tpu.memory_space<smem>>
        %c1_82 = arith.constant 1 : index
        %c0_83 = arith.constant 0 : index
        %133 = vector.load %arg7[%c1_82, %c0_83] : memref<4x256xf32, #tpu.memory_space<vmem>>, vector<1x256xf32>
        %134 = vector.shape_cast %133 : vector<1x256xf32> to vector<1x1x256xf32>
        %cst_84 = arith.constant dense<0.000000e+00> : vector<1xf32>
        %135 = vector.multi_reduction <add>, %134, %cst_84 [1, 2] : vector<1x1x256xf32> to vector<1xf32>
        %136 = vector.shape_cast %135 : vector<1xf32> to vector<1x1x1xf32>
        %137 = vector.extract %136[0, 0, 0] : f32 from vector<1x1x1xf32>
        %c1_85 = arith.constant 1 : index
        %c0_86 = arith.constant 0 : index
        %138 = vector.load %arg8[%c1_85, %c0_86] : memref<4x256xf32, #tpu.memory_space<vmem>>, vector<1x256xf32>
        %139 = vector.shape_cast %138 : vector<1x256xf32> to vector<1x1x256xf32>
        %cst_87 = arith.constant dense<0.000000e+00> : vector<1xf32>
        %140 = vector.multi_reduction <add>, %139, %cst_87 [1, 2] : vector<1x1x256xf32> to vector<1xf32>
        %141 = vector.shape_cast %140 : vector<1xf32> to vector<1x1x1xf32>
        %142 = vector.extract %141[0, 0, 0] : f32 from vector<1x1x1xf32>
        %cst_88 = arith.constant 2.44140625E-4 : f32
        %143 = arith.mulf %137, %cst_88 : f32
        %cst_89 = arith.constant 2.44140625E-4 : f32
        %144 = arith.mulf %142, %cst_89 : f32
        %145 = arith.mulf %143, %143 : f32
        %146 = arith.subf %144, %145 : f32
        %cst_90 = arith.constant 0.000000e+00 : f32
        %147 = arith.maximumf %146, %cst_90 : f32
        %cst_91 = arith.constant 9.99999974E-6 : f32
        %148 = arith.addf %147, %cst_91 : f32
        %149 = math.rsqrt %148 : f32
        %c0_92 = arith.constant 0 : index
        %c1_93 = arith.constant 1 : index
        %150 = memref.load %arg5[%c0_92, %c1_93] : memref<2x4xf32, #tpu.memory_space<smem>>
        %151 = arith.mulf %149, %150 : f32
        %c0_94 = arith.constant 0 : index
        %c1_95 = arith.constant 1 : index
        %152 = memref.load %arg9[%c0_94, %c1_95] : memref<2x4xf32, #tpu.memory_space<smem>>
        memref.store %151, %arg9[%c0_94, %c1_95] : memref<2x4xf32, #tpu.memory_space<smem>>
        %c1_96 = arith.constant 1 : index
        %c1_97 = arith.constant 1 : index
        %153 = memref.load %arg5[%c1_96, %c1_97] : memref<2x4xf32, #tpu.memory_space<smem>>
        %154 = arith.mulf %143, %151 : f32
        %155 = arith.subf %153, %154 : f32
        %c1_98 = arith.constant 1 : index
        %c1_99 = arith.constant 1 : index
        %156 = memref.load %arg9[%c1_98, %c1_99] : memref<2x4xf32, #tpu.memory_space<smem>>
        memref.store %155, %arg9[%c1_98, %c1_99] : memref<2x4xf32, #tpu.memory_space<smem>>
        %c2_100 = arith.constant 2 : index
        %c0_101 = arith.constant 0 : index
        %157 = vector.load %arg7[%c2_100, %c0_101] : memref<4x256xf32, #tpu.memory_space<vmem>>, vector<1x256xf32>
        %158 = vector.shape_cast %157 : vector<1x256xf32> to vector<1x1x256xf32>
        %cst_102 = arith.constant dense<0.000000e+00> : vector<1xf32>
        %159 = vector.multi_reduction <add>, %158, %cst_102 [1, 2] : vector<1x1x256xf32> to vector<1xf32>
        %160 = vector.shape_cast %159 : vector<1xf32> to vector<1x1x1xf32>
        %161 = vector.extract %160[0, 0, 0] : f32 from vector<1x1x1xf32>
        %c2_103 = arith.constant 2 : index
        %c0_104 = arith.constant 0 : index
        %162 = vector.load %arg8[%c2_103, %c0_104] : memref<4x256xf32, #tpu.memory_space<vmem>>, vector<1x256xf32>
        %163 = vector.shape_cast %162 : vector<1x256xf32> to vector<1x1x256xf32>
        %cst_105 = arith.constant dense<0.000000e+00> : vector<1xf32>
        %164 = vector.multi_reduction <add>, %163, %cst_105 [1, 2] : vector<1x1x256xf32> to vector<1xf32>
        %165 = vector.shape_cast %164 : vector<1xf32> to vector<1x1x1xf32>
        %166 = vector.extract %165[0, 0, 0] : f32 from vector<1x1x1xf32>
        %cst_106 = arith.constant 2.44140625E-4 : f32
        %167 = arith.mulf %161, %cst_106 : f32
        %cst_107 = arith.constant 2.44140625E-4 : f32
        %168 = arith.mulf %166, %cst_107 : f32
        %169 = arith.mulf %167, %167 : f32
        %170 = arith.subf %168, %169 : f32
        %cst_108 = arith.constant 0.000000e+00 : f32
        %171 = arith.maximumf %170, %cst_108 : f32
        %cst_109 = arith.constant 9.99999974E-6 : f32
        %172 = arith.addf %171, %cst_109 : f32
        %173 = math.rsqrt %172 : f32
        %c0_110 = arith.constant 0 : index
        %c2_111 = arith.constant 2 : index
        %174 = memref.load %arg5[%c0_110, %c2_111] : memref<2x4xf32, #tpu.memory_space<smem>>
        %175 = arith.mulf %173, %174 : f32
        %c0_112 = arith.constant 0 : index
        %c2_113 = arith.constant 2 : index
        %176 = memref.load %arg9[%c0_112, %c2_113] : memref<2x4xf32, #tpu.memory_space<smem>>
        memref.store %175, %arg9[%c0_112, %c2_113] : memref<2x4xf32, #tpu.memory_space<smem>>
        %c1_114 = arith.constant 1 : index
        %c2_115 = arith.constant 2 : index
        %177 = memref.load %arg5[%c1_114, %c2_115] : memref<2x4xf32, #tpu.memory_space<smem>>
        %178 = arith.mulf %167, %175 : f32
        %179 = arith.subf %177, %178 : f32
        %c1_116 = arith.constant 1 : index
        %c2_117 = arith.constant 2 : index
        %180 = memref.load %arg9[%c1_116, %c2_117] : memref<2x4xf32, #tpu.memory_space<smem>>
        memref.store %179, %arg9[%c1_116, %c2_117] : memref<2x4xf32, #tpu.memory_space<smem>>
        %c3_118 = arith.constant 3 : index
        %c0_119 = arith.constant 0 : index
        %181 = vector.load %arg7[%c3_118, %c0_119] : memref<4x256xf32, #tpu.memory_space<vmem>>, vector<1x256xf32>
        %182 = vector.shape_cast %181 : vector<1x256xf32> to vector<1x1x256xf32>
        %cst_120 = arith.constant dense<0.000000e+00> : vector<1xf32>
        %183 = vector.multi_reduction <add>, %182, %cst_120 [1, 2] : vector<1x1x256xf32> to vector<1xf32>
        %184 = vector.shape_cast %183 : vector<1xf32> to vector<1x1x1xf32>
        %185 = vector.extract %184[0, 0, 0] : f32 from vector<1x1x1xf32>
        %c3_121 = arith.constant 3 : index
        %c0_122 = arith.constant 0 : index
        %186 = vector.load %arg8[%c3_121, %c0_122] : memref<4x256xf32, #tpu.memory_space<vmem>>, vector<1x256xf32>
        %187 = vector.shape_cast %186 : vector<1x256xf32> to vector<1x1x256xf32>
        %cst_123 = arith.constant dense<0.000000e+00> : vector<1xf32>
        %188 = vector.multi_reduction <add>, %187, %cst_123 [1, 2] : vector<1x1x256xf32> to vector<1xf32>
        %189 = vector.shape_cast %188 : vector<1xf32> to vector<1x1x1xf32>
        %190 = vector.extract %189[0, 0, 0] : f32 from vector<1x1x1xf32>
        %cst_124 = arith.constant 2.44140625E-4 : f32
        %191 = arith.mulf %185, %cst_124 : f32
        %cst_125 = arith.constant 2.44140625E-4 : f32
        %192 = arith.mulf %190, %cst_125 : f32
        %193 = arith.mulf %191, %191 : f32
        %194 = arith.subf %192, %193 : f32
        %cst_126 = arith.constant 0.000000e+00 : f32
        %195 = arith.maximumf %194, %cst_126 : f32
        %cst_127 = arith.constant 9.99999974E-6 : f32
        %196 = arith.addf %195, %cst_127 : f32
        %197 = math.rsqrt %196 : f32
        %c0_128 = arith.constant 0 : index
        %c3_129 = arith.constant 3 : index
        %198 = memref.load %arg5[%c0_128, %c3_129] : memref<2x4xf32, #tpu.memory_space<smem>>
        %199 = arith.mulf %197, %198 : f32
        %c0_130 = arith.constant 0 : index
        %c3_131 = arith.constant 3 : index
        %200 = memref.load %arg9[%c0_130, %c3_131] : memref<2x4xf32, #tpu.memory_space<smem>>
        memref.store %199, %arg9[%c0_130, %c3_131] : memref<2x4xf32, #tpu.memory_space<smem>>
        %c1_132 = arith.constant 1 : index
        %c3_133 = arith.constant 3 : index
        %201 = memref.load %arg5[%c1_132, %c3_133] : memref<2x4xf32, #tpu.memory_space<smem>>
        %202 = arith.mulf %191, %199 : f32
        %203 = arith.subf %201, %202 : f32
        %c1_134 = arith.constant 1 : index
        %c3_135 = arith.constant 3 : index
        %204 = memref.load %arg9[%c1_134, %c3_135] : memref<2x4xf32, #tpu.memory_space<smem>>
        memref.store %203, %arg9[%c1_134, %c3_135] : memref<2x4xf32, #tpu.memory_space<smem>>
      } else {
      }
      %c4_i32 = arith.constant 4 : i32
      %9 = arith.muli %arg1, %c4_i32 : i32
      %c0_i32_4 = arith.constant 0 : i32
      %10 = arith.addi %9, %c0_i32_4 : i32
      %11 = arith.index_cast %10 : i32 to index
      %c0 = arith.constant 0 : index
      %c0_5 = arith.constant 0 : index
      %12 = vector.load %arg6[%11, %c0, %c0_5] : memref<8x8x256xf32, #tpu.memory_space<vmem>>, vector<1x8x256xf32>
      %13 = vector.shape_cast %12 : vector<1x8x256xf32> to vector<8x256xf32>
      %c0_6 = arith.constant 0 : index
      %c0_7 = arith.constant 0 : index
      %14 = memref.load %arg9[%c0_6, %c0_7] : memref<2x4xf32, #tpu.memory_space<smem>>
      %15 = vector.broadcast %14 : f32 to vector<8x256xf32>
      %16 = arith.mulf %13, %15 : vector<8x256xf32>
      %c1 = arith.constant 1 : index
      %c0_8 = arith.constant 0 : index
      %17 = memref.load %arg9[%c1, %c0_8] : memref<2x4xf32, #tpu.memory_space<smem>>
      %18 = vector.broadcast %17 : f32 to vector<8x256xf32>
      %19 = arith.addf %16, %18 : vector<8x256xf32>
      %c4_i32_9 = arith.constant 4 : i32
      %20 = arith.muli %arg1, %c4_i32_9 : i32
      %c0_i32_10 = arith.constant 0 : i32
      %21 = arith.addi %20, %c0_i32_10 : i32
      %22 = arith.index_cast %21 : i32 to index
      %c0_11 = arith.constant 0 : index
      %c0_12 = arith.constant 0 : index
      %23 = vector.load %arg3[%22, %c0_11, %c0_12] : memref<8x8x256xf32, #tpu.memory_space<vmem>>, vector<1x8x256xf32>
      %24 = vector.shape_cast %23 : vector<1x8x256xf32> to vector<8x256xf32>
      %25 = arith.addf %19, %24 : vector<8x256xf32>
      %cst = arith.constant 0.000000e+00 : f32
      %26 = vector.broadcast %cst : f32 to vector<8x256xf32>
      %27 = arith.maximumf %25, %26 : vector<8x256xf32>
      %c4_i32_13 = arith.constant 4 : i32
      %28 = arith.muli %arg1, %c4_i32_13 : i32
      %c0_i32_14 = arith.constant 0 : i32
      %29 = arith.addi %28, %c0_i32_14 : i32
      %30 = arith.index_cast %29 : i32 to index
      %c0_15 = arith.constant 0 : index
      %c0_16 = arith.constant 0 : index
      %31 = vector.load %arg6[%30, %c0_15, %c0_16] : memref<8x8x256xf32, #tpu.memory_space<vmem>>, vector<1x8x256xf32>
      %32 = vector.shape_cast %31 : vector<1x8x256xf32> to vector<8x256xf32>
      %33 = vector.shape_cast %27 : vector<8x256xf32> to vector<1x8x256xf32>
      tpu.vector_store %arg6[%30, %c0_15, %c0_16], %33 {strides = array<i32>} : memref<8x8x256xf32, #tpu.memory_space<vmem>>, vector<1x8x256xf32>,
      %c4_i32_17 = arith.constant 4 : i32
      %34 = arith.muli %arg1, %c4_i32_17 : i32
      %c1_i32_18 = arith.constant 1 : i32
      %35 = arith.addi %34, %c1_i32_18 : i32
      %36 = arith.index_cast %35 : i32 to index
      %c0_19 = arith.constant 0 : index
      %c0_20 = arith.constant 0 : index
      %37 = vector.load %arg6[%36, %c0_19, %c0_20] : memref<8x8x256xf32, #tpu.memory_space<vmem>>, vector<1x8x256xf32>
      %38 = vector.shape_cast %37 : vector<1x8x256xf32> to vector<8x256xf32>
      %c0_21 = arith.constant 0 : index
      %c1_22 = arith.constant 1 : index
      %39 = memref.load %arg9[%c0_21, %c1_22] : memref<2x4xf32, #tpu.memory_space<smem>>
      %40 = vector.broadcast %39 : f32 to vector<8x256xf32>
      %41 = arith.mulf %38, %40 : vector<8x256xf32>
      %c1_23 = arith.constant 1 : index
      %c1_24 = arith.constant 1 : index
      %42 = memref.load %arg9[%c1_23, %c1_24] : memref<2x4xf32, #tpu.memory_space<smem>>
      %43 = vector.broadcast %42 : f32 to vector<8x256xf32>
      %44 = arith.addf %41, %43 : vector<8x256xf32>
      %c4_i32_25 = arith.constant 4 : i32
      %45 = arith.muli %arg1, %c4_i32_25 : i32
      %c1_i32_26 = arith.constant 1 : i32
      %46 = arith.addi %45, %c1_i32_26 : i32
      %47 = arith.index_cast %46 : i32 to index
      %c0_27 = arith.constant 0 : index
      %c0_28 = arith.constant 0 : index
      %48 = vector.load %arg3[%47, %c0_27, %c0_28] : memref<8x8x256xf32, #tpu.memory_space<vmem>>, vector<1x8x256xf32>
      %49 = vector.shape_cast %48 : vector<1x8x256xf32> to vector<8x256xf32>
      %50 = arith.addf %44, %49 : vector<8x256xf32>
      %cst_29 = arith.constant 0.000000e+00 : f32
      %51 = vector.broadcast %cst_29 : f32 to vector<8x256xf32>
      %52 = arith.maximumf %50, %51 : vector<8x256xf32>
      %c4_i32_30 = arith.constant 4 : i32
      %53 = arith.muli %arg1, %c4_i32_30 : i32
      %c1_i32_31 = arith.constant 1 : i32
      %54 = arith.addi %53, %c1_i32_31 : i32
      %55 = arith.index_cast %54 : i32 to index
      %c0_32 = arith.constant 0 : index
      %c0_33 = arith.constant 0 : index
      %56 = vector.load %arg6[%55, %c0_32, %c0_33] : memref<8x8x256xf32, #tpu.memory_space<vmem>>, vector<1x8x256xf32>
      %57 = vector.shape_cast %56 : vector<1x8x256xf32> to vector<8x256xf32>
      %58 = vector.shape_cast %52 : vector<8x256xf32> to vector<1x8x256xf32>
      tpu.vector_store %arg6[%55, %c0_32, %c0_33], %58 {strides = array<i32>} : memref<8x8x256xf32, #tpu.memory_space<vmem>>, vector<1x8x256xf32>,
      %c4_i32_34 = arith.constant 4 : i32
      %59 = arith.muli %arg1, %c4_i32_34 : i32
      %c2_i32 = arith.constant 2 : i32
      %60 = arith.addi %59, %c2_i32 : i32
      %61 = arith.index_cast %60 : i32 to index
      %c0_35 = arith.constant 0 : index
      %c0_36 = arith.constant 0 : index
      %62 = vector.load %arg6[%61, %c0_35, %c0_36] : memref<8x8x256xf32, #tpu.memory_space<vmem>>, vector<1x8x256xf32>
      %63 = vector.shape_cast %62 : vector<1x8x256xf32> to vector<8x256xf32>
      %c0_37 = arith.constant 0 : index
      %c2 = arith.constant 2 : index
      %64 = memref.load %arg9[%c0_37, %c2] : memref<2x4xf32, #tpu.memory_space<smem>>
      %65 = vector.broadcast %64 : f32 to vector<8x256xf32>
      %66 = arith.mulf %63, %65 : vector<8x256xf32>
      %c1_38 = arith.constant 1 : index
      %c2_39 = arith.constant 2 : index
      %67 = memref.load %arg9[%c1_38, %c2_39] : memref<2x4xf32, #tpu.memory_space<smem>>
      %68 = vector.broadcast %67 : f32 to vector<8x256xf32>
      %69 = arith.addf %66, %68 : vector<8x256xf32>
      %c4_i32_40 = arith.constant 4 : i32
      %70 = arith.muli %arg1, %c4_i32_40 : i32
      %c2_i32_41 = arith.constant 2 : i32
      %71 = arith.addi %70, %c2_i32_41 : i32
      %72 = arith.index_cast %71 : i32 to index
      %c0_42 = arith.constant 0 : index
      %c0_43 = arith.constant 0 : index
      %73 = vector.load %arg3[%72, %c0_42, %c0_43] : memref<8x8x256xf32, #tpu.memory_space<vmem>>, vector<1x8x256xf32>
      %74 = vector.shape_cast %73 : vector<1x8x256xf32> to vector<8x256xf32>
      %75 = arith.addf %69, %74 : vector<8x256xf32>
      %cst_44 = arith.constant 0.000000e+00 : f32
      %76 = vector.broadcast %cst_44 : f32 to vector<8x256xf32>
      %77 = arith.maximumf %75, %76 : vector<8x256xf32>
      %c4_i32_45 = arith.constant 4 : i32
      %78 = arith.muli %arg1, %c4_i32_45 : i32
      %c2_i32_46 = arith.constant 2 : i32
      %79 = arith.addi %78, %c2_i32_46 : i32
      %80 = arith.index_cast %79 : i32 to index
      %c0_47 = arith.constant 0 : index
      %c0_48 = arith.constant 0 : index
      %81 = vector.load %arg6[%80, %c0_47, %c0_48] : memref<8x8x256xf32, #tpu.memory_space<vmem>>, vector<1x8x256xf32>
      %82 = vector.shape_cast %81 : vector<1x8x256xf32> to vector<8x256xf32>
      %83 = vector.shape_cast %77 : vector<8x256xf32> to vector<1x8x256xf32>
      tpu.vector_store %arg6[%80, %c0_47, %c0_48], %83 {strides = array<i32>} : memref<8x8x256xf32, #tpu.memory_space<vmem>>, vector<1x8x256xf32>,
      %c4_i32_49 = arith.constant 4 : i32
      %84 = arith.muli %arg1, %c4_i32_49 : i32
      %c3_i32 = arith.constant 3 : i32
      %85 = arith.addi %84, %c3_i32 : i32
      %86 = arith.index_cast %85 : i32 to index
      %c0_50 = arith.constant 0 : index
      %c0_51 = arith.constant 0 : index
      %87 = vector.load %arg6[%86, %c0_50, %c0_51] : memref<8x8x256xf32, #tpu.memory_space<vmem>>, vector<1x8x256xf32>
      %88 = vector.shape_cast %87 : vector<1x8x256xf32> to vector<8x256xf32>
      %c0_52 = arith.constant 0 : index
      %c3 = arith.constant 3 : index
      %89 = memref.load %arg9[%c0_52, %c3] : memref<2x4xf32, #tpu.memory_space<smem>>
      %90 = vector.broadcast %89 : f32 to vector<8x256xf32>
      %91 = arith.mulf %88, %90 : vector<8x256xf32>
      %c1_53 = arith.constant 1 : index
      %c3_54 = arith.constant 3 : index
      %92 = memref.load %arg9[%c1_53, %c3_54] : memref<2x4xf32, #tpu.memory_space<smem>>
      %93 = vector.broadcast %92 : f32 to vector<8x256xf32>
      %94 = arith.addf %91, %93 : vector<8x256xf32>
      %c4_i32_55 = arith.constant 4 : i32
      %95 = arith.muli %arg1, %c4_i32_55 : i32
      %c3_i32_56 = arith.constant 3 : i32
      %96 = arith.addi %95, %c3_i32_56 : i32
      %97 = arith.index_cast %96 : i32 to index
      %c0_57 = arith.constant 0 : index
      %c0_58 = arith.constant 0 : index
      %98 = vector.load %arg3[%97, %c0_57, %c0_58] : memref<8x8x256xf32, #tpu.memory_space<vmem>>, vector<1x8x256xf32>
      %99 = vector.shape_cast %98 : vector<1x8x256xf32> to vector<8x256xf32>
      %100 = arith.addf %94, %99 : vector<8x256xf32>
      %cst_59 = arith.constant 0.000000e+00 : f32
      %101 = vector.broadcast %cst_59 : f32 to vector<8x256xf32>
      %102 = arith.maximumf %100, %101 : vector<8x256xf32>
      %c4_i32_60 = arith.constant 4 : i32
      %103 = arith.muli %arg1, %c4_i32_60 : i32
      %c3_i32_61 = arith.constant 3 : i32
      %104 = arith.addi %103, %c3_i32_61 : i32
      %105 = arith.index_cast %104 : i32 to index
      %c0_62 = arith.constant 0 : index
      %c0_63 = arith.constant 0 : index
      %106 = vector.load %arg6[%105, %c0_62, %c0_63] : memref<8x8x256xf32, #tpu.memory_space<vmem>>, vector<1x8x256xf32>
      %107 = vector.shape_cast %106 : vector<1x8x256xf32> to vector<8x256xf32>
      %108 = vector.shape_cast %102 : vector<8x256xf32> to vector<1x8x256xf32>
      tpu.vector_store %arg6[%105, %c0_62, %c0_63], %108 {strides = array<i32>} : memref<8x8x256xf32, #tpu.memory_space<vmem>>, vector<1x8x256xf32>,
    } else {
    }
    return
  }
  func.func @transform_0(%arg0: i32, %arg1: i32) -> (i32, i32, i32, i32) {
    %c1_i32 = arith.constant 1 : i32
    %0 = arith.subi %c1_i32, %arg0 : i32
    %1 = arith.muli %arg1, %0 : i32
    %c1_i32_0 = arith.constant 1 : i32
    %2 = arith.muli %c1_i32_0, %arg0 : i32
    %3 = arith.addi %1, %2 : i32
    %c0_i32 = arith.constant 0 : i32
    %c0_i32_1 = arith.constant 0 : i32
    %c0_i32_2 = arith.constant 0 : i32
    %c0_i32_3 = arith.constant 0 : i32
    return %3, %c0_i32, %c0_i32_1, %c0_i32_2 : i32, i32, i32, i32
  }
  func.func @transform_1(%arg0: i32, %arg1: i32) -> (i32, i32, i32) {
    %c0_i32 = arith.constant 0 : i32
    %c0_i32_0 = arith.constant 0 : i32
    %c0_i32_1 = arith.constant 0 : i32
    %c0_i32_2 = arith.constant 0 : i32
    return %c0_i32, %c0_i32_0, %c0_i32_1 : i32, i32, i32
  }
  func.func @transform_2(%arg0: i32, %arg1: i32) -> (i32, i32) {
    %c0_i32 = arith.constant 0 : i32
    %c0_i32_0 = arith.constant 0 : i32
    %c0_i32_1 = arith.constant 0 : i32
    return %c0_i32, %c0_i32_0 : i32, i32
  }
  func.func @transform_3(%arg0: i32, %arg1: i32) -> (i32, i32) {
    %c0_i32 = arith.constant 0 : i32
    %c0_i32_0 = arith.constant 0 : i32
    %c0_i32_1 = arith.constant 0 : i32
    return %c0_i32, %c0_i32_0 : i32, i32
  }
  func.func @transform_4(%arg0: i32, %arg1: i32) -> (i32, i32, i32) {
    %c0_i32 = arith.constant 0 : i32
    %c0_i32_0 = arith.constant 0 : i32
    %c0_i32_1 = arith.constant 0 : i32
    %c0_i32_2 = arith.constant 0 : i32
    return %c0_i32, %c0_i32_0, %c0_i32_1 : i32, i32, i32
  }
}

</mosaic_0001>

<llo_original>
// kernel: conv_block_3d.1
$region0: #{conv_block_3d.1}
  #allocation0 [shape = 'u32[]', space=smem, size = 0x4, offset = 0x4, fixed_abs, tag = 'smem constant byte address 0x4 - core index']
  #allocation1 [shape = 'u32[144,128]{1,0:T(1,128)}', space=vmem, size = 0x12000, scoped, tag = 'internal scratch']
  #allocation2 [shape = 'f32[4,256]{1,0:T(4,128)}', space=vmem, size = 0x1000, scoped, tag = 'scratch operand']
  #allocation3 [shape = 'f32[4,256]{1,0:T(4,128)}', space=vmem, size = 0x1000, scoped, tag = 'scratch operand']
  #allocation4 [shape = 'f32[2,4]{1,0:T(2,128)}', space=smem, size = 0x400, scoped, tag = 'scratch operand']
  %s0 = inlined_call_operand.vmem [shape: f32[2,4,10,384], index: 0, kind: input, shape index: {}]
  %s1 = inlined_call_operand.vmem [shape: f32[8,8,256], index: 1, kind: input, shape index: {}]
  %s2 = inlined_call_operand.vmem [shape: f32[16,27], index: 2, kind: input, shape index: {}]
  %s3 = inlined_call_operand.vmem [shape: f32[2,4], index: 3, kind: input, shape index: {}]
  %s4 = inlined_call_operand.vmem [shape: f32[8,8,256], index: 4, kind: output, shape index: {}]
  %s5 = sld [smem:[#allocation0]]
  $region73: #{conv_block_3d.1} parent=0
    _
  %s7 = ssub.s32 1, %s5
  %s8 = scalar_select 0, %s7, %s5
  $region1: #{conv_block_3d.1} parent=0
    #allocation5 [shape = 'u8[8192]{0}', space=smem, size = 0x2000, scoped, tag = 'input window, operand 2, single buffered']
    #allocation6 [shape = 's32[2]{0}', space=sflag, size = 0x8, scoped, tag = 'scoped memory for conv_block_3d.1']
    #allocation7 [shape = 'u8[1024]{0}', space=smem, size = 0x400, scoped, tag = 'input window, operand 3, single buffered']
    #allocation8 [shape = 's32[1]{0}', space=sflag, size = 0x4, scoped, tag = 'scoped memory for conv_block_3d.1']
    %9 = vsyncpa [#allocation6], 0
    %10 = vsyncpa [#allocation8], 0
    loop: start=0, step=1, limit=6
    $region2: #{conv_block_3d.1} parent=1 // loop_pre_header
      _
    $region3: #{conv_block_3d.1} parent=1 // loop_header
      %s12 = sphi 0, %s16
      %p13 = scmp.ge.s32.totalorder %s12, 6
      %s19 = sphi 0, %s31
      %s20 = sphi 0, %s27
      %s21 = sphi 0, %s19
      %s22 = sphi 0, %s20
      %s23 = sphi 0, %s21
      %s24 = sphi 0, %s22
      %s40 = sphi 0, %s42
      %s43 = sphi 0, %s40
      %s44 = sphi 0, %s43
      %s60 = sphi 0, %s44
      %s64 = sphi 0, %s64
      %s66 = sphi 0, %s64
      %s67 = sphi 0, %s66
      %s81 = sphi 0, %s67
      %s85 = sphi 0, %s85
      %s87 = sphi 0, %s85
      %s88 = sphi 0, %s87
      %s102 = sphi 0, %s88
      %s106 = sphi 0, %s106
      %s108 = sphi 0, %s106
      %s109 = sphi 0, %s108
      %s123 = sphi 0, %s109
      %s127 = sphi 0, %s127
      %s129 = sphi 0, %s127
      %s130 = sphi 0, %s129
      %s144 = sphi 0, %s130
    $region4: #{conv_block_3d.1} parent=1 // loop_header_branch
      %15 = sbr.rel (%p13) target = $region8
    $region5: #{conv_block_3d.1} parent=1 // loop_body
      %s17 = ssub.s32 %s12, 1
      %s18 = ssub.s32 %s12, 2
      %s25 = sadd.s32 1, %s20
      %p26 = scmp.ge.s32.totalorder %s25, 2
      %s27 = scalar_select %p26, 0, %s25
      %s28 = sadd.s32 1, %s19
      %s29 = scalar_select %p26, %s28, %s19
      %p30 = scmp.ge.s32.totalorder %s29, 2
      %s31 = scalar_select %p30, 0, %s29
      %s32 = ssub.s32 1, %s19
      %s33 = smul.u32 %s20, %s32
      %s34 = sadd.s32 %s33, %s19
      %s35 = ssub.s32 1, %s31
      %s36 = smul.u32 %s27, %s35
      %s37 = sadd.s32 %s36, %s31
      %s38 = ssub.s32 %s34, %s37
      %p39 = scmp.eq.s32.totalorder %s38, 0
      %s41 = sadd.s32 %s40, 1
      %s42 = scalar_select %p39, %s40, %s41
      %p45 = pneg %p39
      %p46 = scmp.eq.s32.totalorder %s12, 3
      %p47 = por %p45, %p46
      %p48 = scmp.ne.s32.totalorder %s40, %s43
      %p49 = scmp.eq.s32.totalorder %s12, 0
      %p50 = por %p48, %p49
      %p51 = scmp.ne.s32.totalorder %s40, %s43
      %p52 = scmp.eq.s32.totalorder %s17, 3
      %p53 = por %p51, %p52
      %p54 = scmp.ne.s32.totalorder %s43, %s44
      %p55 = scmp.eq.s32.totalorder %s17, 0
      %p56 = por %p54, %p55
      %p57 = scmp.ne.s32.totalorder %s43, %s44
      %p58 = scmp.eq.s32.totalorder %s18, 3
      %p59 = por %p57, %p58
      %p61 = scmp.ne.s32.totalorder %s44, %s60
      %p62 = scmp.eq.s32.totalorder %s18, 0
      %p63 = por %p61, %p62
      %s65 = sadd.s32 %s64, 1
      %p68 = scmp.eq.s32.totalorder %s12, 3
      %p69 = scmp.ne.s32.totalorder %s64, %s66
      %p70 = scmp.eq.s32.totalorder %s12, 0
      %p71 = por %p69, %p70
      %p72 = scmp.ne.s32.totalorder %s64, %s66
      %p73 = scmp.eq.s32.totalorder %s17, 3
      %p74 = por %p72, %p73
      %p75 = scmp.ne.s32.totalorder %s66, %s67
      %p76 = scmp.eq.s32.totalorder %s17, 0
      %p77 = por %p75, %p76
      %p78 = scmp.ne.s32.totalorder %s66, %s67
      %p79 = scmp.eq.s32.totalorder %s18, 3
      %p80 = por %p78, %p79
      %p82 = scmp.ne.s32.totalorder %s67, %s81
      %p83 = scmp.eq.s32.totalorder %s18, 0
      %p84 = por %p82, %p83
      %s86 = sadd.s32 %s85, 1
      %p89 = scmp.eq.s32.totalorder %s12, 3
      %p90 = scmp.ne.s32.totalorder %s85, %s87
      %p91 = scmp.eq.s32.totalorder %s12, 0
      %p92 = por %p90, %p91
      %p93 = scmp.ne.s32.totalorder %s85, %s87
      %p94 = scmp.eq.s32.totalorder %s17, 3
      %p95 = por %p93, %p94
      %p96 = scmp.ne.s32.totalorder %s87, %s88
      %p97 = scmp.eq.s32.totalorder %s17, 0
      %p98 = por %p96, %p97
      %p99 = scmp.ne.s32.totalorder %s87, %s88
      %p100 = scmp.eq.s32.totalorder %s18, 3
      %p101 = por %p99, %p100
      %p103 = scmp.ne.s32.totalorder %s88, %s102
      %p104 = scmp.eq.s32.totalorder %s18, 0
      %p105 = por %p103, %p104
      %s107 = sadd.s32 %s106, 1
      %p110 = scmp.eq.s32.totalorder %s12, 3
      %p111 = scmp.ne.s32.totalorder %s106, %s108
      %p112 = scmp.eq.s32.totalorder %s12, 0
      %p113 = por %p111, %p112
      %p114 = scmp.ne.s32.totalorder %s106, %s108
      %p115 = scmp.eq.s32.totalorder %s17, 3
      %p116 = por %p114, %p115
      %p117 = scmp.ne.s32.totalorder %s108, %s109
      %p118 = scmp.eq.s32.totalorder %s17, 0
      %p119 = por %p117, %p118
      %p120 = scmp.ne.s32.totalorder %s108, %s109
      %p121 = scmp.eq.s32.totalorder %s18, 3
      %p122 = por %p120, %p121
      %p124 = scmp.ne.s32.totalorder %s109, %s123
      %p125 = scmp.eq.s32.totalorder %s18, 0
      %p126 = por %p124, %p125
      %s128 = sadd.s32 %s127, 1
      %p131 = scmp.eq.s32.totalorder %s12, 3
      %p132 = scmp.ne.s32.totalorder %s127, %s129
      %p133 = scmp.eq.s32.totalorder %s12, 0
      %p134 = por %p132, %p133
      %p135 = scmp.ne.s32.totalorder %s127, %s129
      %p136 = scmp.eq.s32.totalorder %s17, 3
      %p137 = por %p135, %p136
      %p138 = scmp.ne.s32.totalorder %s129, %s130
      %p139 = scmp.eq.s32.totalorder %s17, 0
      %p140 = por %p138, %p139
      %p141 = scmp.ne.s32.totalorder %s129, %s130
      %p142 = scmp.eq.s32.totalorder %s18, 3
      %p143 = por %p141, %p142
      %p145 = scmp.ne.s32.totalorder %s130, %s144
      %p146 = scmp.eq.s32.totalorder %s18, 0
      %p147 = por %p145, %p146
      %p148 = scmp.le.s32.totalorder 1, %s12
      %p149 = scmp.lt.s32.totalorder %s12, 5
      %p150 = pnand %p148, %p149
      %p151 = pneg %p150
      // Predicated region
      $region9: #{conv_block_3d.1} parent=5 // pred_check
        _
      $region10: #{conv_block_3d.1} parent=5 // pred_check_branch
        %153 = sbr.rel (%p150) target = $region12
      $region11: #{conv_block_3d.1} parent=5 // pred_region
        %s154 = ssub.s32 %s12, 1
        // Predicated region
        $region13: #{conv_block_3d.1} parent=11 // pred_check
          %p155 = pneg %p77
        $region14: #{conv_block_3d.1} parent=11 // pred_check_branch
          %157 = sbr.rel (%p155) target = $region16
        $region15: #{conv_block_3d.1} parent=11 // pred_region
          _
        $region16: #{conv_block_3d.1} parent=11 // pred_fallthru
          _
        // Predicated region
        $region17: #{conv_block_3d.1} parent=11 // pred_check
          %p158 = pneg %p98
        $region18: #{conv_block_3d.1} parent=11 // pred_check_branch
          %160 = sbr.rel (%p158) target = $region20
        $region19: #{conv_block_3d.1} parent=11 // pred_region
          %s162 = ssub.s32 256, 256
          %163 = vsyncadd [#allocation6], %s162
          %s164 = sshll.u32 %s2, 4
          %s165 = int_to_ptr.vmem [resolvable:$true] %s164
          %170 = dma.vmem_to_smem %s165, 256, [#allocation5], [#allocation6], 128, 128, 8
        $region20: #{conv_block_3d.1} parent=11 // pred_fallthru
          _
        // Predicated region
        $region21: #{conv_block_3d.1} parent=11 // pred_check
          %p171 = pneg %p119
        $region22: #{conv_block_3d.1} parent=11 // pred_check_branch
          %173 = sbr.rel (%p171) target = $region24
        $region23: #{conv_block_3d.1} parent=11 // pred_region
          %s175 = ssub.s32 32, 32
          %176 = vsyncadd [#allocation8], %s175
          %s178 = sshll.u32 %s3, 4
          %s179 = int_to_ptr.vmem [resolvable:$true] %s178
          %181 = dma.vmem_to_smem %s179, 32, [#allocation7], [#allocation8]
        $region24: #{conv_block_3d.1} parent=11 // pred_fallthru
          _
      $region12: #{conv_block_3d.1} parent=5 // pred_fallthru
        _
      %p182 = scmp.lt.s32.totalorder %s12, 4
      // Predicated region
      $region25: #{conv_block_3d.1} parent=5 // pred_check
        %p183 = pneg %p182
      $region26: #{conv_block_3d.1} parent=5 // pred_check_branch
        %185 = sbr.rel (%p183) target = $region28
      $region27: #{conv_block_3d.1} parent=5 // pred_region
        // Predicated region
        $region29: #{conv_block_3d.1} parent=27 // pred_check
          %p186 = pneg %p50
        $region30: #{conv_block_3d.1} parent=27 // pred_check_branch
          %188 = sbr.rel (%p186) target = $region32
        $region31: #{conv_block_3d.1} parent=27 // pred_region
          %s189 = ssub.s32 1, %s19
          %s190 = smul.u32 %s20, %s189
          %s191 = sadd.s32 %s190, %s19
          %p192 = scmp.lt.s32.totalorder %s191, 1
          %s193 = scalar_select %p192, %s191, 1
          %s194 = smul.addr %s193, 24
          %s195 = smul.addr %s194, 8
          %s196 = scalar_lea.vmem %s0, %s195
          %s197 = ssub.s32 1, %s19
          %s198 = smul.u32 %s20, %s197
          %s199 = sadd.s32 %s198, %s19
        $region32: #{conv_block_3d.1} parent=27 // pred_fallthru
          _
      $region28: #{conv_block_3d.1} parent=5 // pred_fallthru
        _
      %p200 = scmp.le.s32.totalorder 1, %s12
      %p201 = scmp.lt.s32.totalorder %s12, 5
      %p202 = pnand %p200, %p201
      %p203 = pneg %p202
      // Predicated region
      $region33: #{conv_block_3d.1} parent=5 // pred_check
        _
      $region34: #{conv_block_3d.1} parent=5 // pred_check_branch
        %205 = sbr.rel (%p202) target = $region36
      $region35: #{conv_block_3d.1} parent=5 // pred_region
        %s206 = ssub.s32 %s12, 1
        // Predicated region
        $region37: #{conv_block_3d.1} parent=35 // pred_check
          %p207 = pneg %p98
        $region38: #{conv_block_3d.1} parent=35 // pred_check_branch
          %209 = sbr.rel (%p207) target = $region40
        $region39: #{conv_block_3d.1} parent=35 // pred_region
          %210 = dma.done [#allocation6], 256
        $region40: #{conv_block_3d.1} parent=35 // pred_fallthru
          _
        // Predicated region
        $region41: #{conv_block_3d.1} parent=35 // pred_check
          %p211 = pneg %p119
        $region42: #{conv_block_3d.1} parent=35 // pred_check_branch
          %213 = sbr.rel (%p211) target = $region44
        $region43: #{conv_block_3d.1} parent=35 // pred_region
          %214 = dma.done [#allocation8], 32
        $region44: #{conv_block_3d.1} parent=35 // pred_fallthru
          _
        %215 = sfence
        %s216 = ssub.s32 1, %s21
        %s217 = smul.u32 %s22, %s216
        %s218 = sadd.s32 %s217, %s21
        %p219 = scmp.lt.s32.totalorder %s218, 1
        %s220 = scalar_select %p219, %s218, 1
        %s221 = smul.addr %s220, 24
        %s222 = smul.addr %s221, 8
        %s223 = scalar_lea.vmem %s0, %s222
        %p224 = pneg %p56
        %p225 = pneg %p53
        %p226 = pneg %p77
        %p227 = pneg %p74
        %p228 = pneg %p98
        %p229 = pneg %p95
        %p230 = pneg %p119
        %p231 = pneg %p116
        %p232 = pneg %p140
        %p233 = pneg %p137
        %s234 = ssub.s32 1, %s21
        %s235 = smul.u32 %s22, %s234
        %s236 = sadd.s32 %s235, %s21
        %p237 = scmp.lt.s32.totalorder %s236, 1
        %s238 = scalar_select %p237, %s236, 1
        %s239 = smul.addr %s238, 24
        %s240 = smul.addr %s239, 8
        %s241 = scalar_lea.vmem %s0, %s240
        %s242 = ssub.s32 1, %s21
        %s243 = smul.u32 %s22, %s242
        %s244 = sadd.s32 %s243, %s21
        %p245 = scmp.eq.s32.totalorder %s21, 0
        // Predicated region
        $region45: #{conv_block_3d.1} parent=35 // pred_check
          %p246 = pneg %p245
        $region46: #{conv_block_3d.1} parent=35 // pred_check_branch
          %248 = sbr.rel (%p246) target = $region48
        $region47: #{conv_block_3d.1} parent=35 // pred_region
          %p249 = scmp.eq.s32.totalorder %s22, 0
          // Predicated region
          $region49: #{conv_block_3d.1} parent=47 // pred_check
            %p250 = pneg %p249
          $region50: #{conv_block_3d.1} parent=47 // pred_check_branch
            %252 = sbr.rel (%p250) target = $region52
          $region51: #{conv_block_3d.1} parent=47 // pred_region
            %253 = vst [vmem:[#allocation2] sm:$0xff] 0.0
            %254 = vst [vmem:[#allocation3] sm:$0xff] 0.0
          $region52: #{conv_block_3d.1} parent=47 // pred_fallthru
            _
          %v255 = vld [vmem:[%s241] sm:$0xff]
          %v256 = vld [vmem:[%s241 + $0x8] sm:$0xff]
          %v257 = vld [vmem:[%s241 + $0x10] sm:$0xff]
          %s258 = sld [smem:[#allocation5]]
          %v259 = vstv %s258
          %v260 = vmul.f32 %v259, %v255
          %v261 = vmul.f32 %v259, %v256
          %v262 = vmul.f32 %v259, %v257
          %v263 = vadd.f32 %v260, 0.0
          %v264 = vadd.f32 %v261, 0.0
          %v265 = vadd.f32 %v262, 0.0
          %s266 = sld [smem:[#allocation5 + $0x200]]
          %v267 = vstv %s266
          %v268 = vmul.f32 %v267, %v255
          %v269 = vmul.f32 %v267, %v256
          %v270 = vmul.f32 %v267, %v257
          %v271 = vadd.f32 %v268, 0.0
          %v272 = vadd.f32 %v269, 0.0
          %v273 = vadd.f32 %v270, 0.0
          %s274 = sld [smem:[#allocation5 + $0x400]]
          %v275 = vstv %s274
          %v276 = vmul.f32 %v275, %v255
          %v277 = vmul.f32 %v275, %v256
          %v278 = vmul.f32 %v275, %v257
          %v279 = vadd.f32 %v276, 0.0
          %v280 = vadd.f32 %v277, 0.0
          %v281 = vadd.f32 %v278, 0.0
          %s282 = sld [smem:[#allocation5 + $0x600]]
          %v283 = vstv %s282
          %v284 = vmul.f32 %v283, %v255
          %v285 = vmul.f32 %v283, %v256
          %v286 = vmul.f32 %v283, %v257
          %v287 = vadd.f32 %v284, 0.0
          %v288 = vadd.f32 %v285, 0.0
          %v289 = vadd.f32 %v286, 0.0
          %290 = vrot.lane.b32.xlu0 %v255, 127
          %v291 = vpop.permute.xlu0 %290
          %292 = vrot.lane.b32.xlu0 %v256, 127
          %v293 = vpop.permute.xlu0 %292
          %294 = vrot.lane.b32.xlu0 %v257, 127
          %v295 = vpop.permute.xlu0 %294
          %v296 = vlaneseq
          %v297 = vand.u32 %v296, 127
          %vm298 = vcmp.lt.s32.totalorder %v297, 127
          %v299 = vsel %vm298, %v293, %v295
          %v300 = vsel %vm298, %v291, %v293
          %v301 = vsel %vm298, %v295, %v291
          %s302 = sld [smem:[#allocation5 + $0x1]]
          %v303 = vstv %s302
          %v304 = vmul.f32 %v303, %v300
          %v305 = vmul.f32 %v303, %v299
          %v306 = vmul.f32 %v303, %v301
          %v307 = vadd.f32 %v263, %v304
          %v308 = vadd.f32 %v264, %v305
          %v309 = vadd.f32 %v265, %v306
          %s310 = sld [smem:[#allocation5 + $0x201]]
          %v311 = vstv %s310
          %v312 = vmul.f32 %v311, %v300
          %v313 = vmul.f32 %v311, %v299
          %v314 = vmul.f32 %v311, %v301
          %v315 = vadd.f32 %v271, %v312
          %v316 = vadd.f32 %v272, %v313
          %v317 = vadd.f32 %v273, %v314
          %s318 = sld [smem:[#allocation5 + $0x401]]
          %v319 = vstv %s318
          %v320 = vmul.f32 %v319, %v300
          %v321 = vmul.f32 %v319, %v299
          %v322 = vmul.f32 %v319, %v301
          %v323 = vadd.f32 %v279, %v320
          %v324 = vadd.f32 %v280, %v321
          %v325 = vadd.f32 %v281, %v322
          %s326 = sld [smem:[#allocation5 + $0x601]]
          %v327 = vstv %s326
          %v328 = vmul.f32 %v327, %v300
          %v329 = vmul.f32 %v327, %v299
          %v330 = vmul.f32 %v327, %v301
          %v331 = vadd.f32 %v287, %v328
          %v332 = vadd.f32 %v288, %v329
          %v333 = vadd.f32 %v289, %v330
          %334 = vrot.lane.b32.xlu0 %v255, 126
          %v335 = vpop.permute.xlu0 %334
          %336 = vrot.lane.b32.xlu0 %v256, 126
          %v337 = vpop.permute.xlu0 %336
          %338 = vrot.lane.b32.xlu0 %v257, 126
          %v339 = vpop.permute.xlu0 %338
          %vm340 = vcmp.lt.s32.totalorder %v297, 126
          %v341 = vsel %vm340, %v337, %v339
          %v342 = vsel %vm340, %v335, %v337
          %v343 = vsel %vm340, %v339, %v335
          %s344 = sld [smem:[#allocation5 + $0x2]]
          %v345 = vstv %s344
          %v346 = vmul.f32 %v345, %v342
          %v347 = vmul.f32 %v345, %v341
          %v348 = vmul.f32 %v345, %v343
          %v349 = vadd.f32 %v307, %v346
          %v350 = vadd.f32 %v308, %v347
          %v351 = vadd.f32 %v309, %v348
          %s352 = sld [smem:[#allocation5 + $0x202]]
          %v353 = vstv %s352
          %v354 = vmul.f32 %v353, %v342
          %v355 = vmul.f32 %v353, %v341
          %v356 = vmul.f32 %v353, %v343
          %v357 = vadd.f32 %v315, %v354
          %v358 = vadd.f32 %v316, %v355
          %v359 = vadd.f32 %v317, %v356
          %s360 = sld [smem:[#allocation5 + $0x402]]
          %v361 = vstv %s360
          %v362 = vmul.f32 %v361, %v342
          %v363 = vmul.f32 %v361, %v341
          %v364 = vmul.f32 %v361, %v343
          %v365 = vadd.f32 %v323, %v362
          %v366 = vadd.f32 %v324, %v363
          %v367 = vadd.f32 %v325, %v364
          %s368 = sld [smem:[#allocation5 + $0x602]]
          %v369 = vstv %s368
          %v370 = vmul.f32 %v369, %v342
          %v371 = vmul.f32 %v369, %v341
          %v372 = vmul.f32 %v369, %v343
          %v373 = vadd.f32 %v331, %v370
          %v374 = vadd.f32 %v332, %v371
          %v375 = vadd.f32 %v333, %v372
          %376 = vrot.lane.b32.xlu0 %v255, 110
          %v377 = vpop.permute.xlu0 %376
          %378 = vrot.lane.b32.xlu0 %v256, 110
          %v379 = vpop.permute.xlu0 %378
          %380 = vrot.lane.b32.xlu0 %v257, 110
          %v381 = vpop.permute.xlu0 %380
          %vm382 = vcmp.lt.s32.totalorder %v297, 110
          %v383 = vsel %vm382, %v379, %v381
          %v384 = vsel %vm382, %v377, %v379
          %v385 = vsel %vm382, %v381, %v377
          %s386 = sld [smem:[#allocation5 + $0x3]]
          %v387 = vstv %s386
          %v388 = vmul.f32 %v387, %v384
          %v389 = vmul.f32 %v387, %v383
          %v390 = vmul.f32 %v387, %v385
          %v391 = vadd.f32 %v349, %v388
          %v392 = vadd.f32 %v350, %v389
          %v393 = vadd.f32 %v351, %v390
          %s394 = sld [smem:[#allocation5 + $0x203]]
          %v395 = vstv %s394
          %v396 = vmul.f32 %v395, %v384
          %v397 = vmul.f32 %v395, %v383
          %v398 = vmul.f32 %v395, %v385
          %v399 = vadd.f32 %v357, %v396
          %v400 = vadd.f32 %v358, %v397
          %v401 = vadd.f32 %v359, %v398
          %s402 = sld [smem:[#allocation5 + $0x403]]
          %v403 = vstv %s402
          %v404 = vmul.f32 %v403, %v384
          %v405 = vmul.f32 %v403, %v383
          %v406 = vmul.f32 %v403, %v385
          %v407 = vadd.f32 %v365, %v404
          %v408 = vadd.f32 %v366, %v405
          %v409 = vadd.f32 %v367, %v406
          %s410 = sld [smem:[#allocation5 + $0x603]]
          %v411 = vstv %s410
          %v412 = vmul.f32 %v411, %v384
          %v413 = vmul.f32 %v411, %v383
          %v414 = vmul.f32 %v411, %v385
          %v415 = vadd.f32 %v373, %v412
          %v416 = vadd.f32 %v374, %v413
          %v417 = vadd.f32 %v375, %v414
          %418 = vrot.lane.b32.xlu0 %v255, 109
          %v419 = vpop.permute.xlu0 %418
          %420 = vrot.lane.b32.xlu0 %v256, 109
          %v421 = vpop.permute.xlu0 %420
          %422 = vrot.lane.b32.xlu0 %v257, 109
          %v423 = vpop.permute.xlu0 %422
          %vm424 = vcmp.lt.s32.totalorder %v297, 109
          %v425 = vsel %vm424, %v421, %v423
          %v426 = vsel %vm424, %v419, %v421
          %v427 = vsel %vm424, %v423, %v419
          %s428 = sld [smem:[#allocation5 + $0x4]]
          %v429 = vstv %s428
          %v430 = vmul.f32 %v429, %v426
          %v431 = vmul.f32 %v429, %v425
          %v432 = vmul.f32 %v429, %v427
          %v433 = vadd.f32 %v391, %v430
          %v434 = vadd.f32 %v392, %v431
          %v435 = vadd.f32 %v393, %v432
          %s436 = sld [smem:[#allocation5 + $0x204]]
          %v437 = vstv %s436
          %v438 = vmul.f32 %v437, %v426
          %v439 = vmul.f32 %v437, %v425
          %v440 = vmul.f32 %v437, %v427
          %v441 = vadd.f32 %v399, %v438
          %v442 = vadd.f32 %v400, %v439
          %v443 = vadd.f32 %v401, %v440
          %s444 = sld [smem:[#allocation5 + $0x404]]
          %v445 = vstv %s444
          %v446 = vmul.f32 %v445, %v426
          %v447 = vmul.f32 %v445, %v425
          %v448 = vmul.f32 %v445, %v427
          %v449 = vadd.f32 %v407, %v446
          %v450 = vadd.f32 %v408, %v447
          %v451 = vadd.f32 %v409, %v448
          %s452 = sld [smem:[#allocation5 + $0x604]]
          %v453 = vstv %s452
          %v454 = vmul.f32 %v453, %v426
          %v455 = vmul.f32 %v453, %v425
          %v456 = vmul.f32 %v453, %v427
          %v457 = vadd.f32 %v415, %v454
          %v458 = vadd.f32 %v416, %v455
          %v459 = vadd.f32 %v417, %v456
          %460 = vrot.lane.b32.xlu0 %v255, 108
          %v461 = vpop.permute.xlu0 %460
          %462 = vrot.lane.b32.xlu0 %v256, 108
          %v463 = vpop.permute.xlu0 %462
          %464 = vrot.lane.b32.xlu0 %v257, 108
          %v465 = vpop.permute.xlu0 %464
          %vm466 = vcmp.lt.s32.totalorder %v297, 108
          %v467 = vsel %vm466, %v463, %v465
          %v468 = vsel %vm466, %v461, %v463
          %v469 = vsel %vm466, %v465, %v461
          %s470 = sld [smem:[#allocation5 + $0x5]]
          %v471 = vstv %s470
          %v472 = vmul.f32 %v471, %v468
          %v473 = vmul.f32 %v471, %v467
          %v474 = vmul.f32 %v471, %v469
          %v475 = vadd.f32 %v433, %v472
          %v476 = vadd.f32 %v434, %v473
          %v477 = vadd.f32 %v435, %v474
          %s478 = sld [smem:[#allocation5 + $0x205]]
          %v479 = vstv %s478
          %v480 = vmul.f32 %v479, %v468
          %v481 = vmul.f32 %v479, %v467
          %v482 = vmul.f32 %v479, %v469
          %v483 = vadd.f32 %v441, %v480
          %v484 = vadd.f32 %v442, %v481
          %v485 = vadd.f32 %v443, %v482
          %s486 = sld [smem:[#allocation5 + $0x405]]
          %v487 = vstv %s486
          %v488 = vmul.f32 %v487, %v468
          %v489 = vmul.f32 %v487, %v467
          %v490 = vmul.f32 %v487, %v469
          %v491 = vadd.f32 %v449, %v488
          %v492 = vadd.f32 %v450, %v489
          %v493 = vadd.f32 %v451, %v490
          %s494 = sld [smem:[#allocation5 + $0x605]]
          %v495 = vstv %s494
          %v496 = vmul.f32 %v495, %v468
          %v497 = vmul.f32 %v495, %v467
          %v498 = vmul.f32 %v495, %v469
          %v499 = vadd.f32 %v457, %v496
          %v500 = vadd.f32 %v458, %v497
          %v501 = vadd.f32 %v459, %v498
          %502 = vrot.lane.b32.xlu0 %v255, 92
          %v503 = vpop.permute.xlu0 %502
          %504 = vrot.lane.b32.xlu0 %v256, 92
          %v505 = vpop.permute.xlu0 %504
          %506 = vrot.lane.b32.xlu0 %v257, 92
          %v507 = vpop.permute.xlu0 %506
          %vm508 = vcmp.lt.s32.totalorder %v297, 92
          %v509 = vsel %vm508, %v505, %v507
          %v510 = vsel %vm508, %v503, %v505
          %v511 = vsel %vm508, %v507, %v503
          %s512 = sld [smem:[#allocation5 + $0x6]]
          %v513 = vstv %s512
          %v514 = vmul.f32 %v513, %v510
          %v515 = vmul.f32 %v513, %v509
          %v516 = vmul.f32 %v513, %v511
          %v517 = vadd.f32 %v475, %v514
          %v518 = vadd.f32 %v476, %v515
          %v519 = vadd.f32 %v477, %v516
          %s520 = sld [smem:[#allocation5 + $0x206]]
          %v521 = vstv %s520
          %v522 = vmul.f32 %v521, %v510
          %v523 = vmul.f32 %v521, %v509
          %v524 = vmul.f32 %v521, %v511
          %v525 = vadd.f32 %v483, %v522
          %v526 = vadd.f32 %v484, %v523
          %v527 = vadd.f32 %v485, %v524
          %s528 = sld [smem:[#allocation5 + $0x406]]
          %v529 = vstv %s528
          %v530 = vmul.f32 %v529, %v510
          %v531 = vmul.f32 %v529, %v509
          %v532 = vmul.f32 %v529, %v511
          %v533 = vadd.f32 %v491, %v530
          %v534 = vadd.f32 %v492, %v531
          %v535 = vadd.f32 %v493, %v532
          %s536 = sld [smem:[#allocation5 + $0x606]]
          %v537 = vstv %s536
          %v538 = vmul.f32 %v537, %v510
          %v539 = vmul.f32 %v537, %v509
          %v540 = vmul.f32 %v537, %v511
          %v541 = vadd.f32 %v499, %v538
          %v542 = vadd.f32 %v500, %v539
          %v543 = vadd.f32 %v501, %v540
          %544 = vrot.lane.b32.xlu0 %v255, 91
          %v545 = vpop.permute.xlu0 %544
          %546 = vrot.lane.b32.xlu0 %v256, 91
          %v547 = vpop.permute.xlu0 %546
          %548 = vrot.lane.b32.xlu0 %v257, 91
          %v549 = vpop.permute.xlu0 %548
          %vm550 = vcmp.lt.s32.totalorder %v297, 91
          %v551 = vsel %vm550, %v547, %v549
          %v552 = vsel %vm550, %v545, %v547
          %v553 = vsel %vm550, %v549, %v545
          %s554 = sld [smem:[#allocation5 + $0x7]]
          %v555 = vstv %s554
          %v556 = vmul.f32 %v555, %v552
          %v557 = vmul.f32 %v555, %v551
          %v558 = vmul.f32 %v555, %v553
          %v559 = vadd.f32 %v517, %v556
          %v560 = vadd.f32 %v518, %v557
          %v561 = vadd.f32 %v519, %v558
          %s562 = sld [smem:[#allocation5 + $0x207]]
          %v563 = vstv %s562
          %v564 = vmul.f32 %v563, %v552
          %v565 = vmul.f32 %v563, %v551
          %v566 = vmul.f32 %v563, %v553
          %v567 = vadd.f32 %v525, %v564
          %v568 = vadd.f32 %v526, %v565
          %v569 = vadd.f32 %v527, %v566
          %s570 = sld [smem:[#allocation5 + $0x407]]
          %v571 = vstv %s570
          %v572 = vmul.f32 %v571, %v552
          %v573 = vmul.f32 %v571, %v551
          %v574 = vmul.f32 %v571, %v553
          %v575 = vadd.f32 %v533, %v572
          %v576 = vadd.f32 %v534, %v573
          %v577 = vadd.f32 %v535, %v574
          %s578 = sld [smem:[#allocation5 + $0x607]]
          %v579 = vstv %s578
          %v580 = vmul.f32 %v579, %v552
          %v581 = vmul.f32 %v579, %v551
          %v582 = vmul.f32 %v579, %v553
          %v583 = vadd.f32 %v541, %v580
          %v584 = vadd.f32 %v542, %v581
          %v585 = vadd.f32 %v543, %v582
          %586 = vrot.lane.b32.xlu0 %v255, 90
          %v587 = vpop.permute.xlu0 %586
          %588 = vrot.lane.b32.xlu0 %v256, 90
          %v589 = vpop.permute.xlu0 %588
          %590 = vrot.lane.b32.xlu0 %v257, 90
          %v591 = vpop.permute.xlu0 %590
          %vm592 = vcmp.lt.s32.totalorder %v297, 90
          %v593 = vsel %vm592, %v589, %v591
          %v594 = vsel %vm592, %v587, %v589
          %v595 = vsel %vm592, %v591, %v587
          %s596 = sld [smem:[#allocation5 + $0x8]]
          %v597 = vstv %s596
          %v598 = vmul.f32 %v597, %v594
          %v599 = vmul.f32 %v597, %v593
          %v600 = vmul.f32 %v597, %v595
          %v601 = vadd.f32 %v559, %v598
          %v602 = vadd.f32 %v560, %v599
          %v603 = vadd.f32 %v561, %v600
          %s604 = sld [smem:[#allocation5 + $0x208]]
          %v605 = vstv %s604
          %v606 = vmul.f32 %v605, %v594
          %v607 = vmul.f32 %v605, %v593
          %v608 = vmul.f32 %v605, %v595
          %v609 = vadd.f32 %v567, %v606
          %v610 = vadd.f32 %v568, %v607
          %v611 = vadd.f32 %v569, %v608
          %s612 = sld [smem:[#allocation5 + $0x408]]
          %v613 = vstv %s612
          %v614 = vmul.f32 %v613, %v594
          %v615 = vmul.f32 %v613, %v593
          %v616 = vmul.f32 %v613, %v595
          %v617 = vadd.f32 %v575, %v614
          %v618 = vadd.f32 %v576, %v615
          %v619 = vadd.f32 %v577, %v616
          %s620 = sld [smem:[#allocation5 + $0x608]]
          %v621 = vstv %s620
          %v622 = vmul.f32 %v621, %v594
          %v623 = vmul.f32 %v621, %v593
          %v624 = vmul.f32 %v621, %v595
          %v625 = vadd.f32 %v583, %v622
          %v626 = vadd.f32 %v584, %v623
          %v627 = vadd.f32 %v585, %v624
          %v628 = vld [vmem:[%s241] sm:$0xfe]
          %v629 = vld [vmem:[%s241 + $0x8] sm:$0xfe]
          %v630 = vld [vmem:[%s241 + $0x10] sm:$0xfe]
          %v631 = vld [vmem:[%s241 + $0x18] sm:$0x1]
          %v632 = vld [vmem:[%s241 + $0x20] sm:$0x1]
          %v633 = vld [vmem:[%s241 + $0x28] sm:$0x1]
          %s634 = sld [smem:[#allocation5 + $0x9]]
          %v635 = vstv %s634
          %v636 = vmul.f32 %v635, %v628
          %v637 = vmul.f32 %v635, %v629
          %v638 = vmul.f32 %v635, %v630
          %v639 = vmul.f32 %v635, %v631
          %v640 = vmul.f32 %v635, %v632
          %v641 = vmul.f32 %v635, %v633
          %vm648 = vcmask 1046528
          %v649 = vrot.slane %v636, 1
          %v650 = vrot.slane %v639, 1
          %v651 = vsel %vm648, %v649, %v650
          %v652 = vrot.slane %v637, 1
          %v653 = vrot.slane %v640, 1
          %v654 = vsel %vm648, %v652, %v653
          %v655 = vrot.slane %v638, 1
          %v656 = vrot.slane %v641, 1
          %v657 = vsel %vm648, %v655, %v656
          %v661 = vadd.f32 %v601, %v651
          %v662 = vadd.f32 %v602, %v654
          %v663 = vadd.f32 %v603, %v657
          %s664 = sld [smem:[#allocation5 + $0x209]]
          %v665 = vstv %s664
          %v666 = vmul.f32 %v665, %v628
          %v667 = vmul.f32 %v665, %v629
          %v668 = vmul.f32 %v665, %v630
          %v669 = vmul.f32 %v665, %v631
          %v670 = vmul.f32 %v665, %v632
          %v671 = vmul.f32 %v665, %v633
          %v678 = vrot.slane %v666, 1
          %v679 = vrot.slane %v669, 1
          %v680 = vsel %vm648, %v678, %v679
          %v681 = vrot.slane %v667, 1
          %v682 = vrot.slane %v670, 1
          %v683 = vsel %vm648, %v681, %v682
          %v684 = vrot.slane %v668, 1
          %v685 = vrot.slane %v671, 1
          %v686 = vsel %vm648, %v684, %v685
          %v690 = vadd.f32 %v609, %v680
          %v691 = vadd.f32 %v610, %v683
          %v692 = vadd.f32 %v611, %v686
          %s693 = sld [smem:[#allocation5 + $0x409]]
          %v694 = vstv %s693
          %v695 = vmul.f32 %v694, %v628
          %v696 = vmul.f32 %v694, %v629
          %v697 = vmul.f32 %v694, %v630
          %v698 = vmul.f32 %v694, %v631
          %v699 = vmul.f32 %v694, %v632
          %v700 = vmul.f32 %v694, %v633
          %v707 = vrot.slane %v695, 1
          %v708 = vrot.slane %v698, 1
          %v709 = vsel %vm648, %v707, %v708
          %v710 = vrot.slane %v696, 1
          %v711 = vrot.slane %v699, 1
          %v712 = vsel %vm648, %v710, %v711
          %v713 = vrot.slane %v697, 1
          %v714 = vrot.slane %v700, 1
          %v715 = vsel %vm648, %v713, %v714
          %v719 = vadd.f32 %v617, %v709
          %v720 = vadd.f32 %v618, %v712
          %v721 = vadd.f32 %v619, %v715
          %s722 = sld [smem:[#allocation5 + $0x609]]
          %v723 = vstv %s722
          %v724 = vmul.f32 %v723, %v628
          %v725 = vmul.f32 %v723, %v629
          %v726 = vmul.f32 %v723, %v630
          %v727 = vmul.f32 %v723, %v631
          %v728 = vmul.f32 %v723, %v632
          %v729 = vmul.f32 %v723, %v633
          %v736 = vrot.slane %v724, 1
          %v737 = vrot.slane %v727, 1
          %v738 = vsel %vm648, %v736, %v737
          %v739 = vrot.slane %v725, 1
          %v740 = vrot.slane %v728, 1
          %v741 = vsel %vm648, %v739, %v740
          %v742 = vrot.slane %v726, 1
          %v743 = vrot.slane %v729, 1
          %v744 = vsel %vm648, %v742, %v743
          %v748 = vadd.f32 %v625, %v738
          %v749 = vadd.f32 %v626, %v741
          %v750 = vadd.f32 %v627, %v744
          %v757 = vrot.slane %v628, 1
          %v758 = vrot.slane %v631, 1
          %v759 = vsel %vm648, %v757, %v758
          %v760 = vrot.slane %v629, 1
          %v761 = vrot.slane %v632, 1
          %v762 = vsel %vm648, %v760, %v761
          %v763 = vrot.slane %v630, 1
          %v764 = vrot.slane %v633, 1
          %v765 = vsel %vm648, %v763, %v764
          %769 = vrot.lane.b32.xlu0 %v759, 127
          %v770 = vpop.permute.xlu0 %769
          %771 = vrot.lane.b32.xlu0 %v762, 127
          %v772 = vpop.permute.xlu0 %771
          %773 = vrot.lane.b32.xlu0 %v765, 127
          %v774 = vpop.permute.xlu0 %773
          %v775 = vsel %vm298, %v772, %v774
          %v776 = vsel %vm298, %v770, %v772
          %v777 = vsel %vm298, %v774, %v770
          %s778 = sld [smem:[#allocation5 + $0xa]]
          %v779 = vstv %s778
          %v780 = vmul.f32 %v779, %v776
          %v781 = vmul.f32 %v779, %v775
          %v782 = vmul.f32 %v779, %v777
          %v783 = vadd.f32 %v661, %v780
          %v784 = vadd.f32 %v662, %v781
          %v785 = vadd.f32 %v663, %v782
          %s786 = sld [smem:[#allocation5 + $0x20a]]
          %v787 = vstv %s786
          %v788 = vmul.f32 %v787, %v776
          %v789 = vmul.f32 %v787, %v775
          %v790 = vmul.f32 %v787, %v777
          %v791 = vadd.f32 %v690, %v788
          %v792 = vadd.f32 %v691, %v789
          %v793 = vadd.f32 %v692, %v790
          %s794 = sld [smem:[#allocation5 + $0x40a]]
          %v795 = vstv %s794
          %v796 = vmul.f32 %v795, %v776
          %v797 = vmul.f32 %v795, %v775
          %v798 = vmul.f32 %v795, %v777
          %v799 = vadd.f32 %v719, %v796
          %v800 = vadd.f32 %v720, %v797
          %v801 = vadd.f32 %v721, %v798
          %s802 = sld [smem:[#allocation5 + $0x60a]]
          %v803 = vstv %s802
          %v804 = vmul.f32 %v803, %v776
          %v805 = vmul.f32 %v803, %v775
          %v806 = vmul.f32 %v803, %v777
          %v807 = vadd.f32 %v748, %v804
          %v808 = vadd.f32 %v749, %v805
          %v809 = vadd.f32 %v750, %v806
          %810 = vrot.lane.b32.xlu0 %v759, 126
          %v811 = vpop.permute.xlu0 %810
          %812 = vrot.lane.b32.xlu0 %v762, 126
          %v813 = vpop.permute.xlu0 %812
          %814 = vrot.lane.b32.xlu0 %v765, 126
          %v815 = vpop.permute.xlu0 %814
          %v816 = vsel %vm340, %v813, %v815
          %v817 = vsel %vm340, %v811, %v813
          %v818 = vsel %vm340, %v815, %v811
          %s819 = sld [smem:[#allocation5 + $0xb]]
          %v820 = vstv %s819
          %v821 = vmul.f32 %v820, %v817
          %v822 = vmul.f32 %v820, %v816
          %v823 = vmul.f32 %v820, %v818
          %v824 = vadd.f32 %v783, %v821
          %v825 = vadd.f32 %v784, %v822
          %v826 = vadd.f32 %v785, %v823
          %s827 = sld [smem:[#allocation5 + $0x20b]]
          %v828 = vstv %s827
          %v829 = vmul.f32 %v828, %v817
          %v830 = vmul.f32 %v828, %v816
          %v831 = vmul.f32 %v828, %v818
          %v832 = vadd.f32 %v791, %v829
          %v833 = vadd.f32 %v792, %v830
          %v834 = vadd.f32 %v793, %v831
          %s835 = sld [smem:[#allocation5 + $0x40b]]
          %v836 = vstv %s835
          %v837 = vmul.f32 %v836, %v817
          %v838 = vmul.f32 %v836, %v816
          %v839 = vmul.f32 %v836, %v818
          %v840 = vadd.f32 %v799, %v837
          %v841 = vadd.f32 %v800, %v838
          %v842 = vadd.f32 %v801, %v839
          %s843 = sld [smem:[#allocation5 + $0x60b]]
          %v844 = vstv %s843
          %v845 = vmul.f32 %v844, %v817
          %v846 = vmul.f32 %v844, %v816
          %v847 = vmul.f32 %v844, %v818
          %v848 = vadd.f32 %v807, %v845
          %v849 = vadd.f32 %v808, %v846
          %v850 = vadd.f32 %v809, %v847
          %851 = vrot.lane.b32.xlu0 %v759, 110
          %v852 = vpop.permute.xlu0 %851
          %853 = vrot.lane.b32.xlu0 %v762, 110
          %v854 = vpop.permute.xlu0 %853
          %855 = vrot.lane.b32.xlu0 %v765, 110
          %v856 = vpop.permute.xlu0 %855
          %v857 = vsel %vm382, %v854, %v856
          %v858 = vsel %vm382, %v852, %v854
          %v859 = vsel %vm382, %v856, %v852
          %s860 = sld [smem:[#allocation5 + $0xc]]
          %v861 = vstv %s860
          %v862 = vmul.f32 %v861, %v858
          %v863 = vmul.f32 %v861, %v857
          %v864 = vmul.f32 %v861, %v859
          %v865 = vadd.f32 %v824, %v862
          %v866 = vadd.f32 %v825, %v863
          %v867 = vadd.f32 %v826, %v864
          %s868 = sld [smem:[#allocation5 + $0x20c]]
          %v869 = vstv %s868
          %v870 = vmul.f32 %v869, %v858
          %v871 = vmul.f32 %v869, %v857
          %v872 = vmul.f32 %v869, %v859
          %v873 = vadd.f32 %v832, %v870
          %v874 = vadd.f32 %v833, %v871
          %v875 = vadd.f32 %v834, %v872
          %s876 = sld [smem:[#allocation5 + $0x40c]]
          %v877 = vstv %s876
          %v878 = vmul.f32 %v877, %v858
          %v879 = vmul.f32 %v877, %v857
          %v880 = vmul.f32 %v877, %v859
          %v881 = vadd.f32 %v840, %v878
          %v882 = vadd.f32 %v841, %v879
          %v883 = vadd.f32 %v842, %v880
          %s884 = sld [smem:[#allocation5 + $0x60c]]
          %v885 = vstv %s884
          %v886 = vmul.f32 %v885, %v858
          %v887 = vmul.f32 %v885, %v857
          %v888 = vmul.f32 %v885, %v859
          %v889 = vadd.f32 %v848, %v886
          %v890 = vadd.f32 %v849, %v887
          %v891 = vadd.f32 %v850, %v888
          %892 = vrot.lane.b32.xlu0 %v759, 109
          %v893 = vpop.permute.xlu0 %892
          %894 = vrot.lane.b32.xlu0 %v762, 109
          %v895 = vpop.permute.xlu0 %894
          %896 = vrot.lane.b32.xlu0 %v765, 109
          %v897 = vpop.permute.xlu0 %896
          %v898 = vsel %vm424, %v895, %v897
          %v899 = vsel %vm424, %v893, %v895
          %v900 = vsel %vm424, %v897, %v893
          %s901 = sld [smem:[#allocation5 + $0xd]]
          %v902 = vstv %s901
          %v903 = vmul.f32 %v902, %v899
          %v904 = vmul.f32 %v902, %v898
          %v905 = vmul.f32 %v902, %v900
          %v906 = vadd.f32 %v865, %v903
          %v907 = vadd.f32 %v866, %v904
          %v908 = vadd.f32 %v867, %v905
          %s909 = sld [smem:[#allocation5 + $0x20d]]
          %v910 = vstv %s909
          %v911 = vmul.f32 %v910, %v899
          %v912 = vmul.f32 %v910, %v898
          %v913 = vmul.f32 %v910, %v900
          %v914 = vadd.f32 %v873, %v911
          %v915 = vadd.f32 %v874, %v912
          %v916 = vadd.f32 %v875, %v913
          %s917 = sld [smem:[#allocation5 + $0x40d]]
          %v918 = vstv %s917
          %v919 = vmul.f32 %v918, %v899
          %v920 = vmul.f32 %v918, %v898
          %v921 = vmul.f32 %v918, %v900
          %v922 = vadd.f32 %v881, %v919
          %v923 = vadd.f32 %v882, %v920
          %v924 = vadd.f32 %v883, %v921
          %s925 = sld [smem:[#allocation5 + $0x60d]]
          %v926 = vstv %s925
          %v927 = vmul.f32 %v926, %v899
          %v928 = vmul.f32 %v926, %v898
          %v929 = vmul.f32 %v926, %v900
          %v930 = vadd.f32 %v889, %v927
          %v931 = vadd.f32 %v890, %v928
          %v932 = vadd.f32 %v891, %v929
          %933 = vrot.lane.b32.xlu0 %v759, 108
          %v934 = vpop.permute.xlu0 %933
          %935 = vrot.lane.b32.xlu0 %v762, 108
          %v936 = vpop.permute.xlu0 %935
          %937 = vrot.lane.b32.xlu0 %v765, 108
          %v938 = vpop.permute.xlu0 %937
          %v939 = vsel %vm466, %v936, %v938
          %v940 = vsel %vm466, %v934, %v936
          %v941 = vsel %vm466, %v938, %v934
          %s942 = sld [smem:[#allocation5 + $0xe]]
          %v943 = vstv %s942
          %v944 = vmul.f32 %v943, %v940
          %v945 = vmul.f32 %v943, %v939
          %v946 = vmul.f32 %v943, %v941
          %v947 = vadd.f32 %v906, %v944
          %v948 = vadd.f32 %v907, %v945
          %v949 = vadd.f32 %v908, %v946
          %s950 = sld [smem:[#allocation5 + $0x20e]]
          %v951 = vstv %s950
          %v952 = vmul.f32 %v951, %v940
          %v953 = vmul.f32 %v951, %v939
          %v954 = vmul.f32 %v951, %v941
          %v955 = vadd.f32 %v914, %v952
          %v956 = vadd.f32 %v915, %v953
          %v957 = vadd.f32 %v916, %v954
          %s958 = sld [smem:[#allocation5 + $0x40e]]
          %v959 = vstv %s958
          %v960 = vmul.f32 %v959, %v940
          %v961 = vmul.f32 %v959, %v939
          %v962 = vmul.f32 %v959, %v941
          %v963 = vadd.f32 %v922, %v960
          %v964 = vadd.f32 %v923, %v961
          %v965 = vadd.f32 %v924, %v962
          %s966 = sld [smem:[#allocation5 + $0x60e]]
          %v967 = vstv %s966
          %v968 = vmul.f32 %v967, %v940
          %v969 = vmul.f32 %v967, %v939
          %v970 = vmul.f32 %v967, %v941
          %v971 = vadd.f32 %v930, %v968
          %v972 = vadd.f32 %v931, %v969
          %v973 = vadd.f32 %v932, %v970
          %974 = vrot.lane.b32.xlu0 %v759, 92
          %v975 = vpop.permute.xlu0 %974
          %976 = vrot.lane.b32.xlu0 %v762, 92
          %v977 = vpop.permute.xlu0 %976
          %978 = vrot.lane.b32.xlu0 %v765, 92
          %v979 = vpop.permute.xlu0 %978
          %v980 = vsel %vm508, %v977, %v979
          %v981 = vsel %vm508, %v975, %v977
          %v982 = vsel %vm508, %v979, %v975
          %s983 = sld [smem:[#allocation5 + $0xf]]
          %v984 = vstv %s983
          %v985 = vmul.f32 %v984, %v981
          %v986 = vmul.f32 %v984, %v980
          %v987 = vmul.f32 %v984, %v982
          %v988 = vadd.f32 %v947, %v985
          %v989 = vadd.f32 %v948, %v986
          %v990 = vadd.f32 %v949, %v987
          %s991 = sld [smem:[#allocation5 + $0x20f]]
          %v992 = vstv %s991
          %v993 = vmul.f32 %v992, %v981
          %v994 = vmul.f32 %v992, %v980
          %v995 = vmul.f32 %v992, %v982
          %v996 = vadd.f32 %v955, %v993
          %v997 = vadd.f32 %v956, %v994
          %v998 = vadd.f32 %v957, %v995
          %s999 = sld [smem:[#allocation5 + $0x40f]]
          %v1000 = vstv %s999
          %v1001 = vmul.f32 %v1000, %v981
          %v1002 = vmul.f32 %v1000, %v980
          %v1003 = vmul.f32 %v1000, %v982
          %v1004 = vadd.f32 %v963, %v1001
          %v1005 = vadd.f32 %v964, %v1002
          %v1006 = vadd.f32 %v965, %v1003
          %s1007 = sld [smem:[#allocation5 + $0x60f]]
          %v1008 = vstv %s1007
          %v1009 = vmul.f32 %v1008, %v981
          %v1010 = vmul.f32 %v1008, %v980
          %v1011 = vmul.f32 %v1008, %v982
          %v1012 = vadd.f32 %v971, %v1009
          %v1013 = vadd.f32 %v972, %v1010
          %v1014 = vadd.f32 %v973, %v1011
          %1015 = vrot.lane.b32.xlu0 %v759, 91
          %v1016 = vpop.permute.xlu0 %1015
          %1017 = vrot.lane.b32.xlu0 %v762, 91
          %v1018 = vpop.permute.xlu0 %1017
          %1019 = vrot.lane.b32.xlu0 %v765, 91
          %v1020 = vpop.permute.xlu0 %1019
          %v1021 = vsel %vm550, %v1018, %v1020
          %v1022 = vsel %vm550, %v1016, %v1018
          %v1023 = vsel %vm550, %v1020, %v1016
          %s1024 = sld [smem:[#allocation5 + $0x10]]
          %v1025 = vstv %s1024
          %v1026 = vmul.f32 %v1025, %v1022
          %v1027 = vmul.f32 %v1025, %v1021
          %v1028 = vmul.f32 %v1025, %v1023
          %v1029 = vadd.f32 %v988, %v1026
          %v1030 = vadd.f32 %v989, %v1027
          %v1031 = vadd.f32 %v990, %v1028
          %s1032 = sld [smem:[#allocation5 + $0x210]]
          %v1033 = vstv %s1032
          %v1034 = vmul.f32 %v1033, %v1022
          %v1035 = vmul.f32 %v1033, %v1021
          %v1036 = vmul.f32 %v1033, %v1023
          %v1037 = vadd.f32 %v996, %v1034
          %v1038 = vadd.f32 %v997, %v1035
          %v1039 = vadd.f32 %v998, %v1036
          %s1040 = sld [smem:[#allocation5 + $0x410]]
          %v1041 = vstv %s1040
          %v1042 = vmul.f32 %v1041, %v1022
          %v1043 = vmul.f32 %v1041, %v1021
          %v1044 = vmul.f32 %v1041, %v1023
          %v1045 = vadd.f32 %v1004, %v1042
          %v1046 = vadd.f32 %v1005, %v1043
          %v1047 = vadd.f32 %v1006, %v1044
          %s1048 = sld [smem:[#allocation5 + $0x610]]
          %v1049 = vstv %s1048
          %v1050 = vmul.f32 %v1049, %v1022
          %v1051 = vmul.f32 %v1049, %v1021
          %v1052 = vmul.f32 %v1049, %v1023
          %v1053 = vadd.f32 %v1012, %v1050
          %v1054 = vadd.f32 %v1013, %v1051
          %v1055 = vadd.f32 %v1014, %v1052
          %1056 = vrot.lane.b32.xlu0 %v759, 90
          %v1057 = vpop.permute.xlu0 %1056
          %1058 = vrot.lane.b32.xlu0 %v762, 90
          %v1059 = vpop.permute.xlu0 %1058
          %1060 = vrot.lane.b32.xlu0 %v765, 90
          %v1061 = vpop.permute.xlu0 %1060
          %v1062 = vsel %vm592, %v1059, %v1061
          %v1063 = vsel %vm592, %v1057, %v1059
          %v1064 = vsel %vm592, %v1061, %v1057
          %s1065 = sld [smem:[#allocation5 + $0x11]]
          %v1066 = vstv %s1065
          %v1067 = vmul.f32 %v1066, %v1063
          %v1068 = vmul.f32 %v1066, %v1062
          %v1069 = vmul.f32 %v1066, %v1064
          %v1070 = vadd.f32 %v1029, %v1067
          %v1071 = vadd.f32 %v1030, %v1068
          %v1072 = vadd.f32 %v1031, %v1069
          %s1073 = sld [smem:[#allocation5 + $0x211]]
          %v1074 = vstv %s1073
          %v1075 = vmul.f32 %v1074, %v1063
          %v1076 = vmul.f32 %v1074, %v1062
          %v1077 = vmul.f32 %v1074, %v1064
          %v1078 = vadd.f32 %v1037, %v1075
          %v1079 = vadd.f32 %v1038, %v1076
          %v1080 = vadd.f32 %v1039, %v1077
          %s1081 = sld [smem:[#allocation5 + $0x411]]
          %v1082 = vstv %s1081
          %v1083 = vmul.f32 %v1082, %v1063
          %v1084 = vmul.f32 %v1082, %v1062
          %v1085 = vmul.f32 %v1082, %v1064
          %v1086 = vadd.f32 %v1045, %v1083
          %v1087 = vadd.f32 %v1046, %v1084
          %v1088 = vadd.f32 %v1047, %v1085
          %s1089 = sld [smem:[#allocation5 + $0x611]]
          %v1090 = vstv %s1089
          %v1091 = vmul.f32 %v1090, %v1063
          %v1092 = vmul.f32 %v1090, %v1062
          %v1093 = vmul.f32 %v1090, %v1064
          %v1094 = vadd.f32 %v1053, %v1091
          %v1095 = vadd.f32 %v1054, %v1092
          %v1096 = vadd.f32 %v1055, %v1093
          %v1097 = vld [vmem:[%s241] sm:$0xfc]
          %v1098 = vld [vmem:[%s241 + $0x8] sm:$0xfc]
          %v1099 = vld [vmem:[%s241 + $0x10] sm:$0xfc]
          %v1100 = vld [vmem:[%s241 + $0x18] sm:$0x3]
          %v1101 = vld [vmem:[%s241 + $0x20] sm:$0x3]
          %v1102 = vld [vmem:[%s241 + $0x28] sm:$0x3]
          %s1103 = sld [smem:[#allocation5 + $0x12]]
          %v1104 = vstv %s1103
          %v1105 = vmul.f32 %v1104, %v1097
          %v1106 = vmul.f32 %v1104, %v1098
          %v1107 = vmul.f32 %v1104, %v1099
          %v1108 = vmul.f32 %v1104, %v1100
          %v1109 = vmul.f32 %v1104, %v1101
          %v1110 = vmul.f32 %v1104, %v1102
          %vm1117 = vcmask 1045504
          %v1118 = vrot.slane %v1105, 2
          %v1119 = vrot.slane %v1108, 2
          %v1120 = vsel %vm1117, %v1118, %v1119
          %v1121 = vrot.slane %v1106, 2
          %v1122 = vrot.slane %v1109, 2
          %v1123 = vsel %vm1117, %v1121, %v1122
          %v1124 = vrot.slane %v1107, 2
          %v1125 = vrot.slane %v1110, 2
          %v1126 = vsel %vm1117, %v1124, %v1125
          %v1130 = vadd.f32 %v1070, %v1120
          %v1131 = vadd.f32 %v1071, %v1123
          %v1132 = vadd.f32 %v1072, %v1126
          %s1133 = sld [smem:[#allocation5 + $0x212]]
          %v1134 = vstv %s1133
          %v1135 = vmul.f32 %v1134, %v1097
          %v1136 = vmul.f32 %v1134, %v1098
          %v1137 = vmul.f32 %v1134, %v1099
          %v1138 = vmul.f32 %v1134, %v1100
          %v1139 = vmul.f32 %v1134, %v1101
          %v1140 = vmul.f32 %v1134, %v1102
          %v1147 = vrot.slane %v1135, 2
          %v1148 = vrot.slane %v1138, 2
          %v1149 = vsel %vm1117, %v1147, %v1148
          %v1150 = vrot.slane %v1136, 2
          %v1151 = vrot.slane %v1139, 2
          %v1152 = vsel %vm1117, %v1150, %v1151
          %v1153 = vrot.slane %v1137, 2
          %v1154 = vrot.slane %v1140, 2
          %v1155 = vsel %vm1117, %v1153, %v1154
          %v1159 = vadd.f32 %v1078, %v1149
          %v1160 = vadd.f32 %v1079, %v1152
          %v1161 = vadd.f32 %v1080, %v1155
          %s1162 = sld [smem:[#allocation5 + $0x412]]
          %v1163 = vstv %s1162
          %v1164 = vmul.f32 %v1163, %v1097
          %v1165 = vmul.f32 %v1163, %v1098
          %v1166 = vmul.f32 %v1163, %v1099
          %v1167 = vmul.f32 %v1163, %v1100
          %v1168 = vmul.f32 %v1163, %v1101
          %v1169 = vmul.f32 %v1163, %v1102
          %v1176 = vrot.slane %v1164, 2
          %v1177 = vrot.slane %v1167, 2
          %v1178 = vsel %vm1117, %v1176, %v1177
          %v1179 = vrot.slane %v1165, 2
          %v1180 = vrot.slane %v1168, 2
          %v1181 = vsel %vm1117, %v1179, %v1180
          %v1182 = vrot.slane %v1166, 2
          %v1183 = vrot.slane %v1169, 2
          %v1184 = vsel %vm1117, %v1182, %v1183
          %v1188 = vadd.f32 %v1086, %v1178
          %v1189 = vadd.f32 %v1087, %v1181
          %v1190 = vadd.f32 %v1088, %v1184
          %s1191 = sld [smem:[#allocation5 + $0x612]]
          %v1192 = vstv %s1191
          %v1193 = vmul.f32 %v1192, %v1097
          %v1194 = vmul.f32 %v1192, %v1098
          %v1195 = vmul.f32 %v1192, %v1099
          %v1196 = vmul.f32 %v1192, %v1100
          %v1197 = vmul.f32 %v1192, %v1101
          %v1198 = vmul.f32 %v1192, %v1102
          %v1205 = vrot.slane %v1193, 2
          %v1206 = vrot.slane %v1196, 2
          %v1207 = vsel %vm1117, %v1205, %v1206
          %v1208 = vrot.slane %v1194, 2
          %v1209 = vrot.slane %v1197, 2
          %v1210 = vsel %vm1117, %v1208, %v1209
          %v1211 = vrot.slane %v1195, 2
          %v1212 = vrot.slane %v1198, 2
          %v1213 = vsel %vm1117, %v1211, %v1212
          %v1217 = vadd.f32 %v1094, %v1207
          %v1218 = vadd.f32 %v1095, %v1210
          %v1219 = vadd.f32 %v1096, %v1213
          %v1226 = vrot.slane %v1097, 2
          %v1227 = vrot.slane %v1100, 2
          %v1228 = vsel %vm1117, %v1226, %v1227
          %v1229 = vrot.slane %v1098, 2
          %v1230 = vrot.slane %v1101, 2
          %v1231 = vsel %vm1117, %v1229, %v1230
          %v1232 = vrot.slane %v1099, 2
          %v1233 = vrot.slane %v1102, 2
          %v1234 = vsel %vm1117, %v1232, %v1233
          %1238 = vrot.lane.b32.xlu0 %v1228, 127
          %v1239 = vpop.permute.xlu0 %1238
          %1240 = vrot.lane.b32.xlu0 %v1231, 127
          %v1241 = vpop.permute.xlu0 %1240
          %1242 = vrot.lane.b32.xlu0 %v1234, 127
          %v1243 = vpop.permute.xlu0 %1242
          %v1244 = vsel %vm298, %v1241, %v1243
          %v1245 = vsel %vm298, %v1239, %v1241
          %v1246 = vsel %vm298, %v1243, %v1239
          %s1247 = sld [smem:[#allocation5 + $0x13]]
          %v1248 = vstv %s1247
          %v1249 = vmul.f32 %v1248, %v1245
          %v1250 = vmul.f32 %v1248, %v1244
          %v1251 = vmul.f32 %v1248, %v1246
          %v1252 = vadd.f32 %v1130, %v1249
          %v1253 = vadd.f32 %v1131, %v1250
          %v1254 = vadd.f32 %v1132, %v1251
          %s1255 = sld [smem:[#allocation5 + $0x213]]
          %v1256 = vstv %s1255
          %v1257 = vmul.f32 %v1256, %v1245
          %v1258 = vmul.f32 %v1256, %v1244
          %v1259 = vmul.f32 %v1256, %v1246
          %v1260 = vadd.f32 %v1159, %v1257
          %v1261 = vadd.f32 %v1160, %v1258
          %v1262 = vadd.f32 %v1161, %v1259
          %s1263 = sld [smem:[#allocation5 + $0x413]]
          %v1264 = vstv %s1263
          %v1265 = vmul.f32 %v1264, %v1245
          %v1266 = vmul.f32 %v1264, %v1244
          %v1267 = vmul.f32 %v1264, %v1246
          %v1268 = vadd.f32 %v1188, %v1265
          %v1269 = vadd.f32 %v1189, %v1266
          %v1270 = vadd.f32 %v1190, %v1267
          %s1271 = sld [smem:[#allocation5 + $0x613]]
          %v1272 = vstv %s1271
          %v1273 = vmul.f32 %v1272, %v1245
          %v1274 = vmul.f32 %v1272, %v1244
          %v1275 = vmul.f32 %v1272, %v1246
          %v1276 = vadd.f32 %v1217, %v1273
          %v1277 = vadd.f32 %v1218, %v1274
          %v1278 = vadd.f32 %v1219, %v1275
          %1279 = vrot.lane.b32.xlu0 %v1228, 126
          %v1280 = vpop.permute.xlu0 %1279
          %1281 = vrot.lane.b32.xlu0 %v1231, 126
          %v1282 = vpop.permute.xlu0 %1281
          %1283 = vrot.lane.b32.xlu0 %v1234, 126
          %v1284 = vpop.permute.xlu0 %1283
          %v1285 = vsel %vm340, %v1282, %v1284
          %v1286 = vsel %vm340, %v1280, %v1282
          %v1287 = vsel %vm340, %v1284, %v1280
          %s1288 = sld [smem:[#allocation5 + $0x14]]
          %v1289 = vstv %s1288
          %v1290 = vmul.f32 %v1289, %v1286
          %v1291 = vmul.f32 %v1289, %v1285
          %v1292 = vmul.f32 %v1289, %v1287
          %v1293 = vadd.f32 %v1252, %v1290
          %v1294 = vadd.f32 %v1253, %v1291
          %v1295 = vadd.f32 %v1254, %v1292
          %s1296 = sld [smem:[#allocation5 + $0x214]]
          %v1297 = vstv %s1296
          %v1298 = vmul.f32 %v1297, %v1286
          %v1299 = vmul.f32 %v1297, %v1285
          %v1300 = vmul.f32 %v1297, %v1287
          %v1301 = vadd.f32 %v1260, %v1298
          %v1302 = vadd.f32 %v1261, %v1299
          %v1303 = vadd.f32 %v1262, %v1300
          %s1304 = sld [smem:[#allocation5 + $0x414]]
          %v1305 = vstv %s1304
          %v1306 = vmul.f32 %v1305, %v1286
          %v1307 = vmul.f32 %v1305, %v1285
          %v1308 = vmul.f32 %v1305, %v1287
          %v1309 = vadd.f32 %v1268, %v1306
          %v1310 = vadd.f32 %v1269, %v1307
          %v1311 = vadd.f32 %v1270, %v1308
          %s1312 = sld [smem:[#allocation5 + $0x614]]
          %v1313 = vstv %s1312
          %v1314 = vmul.f32 %v1313, %v1286
          %v1315 = vmul.f32 %v1313, %v1285
          %v1316 = vmul.f32 %v1313, %v1287
          %v1317 = vadd.f32 %v1276, %v1314
          %v1318 = vadd.f32 %v1277, %v1315
          %v1319 = vadd.f32 %v1278, %v1316
          %1320 = vrot.lane.b32.xlu0 %v1228, 110
          %v1321 = vpop.permute.xlu0 %1320
          %1322 = vrot.lane.b32.xlu0 %v1231, 110
          %v1323 = vpop.permute.xlu0 %1322
          %1324 = vrot.lane.b32.xlu0 %v1234, 110
          %v1325 = vpop.permute.xlu0 %1324
          %v1326 = vsel %vm382, %v1323, %v1325
          %v1327 = vsel %vm382, %v1321, %v1323
          %v1328 = vsel %vm382, %v1325, %v1321
          %s1329 = sld [smem:[#allocation5 + $0x15]]
          %v1330 = vstv %s1329
          %v1331 = vmul.f32 %v1330, %v1327
          %v1332 = vmul.f32 %v1330, %v1326
          %v1333 = vmul.f32 %v1330, %v1328
          %v1334 = vadd.f32 %v1293, %v1331
          %v1335 = vadd.f32 %v1294, %v1332
          %v1336 = vadd.f32 %v1295, %v1333
          %s1337 = sld [smem:[#allocation5 + $0x215]]
          %v1338 = vstv %s1337
          %v1339 = vmul.f32 %v1338, %v1327
          %v1340 = vmul.f32 %v1338, %v1326
          %v1341 = vmul.f32 %v1338, %v1328
          %v1342 = vadd.f32 %v1301, %v1339
          %v1343 = vadd.f32 %v1302, %v1340
          %v1344 = vadd.f32 %v1303, %v1341
          %s1345 = sld [smem:[#allocation5 + $0x415]]
          %v1346 = vstv %s1345
          %v1347 = vmul.f32 %v1346, %v1327
          %v1348 = vmul.f32 %v1346, %v1326
          %v1349 = vmul.f32 %v1346, %v1328
          %v1350 = vadd.f32 %v1309, %v1347
          %v1351 = vadd.f32 %v1310, %v1348
          %v1352 = vadd.f32 %v1311, %v1349
          %s1353 = sld [smem:[#allocation5 + $0x615]]
          %v1354 = vstv %s1353
          %v1355 = vmul.f32 %v1354, %v1327
          %v1356 = vmul.f32 %v1354, %v1326
          %v1357 = vmul.f32 %v1354, %v1328
          %v1358 = vadd.f32 %v1317, %v1355
          %v1359 = vadd.f32 %v1318, %v1356
          %v1360 = vadd.f32 %v1319, %v1357
          %1361 = vrot.lane.b32.xlu0 %v1228, 109
          %v1362 = vpop.permute.xlu0 %1361
          %1363 = vrot.lane.b32.xlu0 %v1231, 109
          %v1364 = vpop.permute.xlu0 %1363
          %1365 = vrot.lane.b32.xlu0 %v1234, 109
          %v1366 = vpop.permute.xlu0 %1365
          %v1367 = vsel %vm424, %v1364, %v1366
          %v1368 = vsel %vm424, %v1362, %v1364
          %v1369 = vsel %vm424, %v1366, %v1362
          %s1370 = sld [smem:[#allocation5 + $0x16]]
          %v1371 = vstv %s1370
          %v1372 = vmul.f32 %v1371, %v1368
          %v1373 = vmul.f32 %v1371, %v1367
          %v1374 = vmul.f32 %v1371, %v1369
          %v1375 = vadd.f32 %v1334, %v1372
          %v1376 = vadd.f32 %v1335, %v1373
          %v1377 = vadd.f32 %v1336, %v1374
          %s1378 = sld [smem:[#allocation5 + $0x216]]
          %v1379 = vstv %s1378
          %v1380 = vmul.f32 %v1379, %v1368
          %v1381 = vmul.f32 %v1379, %v1367
          %v1382 = vmul.f32 %v1379, %v1369
          %v1383 = vadd.f32 %v1342, %v1380
          %v1384 = vadd.f32 %v1343, %v1381
          %v1385 = vadd.f32 %v1344, %v1382
          %s1386 = sld [smem:[#allocation5 + $0x416]]
          %v1387 = vstv %s1386
          %v1388 = vmul.f32 %v1387, %v1368
          %v1389 = vmul.f32 %v1387, %v1367
          %v1390 = vmul.f32 %v1387, %v1369
          %v1391 = vadd.f32 %v1350, %v1388
          %v1392 = vadd.f32 %v1351, %v1389
          %v1393 = vadd.f32 %v1352, %v1390
          %s1394 = sld [smem:[#allocation5 + $0x616]]
          %v1395 = vstv %s1394
          %v1396 = vmul.f32 %v1395, %v1368
          %v1397 = vmul.f32 %v1395, %v1367
          %v1398 = vmul.f32 %v1395, %v1369
          %v1399 = vadd.f32 %v1358, %v1396
          %v1400 = vadd.f32 %v1359, %v1397
          %v1401 = vadd.f32 %v1360, %v1398
          %1402 = vrot.lane.b32.xlu0 %v1228, 108
          %v1403 = vpop.permute.xlu0 %1402
          %1404 = vrot.lane.b32.xlu0 %v1231, 108
          %v1405 = vpop.permute.xlu0 %1404
          %1406 = vrot.lane.b32.xlu0 %v1234, 108
          %v1407 = vpop.permute.xlu0 %1406
          %v1408 = vsel %vm466, %v1405, %v1407
          %v1409 = vsel %vm466, %v1403, %v1405
          %v1410 = vsel %vm466, %v1407, %v1403
          %s1411 = sld [smem:[#allocation5 + $0x17]]
          %v1412 = vstv %s1411
          %v1413 = vmul.f32 %v1412, %v1409
          %v1414 = vmul.f32 %v1412, %v1408
          %v1415 = vmul.f32 %v1412, %v1410
          %v1416 = vadd.f32 %v1375, %v1413
          %v1417 = vadd.f32 %v1376, %v1414
          %v1418 = vadd.f32 %v1377, %v1415
          %s1419 = sld [smem:[#allocation5 + $0x217]]
          %v1420 = vstv %s1419
          %v1421 = vmul.f32 %v1420, %v1409
          %v1422 = vmul.f32 %v1420, %v1408
          %v1423 = vmul.f32 %v1420, %v1410
          %v1424 = vadd.f32 %v1383, %v1421
          %v1425 = vadd.f32 %v1384, %v1422
          %v1426 = vadd.f32 %v1385, %v1423
          %s1427 = sld [smem:[#allocation5 + $0x417]]
          %v1428 = vstv %s1427
          %v1429 = vmul.f32 %v1428, %v1409
          %v1430 = vmul.f32 %v1428, %v1408
          %v1431 = vmul.f32 %v1428, %v1410
          %v1432 = vadd.f32 %v1391, %v1429
          %v1433 = vadd.f32 %v1392, %v1430
          %v1434 = vadd.f32 %v1393, %v1431
          %s1435 = sld [smem:[#allocation5 + $0x617]]
          %v1436 = vstv %s1435
          %v1437 = vmul.f32 %v1436, %v1409
          %v1438 = vmul.f32 %v1436, %v1408
          %v1439 = vmul.f32 %v1436, %v1410
          %v1440 = vadd.f32 %v1399, %v1437
          %v1441 = vadd.f32 %v1400, %v1438
          %v1442 = vadd.f32 %v1401, %v1439
          %1443 = vrot.lane.b32.xlu0 %v1228, 92
          %v1444 = vpop.permute.xlu0 %1443
          %1445 = vrot.lane.b32.xlu0 %v1231, 92
          %v1446 = vpop.permute.xlu0 %1445
          %1447 = vrot.lane.b32.xlu0 %v1234, 92
          %v1448 = vpop.permute.xlu0 %1447
          %v1449 = vsel %vm508, %v1446, %v1448
          %v1450 = vsel %vm508, %v1444, %v1446
          %v1451 = vsel %vm508, %v1448, %v1444
          %s1452 = sld [smem:[#allocation5 + $0x18]]
          %v1453 = vstv %s1452
          %v1454 = vmul.f32 %v1453, %v1450
          %v1455 = vmul.f32 %v1453, %v1449
          %v1456 = vmul.f32 %v1453, %v1451
          %v1457 = vadd.f32 %v1416, %v1454
          %v1458 = vadd.f32 %v1417, %v1455
          %v1459 = vadd.f32 %v1418, %v1456
          %s1460 = sld [smem:[#allocation5 + $0x218]]
          %v1461 = vstv %s1460
          %v1462 = vmul.f32 %v1461, %v1450
          %v1463 = vmul.f32 %v1461, %v1449
          %v1464 = vmul.f32 %v1461, %v1451
          %v1465 = vadd.f32 %v1424, %v1462
          %v1466 = vadd.f32 %v1425, %v1463
          %v1467 = vadd.f32 %v1426, %v1464
          %s1468 = sld [smem:[#allocation5 + $0x418]]
          %v1469 = vstv %s1468
          %v1470 = vmul.f32 %v1469, %v1450
          %v1471 = vmul.f32 %v1469, %v1449
          %v1472 = vmul.f32 %v1469, %v1451
          %v1473 = vadd.f32 %v1432, %v1470
          %v1474 = vadd.f32 %v1433, %v1471
          %v1475 = vadd.f32 %v1434, %v1472
          %s1476 = sld [smem:[#allocation5 + $0x618]]
          %v1477 = vstv %s1476
          %v1478 = vmul.f32 %v1477, %v1450
          %v1479 = vmul.f32 %v1477, %v1449
          %v1480 = vmul.f32 %v1477, %v1451
          %v1481 = vadd.f32 %v1440, %v1478
          %v1482 = vadd.f32 %v1441, %v1479
          %v1483 = vadd.f32 %v1442, %v1480
          %1484 = vrot.lane.b32.xlu0 %v1228, 91
          %v1485 = vpop.permute.xlu0 %1484
          %1486 = vrot.lane.b32.xlu0 %v1231, 91
          %v1487 = vpop.permute.xlu0 %1486
          %1488 = vrot.lane.b32.xlu0 %v1234, 91
          %v1489 = vpop.permute.xlu0 %1488
          %v1490 = vsel %vm550, %v1487, %v1489
          %v1491 = vsel %vm550, %v1485, %v1487
          %v1492 = vsel %vm550, %v1489, %v1485
          %s1493 = sld [smem:[#allocation5 + $0x19]]
          %v1494 = vstv %s1493
          %v1495 = vmul.f32 %v1494, %v1491
          %v1496 = vmul.f32 %v1494, %v1490
          %v1497 = vmul.f32 %v1494, %v1492
          %v1498 = vadd.f32 %v1457, %v1495
          %v1499 = vadd.f32 %v1458, %v1496
          %v1500 = vadd.f32 %v1459, %v1497
          %s1501 = sld [smem:[#allocation5 + $0x219]]
          %v1502 = vstv %s1501
          %v1503 = vmul.f32 %v1502, %v1491
          %v1504 = vmul.f32 %v1502, %v1490
          %v1505 = vmul.f32 %v1502, %v1492
          %v1506 = vadd.f32 %v1465, %v1503
          %v1507 = vadd.f32 %v1466, %v1504
          %v1508 = vadd.f32 %v1467, %v1505
          %s1509 = sld [smem:[#allocation5 + $0x419]]
          %v1510 = vstv %s1509
          %v1511 = vmul.f32 %v1510, %v1491
          %v1512 = vmul.f32 %v1510, %v1490
          %v1513 = vmul.f32 %v1510, %v1492
          %v1514 = vadd.f32 %v1473, %v1511
          %v1515 = vadd.f32 %v1474, %v1512
          %v1516 = vadd.f32 %v1475, %v1513
          %s1517 = sld [smem:[#allocation5 + $0x619]]
          %v1518 = vstv %s1517
          %v1519 = vmul.f32 %v1518, %v1491
          %v1520 = vmul.f32 %v1518, %v1490
          %v1521 = vmul.f32 %v1518, %v1492
          %v1522 = vadd.f32 %v1481, %v1519
          %v1523 = vadd.f32 %v1482, %v1520
          %v1524 = vadd.f32 %v1483, %v1521
          %1525 = vrot.lane.b32.xlu0 %v1228, 90
          %v1526 = vpop.permute.xlu0 %1525
          %1527 = vrot.lane.b32.xlu0 %v1231, 90
          %v1528 = vpop.permute.xlu0 %1527
          %1529 = vrot.lane.b32.xlu0 %v1234, 90
          %v1530 = vpop.permute.xlu0 %1529
          %v1531 = vsel %vm592, %v1528, %v1530
          %v1532 = vsel %vm592, %v1526, %v1528
          %v1533 = vsel %vm592, %v1530, %v1526
          %s1534 = sld [smem:[#allocation5 + $0x1a]]
          %v1535 = vstv %s1534
          %v1536 = vmul.f32 %v1535, %v1532
          %v1537 = vmul.f32 %v1535, %v1531
          %v1538 = vmul.f32 %v1535, %v1533
          %v1539 = vadd.f32 %v1498, %v1536
          %v1540 = vadd.f32 %v1499, %v1537
          %v1541 = vadd.f32 %v1500, %v1538
          %s1542 = sld [smem:[#allocation5 + $0x21a]]
          %v1543 = vstv %s1542
          %v1544 = vmul.f32 %v1543, %v1532
          %v1545 = vmul.f32 %v1543, %v1531
          %v1546 = vmul.f32 %v1543, %v1533
          %v1547 = vadd.f32 %v1506, %v1544
          %v1548 = vadd.f32 %v1507, %v1545
          %v1549 = vadd.f32 %v1508, %v1546
          %s1550 = sld [smem:[#allocation5 + $0x41a]]
          %v1551 = vstv %s1550
          %v1552 = vmul.f32 %v1551, %v1532
          %v1553 = vmul.f32 %v1551, %v1531
          %v1554 = vmul.f32 %v1551, %v1533
          %v1555 = vadd.f32 %v1514, %v1552
          %v1556 = vadd.f32 %v1515, %v1553
          %v1557 = vadd.f32 %v1516, %v1554
          %s1558 = sld [smem:[#allocation5 + $0x61a]]
          %v1559 = vstv %s1558
          %v1560 = vmul.f32 %v1559, %v1532
          %v1561 = vmul.f32 %v1559, %v1531
          %v1562 = vmul.f32 %v1559, %v1533
          %v1563 = vadd.f32 %v1522, %v1560
          %v1564 = vadd.f32 %v1523, %v1561
          %v1565 = vadd.f32 %v1524, %v1562
          %s1566 = scalar_lea.vmem %s241, 48
          %v1567 = vld [vmem:[%s1566] sm:$0xff]
          %v1568 = vld [vmem:[%s1566 + $0x8] sm:$0xff]
          %v1569 = vld [vmem:[%s1566 + $0x10] sm:$0xff]
          %s1570 = sld [smem:[#allocation5 + $0x80]]
          %v1571 = vstv %s1570
          %v1572 = vmul.f32 %v1571, %v1567
          %v1573 = vmul.f32 %v1571, %v1568
          %v1574 = vmul.f32 %v1571, %v1569
          %v1575 = vadd.f32 %v1539, %v1572
          %v1576 = vadd.f32 %v1540, %v1573
          %v1577 = vadd.f32 %v1541, %v1574
          %s1578 = sld [smem:[#allocation5 + $0x280]]
          %v1579 = vstv %s1578
          %v1580 = vmul.f32 %v1579, %v1567
          %v1581 = vmul.f32 %v1579, %v1568
          %v1582 = vmul.f32 %v1579, %v1569
          %v1583 = vadd.f32 %v1547, %v1580
          %v1584 = vadd.f32 %v1548, %v1581
          %v1585 = vadd.f32 %v1549, %v1582
          %s1586 = sld [smem:[#allocation5 + $0x480]]
          %v1587 = vstv %s1586
          %v1588 = vmul.f32 %v1587, %v1567
          %v1589 = vmul.f32 %v1587, %v1568
          %v1590 = vmul.f32 %v1587, %v1569
          %v1591 = vadd.f32 %v1555, %v1588
          %v1592 = vadd.f32 %v1556, %v1589
          %v1593 = vadd.f32 %v1557, %v1590
          %s1594 = sld [smem:[#allocation5 + $0x680]]
          %v1595 = vstv %s1594
          %v1596 = vmul.f32 %v1595, %v1567
          %v1597 = vmul.f32 %v1595, %v1568
          %v1598 = vmul.f32 %v1595, %v1569
          %v1599 = vadd.f32 %v1563, %v1596
          %v1600 = vadd.f32 %v1564, %v1597
          %v1601 = vadd.f32 %v1565, %v1598
          %1602 = vrot.lane.b32.xlu0 %v1567, 127
          %v1603 = vpop.permute.xlu0 %1602
          %1604 = vrot.lane.b32.xlu0 %v1568, 127
          %v1605 = vpop.permute.xlu0 %1604
          %1606 = vrot.lane.b32.xlu0 %v1569, 127
          %v1607 = vpop.permute.xlu0 %1606
          %v1608 = vsel %vm298, %v1605, %v1607
          %v1609 = vsel %vm298, %v1603, %v1605
          %v1610 = vsel %vm298, %v1607, %v1603
          %s1611 = sld [smem:[#allocation5 + $0x81]]
          %v1612 = vstv %s1611
          %v1613 = vmul.f32 %v1612, %v1609
          %v1614 = vmul.f32 %v1612, %v1608
          %v1615 = vmul.f32 %v1612, %v1610
          %v1616 = vadd.f32 %v1575, %v1613
          %v1617 = vadd.f32 %v1576, %v1614
          %v1618 = vadd.f32 %v1577, %v1615
          %s1619 = sld [smem:[#allocation5 + $0x281]]
          %v1620 = vstv %s1619
          %v1621 = vmul.f32 %v1620, %v1609
          %v1622 = vmul.f32 %v1620, %v1608
          %v1623 = vmul.f32 %v1620, %v1610
          %v1624 = vadd.f32 %v1583, %v1621
          %v1625 = vadd.f32 %v1584, %v1622
          %v1626 = vadd.f32 %v1585, %v1623
          %s1627 = sld [smem:[#allocation5 + $0x481]]
          %v1628 = vstv %s1627
          %v1629 = vmul.f32 %v1628, %v1609
          %v1630 = vmul.f32 %v1628, %v1608
          %v1631 = vmul.f32 %v1628, %v1610
          %v1632 = vadd.f32 %v1591, %v1629
          %v1633 = vadd.f32 %v1592, %v1630
          %v1634 = vadd.f32 %v1593, %v1631
          %s1635 = sld [smem:[#allocation5 + $0x681]]
          %v1636 = vstv %s1635
          %v1637 = vmul.f32 %v1636, %v1609
          %v1638 = vmul.f32 %v1636, %v1608
          %v1639 = vmul.f32 %v1636, %v1610
          %v1640 = vadd.f32 %v1599, %v1637
          %v1641 = vadd.f32 %v1600, %v1638
          %v1642 = vadd.f32 %v1601, %v1639
          %1643 = vrot.lane.b32.xlu0 %v1567, 126
          %v1644 = vpop.permute.xlu0 %1643
          %1645 = vrot.lane.b32.xlu0 %v1568, 126
          %v1646 = vpop.permute.xlu0 %1645
          %1647 = vrot.lane.b32.xlu0 %v1569, 126
          %v1648 = vpop.permute.xlu0 %1647
          %v1649 = vsel %vm340, %v1646, %v1648
          %v1650 = vsel %vm340, %v1644, %v1646
          %v1651 = vsel %vm340, %v1648, %v1644
          %s1652 = sld [smem:[#allocation5 + $0x82]]
          %v1653 = vstv %s1652
          %v1654 = vmul.f32 %v1653, %v1650
          %v1655 = vmul.f32 %v1653, %v1649
          %v1656 = vmul.f32 %v1653, %v1651
          %v1657 = vadd.f32 %v1616, %v1654
          %v1658 = vadd.f32 %v1617, %v1655
          %v1659 = vadd.f32 %v1618, %v1656
          %s1660 = sld [smem:[#allocation5 + $0x282]]
          %v1661 = vstv %s1660
          %v1662 = vmul.f32 %v1661, %v1650
          %v1663 = vmul.f32 %v1661, %v1649
          %v1664 = vmul.f32 %v1661, %v1651
          %v1665 = vadd.f32 %v1624, %v1662
          %v1666 = vadd.f32 %v1625, %v1663
          %v1667 = vadd.f32 %v1626, %v1664
          %s1668 = sld [smem:[#allocation5 + $0x482]]
          %v1669 = vstv %s1668
          %v1670 = vmul.f32 %v1669, %v1650
          %v1671 = vmul.f32 %v1669, %v1649
          %v1672 = vmul.f32 %v1669, %v1651
          %v1673 = vadd.f32 %v1632, %v1670
          %v1674 = vadd.f32 %v1633, %v1671
          %v1675 = vadd.f32 %v1634, %v1672
          %s1676 = sld [smem:[#allocation5 + $0x682]]
          %v1677 = vstv %s1676
          %v1678 = vmul.f32 %v1677, %v1650
          %v1679 = vmul.f32 %v1677, %v1649
          %v1680 = vmul.f32 %v1677, %v1651
          %v1681 = vadd.f32 %v1640, %v1678
          %v1682 = vadd.f32 %v1641, %v1679
          %v1683 = vadd.f32 %v1642, %v1680
          %1684 = vrot.lane.b32.xlu0 %v1567, 110
          %v1685 = vpop.permute.xlu0 %1684
          %1686 = vrot.lane.b32.xlu0 %v1568, 110
          %v1687 = vpop.permute.xlu0 %1686
          %1688 = vrot.lane.b32.xlu0 %v1569, 110
          %v1689 = vpop.permute.xlu0 %1688
          %v1690 = vsel %vm382, %v1687, %v1689
          %v1691 = vsel %vm382, %v1685, %v1687
          %v1692 = vsel %vm382, %v1689, %v1685
          %s1693 = sld [smem:[#allocation5 + $0x83]]
          %v1694 = vstv %s1693
          %v1695 = vmul.f32 %v1694, %v1691
          %v1696 = vmul.f32 %v1694, %v1690
          %v1697 = vmul.f32 %v1694, %v1692
          %v1698 = vadd.f32 %v1657, %v1695
          %v1699 = vadd.f32 %v1658, %v1696
          %v1700 = vadd.f32 %v1659, %v1697
          %s1701 = sld [smem:[#allocation5 + $0x283]]
          %v1702 = vstv %s1701
          %v1703 = vmul.f32 %v1702, %v1691
          %v1704 = vmul.f32 %v1702, %v1690
          %v1705 = vmul.f32 %v1702, %v1692
          %v1706 = vadd.f32 %v1665, %v1703
          %v1707 = vadd.f32 %v1666, %v1704
          %v1708 = vadd.f32 %v1667, %v1705
          %s1709 = sld [smem:[#allocation5 + $0x483]]
          %v1710 = vstv %s1709
          %v1711 = vmul.f32 %v1710, %v1691
          %v1712 = vmul.f32 %v1710, %v1690
          %v1713 = vmul.f32 %v1710, %v1692
          %v1714 = vadd.f32 %v1673, %v1711
          %v1715 = vadd.f32 %v1674, %v1712
          %v1716 = vadd.f32 %v1675, %v1713
          %s1717 = sld [smem:[#allocation5 + $0x683]]
          %v1718 = vstv %s1717
          %v1719 = vmul.f32 %v1718, %v1691
          %v1720 = vmul.f32 %v1718, %v1690
          %v1721 = vmul.f32 %v1718, %v1692
          %v1722 = vadd.f32 %v1681, %v1719
          %v1723 = vadd.f32 %v1682, %v1720
          %v1724 = vadd.f32 %v1683, %v1721
          %1725 = vrot.lane.b32.xlu0 %v1567, 109
          %v1726 = vpop.permute.xlu0 %1725
          %1727 = vrot.lane.b32.xlu0 %v1568, 109
          %v1728 = vpop.permute.xlu0 %1727
          %1729 = vrot.lane.b32.xlu0 %v1569, 109
          %v1730 = vpop.permute.xlu0 %1729
          %v1731 = vsel %vm424, %v1728, %v1730
          %v1732 = vsel %vm424, %v1726, %v1728
          %v1733 = vsel %vm424, %v1730, %v1726
          %s1734 = sld [smem:[#allocation5 + $0x84]]
          %v1735 = vstv %s1734
          %v1736 = vmul.f32 %v1735, %v1732
          %v1737 = vmul.f32 %v1735, %v1731
          %v1738 = vmul.f32 %v1735, %v1733
          %v1739 = vadd.f32 %v1698, %v1736
          %v1740 = vadd.f32 %v1699, %v1737
          %v1741 = vadd.f32 %v1700, %v1738
          %s1742 = sld [smem:[#allocation5 + $0x284]]
          %v1743 = vstv %s1742
          %v1744 = vmul.f32 %v1743, %v1732
          %v1745 = vmul.f32 %v1743, %v1731
          %v1746 = vmul.f32 %v1743, %v1733
          %v1747 = vadd.f32 %v1706, %v1744
          %v1748 = vadd.f32 %v1707, %v1745
          %v1749 = vadd.f32 %v1708, %v1746
          %s1750 = sld [smem:[#allocation5 + $0x484]]
          %v1751 = vstv %s1750
          %v1752 = vmul.f32 %v1751, %v1732
          %v1753 = vmul.f32 %v1751, %v1731
          %v1754 = vmul.f32 %v1751, %v1733
          %v1755 = vadd.f32 %v1714, %v1752
          %v1756 = vadd.f32 %v1715, %v1753
          %v1757 = vadd.f32 %v1716, %v1754
          %s1758 = sld [smem:[#allocation5 + $0x684]]
          %v1759 = vstv %s1758
          %v1760 = vmul.f32 %v1759, %v1732
          %v1761 = vmul.f32 %v1759, %v1731
          %v1762 = vmul.f32 %v1759, %v1733
          %v1763 = vadd.f32 %v1722, %v1760
          %v1764 = vadd.f32 %v1723, %v1761
          %v1765 = vadd.f32 %v1724, %v1762
          %1766 = vrot.lane.b32.xlu0 %v1567, 108
          %v1767 = vpop.permute.xlu0 %1766
          %1768 = vrot.lane.b32.xlu0 %v1568, 108
          %v1769 = vpop.permute.xlu0 %1768
          %1770 = vrot.lane.b32.xlu0 %v1569, 108
          %v1771 = vpop.permute.xlu0 %1770
          %v1772 = vsel %vm466, %v1769, %v1771
          %v1773 = vsel %vm466, %v1767, %v1769
          %v1774 = vsel %vm466, %v1771, %v1767
          %s1775 = sld [smem:[#allocation5 + $0x85]]
          %v1776 = vstv %s1775
          %v1777 = vmul.f32 %v1776, %v1773
          %v1778 = vmul.f32 %v1776, %v1772
          %v1779 = vmul.f32 %v1776, %v1774
          %v1780 = vadd.f32 %v1739, %v1777
          %v1781 = vadd.f32 %v1740, %v1778
          %v1782 = vadd.f32 %v1741, %v1779
          %s1783 = sld [smem:[#allocation5 + $0x285]]
          %v1784 = vstv %s1783
          %v1785 = vmul.f32 %v1784, %v1773
          %v1786 = vmul.f32 %v1784, %v1772
          %v1787 = vmul.f32 %v1784, %v1774
          %v1788 = vadd.f32 %v1747, %v1785
          %v1789 = vadd.f32 %v1748, %v1786
          %v1790 = vadd.f32 %v1749, %v1787
          %s1791 = sld [smem:[#allocation5 + $0x485]]
          %v1792 = vstv %s1791
          %v1793 = vmul.f32 %v1792, %v1773
          %v1794 = vmul.f32 %v1792, %v1772
          %v1795 = vmul.f32 %v1792, %v1774
          %v1796 = vadd.f32 %v1755, %v1793
          %v1797 = vadd.f32 %v1756, %v1794
          %v1798 = vadd.f32 %v1757, %v1795
          %s1799 = sld [smem:[#allocation5 + $0x685]]
          %v1800 = vstv %s1799
          %v1801 = vmul.f32 %v1800, %v1773
          %v1802 = vmul.f32 %v1800, %v1772
          %v1803 = vmul.f32 %v1800, %v1774
          %v1804 = vadd.f32 %v1763, %v1801
          %v1805 = vadd.f32 %v1764, %v1802
          %v1806 = vadd.f32 %v1765, %v1803
          %1807 = vrot.lane.b32.xlu0 %v1567, 92
          %v1808 = vpop.permute.xlu0 %1807
          %1809 = vrot.lane.b32.xlu0 %v1568, 92
          %v1810 = vpop.permute.xlu0 %1809
          %1811 = vrot.lane.b32.xlu0 %v1569, 92
          %v1812 = vpop.permute.xlu0 %1811
          %v1813 = vsel %vm508, %v1810, %v1812
          %v1814 = vsel %vm508, %v1808, %v1810
          %v1815 = vsel %vm508, %v1812, %v1808
          %s1816 = sld [smem:[#allocation5 + $0x86]]
          %v1817 = vstv %s1816
          %v1818 = vmul.f32 %v1817, %v1814
          %v1819 = vmul.f32 %v1817, %v1813
          %v1820 = vmul.f32 %v1817, %v1815
          %v1821 = vadd.f32 %v1780, %v1818
          %v1822 = vadd.f32 %v1781, %v1819
          %v1823 = vadd.f32 %v1782, %v1820
          %s1824 = sld [smem:[#allocation5 + $0x286]]
          %v1825 = vstv %s1824
          %v1826 = vmul.f32 %v1825, %v1814
          %v1827 = vmul.f32 %v1825, %v1813
          %v1828 = vmul.f32 %v1825, %v1815
          %v1829 = vadd.f32 %v1788, %v1826
          %v1830 = vadd.f32 %v1789, %v1827
          %v1831 = vadd.f32 %v1790, %v1828
          %s1832 = sld [smem:[#allocation5 + $0x486]]
          %v1833 = vstv %s1832
          %v1834 = vmul.f32 %v1833, %v1814
          %v1835 = vmul.f32 %v1833, %v1813
          %v1836 = vmul.f32 %v1833, %v1815
          %v1837 = vadd.f32 %v1796, %v1834
          %v1838 = vadd.f32 %v1797, %v1835
          %v1839 = vadd.f32 %v1798, %v1836
          %s1840 = sld [smem:[#allocation5 + $0x686]]
          %v1841 = vstv %s1840
          %v1842 = vmul.f32 %v1841, %v1814
          %v1843 = vmul.f32 %v1841, %v1813
          %v1844 = vmul.f32 %v1841, %v1815
          %v1845 = vadd.f32 %v1804, %v1842
          %v1846 = vadd.f32 %v1805, %v1843
          %v1847 = vadd.f32 %v1806, %v1844
          %1848 = vrot.lane.b32.xlu0 %v1567, 91
          %v1849 = vpop.permute.xlu0 %1848
          %1850 = vrot.lane.b32.xlu0 %v1568, 91
          %v1851 = vpop.permute.xlu0 %1850
          %1852 = vrot.lane.b32.xlu0 %v1569, 91
          %v1853 = vpop.permute.xlu0 %1852
          %v1854 = vsel %vm550, %v1851, %v1853
          %v1855 = vsel %vm550, %v1849, %v1851
          %v1856 = vsel %vm550, %v1853, %v1849
          %s1857 = sld [smem:[#allocation5 + $0x87]]
          %v1858 = vstv %s1857
          %v1859 = vmul.f32 %v1858, %v1855
          %v1860 = vmul.f32 %v1858, %v1854
          %v1861 = vmul.f32 %v1858, %v1856
          %v1862 = vadd.f32 %v1821, %v1859
          %v1863 = vadd.f32 %v1822, %v1860
          %v1864 = vadd.f32 %v1823, %v1861
          %s1865 = sld [smem:[#allocation5 + $0x287]]
          %v1866 = vstv %s1865
          %v1867 = vmul.f32 %v1866, %v1855
          %v1868 = vmul.f32 %v1866, %v1854
          %v1869 = vmul.f32 %v1866, %v1856
          %v1870 = vadd.f32 %v1829, %v1867
          %v1871 = vadd.f32 %v1830, %v1868
          %v1872 = vadd.f32 %v1831, %v1869
          %s1873 = sld [smem:[#allocation5 + $0x487]]
          %v1874 = vstv %s1873
          %v1875 = vmul.f32 %v1874, %v1855
          %v1876 = vmul.f32 %v1874, %v1854
          %v1877 = vmul.f32 %v1874, %v1856
          %v1878 = vadd.f32 %v1837, %v1875
          %v1879 = vadd.f32 %v1838, %v1876
          %v1880 = vadd.f32 %v1839, %v1877
          %s1881 = sld [smem:[#allocation5 + $0x687]]
          %v1882 = vstv %s1881
          %v1883 = vmul.f32 %v1882, %v1855
          %v1884 = vmul.f32 %v1882, %v1854
          %v1885 = vmul.f32 %v1882, %v1856
          %v1886 = vadd.f32 %v1845, %v1883
          %v1887 = vadd.f32 %v1846, %v1884
          %v1888 = vadd.f32 %v1847, %v1885
          %1889 = vrot.lane.b32.xlu0 %v1567, 90
          %v1890 = vpop.permute.xlu0 %1889
          %1891 = vrot.lane.b32.xlu0 %v1568, 90
          %v1892 = vpop.permute.xlu0 %1891
          %1893 = vrot.lane.b32.xlu0 %v1569, 90
          %v1894 = vpop.permute.xlu0 %1893
          %v1895 = vsel %vm592, %v1892, %v1894
          %v1896 = vsel %vm592, %v1890, %v1892
          %v1897 = vsel %vm592, %v1894, %v1890
          %s1898 = sld [smem:[#allocation5 + $0x88]]
          %v1899 = vstv %s1898
          %v1900 = vmul.f32 %v1899, %v1896
          %v1901 = vmul.f32 %v1899, %v1895
          %v1902 = vmul.f32 %v1899, %v1897
          %v1903 = vadd.f32 %v1862, %v1900
          %v1904 = vadd.f32 %v1863, %v1901
          %v1905 = vadd.f32 %v1864, %v1902
          %s1906 = sld [smem:[#allocation5 + $0x288]]
          %v1907 = vstv %s1906
          %v1908 = vmul.f32 %v1907, %v1896
          %v1909 = vmul.f32 %v1907, %v1895
          %v1910 = vmul.f32 %v1907, %v1897
          %v1911 = vadd.f32 %v1870, %v1908
          %v1912 = vadd.f32 %v1871, %v1909
          %v1913 = vadd.f32 %v1872, %v1910
          %s1914 = sld [smem:[#allocation5 + $0x488]]
          %v1915 = vstv %s1914
          %v1916 = vmul.f32 %v1915, %v1896
          %v1917 = vmul.f32 %v1915, %v1895
          %v1918 = vmul.f32 %v1915, %v1897
          %v1919 = vadd.f32 %v1878, %v1916
          %v1920 = vadd.f32 %v1879, %v1917
          %v1921 = vadd.f32 %v1880, %v1918
          %s1922 = sld [smem:[#allocation5 + $0x688]]
          %v1923 = vstv %s1922
          %v1924 = vmul.f32 %v1923, %v1896
          %v1925 = vmul.f32 %v1923, %v1895
          %v1926 = vmul.f32 %v1923, %v1897
          %v1927 = vadd.f32 %v1886, %v1924
          %v1928 = vadd.f32 %v1887, %v1925
          %v1929 = vadd.f32 %v1888, %v1926
          %v1930 = vld [vmem:[%s1566] sm:$0xfe]
          %v1931 = vld [vmem:[%s1566 + $0x8] sm:$0xfe]
          %v1932 = vld [vmem:[%s1566 + $0x10] sm:$0xfe]
          %v1933 = vld [vmem:[%s1566 + $0x18] sm:$0x1]
          %v1934 = vld [vmem:[%s1566 + $0x20] sm:$0x1]
          %v1935 = vld [vmem:[%s1566 + $0x28] sm:$0x1]
          %s1936 = sld [smem:[#allocation5 + $0x89]]
          %v1937 = vstv %s1936
          %v1938 = vmul.f32 %v1937, %v1930
          %v1939 = vmul.f32 %v1937, %v1931
          %v1940 = vmul.f32 %v1937, %v1932
          %v1941 = vmul.f32 %v1937, %v1933
          %v1942 = vmul.f32 %v1937, %v1934
          %v1943 = vmul.f32 %v1937, %v1935
          %v1950 = vrot.slane %v1938, 1
          %v1951 = vrot.slane %v1941, 1
          %v1952 = vsel %vm648, %v1950, %v1951
          %v1953 = vrot.slane %v1939, 1
          %v1954 = vrot.slane %v1942, 1
          %v1955 = vsel %vm648, %v1953, %v1954
          %v1956 = vrot.slane %v1940, 1
          %v1957 = vrot.slane %v1943, 1
          %v1958 = vsel %vm648, %v1956, %v1957
          %v1962 = vadd.f32 %v1903, %v1952
          %v1963 = vadd.f32 %v1904, %v1955
          %v1964 = vadd.f32 %v1905, %v1958
          %s1965 = sld [smem:[#allocation5 + $0x289]]
          %v1966 = vstv %s1965
          %v1967 = vmul.f32 %v1966, %v1930
          %v1968 = vmul.f32 %v1966, %v1931
          %v1969 = vmul.f32 %v1966, %v1932
          %v1970 = vmul.f32 %v1966, %v1933
          %v1971 = vmul.f32 %v1966, %v1934
          %v1972 = vmul.f32 %v1966, %v1935
          %v1979 = vrot.slane %v1967, 1
          %v1980 = vrot.slane %v1970, 1
          %v1981 = vsel %vm648, %v1979, %v1980
          %v1982 = vrot.slane %v1968, 1
          %v1983 = vrot.slane %v1971, 1
          %v1984 = vsel %vm648, %v1982, %v1983
          %v1985 = vrot.slane %v1969, 1
          %v1986 = vrot.slane %v1972, 1
          %v1987 = vsel %vm648, %v1985, %v1986
          %v1991 = vadd.f32 %v1911, %v1981
          %v1992 = vadd.f32 %v1912, %v1984
          %v1993 = vadd.f32 %v1913, %v1987
          %s1994 = sld [smem:[#allocation5 + $0x489]]
          %v1995 = vstv %s1994
          %v1996 = vmul.f32 %v1995, %v1930
          %v1997 = vmul.f32 %v1995, %v1931
          %v1998 = vmul.f32 %v1995, %v1932
          %v1999 = vmul.f32 %v1995, %v1933
          %v2000 = vmul.f32 %v1995, %v1934
          %v2001 = vmul.f32 %v1995, %v1935
          %v2008 = vrot.slane %v1996, 1
          %v2009 = vrot.slane %v1999, 1
          %v2010 = vsel %vm648, %v2008, %v2009
          %v2011 = vrot.slane %v1997, 1
          %v2012 = vrot.slane %v2000, 1
          %v2013 = vsel %vm648, %v2011, %v2012
          %v2014 = vrot.slane %v1998, 1
          %v2015 = vrot.slane %v2001, 1
          %v2016 = vsel %vm648, %v2014, %v2015
          %v2020 = vadd.f32 %v1919, %v2010
          %v2021 = vadd.f32 %v1920, %v2013
          %v2022 = vadd.f32 %v1921, %v2016
          %s2023 = sld [smem:[#allocation5 + $0x689]]
          %v2024 = vstv %s2023
          %v2025 = vmul.f32 %v2024, %v1930
          %v2026 = vmul.f32 %v2024, %v1931
          %v2027 = vmul.f32 %v2024, %v1932
          %v2028 = vmul.f32 %v2024, %v1933
          %v2029 = vmul.f32 %v2024, %v1934
          %v2030 = vmul.f32 %v2024, %v1935
          %v2037 = vrot.slane %v2025, 1
          %v2038 = vrot.slane %v2028, 1
          %v2039 = vsel %vm648, %v2037, %v2038
          %v2040 = vrot.slane %v2026, 1
          %v2041 = vrot.slane %v2029, 1
          %v2042 = vsel %vm648, %v2040, %v2041
          %v2043 = vrot.slane %v2027, 1
          %v2044 = vrot.slane %v2030, 1
          %v2045 = vsel %vm648, %v2043, %v2044
          %v2049 = vadd.f32 %v1927, %v2039
          %v2050 = vadd.f32 %v1928, %v2042
          %v2051 = vadd.f32 %v1929, %v2045
          %v2058 = vrot.slane %v1930, 1
          %v2059 = vrot.slane %v1933, 1
          %v2060 = vsel %vm648, %v2058, %v2059
          %v2061 = vrot.slane %v1931, 1
          %v2062 = vrot.slane %v1934, 1
          %v2063 = vsel %vm648, %v2061, %v2062
          %v2064 = vrot.slane %v1932, 1
          %v2065 = vrot.slane %v1935, 1
          %v2066 = vsel %vm648, %v2064, %v2065
          %2070 = vrot.lane.b32.xlu0 %v2060, 127
          %v2071 = vpop.permute.xlu0 %2070
          %2072 = vrot.lane.b32.xlu0 %v2063, 127
          %v2073 = vpop.permute.xlu0 %2072
          %2074 = vrot.lane.b32.xlu0 %v2066, 127
          %v2075 = vpop.permute.xlu0 %2074
          %v2076 = vsel %vm298, %v2073, %v2075
          %v2077 = vsel %vm298, %v2071, %v2073
          %v2078 = vsel %vm298, %v2075, %v2071
          %s2079 = sld [smem:[#allocation5 + $0x8a]]
          %v2080 = vstv %s2079
          %v2081 = vmul.f32 %v2080, %v2077
          %v2082 = vmul.f32 %v2080, %v2076
          %v2083 = vmul.f32 %v2080, %v2078
          %v2084 = vadd.f32 %v1962, %v2081
          %v2085 = vadd.f32 %v1963, %v2082
          %v2086 = vadd.f32 %v1964, %v2083
          %s2087 = sld [smem:[#allocation5 + $0x28a]]
          %v2088 = vstv %s2087
          %v2089 = vmul.f32 %v2088, %v2077
          %v2090 = vmul.f32 %v2088, %v2076
          %v2091 = vmul.f32 %v2088, %v2078
          %v2092 = vadd.f32 %v1991, %v2089
          %v2093 = vadd.f32 %v1992, %v2090
          %v2094 = vadd.f32 %v1993, %v2091
          %s2095 = sld [smem:[#allocation5 + $0x48a]]
          %v2096 = vstv %s2095
          %v2097 = vmul.f32 %v2096, %v2077
          %v2098 = vmul.f32 %v2096, %v2076
          %v2099 = vmul.f32 %v2096, %v2078
          %v2100 = vadd.f32 %v2020, %v2097
          %v2101 = vadd.f32 %v2021, %v2098
          %v2102 = vadd.f32 %v2022, %v2099
          %s2103 = sld [smem:[#allocation5 + $0x68a]]
          %v2104 = vstv %s2103
          %v2105 = vmul.f32 %v2104, %v2077
          %v2106 = vmul.f32 %v2104, %v2076
          %v2107 = vmul.f32 %v2104, %v2078
          %v2108 = vadd.f32 %v2049, %v2105
          %v2109 = vadd.f32 %v2050, %v2106
          %v2110 = vadd.f32 %v2051, %v2107
          %2111 = vrot.lane.b32.xlu0 %v2060, 126
          %v2112 = vpop.permute.xlu0 %2111
          %2113 = vrot.lane.b32.xlu0 %v2063, 126
          %v2114 = vpop.permute.xlu0 %2113
          %2115 = vrot.lane.b32.xlu0 %v2066, 126
          %v2116 = vpop.permute.xlu0 %2115
          %v2117 = vsel %vm340, %v2114, %v2116
          %v2118 = vsel %vm340, %v2112, %v2114
          %v2119 = vsel %vm340, %v2116, %v2112
          %s2120 = sld [smem:[#allocation5 + $0x8b]]
          %v2121 = vstv %s2120
          %v2122 = vmul.f32 %v2121, %v2118
          %v2123 = vmul.f32 %v2121, %v2117
          %v2124 = vmul.f32 %v2121, %v2119
          %v2125 = vadd.f32 %v2084, %v2122
          %v2126 = vadd.f32 %v2085, %v2123
          %v2127 = vadd.f32 %v2086, %v2124
          %s2128 = sld [smem:[#allocation5 + $0x28b]]
          %v2129 = vstv %s2128
          %v2130 = vmul.f32 %v2129, %v2118
          %v2131 = vmul.f32 %v2129, %v2117
          %v2132 = vmul.f32 %v2129, %v2119
          %v2133 = vadd.f32 %v2092, %v2130
          %v2134 = vadd.f32 %v2093, %v2131
          %v2135 = vadd.f32 %v2094, %v2132
          %s2136 = sld [smem:[#allocation5 + $0x48b]]
          %v2137 = vstv %s2136
          %v2138 = vmul.f32 %v2137, %v2118
          %v2139 = vmul.f32 %v2137, %v2117
          %v2140 = vmul.f32 %v2137, %v2119
          %v2141 = vadd.f32 %v2100, %v2138
          %v2142 = vadd.f32 %v2101, %v2139
          %v2143 = vadd.f32 %v2102, %v2140
          %s2144 = sld [smem:[#allocation5 + $0x68b]]
          %v2145 = vstv %s2144
          %v2146 = vmul.f32 %v2145, %v2118
          %v2147 = vmul.f32 %v2145, %v2117
          %v2148 = vmul.f32 %v2145, %v2119
          %v2149 = vadd.f32 %v2108, %v2146
          %v2150 = vadd.f32 %v2109, %v2147
          %v2151 = vadd.f32 %v2110, %v2148
          %2152 = vrot.lane.b32.xlu0 %v2060, 110
          %v2153 = vpop.permute.xlu0 %2152
          %2154 = vrot.lane.b32.xlu0 %v2063, 110
          %v2155 = vpop.permute.xlu0 %2154
          %2156 = vrot.lane.b32.xlu0 %v2066, 110
          %v2157 = vpop.permute.xlu0 %2156
          %v2158 = vsel %vm382, %v2155, %v2157
          %v2159 = vsel %vm382, %v2153, %v2155
          %v2160 = vsel %vm382, %v2157, %v2153
          %s2161 = sld [smem:[#allocation5 + $0x8c]]
          %v2162 = vstv %s2161
          %v2163 = vmul.f32 %v2162, %v2159
          %v2164 = vmul.f32 %v2162, %v2158
          %v2165 = vmul.f32 %v2162, %v2160
          %v2166 = vadd.f32 %v2125, %v2163
          %v2167 = vadd.f32 %v2126, %v2164
          %v2168 = vadd.f32 %v2127, %v2165
          %s2169 = sld [smem:[#allocation5 + $0x28c]]
          %v2170 = vstv %s2169
          %v2171 = vmul.f32 %v2170, %v2159
          %v2172 = vmul.f32 %v2170, %v2158
          %v2173 = vmul.f32 %v2170, %v2160
          %v2174 = vadd.f32 %v2133, %v2171
          %v2175 = vadd.f32 %v2134, %v2172
          %v2176 = vadd.f32 %v2135, %v2173
          %s2177 = sld [smem:[#allocation5 + $0x48c]]
          %v2178 = vstv %s2177
          %v2179 = vmul.f32 %v2178, %v2159
          %v2180 = vmul.f32 %v2178, %v2158
          %v2181 = vmul.f32 %v2178, %v2160
          %v2182 = vadd.f32 %v2141, %v2179
          %v2183 = vadd.f32 %v2142, %v2180
          %v2184 = vadd.f32 %v2143, %v2181
          %s2185 = sld [smem:[#allocation5 + $0x68c]]
          %v2186 = vstv %s2185
          %v2187 = vmul.f32 %v2186, %v2159
          %v2188 = vmul.f32 %v2186, %v2158
          %v2189 = vmul.f32 %v2186, %v2160
          %v2190 = vadd.f32 %v2149, %v2187
          %v2191 = vadd.f32 %v2150, %v2188
          %v2192 = vadd.f32 %v2151, %v2189
          %2193 = vrot.lane.b32.xlu0 %v2060, 109
          %v2194 = vpop.permute.xlu0 %2193
          %2195 = vrot.lane.b32.xlu0 %v2063, 109
          %v2196 = vpop.permute.xlu0 %2195
          %2197 = vrot.lane.b32.xlu0 %v2066, 109
          %v2198 = vpop.permute.xlu0 %2197
          %v2199 = vsel %vm424, %v2196, %v2198
          %v2200 = vsel %vm424, %v2194, %v2196
          %v2201 = vsel %vm424, %v2198, %v2194
          %s2202 = sld [smem:[#allocation5 + $0x8d]]
          %v2203 = vstv %s2202
          %v2204 = vmul.f32 %v2203, %v2200
          %v2205 = vmul.f32 %v2203, %v2199
          %v2206 = vmul.f32 %v2203, %v2201
          %v2207 = vadd.f32 %v2166, %v2204
          %v2208 = vadd.f32 %v2167, %v2205
          %v2209 = vadd.f32 %v2168, %v2206
          %s2210 = sld [smem:[#allocation5 + $0x28d]]
          %v2211 = vstv %s2210
          %v2212 = vmul.f32 %v2211, %v2200
          %v2213 = vmul.f32 %v2211, %v2199
          %v2214 = vmul.f32 %v2211, %v2201
          %v2215 = vadd.f32 %v2174, %v2212
          %v2216 = vadd.f32 %v2175, %v2213
          %v2217 = vadd.f32 %v2176, %v2214
          %s2218 = sld [smem:[#allocation5 + $0x48d]]
          %v2219 = vstv %s2218
          %v2220 = vmul.f32 %v2219, %v2200
          %v2221 = vmul.f32 %v2219, %v2199
          %v2222 = vmul.f32 %v2219, %v2201
          %v2223 = vadd.f32 %v2182, %v2220
          %v2224 = vadd.f32 %v2183, %v2221
          %v2225 = vadd.f32 %v2184, %v2222
          %s2226 = sld [smem:[#allocation5 + $0x68d]]
          %v2227 = vstv %s2226
          %v2228 = vmul.f32 %v2227, %v2200
          %v2229 = vmul.f32 %v2227, %v2199
          %v2230 = vmul.f32 %v2227, %v2201
          %v2231 = vadd.f32 %v2190, %v2228
          %v2232 = vadd.f32 %v2191, %v2229
          %v2233 = vadd.f32 %v2192, %v2230
          %2234 = vrot.lane.b32.xlu0 %v2060, 108
          %v2235 = vpop.permute.xlu0 %2234
          %2236 = vrot.lane.b32.xlu0 %v2063, 108
          %v2237 = vpop.permute.xlu0 %2236
          %2238 = vrot.lane.b32.xlu0 %v2066, 108
          %v2239 = vpop.permute.xlu0 %2238
          %v2240 = vsel %vm466, %v2237, %v2239
          %v2241 = vsel %vm466, %v2235, %v2237
          %v2242 = vsel %vm466, %v2239, %v2235
          %s2243 = sld [smem:[#allocation5 + $0x8e]]
          %v2244 = vstv %s2243
          %v2245 = vmul.f32 %v2244, %v2241
          %v2246 = vmul.f32 %v2244, %v2240
          %v2247 = vmul.f32 %v2244, %v2242
          %v2248 = vadd.f32 %v2207, %v2245
          %v2249 = vadd.f32 %v2208, %v2246
          %v2250 = vadd.f32 %v2209, %v2247
          %s2251 = sld [smem:[#allocation5 + $0x28e]]
          %v2252 = vstv %s2251
          %v2253 = vmul.f32 %v2252, %v2241
          %v2254 = vmul.f32 %v2252, %v2240
          %v2255 = vmul.f32 %v2252, %v2242
          %v2256 = vadd.f32 %v2215, %v2253
          %v2257 = vadd.f32 %v2216, %v2254
          %v2258 = vadd.f32 %v2217, %v2255
          %s2259 = sld [smem:[#allocation5 + $0x48e]]
          %v2260 = vstv %s2259
          %v2261 = vmul.f32 %v2260, %v2241
          %v2262 = vmul.f32 %v2260, %v2240
          %v2263 = vmul.f32 %v2260, %v2242
          %v2264 = vadd.f32 %v2223, %v2261
          %v2265 = vadd.f32 %v2224, %v2262
          %v2266 = vadd.f32 %v2225, %v2263
          %s2267 = sld [smem:[#allocation5 + $0x68e]]
          %v2268 = vstv %s2267
          %v2269 = vmul.f32 %v2268, %v2241
          %v2270 = vmul.f32 %v2268, %v2240
          %v2271 = vmul.f32 %v2268, %v2242
          %v2272 = vadd.f32 %v2231, %v2269
          %v2273 = vadd.f32 %v2232, %v2270
          %v2274 = vadd.f32 %v2233, %v2271
          %2275 = vrot.lane.b32.xlu0 %v2060, 92
          %v2276 = vpop.permute.xlu0 %2275
          %2277 = vrot.lane.b32.xlu0 %v2063, 92
          %v2278 = vpop.permute.xlu0 %2277
          %2279 = vrot.lane.b32.xlu0 %v2066, 92
          %v2280 = vpop.permute.xlu0 %2279
          %v2281 = vsel %vm508, %v2278, %v2280
          %v2282 = vsel %vm508, %v2276, %v2278
          %v2283 = vsel %vm508, %v2280, %v2276
          %s2284 = sld [smem:[#allocation5 + $0x8f]]
          %v2285 = vstv %s2284
          %v2286 = vmul.f32 %v2285, %v2282
          %v2287 = vmul.f32 %v2285, %v2281
          %v2288 = vmul.f32 %v2285, %v2283
          %v2289 = vadd.f32 %v2248, %v2286
          %v2290 = vadd.f32 %v2249, %v2287
          %v2291 = vadd.f32 %v2250, %v2288
          %s2292 = sld [smem:[#allocation5 + $0x28f]]
          %v2293 = vstv %s2292
          %v2294 = vmul.f32 %v2293, %v2282
          %v2295 = vmul.f32 %v2293, %v2281
          %v2296 = vmul.f32 %v2293, %v2283
          %v2297 = vadd.f32 %v2256, %v2294
          %v2298 = vadd.f32 %v2257, %v2295
          %v2299 = vadd.f32 %v2258, %v2296
          %s2300 = sld [smem:[#allocation5 + $0x48f]]
          %v2301 = vstv %s2300
          %v2302 = vmul.f32 %v2301, %v2282
          %v2303 = vmul.f32 %v2301, %v2281
          %v2304 = vmul.f32 %v2301, %v2283
          %v2305 = vadd.f32 %v2264, %v2302
          %v2306 = vadd.f32 %v2265, %v2303
          %v2307 = vadd.f32 %v2266, %v2304
          %s2308 = sld [smem:[#allocation5 + $0x68f]]
          %v2309 = vstv %s2308
          %v2310 = vmul.f32 %v2309, %v2282
          %v2311 = vmul.f32 %v2309, %v2281
          %v2312 = vmul.f32 %v2309, %v2283
          %v2313 = vadd.f32 %v2272, %v2310
          %v2314 = vadd.f32 %v2273, %v2311
          %v2315 = vadd.f32 %v2274, %v2312
          %2316 = vrot.lane.b32.xlu0 %v2060, 91
          %v2317 = vpop.permute.xlu0 %2316
          %2318 = vrot.lane.b32.xlu0 %v2063, 91
          %v2319 = vpop.permute.xlu0 %2318
          %2320 = vrot.lane.b32.xlu0 %v2066, 91
          %v2321 = vpop.permute.xlu0 %2320
          %v2322 = vsel %vm550, %v2319, %v2321
          %v2323 = vsel %vm550, %v2317, %v2319
          %v2324 = vsel %vm550, %v2321, %v2317
          %s2325 = sld [smem:[#allocation5 + $0x90]]
          %v2326 = vstv %s2325
          %v2327 = vmul.f32 %v2326, %v2323
          %v2328 = vmul.f32 %v2326, %v2322
          %v2329 = vmul.f32 %v2326, %v2324
          %v2330 = vadd.f32 %v2289, %v2327
          %v2331 = vadd.f32 %v2290, %v2328
          %v2332 = vadd.f32 %v2291, %v2329
          %s2333 = sld [smem:[#allocation5 + $0x290]]
          %v2334 = vstv %s2333
          %v2335 = vmul.f32 %v2334, %v2323
          %v2336 = vmul.f32 %v2334, %v2322
          %v2337 = vmul.f32 %v2334, %v2324
          %v2338 = vadd.f32 %v2297, %v2335
          %v2339 = vadd.f32 %v2298, %v2336
          %v2340 = vadd.f32 %v2299, %v2337
          %s2341 = sld [smem:[#allocation5 + $0x490]]
          %v2342 = vstv %s2341
          %v2343 = vmul.f32 %v2342, %v2323
          %v2344 = vmul.f32 %v2342, %v2322
          %v2345 = vmul.f32 %v2342, %v2324
          %v2346 = vadd.f32 %v2305, %v2343
          %v2347 = vadd.f32 %v2306, %v2344
          %v2348 = vadd.f32 %v2307, %v2345
          %s2349 = sld [smem:[#allocation5 + $0x690]]
          %v2350 = vstv %s2349
          %v2351 = vmul.f32 %v2350, %v2323
          %v2352 = vmul.f32 %v2350, %v2322
          %v2353 = vmul.f32 %v2350, %v2324
          %v2354 = vadd.f32 %v2313, %v2351
          %v2355 = vadd.f32 %v2314, %v2352
          %v2356 = vadd.f32 %v2315, %v2353
          %2357 = vrot.lane.b32.xlu0 %v2060, 90
          %v2358 = vpop.permute.xlu0 %2357
          %2359 = vrot.lane.b32.xlu0 %v2063, 90
          %v2360 = vpop.permute.xlu0 %2359
          %2361 = vrot.lane.b32.xlu0 %v2066, 90
          %v2362 = vpop.permute.xlu0 %2361
          %v2363 = vsel %vm592, %v2360, %v2362
          %v2364 = vsel %vm592, %v2358, %v2360
          %v2365 = vsel %vm592, %v2362, %v2358
          %s2366 = sld [smem:[#allocation5 + $0x91]]
          %v2367 = vstv %s2366
          %v2368 = vmul.f32 %v2367, %v2364
          %v2369 = vmul.f32 %v2367, %v2363
          %v2370 = vmul.f32 %v2367, %v2365
          %v2371 = vadd.f32 %v2330, %v2368
          %v2372 = vadd.f32 %v2331, %v2369
          %v2373 = vadd.f32 %v2332, %v2370
          %s2374 = sld [smem:[#allocation5 + $0x291]]
          %v2375 = vstv %s2374
          %v2376 = vmul.f32 %v2375, %v2364
          %v2377 = vmul.f32 %v2375, %v2363
          %v2378 = vmul.f32 %v2375, %v2365
          %v2379 = vadd.f32 %v2338, %v2376
          %v2380 = vadd.f32 %v2339, %v2377
          %v2381 = vadd.f32 %v2340, %v2378
          %s2382 = sld [smem:[#allocation5 + $0x491]]
          %v2383 = vstv %s2382
          %v2384 = vmul.f32 %v2383, %v2364
          %v2385 = vmul.f32 %v2383, %v2363
          %v2386 = vmul.f32 %v2383, %v2365
          %v2387 = vadd.f32 %v2346, %v2384
          %v2388 = vadd.f32 %v2347, %v2385
          %v2389 = vadd.f32 %v2348, %v2386
          %s2390 = sld [smem:[#allocation5 + $0x691]]
          %v2391 = vstv %s2390
          %v2392 = vmul.f32 %v2391, %v2364
          %v2393 = vmul.f32 %v2391, %v2363
          %v2394 = vmul.f32 %v2391, %v2365
          %v2395 = vadd.f32 %v2354, %v2392
          %v2396 = vadd.f32 %v2355, %v2393
          %v2397 = vadd.f32 %v2356, %v2394
          %v2398 = vld [vmem:[%s1566] sm:$0xfc]
          %v2399 = vld [vmem:[%s1566 + $0x8] sm:$0xfc]
          %v2400 = vld [vmem:[%s1566 + $0x10] sm:$0xfc]
          %v2401 = vld [vmem:[%s1566 + $0x18] sm:$0x3]
          %v2402 = vld [vmem:[%s1566 + $0x20] sm:$0x3]
          %v2403 = vld [vmem:[%s1566 + $0x28] sm:$0x3]
          %s2404 = sld [smem:[#allocation5 + $0x92]]
          %v2405 = vstv %s2404
          %v2406 = vmul.f32 %v2405, %v2398
          %v2407 = vmul.f32 %v2405, %v2399
          %v2408 = vmul.f32 %v2405, %v2400
          %v2409 = vmul.f32 %v2405, %v2401
          %v2410 = vmul.f32 %v2405, %v2402
          %v2411 = vmul.f32 %v2405, %v2403
          %v2418 = vrot.slane %v2406, 2
          %v2419 = vrot.slane %v2409, 2
          %v2420 = vsel %vm1117, %v2418, %v2419
          %v2421 = vrot.slane %v2407, 2
          %v2422 = vrot.slane %v2410, 2
          %v2423 = vsel %vm1117, %v2421, %v2422
          %v2424 = vrot.slane %v2408, 2
          %v2425 = vrot.slane %v2411, 2
          %v2426 = vsel %vm1117, %v2424, %v2425
          %v2430 = vadd.f32 %v2371, %v2420
          %v2431 = vadd.f32 %v2372, %v2423
          %v2432 = vadd.f32 %v2373, %v2426
          %s2433 = sld [smem:[#allocation5 + $0x292]]
          %v2434 = vstv %s2433
          %v2435 = vmul.f32 %v2434, %v2398
          %v2436 = vmul.f32 %v2434, %v2399
          %v2437 = vmul.f32 %v2434, %v2400
          %v2438 = vmul.f32 %v2434, %v2401
          %v2439 = vmul.f32 %v2434, %v2402
          %v2440 = vmul.f32 %v2434, %v2403
          %v2447 = vrot.slane %v2435, 2
          %v2448 = vrot.slane %v2438, 2
          %v2449 = vsel %vm1117, %v2447, %v2448
          %v2450 = vrot.slane %v2436, 2
          %v2451 = vrot.slane %v2439, 2
          %v2452 = vsel %vm1117, %v2450, %v2451
          %v2453 = vrot.slane %v2437, 2
          %v2454 = vrot.slane %v2440, 2
          %v2455 = vsel %vm1117, %v2453, %v2454
          %v2459 = vadd.f32 %v2379, %v2449
          %v2460 = vadd.f32 %v2380, %v2452
          %v2461 = vadd.f32 %v2381, %v2455
          %s2462 = sld [smem:[#allocation5 + $0x492]]
          %v2463 = vstv %s2462
          %v2464 = vmul.f32 %v2463, %v2398
          %v2465 = vmul.f32 %v2463, %v2399
          %v2466 = vmul.f32 %v2463, %v2400
          %v2467 = vmul.f32 %v2463, %v2401
          %v2468 = vmul.f32 %v2463, %v2402
          %v2469 = vmul.f32 %v2463, %v2403
          %v2476 = vrot.slane %v2464, 2
          %v2477 = vrot.slane %v2467, 2
          %v2478 = vsel %vm1117, %v2476, %v2477
          %v2479 = vrot.slane %v2465, 2
          %v2480 = vrot.slane %v2468, 2
          %v2481 = vsel %vm1117, %v2479, %v2480
          %v2482 = vrot.slane %v2466, 2
          %v2483 = vrot.slane %v2469, 2
          %v2484 = vsel %vm1117, %v2482, %v2483
          %v2488 = vadd.f32 %v2387, %v2478
          %v2489 = vadd.f32 %v2388, %v2481
          %v2490 = vadd.f32 %v2389, %v2484
          %s2491 = sld [smem:[#allocation5 + $0x692]]
          %v2492 = vstv %s2491
          %v2493 = vmul.f32 %v2492, %v2398
          %v2494 = vmul.f32 %v2492, %v2399
          %v2495 = vmul.f32 %v2492, %v2400
          %v2496 = vmul.f32 %v2492, %v2401
          %v2497 = vmul.f32 %v2492, %v2402
          %v2498 = vmul.f32 %v2492, %v2403
          %v2505 = vrot.slane %v2493, 2
          %v2506 = vrot.slane %v2496, 2
          %v2507 = vsel %vm1117, %v2505, %v2506
          %v2508 = vrot.slane %v2494, 2
          %v2509 = vrot.slane %v2497, 2
          %v2510 = vsel %vm1117, %v2508, %v2509
          %v2511 = vrot.slane %v2495, 2
          %v2512 = vrot.slane %v2498, 2
          %v2513 = vsel %vm1117, %v2511, %v2512
          %v2517 = vadd.f32 %v2395, %v2507
          %v2518 = vadd.f32 %v2396, %v2510
          %v2519 = vadd.f32 %v2397, %v2513
          %v2526 = vrot.slane %v2398, 2
          %v2527 = vrot.slane %v2401, 2
          %v2528 = vsel %vm1117, %v2526, %v2527
          %v2529 = vrot.slane %v2399, 2
          %v2530 = vrot.slane %v2402, 2
          %v2531 = vsel %vm1117, %v2529, %v2530
          %v2532 = vrot.slane %v2400, 2
          %v2533 = vrot.slane %v2403, 2
          %v2534 = vsel %vm1117, %v2532, %v2533
          %2538 = vrot.lane.b32.xlu0 %v2528, 127
          %v2539 = vpop.permute.xlu0 %2538
          %2540 = vrot.lane.b32.xlu0 %v2531, 127
          %v2541 = vpop.permute.xlu0 %2540
          %2542 = vrot.lane.b32.xlu0 %v2534, 127
          %v2543 = vpop.permute.xlu0 %2542
          %v2544 = vsel %vm298, %v2541, %v2543
          %v2545 = vsel %vm298, %v2539, %v2541
          %v2546 = vsel %vm298, %v2543, %v2539
          %s2547 = sld [smem:[#allocation5 + $0x93]]
          %v2548 = vstv %s2547
          %v2549 = vmul.f32 %v2548, %v2545
          %v2550 = vmul.f32 %v2548, %v2544
          %v2551 = vmul.f32 %v2548, %v2546
          %v2552 = vadd.f32 %v2430, %v2549
          %v2553 = vadd.f32 %v2431, %v2550
          %v2554 = vadd.f32 %v2432, %v2551
          %s2555 = sld [smem:[#allocation5 + $0x293]]
          %v2556 = vstv %s2555
          %v2557 = vmul.f32 %v2556, %v2545
          %v2558 = vmul.f32 %v2556, %v2544
          %v2559 = vmul.f32 %v2556, %v2546
          %v2560 = vadd.f32 %v2459, %v2557
          %v2561 = vadd.f32 %v2460, %v2558
          %v2562 = vadd.f32 %v2461, %v2559
          %s2563 = sld [smem:[#allocation5 + $0x493]]
          %v2564 = vstv %s2563
          %v2565 = vmul.f32 %v2564, %v2545
          %v2566 = vmul.f32 %v2564, %v2544
          %v2567 = vmul.f32 %v2564, %v2546
          %v2568 = vadd.f32 %v2488, %v2565
          %v2569 = vadd.f32 %v2489, %v2566
          %v2570 = vadd.f32 %v2490, %v2567
          %s2571 = sld [smem:[#allocation5 + $0x693]]
          %v2572 = vstv %s2571
          %v2573 = vmul.f32 %v2572, %v2545
          %v2574 = vmul.f32 %v2572, %v2544
          %v2575 = vmul.f32 %v2572, %v2546
          %v2576 = vadd.f32 %v2517, %v2573
          %v2577 = vadd.f32 %v2518, %v2574
          %v2578 = vadd.f32 %v2519, %v2575
          %2579 = vrot.lane.b32.xlu0 %v2528, 126
          %v2580 = vpop.permute.xlu0 %2579
          %2581 = vrot.lane.b32.xlu0 %v2531, 126
          %v2582 = vpop.permute.xlu0 %2581
          %2583 = vrot.lane.b32.xlu0 %v2534, 126
          %v2584 = vpop.permute.xlu0 %2583
          %v2585 = vsel %vm340, %v2582, %v2584
          %v2586 = vsel %vm340, %v2580, %v2582
          %v2587 = vsel %vm340, %v2584, %v2580
          %s2588 = sld [smem:[#allocation5 + $0x94]]
          %v2589 = vstv %s2588
          %v2590 = vmul.f32 %v2589, %v2586
          %v2591 = vmul.f32 %v2589, %v2585
          %v2592 = vmul.f32 %v2589, %v2587
          %v2593 = vadd.f32 %v2552, %v2590
          %v2594 = vadd.f32 %v2553, %v2591
          %v2595 = vadd.f32 %v2554, %v2592
          %s2596 = sld [smem:[#allocation5 + $0x294]]
          %v2597 = vstv %s2596
          %v2598 = vmul.f32 %v2597, %v2586
          %v2599 = vmul.f32 %v2597, %v2585
          %v2600 = vmul.f32 %v2597, %v2587
          %v2601 = vadd.f32 %v2560, %v2598
          %v2602 = vadd.f32 %v2561, %v2599
          %v2603 = vadd.f32 %v2562, %v2600
          %s2604 = sld [smem:[#allocation5 + $0x494]]
          %v2605 = vstv %s2604
          %v2606 = vmul.f32 %v2605, %v2586
          %v2607 = vmul.f32 %v2605, %v2585
          %v2608 = vmul.f32 %v2605, %v2587
          %v2609 = vadd.f32 %v2568, %v2606
          %v2610 = vadd.f32 %v2569, %v2607
          %v2611 = vadd.f32 %v2570, %v2608
          %s2612 = sld [smem:[#allocation5 + $0x694]]
          %v2613 = vstv %s2612
          %v2614 = vmul.f32 %v2613, %v2586
          %v2615 = vmul.f32 %v2613, %v2585
          %v2616 = vmul.f32 %v2613, %v2587
          %v2617 = vadd.f32 %v2576, %v2614
          %v2618 = vadd.f32 %v2577, %v2615
          %v2619 = vadd.f32 %v2578, %v2616
          %2620 = vrot.lane.b32.xlu0 %v2528, 110
          %v2621 = vpop.permute.xlu0 %2620
          %2622 = vrot.lane.b32.xlu0 %v2531, 110
          %v2623 = vpop.permute.xlu0 %2622
          %2624 = vrot.lane.b32.xlu0 %v2534, 110
          %v2625 = vpop.permute.xlu0 %2624
          %v2626 = vsel %vm382, %v2623, %v2625
          %v2627 = vsel %vm382, %v2621, %v2623
          %v2628 = vsel %vm382, %v2625, %v2621
          %s2629 = sld [smem:[#allocation5 + $0x95]]
          %v2630 = vstv %s2629
          %v2631 = vmul.f32 %v2630, %v2627
          %v2632 = vmul.f32 %v2630, %v2626
          %v2633 = vmul.f32 %v2630, %v2628
          %v2634 = vadd.f32 %v2593, %v2631
          %v2635 = vadd.f32 %v2594, %v2632
          %v2636 = vadd.f32 %v2595, %v2633
          %s2637 = sld [smem:[#allocation5 + $0x295]]
          %v2638 = vstv %s2637
          %v2639 = vmul.f32 %v2638, %v2627
          %v2640 = vmul.f32 %v2638, %v2626
          %v2641 = vmul.f32 %v2638, %v2628
          %v2642 = vadd.f32 %v2601, %v2639
          %v2643 = vadd.f32 %v2602, %v2640
          %v2644 = vadd.f32 %v2603, %v2641
          %s2645 = sld [smem:[#allocation5 + $0x495]]
          %v2646 = vstv %s2645
          %v2647 = vmul.f32 %v2646, %v2627
          %v2648 = vmul.f32 %v2646, %v2626
          %v2649 = vmul.f32 %v2646, %v2628
          %v2650 = vadd.f32 %v2609, %v2647
          %v2651 = vadd.f32 %v2610, %v2648
          %v2652 = vadd.f32 %v2611, %v2649
          %s2653 = sld [smem:[#allocation5 + $0x695]]
          %v2654 = vstv %s2653
          %v2655 = vmul.f32 %v2654, %v2627
          %v2656 = vmul.f32 %v2654, %v2626
          %v2657 = vmul.f32 %v2654, %v2628
          %v2658 = vadd.f32 %v2617, %v2655
          %v2659 = vadd.f32 %v2618, %v2656
          %v2660 = vadd.f32 %v2619, %v2657
          %2661 = vrot.lane.b32.xlu0 %v2528, 109
          %v2662 = vpop.permute.xlu0 %2661
          %2663 = vrot.lane.b32.xlu0 %v2531, 109
          %v2664 = vpop.permute.xlu0 %2663
          %2665 = vrot.lane.b32.xlu0 %v2534, 109
          %v2666 = vpop.permute.xlu0 %2665
          %v2667 = vsel %vm424, %v2664, %v2666
          %v2668 = vsel %vm424, %v2662, %v2664
          %v2669 = vsel %vm424, %v2666, %v2662
          %s2670 = sld [smem:[#allocation5 + $0x96]]
          %v2671 = vstv %s2670
          %v2672 = vmul.f32 %v2671, %v2668
          %v2673 = vmul.f32 %v2671, %v2667
          %v2674 = vmul.f32 %v2671, %v2669
          %v2675 = vadd.f32 %v2634, %v2672
          %v2676 = vadd.f32 %v2635, %v2673
          %v2677 = vadd.f32 %v2636, %v2674
          %s2678 = sld [smem:[#allocation5 + $0x296]]
          %v2679 = vstv %s2678
          %v2680 = vmul.f32 %v2679, %v2668
          %v2681 = vmul.f32 %v2679, %v2667
          %v2682 = vmul.f32 %v2679, %v2669
          %v2683 = vadd.f32 %v2642, %v2680
          %v2684 = vadd.f32 %v2643, %v2681
          %v2685 = vadd.f32 %v2644, %v2682
          %s2686 = sld [smem:[#allocation5 + $0x496]]
          %v2687 = vstv %s2686
          %v2688 = vmul.f32 %v2687, %v2668
          %v2689 = vmul.f32 %v2687, %v2667
          %v2690 = vmul.f32 %v2687, %v2669
          %v2691 = vadd.f32 %v2650, %v2688
          %v2692 = vadd.f32 %v2651, %v2689
          %v2693 = vadd.f32 %v2652, %v2690
          %s2694 = sld [smem:[#allocation5 + $0x696]]
          %v2695 = vstv %s2694
          %v2696 = vmul.f32 %v2695, %v2668
          %v2697 = vmul.f32 %v2695, %v2667
          %v2698 = vmul.f32 %v2695, %v2669
          %v2699 = vadd.f32 %v2658, %v2696
          %v2700 = vadd.f32 %v2659, %v2697
          %v2701 = vadd.f32 %v2660, %v2698
          %2702 = vrot.lane.b32.xlu0 %v2528, 108
          %v2703 = vpop.permute.xlu0 %2702
          %2704 = vrot.lane.b32.xlu0 %v2531, 108
          %v2705 = vpop.permute.xlu0 %2704
          %2706 = vrot.lane.b32.xlu0 %v2534, 108
          %v2707 = vpop.permute.xlu0 %2706
          %v2708 = vsel %vm466, %v2705, %v2707
          %v2709 = vsel %vm466, %v2703, %v2705
          %v2710 = vsel %vm466, %v2707, %v2703
          %s2711 = sld [smem:[#allocation5 + $0x97]]
          %v2712 = vstv %s2711
          %v2713 = vmul.f32 %v2712, %v2709
          %v2714 = vmul.f32 %v2712, %v2708
          %v2715 = vmul.f32 %v2712, %v2710
          %v2716 = vadd.f32 %v2675, %v2713
          %v2717 = vadd.f32 %v2676, %v2714
          %v2718 = vadd.f32 %v2677, %v2715
          %s2719 = sld [smem:[#allocation5 + $0x297]]
          %v2720 = vstv %s2719
          %v2721 = vmul.f32 %v2720, %v2709
          %v2722 = vmul.f32 %v2720, %v2708
          %v2723 = vmul.f32 %v2720, %v2710
          %v2724 = vadd.f32 %v2683, %v2721
          %v2725 = vadd.f32 %v2684, %v2722
          %v2726 = vadd.f32 %v2685, %v2723
          %s2727 = sld [smem:[#allocation5 + $0x497]]
          %v2728 = vstv %s2727
          %v2729 = vmul.f32 %v2728, %v2709
          %v2730 = vmul.f32 %v2728, %v2708
          %v2731 = vmul.f32 %v2728, %v2710
          %v2732 = vadd.f32 %v2691, %v2729
          %v2733 = vadd.f32 %v2692, %v2730
          %v2734 = vadd.f32 %v2693, %v2731
          %s2735 = sld [smem:[#allocation5 + $0x697]]
          %v2736 = vstv %s2735
          %v2737 = vmul.f32 %v2736, %v2709
          %v2738 = vmul.f32 %v2736, %v2708
          %v2739 = vmul.f32 %v2736, %v2710
          %v2740 = vadd.f32 %v2699, %v2737
          %v2741 = vadd.f32 %v2700, %v2738
          %v2742 = vadd.f32 %v2701, %v2739
          %2743 = vrot.lane.b32.xlu0 %v2528, 92
          %v2744 = vpop.permute.xlu0 %2743
          %2745 = vrot.lane.b32.xlu0 %v2531, 92
          %v2746 = vpop.permute.xlu0 %2745
          %2747 = vrot.lane.b32.xlu0 %v2534, 92
          %v2748 = vpop.permute.xlu0 %2747
          %v2749 = vsel %vm508, %v2746, %v2748
          %v2750 = vsel %vm508, %v2744, %v2746
          %v2751 = vsel %vm508, %v2748, %v2744
          %s2752 = sld [smem:[#allocation5 + $0x98]]
          %v2753 = vstv %s2752
          %v2754 = vmul.f32 %v2753, %v2750
          %v2755 = vmul.f32 %v2753, %v2749
          %v2756 = vmul.f32 %v2753, %v2751
          %v2757 = vadd.f32 %v2716, %v2754
          %v2758 = vadd.f32 %v2717, %v2755
          %v2759 = vadd.f32 %v2718, %v2756
          %s2760 = sld [smem:[#allocation5 + $0x298]]
          %v2761 = vstv %s2760
          %v2762 = vmul.f32 %v2761, %v2750
          %v2763 = vmul.f32 %v2761, %v2749
          %v2764 = vmul.f32 %v2761, %v2751
          %v2765 = vadd.f32 %v2724, %v2762
          %v2766 = vadd.f32 %v2725, %v2763
          %v2767 = vadd.f32 %v2726, %v2764
          %s2768 = sld [smem:[#allocation5 + $0x498]]
          %v2769 = vstv %s2768
          %v2770 = vmul.f32 %v2769, %v2750
          %v2771 = vmul.f32 %v2769, %v2749
          %v2772 = vmul.f32 %v2769, %v2751
          %v2773 = vadd.f32 %v2732, %v2770
          %v2774 = vadd.f32 %v2733, %v2771
          %v2775 = vadd.f32 %v2734, %v2772
          %s2776 = sld [smem:[#allocation5 + $0x698]]
          %v2777 = vstv %s2776
          %v2778 = vmul.f32 %v2777, %v2750
          %v2779 = vmul.f32 %v2777, %v2749
          %v2780 = vmul.f32 %v2777, %v2751
          %v2781 = vadd.f32 %v2740, %v2778
          %v2782 = vadd.f32 %v2741, %v2779
          %v2783 = vadd.f32 %v2742, %v2780
          %2784 = vrot.lane.b32.xlu0 %v2528, 91
          %v2785 = vpop.permute.xlu0 %2784
          %2786 = vrot.lane.b32.xlu0 %v2531, 91
          %v2787 = vpop.permute.xlu0 %2786
          %2788 = vrot.lane.b32.xlu0 %v2534, 91
          %v2789 = vpop.permute.xlu0 %2788
          %v2790 = vsel %vm550, %v2787, %v2789
          %v2791 = vsel %vm550, %v2785, %v2787
          %v2792 = vsel %vm550, %v2789, %v2785
          %s2793 = sld [smem:[#allocation5 + $0x99]]
          %v2794 = vstv %s2793
          %v2795 = vmul.f32 %v2794, %v2791
          %v2796 = vmul.f32 %v2794, %v2790
          %v2797 = vmul.f32 %v2794, %v2792
          %v2798 = vadd.f32 %v2757, %v2795
          %v2799 = vadd.f32 %v2758, %v2796
          %v2800 = vadd.f32 %v2759, %v2797
          %s2801 = sld [smem:[#allocation5 + $0x299]]
          %v2802 = vstv %s2801
          %v2803 = vmul.f32 %v2802, %v2791
          %v2804 = vmul.f32 %v2802, %v2790
          %v2805 = vmul.f32 %v2802, %v2792
          %v2806 = vadd.f32 %v2765, %v2803
          %v2807 = vadd.f32 %v2766, %v2804
          %v2808 = vadd.f32 %v2767, %v2805
          %s2809 = sld [smem:[#allocation5 + $0x499]]
          %v2810 = vstv %s2809
          %v2811 = vmul.f32 %v2810, %v2791
          %v2812 = vmul.f32 %v2810, %v2790
          %v2813 = vmul.f32 %v2810, %v2792
          %v2814 = vadd.f32 %v2773, %v2811
          %v2815 = vadd.f32 %v2774, %v2812
          %v2816 = vadd.f32 %v2775, %v2813
          %s2817 = sld [smem:[#allocation5 + $0x699]]
          %v2818 = vstv %s2817
          %v2819 = vmul.f32 %v2818, %v2791
          %v2820 = vmul.f32 %v2818, %v2790
          %v2821 = vmul.f32 %v2818, %v2792
          %v2822 = vadd.f32 %v2781, %v2819
          %v2823 = vadd.f32 %v2782, %v2820
          %v2824 = vadd.f32 %v2783, %v2821
          %2825 = vrot.lane.b32.xlu0 %v2528, 90
          %v2826 = vpop.permute.xlu0 %2825
          %2827 = vrot.lane.b32.xlu0 %v2531, 90
          %v2828 = vpop.permute.xlu0 %2827
          %2829 = vrot.lane.b32.xlu0 %v2534, 90
          %v2830 = vpop.permute.xlu0 %2829
          %v2831 = vsel %vm592, %v2828, %v2830
          %v2832 = vsel %vm592, %v2826, %v2828
          %v2833 = vsel %vm592, %v2830, %v2826
          %s2834 = sld [smem:[#allocation5 + $0x9a]]
          %v2835 = vstv %s2834
          %v2836 = vmul.f32 %v2835, %v2832
          %v2837 = vmul.f32 %v2835, %v2831
          %v2838 = vmul.f32 %v2835, %v2833
          %v2839 = vadd.f32 %v2798, %v2836
          %v2840 = vadd.f32 %v2799, %v2837
          %v2841 = vadd.f32 %v2800, %v2838
          %s2842 = sld [smem:[#allocation5 + $0x29a]]
          %v2843 = vstv %s2842
          %v2844 = vmul.f32 %v2843, %v2832
          %v2845 = vmul.f32 %v2843, %v2831
          %v2846 = vmul.f32 %v2843, %v2833
          %v2847 = vadd.f32 %v2806, %v2844
          %v2848 = vadd.f32 %v2807, %v2845
          %v2849 = vadd.f32 %v2808, %v2846
          %s2850 = sld [smem:[#allocation5 + $0x49a]]
          %v2851 = vstv %s2850
          %v2852 = vmul.f32 %v2851, %v2832
          %v2853 = vmul.f32 %v2851, %v2831
          %v2854 = vmul.f32 %v2851, %v2833
          %v2855 = vadd.f32 %v2814, %v2852
          %v2856 = vadd.f32 %v2815, %v2853
          %v2857 = vadd.f32 %v2816, %v2854
          %s2858 = sld [smem:[#allocation5 + $0x69a]]
          %v2859 = vstv %s2858
          %v2860 = vmul.f32 %v2859, %v2832
          %v2861 = vmul.f32 %v2859, %v2831
          %v2862 = vmul.f32 %v2859, %v2833
          %v2863 = vadd.f32 %v2822, %v2860
          %v2864 = vadd.f32 %v2823, %v2861
          %v2865 = vadd.f32 %v2824, %v2862
          %s2866 = scalar_lea.vmem %s241, 96
          %v2867 = vld [vmem:[%s2866] sm:$0xff]
          %v2868 = vld [vmem:[%s2866 + $0x8] sm:$0xff]
          %v2869 = vld [vmem:[%s2866 + $0x10] sm:$0xff]
          %s2870 = sld [smem:[#allocation5 + $0x100]]
          %v2871 = vstv %s2870
          %v2872 = vmul.f32 %v2871, %v2867
          %v2873 = vmul.f32 %v2871, %v2868
          %v2874 = vmul.f32 %v2871, %v2869
          %v2875 = vadd.f32 %v2839, %v2872
          %v2876 = vadd.f32 %v2840, %v2873
          %v2877 = vadd.f32 %v2841, %v2874
          %s2878 = sld [smem:[#allocation5 + $0x300]]
          %v2879 = vstv %s2878
          %v2880 = vmul.f32 %v2879, %v2867
          %v2881 = vmul.f32 %v2879, %v2868
          %v2882 = vmul.f32 %v2879, %v2869
          %v2883 = vadd.f32 %v2847, %v2880
          %v2884 = vadd.f32 %v2848, %v2881
          %v2885 = vadd.f32 %v2849, %v2882
          %s2886 = sld [smem:[#allocation5 + $0x500]]
          %v2887 = vstv %s2886
          %v2888 = vmul.f32 %v2887, %v2867
          %v2889 = vmul.f32 %v2887, %v2868
          %v2890 = vmul.f32 %v2887, %v2869
          %v2891 = vadd.f32 %v2855, %v2888
          %v2892 = vadd.f32 %v2856, %v2889
          %v2893 = vadd.f32 %v2857, %v2890
          %s2894 = sld [smem:[#allocation5 + $0x700]]
          %v2895 = vstv %s2894
          %v2896 = vmul.f32 %v2895, %v2867
          %v2897 = vmul.f32 %v2895, %v2868
          %v2898 = vmul.f32 %v2895, %v2869
          %v2899 = vadd.f32 %v2863, %v2896
          %v2900 = vadd.f32 %v2864, %v2897
          %v2901 = vadd.f32 %v2865, %v2898
          %2902 = vrot.lane.b32.xlu0 %v2867, 127
          %v2903 = vpop.permute.xlu0 %2902
          %2904 = vrot.lane.b32.xlu0 %v2868, 127
          %v2905 = vpop.permute.xlu0 %2904
          %2906 = vrot.lane.b32.xlu0 %v2869, 127
          %v2907 = vpop.permute.xlu0 %2906
          %v2908 = vsel %vm298, %v2905, %v2907
          %v2909 = vsel %vm298, %v2903, %v2905
          %v2910 = vsel %vm298, %v2907, %v2903
          %s2911 = sld [smem:[#allocation5 + $0x101]]
          %v2912 = vstv %s2911
          %v2913 = vmul.f32 %v2912, %v2909
          %v2914 = vmul.f32 %v2912, %v2908
          %v2915 = vmul.f32 %v2912, %v2910
          %v2916 = vadd.f32 %v2875, %v2913
          %v2917 = vadd.f32 %v2876, %v2914
          %v2918 = vadd.f32 %v2877, %v2915
          %s2919 = sld [smem:[#allocation5 + $0x301]]
          %v2920 = vstv %s2919
          %v2921 = vmul.f32 %v2920, %v2909
          %v2922 = vmul.f32 %v2920, %v2908
          %v2923 = vmul.f32 %v2920, %v2910
          %v2924 = vadd.f32 %v2883, %v2921
          %v2925 = vadd.f32 %v2884, %v2922
          %v2926 = vadd.f32 %v2885, %v2923
          %s2927 = sld [smem:[#allocation5 + $0x501]]
          %v2928 = vstv %s2927
          %v2929 = vmul.f32 %v2928, %v2909
          %v2930 = vmul.f32 %v2928, %v2908
          %v2931 = vmul.f32 %v2928, %v2910
          %v2932 = vadd.f32 %v2891, %v2929
          %v2933 = vadd.f32 %v2892, %v2930
          %v2934 = vadd.f32 %v2893, %v2931
          %s2935 = sld [smem:[#allocation5 + $0x701]]
          %v2936 = vstv %s2935
          %v2937 = vmul.f32 %v2936, %v2909
          %v2938 = vmul.f32 %v2936, %v2908
          %v2939 = vmul.f32 %v2936, %v2910
          %v2940 = vadd.f32 %v2899, %v2937
          %v2941 = vadd.f32 %v2900, %v2938
          %v2942 = vadd.f32 %v2901, %v2939
          %2943 = vrot.lane.b32.xlu0 %v2867, 126
          %v2944 = vpop.permute.xlu0 %2943
          %2945 = vrot.lane.b32.xlu0 %v2868, 126
          %v2946 = vpop.permute.xlu0 %2945
          %2947 = vrot.lane.b32.xlu0 %v2869, 126
          %v2948 = vpop.permute.xlu0 %2947
          %v2949 = vsel %vm340, %v2946, %v2948
          %v2950 = vsel %vm340, %v2944, %v2946
          %v2951 = vsel %vm340, %v2948, %v2944
          %s2952 = sld [smem:[#allocation5 + $0x102]]
          %v2953 = vstv %s2952
          %v2954 = vmul.f32 %v2953, %v2950
          %v2955 = vmul.f32 %v2953, %v2949
          %v2956 = vmul.f32 %v2953, %v2951
          %v2957 = vadd.f32 %v2916, %v2954
          %v2958 = vadd.f32 %v2917, %v2955
          %v2959 = vadd.f32 %v2918, %v2956
          %s2960 = sld [smem:[#allocation5 + $0x302]]
          %v2961 = vstv %s2960
          %v2962 = vmul.f32 %v2961, %v2950
          %v2963 = vmul.f32 %v2961, %v2949
          %v2964 = vmul.f32 %v2961, %v2951
          %v2965 = vadd.f32 %v2924, %v2962
          %v2966 = vadd.f32 %v2925, %v2963
          %v2967 = vadd.f32 %v2926, %v2964
          %s2968 = sld [smem:[#allocation5 + $0x502]]
          %v2969 = vstv %s2968
          %v2970 = vmul.f32 %v2969, %v2950
          %v2971 = vmul.f32 %v2969, %v2949
          %v2972 = vmul.f32 %v2969, %v2951
          %v2973 = vadd.f32 %v2932, %v2970
          %v2974 = vadd.f32 %v2933, %v2971
          %v2975 = vadd.f32 %v2934, %v2972
          %s2976 = sld [smem:[#allocation5 + $0x702]]
          %v2977 = vstv %s2976
          %v2978 = vmul.f32 %v2977, %v2950
          %v2979 = vmul.f32 %v2977, %v2949
          %v2980 = vmul.f32 %v2977, %v2951
          %v2981 = vadd.f32 %v2940, %v2978
          %v2982 = vadd.f32 %v2941, %v2979
          %v2983 = vadd.f32 %v2942, %v2980
          %2984 = vrot.lane.b32.xlu0 %v2867, 110
          %v2985 = vpop.permute.xlu0 %2984
          %2986 = vrot.lane.b32.xlu0 %v2868, 110
          %v2987 = vpop.permute.xlu0 %2986
          %2988 = vrot.lane.b32.xlu0 %v2869, 110
          %v2989 = vpop.permute.xlu0 %2988
          %v2990 = vsel %vm382, %v2987, %v2989
          %v2991 = vsel %vm382, %v2985, %v2987
          %v2992 = vsel %vm382, %v2989, %v2985
          %s2993 = sld [smem:[#allocation5 + $0x103]]
          %v2994 = vstv %s2993
          %v2995 = vmul.f32 %v2994, %v2991
          %v2996 = vmul.f32 %v2994, %v2990
          %v2997 = vmul.f32 %v2994, %v2992
          %v2998 = vadd.f32 %v2957, %v2995
          %v2999 = vadd.f32 %v2958, %v2996
          %v3000 = vadd.f32 %v2959, %v2997
          %s3001 = sld [smem:[#allocation5 + $0x303]]
          %v3002 = vstv %s3001
          %v3003 = vmul.f32 %v3002, %v2991
          %v3004 = vmul.f32 %v3002, %v2990
          %v3005 = vmul.f32 %v3002, %v2992
          %v3006 = vadd.f32 %v2965, %v3003
          %v3007 = vadd.f32 %v2966, %v3004
          %v3008 = vadd.f32 %v2967, %v3005
          %s3009 = sld [smem:[#allocation5 + $0x503]]
          %v3010 = vstv %s3009
          %v3011 = vmul.f32 %v3010, %v2991
          %v3012 = vmul.f32 %v3010, %v2990
          %v3013 = vmul.f32 %v3010, %v2992
          %v3014 = vadd.f32 %v2973, %v3011
          %v3015 = vadd.f32 %v2974, %v3012
          %v3016 = vadd.f32 %v2975, %v3013
          %s3017 = sld [smem:[#allocation5 + $0x703]]
          %v3018 = vstv %s3017
          %v3019 = vmul.f32 %v3018, %v2991
          %v3020 = vmul.f32 %v3018, %v2990
          %v3021 = vmul.f32 %v3018, %v2992
          %v3022 = vadd.f32 %v2981, %v3019
          %v3023 = vadd.f32 %v2982, %v3020
          %v3024 = vadd.f32 %v2983, %v3021
          %3025 = vrot.lane.b32.xlu0 %v2867, 109
          %v3026 = vpop.permute.xlu0 %3025
          %3027 = vrot.lane.b32.xlu0 %v2868, 109
          %v3028 = vpop.permute.xlu0 %3027
          %3029 = vrot.lane.b32.xlu0 %v2869, 109
          %v3030 = vpop.permute.xlu0 %3029
          %v3031 = vsel %vm424, %v3028, %v3030
          %v3032 = vsel %vm424, %v3026, %v3028
          %v3033 = vsel %vm424, %v3030, %v3026
          %s3034 = sld [smem:[#allocation5 + $0x104]]
          %v3035 = vstv %s3034
          %v3036 = vmul.f32 %v3035, %v3032
          %v3037 = vmul.f32 %v3035, %v3031
          %v3038 = vmul.f32 %v3035, %v3033
          %v3039 = vadd.f32 %v2998, %v3036
          %v3040 = vadd.f32 %v2999, %v3037
          %v3041 = vadd.f32 %v3000, %v3038
          %s3042 = sld [smem:[#allocation5 + $0x304]]
          %v3043 = vstv %s3042
          %v3044 = vmul.f32 %v3043, %v3032
          %v3045 = vmul.f32 %v3043, %v3031
          %v3046 = vmul.f32 %v3043, %v3033
          %v3047 = vadd.f32 %v3006, %v3044
          %v3048 = vadd.f32 %v3007, %v3045
          %v3049 = vadd.f32 %v3008, %v3046
          %s3050 = sld [smem:[#allocation5 + $0x504]]
          %v3051 = vstv %s3050
          %v3052 = vmul.f32 %v3051, %v3032
          %v3053 = vmul.f32 %v3051, %v3031
          %v3054 = vmul.f32 %v3051, %v3033
          %v3055 = vadd.f32 %v3014, %v3052
          %v3056 = vadd.f32 %v3015, %v3053
          %v3057 = vadd.f32 %v3016, %v3054
          %s3058 = sld [smem:[#allocation5 + $0x704]]
          %v3059 = vstv %s3058
          %v3060 = vmul.f32 %v3059, %v3032
          %v3061 = vmul.f32 %v3059, %v3031
          %v3062 = vmul.f32 %v3059, %v3033
          %v3063 = vadd.f32 %v3022, %v3060
          %v3064 = vadd.f32 %v3023, %v3061
          %v3065 = vadd.f32 %v3024, %v3062
          %3066 = vrot.lane.b32.xlu0 %v2867, 108
          %v3067 = vpop.permute.xlu0 %3066
          %3068 = vrot.lane.b32.xlu0 %v2868, 108
          %v3069 = vpop.permute.xlu0 %3068
          %3070 = vrot.lane.b32.xlu0 %v2869, 108
          %v3071 = vpop.permute.xlu0 %3070
          %v3072 = vsel %vm466, %v3069, %v3071
          %v3073 = vsel %vm466, %v3067, %v3069
          %v3074 = vsel %vm466, %v3071, %v3067
          %s3075 = sld [smem:[#allocation5 + $0x105]]
          %v3076 = vstv %s3075
          %v3077 = vmul.f32 %v3076, %v3073
          %v3078 = vmul.f32 %v3076, %v3072
          %v3079 = vmul.f32 %v3076, %v3074
          %v3080 = vadd.f32 %v3039, %v3077
          %v3081 = vadd.f32 %v3040, %v3078
          %v3082 = vadd.f32 %v3041, %v3079
          %s3083 = sld [smem:[#allocation5 + $0x305]]
          %v3084 = vstv %s3083
          %v3085 = vmul.f32 %v3084, %v3073
          %v3086 = vmul.f32 %v3084, %v3072
          %v3087 = vmul.f32 %v3084, %v3074
          %v3088 = vadd.f32 %v3047, %v3085
          %v3089 = vadd.f32 %v3048, %v3086
          %v3090 = vadd.f32 %v3049, %v3087
          %s3091 = sld [smem:[#allocation5 + $0x505]]
          %v3092 = vstv %s3091
          %v3093 = vmul.f32 %v3092, %v3073
          %v3094 = vmul.f32 %v3092, %v3072
          %v3095 = vmul.f32 %v3092, %v3074
          %v3096 = vadd.f32 %v3055, %v3093
          %v3097 = vadd.f32 %v3056, %v3094
          %v3098 = vadd.f32 %v3057, %v3095
          %s3099 = sld [smem:[#allocation5 + $0x705]]
          %v3100 = vstv %s3099
          %v3101 = vmul.f32 %v3100, %v3073
          %v3102 = vmul.f32 %v3100, %v3072
          %v3103 = vmul.f32 %v3100, %v3074
          %v3104 = vadd.f32 %v3063, %v3101
          %v3105 = vadd.f32 %v3064, %v3102
          %v3106 = vadd.f32 %v3065, %v3103
          %3107 = vrot.lane.b32.xlu0 %v2867, 92
          %v3108 = vpop.permute.xlu0 %3107
          %3109 = vrot.lane.b32.xlu0 %v2868, 92
          %v3110 = vpop.permute.xlu0 %3109
          %3111 = vrot.lane.b32.xlu0 %v2869, 92
          %v3112 = vpop.permute.xlu0 %3111
          %v3113 = vsel %vm508, %v3110, %v3112
          %v3114 = vsel %vm508, %v3108, %v3110
          %v3115 = vsel %vm508, %v3112, %v3108
          %s3116 = sld [smem:[#allocation5 + $0x106]]
          %v3117 = vstv %s3116
          %v3118 = vmul.f32 %v3117, %v3114
          %v3119 = vmul.f32 %v3117, %v3113
          %v3120 = vmul.f32 %v3117, %v3115
          %v3121 = vadd.f32 %v3080, %v3118
          %v3122 = vadd.f32 %v3081, %v3119
          %v3123 = vadd.f32 %v3082, %v3120
          %s3124 = sld [smem:[#allocation5 + $0x306]]
          %v3125 = vstv %s3124
          %v3126 = vmul.f32 %v3125, %v3114
          %v3127 = vmul.f32 %v3125, %v3113
          %v3128 = vmul.f32 %v3125, %v3115
          %v3129 = vadd.f32 %v3088, %v3126
          %v3130 = vadd.f32 %v3089, %v3127
          %v3131 = vadd.f32 %v3090, %v3128
          %s3132 = sld [smem:[#allocation5 + $0x506]]
          %v3133 = vstv %s3132
          %v3134 = vmul.f32 %v3133, %v3114
          %v3135 = vmul.f32 %v3133, %v3113
          %v3136 = vmul.f32 %v3133, %v3115
          %v3137 = vadd.f32 %v3096, %v3134
          %v3138 = vadd.f32 %v3097, %v3135
          %v3139 = vadd.f32 %v3098, %v3136
          %s3140 = sld [smem:[#allocation5 + $0x706]]
          %v3141 = vstv %s3140
          %v3142 = vmul.f32 %v3141, %v3114
          %v3143 = vmul.f32 %v3141, %v3113
          %v3144 = vmul.f32 %v3141, %v3115
          %v3145 = vadd.f32 %v3104, %v3142
          %v3146 = vadd.f32 %v3105, %v3143
          %v3147 = vadd.f32 %v3106, %v3144
          %3148 = vrot.lane.b32.xlu0 %v2867, 91
          %v3149 = vpop.permute.xlu0 %3148
          %3150 = vrot.lane.b32.xlu0 %v2868, 91
          %v3151 = vpop.permute.xlu0 %3150
          %3152 = vrot.lane.b32.xlu0 %v2869, 91
          %v3153 = vpop.permute.xlu0 %3152
          %v3154 = vsel %vm550, %v3151, %v3153
          %v3155 = vsel %vm550, %v3149, %v3151
          %v3156 = vsel %vm550, %v3153, %v3149
          %s3157 = sld [smem:[#allocation5 + $0x107]]
          %v3158 = vstv %s3157
          %v3159 = vmul.f32 %v3158, %v3155
          %v3160 = vmul.f32 %v3158, %v3154
          %v3161 = vmul.f32 %v3158, %v3156
          %v3162 = vadd.f32 %v3121, %v3159
          %v3163 = vadd.f32 %v3122, %v3160
          %v3164 = vadd.f32 %v3123, %v3161
          %s3165 = sld [smem:[#allocation5 + $0x307]]
          %v3166 = vstv %s3165
          %v3167 = vmul.f32 %v3166, %v3155
          %v3168 = vmul.f32 %v3166, %v3154
          %v3169 = vmul.f32 %v3166, %v3156
          %v3170 = vadd.f32 %v3129, %v3167
          %v3171 = vadd.f32 %v3130, %v3168
          %v3172 = vadd.f32 %v3131, %v3169
          %s3173 = sld [smem:[#allocation5 + $0x507]]
          %v3174 = vstv %s3173
          %v3175 = vmul.f32 %v3174, %v3155
          %v3176 = vmul.f32 %v3174, %v3154
          %v3177 = vmul.f32 %v3174, %v3156
          %v3178 = vadd.f32 %v3137, %v3175
          %v3179 = vadd.f32 %v3138, %v3176
          %v3180 = vadd.f32 %v3139, %v3177
          %s3181 = sld [smem:[#allocation5 + $0x707]]
          %v3182 = vstv %s3181
          %v3183 = vmul.f32 %v3182, %v3155
          %v3184 = vmul.f32 %v3182, %v3154
          %v3185 = vmul.f32 %v3182, %v3156
          %v3186 = vadd.f32 %v3145, %v3183
          %v3187 = vadd.f32 %v3146, %v3184
          %v3188 = vadd.f32 %v3147, %v3185
          %3189 = vrot.lane.b32.xlu0 %v2867, 90
          %v3190 = vpop.permute.xlu0 %3189
          %3191 = vrot.lane.b32.xlu0 %v2868, 90
          %v3192 = vpop.permute.xlu0 %3191
          %3193 = vrot.lane.b32.xlu0 %v2869, 90
          %v3194 = vpop.permute.xlu0 %3193
          %v3195 = vsel %vm592, %v3192, %v3194
          %v3196 = vsel %vm592, %v3190, %v3192
          %v3197 = vsel %vm592, %v3194, %v3190
          %s3198 = sld [smem:[#allocation5 + $0x108]]
          %v3199 = vstv %s3198
          %v3200 = vmul.f32 %v3199, %v3196
          %v3201 = vmul.f32 %v3199, %v3195
          %v3202 = vmul.f32 %v3199, %v3197
          %v3203 = vadd.f32 %v3162, %v3200
          %v3204 = vadd.f32 %v3163, %v3201
          %v3205 = vadd.f32 %v3164, %v3202
          %s3206 = sld [smem:[#allocation5 + $0x308]]
          %v3207 = vstv %s3206
          %v3208 = vmul.f32 %v3207, %v3196
          %v3209 = vmul.f32 %v3207, %v3195
          %v3210 = vmul.f32 %v3207, %v3197
          %v3211 = vadd.f32 %v3170, %v3208
          %v3212 = vadd.f32 %v3171, %v3209
          %v3213 = vadd.f32 %v3172, %v3210
          %s3214 = sld [smem:[#allocation5 + $0x508]]
          %v3215 = vstv %s3214
          %v3216 = vmul.f32 %v3215, %v3196
          %v3217 = vmul.f32 %v3215, %v3195
          %v3218 = vmul.f32 %v3215, %v3197
          %v3219 = vadd.f32 %v3178, %v3216
          %v3220 = vadd.f32 %v3179, %v3217
          %v3221 = vadd.f32 %v3180, %v3218
          %s3222 = sld [smem:[#allocation5 + $0x708]]
          %v3223 = vstv %s3222
          %v3224 = vmul.f32 %v3223, %v3196
          %v3225 = vmul.f32 %v3223, %v3195
          %v3226 = vmul.f32 %v3223, %v3197
          %v3227 = vadd.f32 %v3186, %v3224
          %v3228 = vadd.f32 %v3187, %v3225
          %v3229 = vadd.f32 %v3188, %v3226
          %v3230 = vld [vmem:[%s2866] sm:$0xfe]
          %v3231 = vld [vmem:[%s2866 + $0x8] sm:$0xfe]
          %v3232 = vld [vmem:[%s2866 + $0x10] sm:$0xfe]
          %v3233 = vld [vmem:[%s2866 + $0x18] sm:$0x1]
          %v3234 = vld [vmem:[%s2866 + $0x20] sm:$0x1]
          %v3235 = vld [vmem:[%s2866 + $0x28] sm:$0x1]
          %s3236 = sld [smem:[#allocation5 + $0x109]]
          %v3237 = vstv %s3236
          %v3238 = vmul.f32 %v3237, %v3230
          %v3239 = vmul.f32 %v3237, %v3231
          %v3240 = vmul.f32 %v3237, %v3232
          %v3241 = vmul.f32 %v3237, %v3233
          %v3242 = vmul.f32 %v3237, %v3234
          %v3243 = vmul.f32 %v3237, %v3235
          %v3250 = vrot.slane %v3238, 1
          %v3251 = vrot.slane %v3241, 1
          %v3252 = vsel %vm648, %v3250, %v3251
          %v3253 = vrot.slane %v3239, 1
          %v3254 = vrot.slane %v3242, 1
          %v3255 = vsel %vm648, %v3253, %v3254
          %v3256 = vrot.slane %v3240, 1
          %v3257 = vrot.slane %v3243, 1
          %v3258 = vsel %vm648, %v3256, %v3257
          %v3262 = vadd.f32 %v3203, %v3252
          %v3263 = vadd.f32 %v3204, %v3255
          %v3264 = vadd.f32 %v3205, %v3258
          %s3265 = sld [smem:[#allocation5 + $0x309]]
          %v3266 = vstv %s3265
          %v3267 = vmul.f32 %v3266, %v3230
          %v3268 = vmul.f32 %v3266, %v3231
          %v3269 = vmul.f32 %v3266, %v3232
          %v3270 = vmul.f32 %v3266, %v3233
          %v3271 = vmul.f32 %v3266, %v3234
          %v3272 = vmul.f32 %v3266, %v3235
          %v3279 = vrot.slane %v3267, 1
          %v3280 = vrot.slane %v3270, 1
          %v3281 = vsel %vm648, %v3279, %v3280
          %v3282 = vrot.slane %v3268, 1
          %v3283 = vrot.slane %v3271, 1
          %v3284 = vsel %vm648, %v3282, %v3283
          %v3285 = vrot.slane %v3269, 1
          %v3286 = vrot.slane %v3272, 1
          %v3287 = vsel %vm648, %v3285, %v3286
          %v3291 = vadd.f32 %v3211, %v3281
          %v3292 = vadd.f32 %v3212, %v3284
          %v3293 = vadd.f32 %v3213, %v3287
          %s3294 = sld [smem:[#allocation5 + $0x509]]
          %v3295 = vstv %s3294
          %v3296 = vmul.f32 %v3295, %v3230
          %v3297 = vmul.f32 %v3295, %v3231
          %v3298 = vmul.f32 %v3295, %v3232
          %v3299 = vmul.f32 %v3295, %v3233
          %v3300 = vmul.f32 %v3295, %v3234
          %v3301 = vmul.f32 %v3295, %v3235
          %v3308 = vrot.slane %v3296, 1
          %v3309 = vrot.slane %v3299, 1
          %v3310 = vsel %vm648, %v3308, %v3309
          %v3311 = vrot.slane %v3297, 1
          %v3312 = vrot.slane %v3300, 1
          %v3313 = vsel %vm648, %v3311, %v3312
          %v3314 = vrot.slane %v3298, 1
          %v3315 = vrot.slane %v3301, 1
          %v3316 = vsel %vm648, %v3314, %v3315
          %v3320 = vadd.f32 %v3219, %v3310
          %v3321 = vadd.f32 %v3220, %v3313
          %v3322 = vadd.f32 %v3221, %v3316
          %s3323 = sld [smem:[#allocation5 + $0x709]]
          %v3324 = vstv %s3323
          %v3325 = vmul.f32 %v3324, %v3230
          %v3326 = vmul.f32 %v3324, %v3231
          %v3327 = vmul.f32 %v3324, %v3232
          %v3328 = vmul.f32 %v3324, %v3233
          %v3329 = vmul.f32 %v3324, %v3234
          %v3330 = vmul.f32 %v3324, %v3235
          %v3337 = vrot.slane %v3325, 1
          %v3338 = vrot.slane %v3328, 1
          %v3339 = vsel %vm648, %v3337, %v3338
          %v3340 = vrot.slane %v3326, 1
          %v3341 = vrot.slane %v3329, 1
          %v3342 = vsel %vm648, %v3340, %v3341
          %v3343 = vrot.slane %v3327, 1
          %v3344 = vrot.slane %v3330, 1
          %v3345 = vsel %vm648, %v3343, %v3344
          %v3349 = vadd.f32 %v3227, %v3339
          %v3350 = vadd.f32 %v3228, %v3342
          %v3351 = vadd.f32 %v3229, %v3345
          %v3358 = vrot.slane %v3230, 1
          %v3359 = vrot.slane %v3233, 1
          %v3360 = vsel %vm648, %v3358, %v3359
          %v3361 = vrot.slane %v3231, 1
          %v3362 = vrot.slane %v3234, 1
          %v3363 = vsel %vm648, %v3361, %v3362
          %v3364 = vrot.slane %v3232, 1
          %v3365 = vrot.slane %v3235, 1
          %v3366 = vsel %vm648, %v3364, %v3365
          %3370 = vrot.lane.b32.xlu0 %v3360, 127
          %v3371 = vpop.permute.xlu0 %3370
          %3372 = vrot.lane.b32.xlu0 %v3363, 127
          %v3373 = vpop.permute.xlu0 %3372
          %3374 = vrot.lane.b32.xlu0 %v3366, 127
          %v3375 = vpop.permute.xlu0 %3374
          %v3376 = vsel %vm298, %v3373, %v3375
          %v3377 = vsel %vm298, %v3371, %v3373
          %v3378 = vsel %vm298, %v3375, %v3371
          %s3379 = sld [smem:[#allocation5 + $0x10a]]
          %v3380 = vstv %s3379
          %v3381 = vmul.f32 %v3380, %v3377
          %v3382 = vmul.f32 %v3380, %v3376
          %v3383 = vmul.f32 %v3380, %v3378
          %v3384 = vadd.f32 %v3262, %v3381
          %v3385 = vadd.f32 %v3263, %v3382
          %v3386 = vadd.f32 %v3264, %v3383
          %s3387 = sld [smem:[#allocation5 + $0x30a]]
          %v3388 = vstv %s3387
          %v3389 = vmul.f32 %v3388, %v3377
          %v3390 = vmul.f32 %v3388, %v3376
          %v3391 = vmul.f32 %v3388, %v3378
          %v3392 = vadd.f32 %v3291, %v3389
          %v3393 = vadd.f32 %v3292, %v3390
          %v3394 = vadd.f32 %v3293, %v3391
          %s3395 = sld [smem:[#allocation5 + $0x50a]]
          %v3396 = vstv %s3395
          %v3397 = vmul.f32 %v3396, %v3377
          %v3398 = vmul.f32 %v3396, %v3376
          %v3399 = vmul.f32 %v3396, %v3378
          %v3400 = vadd.f32 %v3320, %v3397
          %v3401 = vadd.f32 %v3321, %v3398
          %v3402 = vadd.f32 %v3322, %v3399
          %s3403 = sld [smem:[#allocation5 + $0x70a]]
          %v3404 = vstv %s3403
          %v3405 = vmul.f32 %v3404, %v3377
          %v3406 = vmul.f32 %v3404, %v3376
          %v3407 = vmul.f32 %v3404, %v3378
          %v3408 = vadd.f32 %v3349, %v3405
          %v3409 = vadd.f32 %v3350, %v3406
          %v3410 = vadd.f32 %v3351, %v3407
          %3411 = vrot.lane.b32.xlu0 %v3360, 126
          %v3412 = vpop.permute.xlu0 %3411
          %3413 = vrot.lane.b32.xlu0 %v3363, 126
          %v3414 = vpop.permute.xlu0 %3413
          %3415 = vrot.lane.b32.xlu0 %v3366, 126
          %v3416 = vpop.permute.xlu0 %3415
          %v3417 = vsel %vm340, %v3414, %v3416
          %v3418 = vsel %vm340, %v3412, %v3414
          %v3419 = vsel %vm340, %v3416, %v3412
          %s3420 = sld [smem:[#allocation5 + $0x10b]]
          %v3421 = vstv %s3420
          %v3422 = vmul.f32 %v3421, %v3418
          %v3423 = vmul.f32 %v3421, %v3417
          %v3424 = vmul.f32 %v3421, %v3419
          %v3425 = vadd.f32 %v3384, %v3422
          %v3426 = vadd.f32 %v3385, %v3423
          %v3427 = vadd.f32 %v3386, %v3424
          %s3428 = sld [smem:[#allocation5 + $0x30b]]
          %v3429 = vstv %s3428
          %v3430 = vmul.f32 %v3429, %v3418
          %v3431 = vmul.f32 %v3429, %v3417
          %v3432 = vmul.f32 %v3429, %v3419
          %v3433 = vadd.f32 %v3392, %v3430
          %v3434 = vadd.f32 %v3393, %v3431
          %v3435 = vadd.f32 %v3394, %v3432
          %s3436 = sld [smem:[#allocation5 + $0x50b]]
          %v3437 = vstv %s3436
          %v3438 = vmul.f32 %v3437, %v3418
          %v3439 = vmul.f32 %v3437, %v3417
          %v3440 = vmul.f32 %v3437, %v3419
          %v3441 = vadd.f32 %v3400, %v3438
          %v3442 = vadd.f32 %v3401, %v3439
          %v3443 = vadd.f32 %v3402, %v3440
          %s3444 = sld [smem:[#allocation5 + $0x70b]]
          %v3445 = vstv %s3444
          %v3446 = vmul.f32 %v3445, %v3418
          %v3447 = vmul.f32 %v3445, %v3417
          %v3448 = vmul.f32 %v3445, %v3419
          %v3449 = vadd.f32 %v3408, %v3446
          %v3450 = vadd.f32 %v3409, %v3447
          %v3451 = vadd.f32 %v3410, %v3448
          %3452 = vrot.lane.b32.xlu0 %v3360, 110
          %v3453 = vpop.permute.xlu0 %3452
          %3454 = vrot.lane.b32.xlu0 %v3363, 110
          %v3455 = vpop.permute.xlu0 %3454
          %3456 = vrot.lane.b32.xlu0 %v3366, 110
          %v3457 = vpop.permute.xlu0 %3456
          %v3458 = vsel %vm382, %v3455, %v3457
          %v3459 = vsel %vm382, %v3453, %v3455
          %v3460 = vsel %vm382, %v3457, %v3453
          %s3461 = sld [smem:[#allocation5 + $0x10c]]
          %v3462 = vstv %s3461
          %v3463 = vmul.f32 %v3462, %v3459
          %v3464 = vmul.f32 %v3462, %v3458
          %v3465 = vmul.f32 %v3462, %v3460
          %v3466 = vadd.f32 %v3425, %v3463
          %v3467 = vadd.f32 %v3426, %v3464
          %v3468 = vadd.f32 %v3427, %v3465
          %s3469 = sld [smem:[#allocation5 + $0x30c]]
          %v3470 = vstv %s3469
          %v3471 = vmul.f32 %v3470, %v3459
          %v3472 = vmul.f32 %v3470, %v3458
          %v3473 = vmul.f32 %v3470, %v3460
          %v3474 = vadd.f32 %v3433, %v3471
          %v3475 = vadd.f32 %v3434, %v3472
          %v3476 = vadd.f32 %v3435, %v3473
          %s3477 = sld [smem:[#allocation5 + $0x50c]]
          %v3478 = vstv %s3477
          %v3479 = vmul.f32 %v3478, %v3459
          %v3480 = vmul.f32 %v3478, %v3458
          %v3481 = vmul.f32 %v3478, %v3460
          %v3482 = vadd.f32 %v3441, %v3479
          %v3483 = vadd.f32 %v3442, %v3480
          %v3484 = vadd.f32 %v3443, %v3481
          %s3485 = sld [smem:[#allocation5 + $0x70c]]
          %v3486 = vstv %s3485
          %v3487 = vmul.f32 %v3486, %v3459
          %v3488 = vmul.f32 %v3486, %v3458
          %v3489 = vmul.f32 %v3486, %v3460
          %v3490 = vadd.f32 %v3449, %v3487
          %v3491 = vadd.f32 %v3450, %v3488
          %v3492 = vadd.f32 %v3451, %v3489
          %3493 = vrot.lane.b32.xlu0 %v3360, 109
          %v3494 = vpop.permute.xlu0 %3493
          %3495 = vrot.lane.b32.xlu0 %v3363, 109
          %v3496 = vpop.permute.xlu0 %3495
          %3497 = vrot.lane.b32.xlu0 %v3366, 109
          %v3498 = vpop.permute.xlu0 %3497
          %v3499 = vsel %vm424, %v3496, %v3498
          %v3500 = vsel %vm424, %v3494, %v3496
          %v3501 = vsel %vm424, %v3498, %v3494
          %s3502 = sld [smem:[#allocation5 + $0x10d]]
          %v3503 = vstv %s3502
          %v3504 = vmul.f32 %v3503, %v3500
          %v3505 = vmul.f32 %v3503, %v3499
          %v3506 = vmul.f32 %v3503, %v3501
          %v3507 = vadd.f32 %v3466, %v3504
          %v3508 = vadd.f32 %v3467, %v3505
          %v3509 = vadd.f32 %v3468, %v3506
          %s3510 = sld [smem:[#allocation5 + $0x30d]]
          %v3511 = vstv %s3510
          %v3512 = vmul.f32 %v3511, %v3500
          %v3513 = vmul.f32 %v3511, %v3499
          %v3514 = vmul.f32 %v3511, %v3501
          %v3515 = vadd.f32 %v3474, %v3512
          %v3516 = vadd.f32 %v3475, %v3513
          %v3517 = vadd.f32 %v3476, %v3514
          %s3518 = sld [smem:[#allocation5 + $0x50d]]
          %v3519 = vstv %s3518
          %v3520 = vmul.f32 %v3519, %v3500
          %v3521 = vmul.f32 %v3519, %v3499
          %v3522 = vmul.f32 %v3519, %v3501
          %v3523 = vadd.f32 %v3482, %v3520
          %v3524 = vadd.f32 %v3483, %v3521
          %v3525 = vadd.f32 %v3484, %v3522
          %s3526 = sld [smem:[#allocation5 + $0x70d]]
          %v3527 = vstv %s3526
          %v3528 = vmul.f32 %v3527, %v3500
          %v3529 = vmul.f32 %v3527, %v3499
          %v3530 = vmul.f32 %v3527, %v3501
          %v3531 = vadd.f32 %v3490, %v3528
          %v3532 = vadd.f32 %v3491, %v3529
          %v3533 = vadd.f32 %v3492, %v3530
          %3534 = vrot.lane.b32.xlu0 %v3360, 108
          %v3535 = vpop.permute.xlu0 %3534
          %3536 = vrot.lane.b32.xlu0 %v3363, 108
          %v3537 = vpop.permute.xlu0 %3536
          %3538 = vrot.lane.b32.xlu0 %v3366, 108
          %v3539 = vpop.permute.xlu0 %3538
          %v3540 = vsel %vm466, %v3537, %v3539
          %v3541 = vsel %vm466, %v3535, %v3537
          %v3542 = vsel %vm466, %v3539, %v3535
          %s3543 = sld [smem:[#allocation5 + $0x10e]]
          %v3544 = vstv %s3543
          %v3545 = vmul.f32 %v3544, %v3541
          %v3546 = vmul.f32 %v3544, %v3540
          %v3547 = vmul.f32 %v3544, %v3542
          %v3548 = vadd.f32 %v3507, %v3545
          %v3549 = vadd.f32 %v3508, %v3546
          %v3550 = vadd.f32 %v3509, %v3547
          %s3551 = sld [smem:[#allocation5 + $0x30e]]
          %v3552 = vstv %s3551
          %v3553 = vmul.f32 %v3552, %v3541
          %v3554 = vmul.f32 %v3552, %v3540
          %v3555 = vmul.f32 %v3552, %v3542
          %v3556 = vadd.f32 %v3515, %v3553
          %v3557 = vadd.f32 %v3516, %v3554
          %v3558 = vadd.f32 %v3517, %v3555
          %s3559 = sld [smem:[#allocation5 + $0x50e]]
          %v3560 = vstv %s3559
          %v3561 = vmul.f32 %v3560, %v3541
          %v3562 = vmul.f32 %v3560, %v3540
          %v3563 = vmul.f32 %v3560, %v3542
          %v3564 = vadd.f32 %v3523, %v3561
          %v3565 = vadd.f32 %v3524, %v3562
          %v3566 = vadd.f32 %v3525, %v3563
          %s3567 = sld [smem:[#allocation5 + $0x70e]]
          %v3568 = vstv %s3567
          %v3569 = vmul.f32 %v3568, %v3541
          %v3570 = vmul.f32 %v3568, %v3540
          %v3571 = vmul.f32 %v3568, %v3542
          %v3572 = vadd.f32 %v3531, %v3569
          %v3573 = vadd.f32 %v3532, %v3570
          %v3574 = vadd.f32 %v3533, %v3571
          %3575 = vrot.lane.b32.xlu0 %v3360, 92
          %v3576 = vpop.permute.xlu0 %3575
          %3577 = vrot.lane.b32.xlu0 %v3363, 92
          %v3578 = vpop.permute.xlu0 %3577
          %3579 = vrot.lane.b32.xlu0 %v3366, 92
          %v3580 = vpop.permute.xlu0 %3579
          %v3581 = vsel %vm508, %v3578, %v3580
          %v3582 = vsel %vm508, %v3576, %v3578
          %v3583 = vsel %vm508, %v3580, %v3576
          %s3584 = sld [smem:[#allocation5 + $0x10f]]
          %v3585 = vstv %s3584
          %v3586 = vmul.f32 %v3585, %v3582
          %v3587 = vmul.f32 %v3585, %v3581
          %v3588 = vmul.f32 %v3585, %v3583
          %v3589 = vadd.f32 %v3548, %v3586
          %v3590 = vadd.f32 %v3549, %v3587
          %v3591 = vadd.f32 %v3550, %v3588
          %s3592 = sld [smem:[#allocation5 + $0x30f]]
          %v3593 = vstv %s3592
          %v3594 = vmul.f32 %v3593, %v3582
          %v3595 = vmul.f32 %v3593, %v3581
          %v3596 = vmul.f32 %v3593, %v3583
          %v3597 = vadd.f32 %v3556, %v3594
          %v3598 = vadd.f32 %v3557, %v3595
          %v3599 = vadd.f32 %v3558, %v3596
          %s3600 = sld [smem:[#allocation5 + $0x50f]]
          %v3601 = vstv %s3600
          %v3602 = vmul.f32 %v3601, %v3582
          %v3603 = vmul.f32 %v3601, %v3581
          %v3604 = vmul.f32 %v3601, %v3583
          %v3605 = vadd.f32 %v3564, %v3602
          %v3606 = vadd.f32 %v3565, %v3603
          %v3607 = vadd.f32 %v3566, %v3604
          %s3608 = sld [smem:[#allocation5 + $0x70f]]
          %v3609 = vstv %s3608
          %v3610 = vmul.f32 %v3609, %v3582
          %v3611 = vmul.f32 %v3609, %v3581
          %v3612 = vmul.f32 %v3609, %v3583
          %v3613 = vadd.f32 %v3572, %v3610
          %v3614 = vadd.f32 %v3573, %v3611
          %v3615 = vadd.f32 %v3574, %v3612
          %3616 = vrot.lane.b32.xlu0 %v3360, 91
          %v3617 = vpop.permute.xlu0 %3616
          %3618 = vrot.lane.b32.xlu0 %v3363, 91
          %v3619 = vpop.permute.xlu0 %3618
          %3620 = vrot.lane.b32.xlu0 %v3366, 91
          %v3621 = vpop.permute.xlu0 %3620
          %v3622 = vsel %vm550, %v3619, %v3621
          %v3623 = vsel %vm550, %v3617, %v3619
          %v3624 = vsel %vm550, %v3621, %v3617
          %s3625 = sld [smem:[#allocation5 + $0x110]]
          %v3626 = vstv %s3625
          %v3627 = vmul.f32 %v3626, %v3623
          %v3628 = vmul.f32 %v3626, %v3622
          %v3629 = vmul.f32 %v3626, %v3624
          %v3630 = vadd.f32 %v3589, %v3627
          %v3631 = vadd.f32 %v3590, %v3628
          %v3632 = vadd.f32 %v3591, %v3629
          %s3633 = sld [smem:[#allocation5 + $0x310]]
          %v3634 = vstv %s3633
          %v3635 = vmul.f32 %v3634, %v3623
          %v3636 = vmul.f32 %v3634, %v3622
          %v3637 = vmul.f32 %v3634, %v3624
          %v3638 = vadd.f32 %v3597, %v3635
          %v3639 = vadd.f32 %v3598, %v3636
          %v3640 = vadd.f32 %v3599, %v3637
          %s3641 = sld [smem:[#allocation5 + $0x510]]
          %v3642 = vstv %s3641
          %v3643 = vmul.f32 %v3642, %v3623
          %v3644 = vmul.f32 %v3642, %v3622
          %v3645 = vmul.f32 %v3642, %v3624
          %v3646 = vadd.f32 %v3605, %v3643
          %v3647 = vadd.f32 %v3606, %v3644
          %v3648 = vadd.f32 %v3607, %v3645
          %s3649 = sld [smem:[#allocation5 + $0x710]]
          %v3650 = vstv %s3649
          %v3651 = vmul.f32 %v3650, %v3623
          %v3652 = vmul.f32 %v3650, %v3622
          %v3653 = vmul.f32 %v3650, %v3624
          %v3654 = vadd.f32 %v3613, %v3651
          %v3655 = vadd.f32 %v3614, %v3652
          %v3656 = vadd.f32 %v3615, %v3653
          %3657 = vrot.lane.b32.xlu0 %v3360, 90
          %v3658 = vpop.permute.xlu0 %3657
          %3659 = vrot.lane.b32.xlu0 %v3363, 90
          %v3660 = vpop.permute.xlu0 %3659
          %3661 = vrot.lane.b32.xlu0 %v3366, 90
          %v3662 = vpop.permute.xlu0 %3661
          %v3663 = vsel %vm592, %v3660, %v3662
          %v3664 = vsel %vm592, %v3658, %v3660
          %v3665 = vsel %vm592, %v3662, %v3658
          %s3666 = sld [smem:[#allocation5 + $0x111]]
          %v3667 = vstv %s3666
          %v3668 = vmul.f32 %v3667, %v3664
          %v3669 = vmul.f32 %v3667, %v3663
          %v3670 = vmul.f32 %v3667, %v3665
          %v3671 = vadd.f32 %v3630, %v3668
          %v3672 = vadd.f32 %v3631, %v3669
          %v3673 = vadd.f32 %v3632, %v3670
          %s3674 = sld [smem:[#allocation5 + $0x311]]
          %v3675 = vstv %s3674
          %v3676 = vmul.f32 %v3675, %v3664
          %v3677 = vmul.f32 %v3675, %v3663
          %v3678 = vmul.f32 %v3675, %v3665
          %v3679 = vadd.f32 %v3638, %v3676
          %v3680 = vadd.f32 %v3639, %v3677
          %v3681 = vadd.f32 %v3640, %v3678
          %s3682 = sld [smem:[#allocation5 + $0x511]]
          %v3683 = vstv %s3682
          %v3684 = vmul.f32 %v3683, %v3664
          %v3685 = vmul.f32 %v3683, %v3663
          %v3686 = vmul.f32 %v3683, %v3665
          %v3687 = vadd.f32 %v3646, %v3684
          %v3688 = vadd.f32 %v3647, %v3685
          %v3689 = vadd.f32 %v3648, %v3686
          %s3690 = sld [smem:[#allocation5 + $0x711]]
          %v3691 = vstv %s3690
          %v3692 = vmul.f32 %v3691, %v3664
          %v3693 = vmul.f32 %v3691, %v3663
          %v3694 = vmul.f32 %v3691, %v3665
          %v3695 = vadd.f32 %v3654, %v3692
          %v3696 = vadd.f32 %v3655, %v3693
          %v3697 = vadd.f32 %v3656, %v3694
          %v3698 = vld [vmem:[%s2866] sm:$0xfc]
          %v3699 = vld [vmem:[%s2866 + $0x8] sm:$0xfc]
          %v3700 = vld [vmem:[%s2866 + $0x10] sm:$0xfc]
          %v3701 = vld [vmem:[%s2866 + $0x18] sm:$0x3]
          %v3702 = vld [vmem:[%s2866 + $0x20] sm:$0x3]
          %v3703 = vld [vmem:[%s2866 + $0x28] sm:$0x3]
          %s3704 = sld [smem:[#allocation5 + $0x112]]
          %v3705 = vstv %s3704
          %v3706 = vmul.f32 %v3705, %v3698
          %v3707 = vmul.f32 %v3705, %v3699
          %v3708 = vmul.f32 %v3705, %v3700
          %v3709 = vmul.f32 %v3705, %v3701
          %v3710 = vmul.f32 %v3705, %v3702
          %v3711 = vmul.f32 %v3705, %v3703
          %v3718 = vrot.slane %v3706, 2
          %v3719 = vrot.slane %v3709, 2
          %v3720 = vsel %vm1117, %v3718, %v3719
          %v3721 = vrot.slane %v3707, 2
          %v3722 = vrot.slane %v3710, 2
          %v3723 = vsel %vm1117, %v3721, %v3722
          %v3724 = vrot.slane %v3708, 2
          %v3725 = vrot.slane %v3711, 2
          %v3726 = vsel %vm1117, %v3724, %v3725
          %v3730 = vadd.f32 %v3671, %v3720
          %v3731 = vadd.f32 %v3672, %v3723
          %v3732 = vadd.f32 %v3673, %v3726
          %s3733 = sld [smem:[#allocation5 + $0x312]]
          %v3734 = vstv %s3733
          %v3735 = vmul.f32 %v3734, %v3698
          %v3736 = vmul.f32 %v3734, %v3699
          %v3737 = vmul.f32 %v3734, %v3700
          %v3738 = vmul.f32 %v3734, %v3701
          %v3739 = vmul.f32 %v3734, %v3702
          %v3740 = vmul.f32 %v3734, %v3703
          %v3747 = vrot.slane %v3735, 2
          %v3748 = vrot.slane %v3738, 2
          %v3749 = vsel %vm1117, %v3747, %v3748
          %v3750 = vrot.slane %v3736, 2
          %v3751 = vrot.slane %v3739, 2
          %v3752 = vsel %vm1117, %v3750, %v3751
          %v3753 = vrot.slane %v3737, 2
          %v3754 = vrot.slane %v3740, 2
          %v3755 = vsel %vm1117, %v3753, %v3754
          %v3759 = vadd.f32 %v3679, %v3749
          %v3760 = vadd.f32 %v3680, %v3752
          %v3761 = vadd.f32 %v3681, %v3755
          %s3762 = sld [smem:[#allocation5 + $0x512]]
          %v3763 = vstv %s3762
          %v3764 = vmul.f32 %v3763, %v3698
          %v3765 = vmul.f32 %v3763, %v3699
          %v3766 = vmul.f32 %v3763, %v3700
          %v3767 = vmul.f32 %v3763, %v3701
          %v3768 = vmul.f32 %v3763, %v3702
          %v3769 = vmul.f32 %v3763, %v3703
          %v3776 = vrot.slane %v3764, 2
          %v3777 = vrot.slane %v3767, 2
          %v3778 = vsel %vm1117, %v3776, %v3777
          %v3779 = vrot.slane %v3765, 2
          %v3780 = vrot.slane %v3768, 2
          %v3781 = vsel %vm1117, %v3779, %v3780
          %v3782 = vrot.slane %v3766, 2
          %v3783 = vrot.slane %v3769, 2
          %v3784 = vsel %vm1117, %v3782, %v3783
          %v3788 = vadd.f32 %v3687, %v3778
          %v3789 = vadd.f32 %v3688, %v3781
          %v3790 = vadd.f32 %v3689, %v3784
          %s3791 = sld [smem:[#allocation5 + $0x712]]
          %v3792 = vstv %s3791
          %v3793 = vmul.f32 %v3792, %v3698
          %v3794 = vmul.f32 %v3792, %v3699
          %v3795 = vmul.f32 %v3792, %v3700
          %v3796 = vmul.f32 %v3792, %v3701
          %v3797 = vmul.f32 %v3792, %v3702
          %v3798 = vmul.f32 %v3792, %v3703
          %v3805 = vrot.slane %v3793, 2
          %v3806 = vrot.slane %v3796, 2
          %v3807 = vsel %vm1117, %v3805, %v3806
          %v3808 = vrot.slane %v3794, 2
          %v3809 = vrot.slane %v3797, 2
          %v3810 = vsel %vm1117, %v3808, %v3809
          %v3811 = vrot.slane %v3795, 2
          %v3812 = vrot.slane %v3798, 2
          %v3813 = vsel %vm1117, %v3811, %v3812
          %v3817 = vadd.f32 %v3695, %v3807
          %v3818 = vadd.f32 %v3696, %v3810
          %v3819 = vadd.f32 %v3697, %v3813
          %v3826 = vrot.slane %v3698, 2
          %v3827 = vrot.slane %v3701, 2
          %v3828 = vsel %vm1117, %v3826, %v3827
          %v3829 = vrot.slane %v3699, 2
          %v3830 = vrot.slane %v3702, 2
          %v3831 = vsel %vm1117, %v3829, %v3830
          %v3832 = vrot.slane %v3700, 2
          %v3833 = vrot.slane %v3703, 2
          %v3834 = vsel %vm1117, %v3832, %v3833
          %3838 = vrot.lane.b32.xlu0 %v3828, 127
          %v3839 = vpop.permute.xlu0 %3838
          %3840 = vrot.lane.b32.xlu0 %v3831, 127
          %v3841 = vpop.permute.xlu0 %3840
          %3842 = vrot.lane.b32.xlu0 %v3834, 127
          %v3843 = vpop.permute.xlu0 %3842
          %v3844 = vsel %vm298, %v3841, %v3843
          %v3845 = vsel %vm298, %v3839, %v3841
          %v3846 = vsel %vm298, %v3843, %v3839
          %s3847 = sld [smem:[#allocation5 + $0x113]]
          %v3848 = vstv %s3847
          %v3849 = vmul.f32 %v3848, %v3845
          %v3850 = vmul.f32 %v3848, %v3844
          %v3851 = vmul.f32 %v3848, %v3846
          %v3852 = vadd.f32 %v3730, %v3849
          %v3853 = vadd.f32 %v3731, %v3850
          %v3854 = vadd.f32 %v3732, %v3851
          %s3855 = sld [smem:[#allocation5 + $0x313]]
          %v3856 = vstv %s3855
          %v3857 = vmul.f32 %v3856, %v3845
          %v3858 = vmul.f32 %v3856, %v3844
          %v3859 = vmul.f32 %v3856, %v3846
          %v3860 = vadd.f32 %v3759, %v3857
          %v3861 = vadd.f32 %v3760, %v3858
          %v3862 = vadd.f32 %v3761, %v3859
          %s3863 = sld [smem:[#allocation5 + $0x513]]
          %v3864 = vstv %s3863
          %v3865 = vmul.f32 %v3864, %v3845
          %v3866 = vmul.f32 %v3864, %v3844
          %v3867 = vmul.f32 %v3864, %v3846
          %v3868 = vadd.f32 %v3788, %v3865
          %v3869 = vadd.f32 %v3789, %v3866
          %v3870 = vadd.f32 %v3790, %v3867
          %s3871 = sld [smem:[#allocation5 + $0x713]]
          %v3872 = vstv %s3871
          %v3873 = vmul.f32 %v3872, %v3845
          %v3874 = vmul.f32 %v3872, %v3844
          %v3875 = vmul.f32 %v3872, %v3846
          %v3876 = vadd.f32 %v3817, %v3873
          %v3877 = vadd.f32 %v3818, %v3874
          %v3878 = vadd.f32 %v3819, %v3875
          %3879 = vrot.lane.b32.xlu0 %v3828, 126
          %v3880 = vpop.permute.xlu0 %3879
          %3881 = vrot.lane.b32.xlu0 %v3831, 126
          %v3882 = vpop.permute.xlu0 %3881
          %3883 = vrot.lane.b32.xlu0 %v3834, 126
          %v3884 = vpop.permute.xlu0 %3883
          %v3885 = vsel %vm340, %v3882, %v3884
          %v3886 = vsel %vm340, %v3880, %v3882
          %v3887 = vsel %vm340, %v3884, %v3880
          %s3888 = sld [smem:[#allocation5 + $0x114]]
          %v3889 = vstv %s3888
          %v3890 = vmul.f32 %v3889, %v3886
          %v3891 = vmul.f32 %v3889, %v3885
          %v3892 = vmul.f32 %v3889, %v3887
          %v3893 = vadd.f32 %v3852, %v3890
          %v3894 = vadd.f32 %v3853, %v3891
          %v3895 = vadd.f32 %v3854, %v3892
          %s3896 = sld [smem:[#allocation5 + $0x314]]
          %v3897 = vstv %s3896
          %v3898 = vmul.f32 %v3897, %v3886
          %v3899 = vmul.f32 %v3897, %v3885
          %v3900 = vmul.f32 %v3897, %v3887
          %v3901 = vadd.f32 %v3860, %v3898
          %v3902 = vadd.f32 %v3861, %v3899
          %v3903 = vadd.f32 %v3862, %v3900
          %s3904 = sld [smem:[#allocation5 + $0x514]]
          %v3905 = vstv %s3904
          %v3906 = vmul.f32 %v3905, %v3886
          %v3907 = vmul.f32 %v3905, %v3885
          %v3908 = vmul.f32 %v3905, %v3887
          %v3909 = vadd.f32 %v3868, %v3906
          %v3910 = vadd.f32 %v3869, %v3907
          %v3911 = vadd.f32 %v3870, %v3908
          %s3912 = sld [smem:[#allocation5 + $0x714]]
          %v3913 = vstv %s3912
          %v3914 = vmul.f32 %v3913, %v3886
          %v3915 = vmul.f32 %v3913, %v3885
          %v3916 = vmul.f32 %v3913, %v3887
          %v3917 = vadd.f32 %v3876, %v3914
          %v3918 = vadd.f32 %v3877, %v3915
          %v3919 = vadd.f32 %v3878, %v3916
          %3920 = vrot.lane.b32.xlu0 %v3828, 110
          %v3921 = vpop.permute.xlu0 %3920
          %3922 = vrot.lane.b32.xlu0 %v3831, 110
          %v3923 = vpop.permute.xlu0 %3922
          %3924 = vrot.lane.b32.xlu0 %v3834, 110
          %v3925 = vpop.permute.xlu0 %3924
          %v3926 = vsel %vm382, %v3923, %v3925
          %v3927 = vsel %vm382, %v3921, %v3923
          %v3928 = vsel %vm382, %v3925, %v3921
          %s3929 = sld [smem:[#allocation5 + $0x115]]
          %v3930 = vstv %s3929
          %v3931 = vmul.f32 %v3930, %v3927
          %v3932 = vmul.f32 %v3930, %v3926
          %v3933 = vmul.f32 %v3930, %v3928
          %v3934 = vadd.f32 %v3893, %v3931
          %v3935 = vadd.f32 %v3894, %v3932
          %v3936 = vadd.f32 %v3895, %v3933
          %s3937 = sld [smem:[#allocation5 + $0x315]]
          %v3938 = vstv %s3937
          %v3939 = vmul.f32 %v3938, %v3927
          %v3940 = vmul.f32 %v3938, %v3926
          %v3941 = vmul.f32 %v3938, %v3928
          %v3942 = vadd.f32 %v3901, %v3939
          %v3943 = vadd.f32 %v3902, %v3940
          %v3944 = vadd.f32 %v3903, %v3941
          %s3945 = sld [smem:[#allocation5 + $0x515]]
          %v3946 = vstv %s3945
          %v3947 = vmul.f32 %v3946, %v3927
          %v3948 = vmul.f32 %v3946, %v3926
          %v3949 = vmul.f32 %v3946, %v3928
          %v3950 = vadd.f32 %v3909, %v3947
          %v3951 = vadd.f32 %v3910, %v3948
          %v3952 = vadd.f32 %v3911, %v3949
          %s3953 = sld [smem:[#allocation5 + $0x715]]
          %v3954 = vstv %s3953
          %v3955 = vmul.f32 %v3954, %v3927
          %v3956 = vmul.f32 %v3954, %v3926
          %v3957 = vmul.f32 %v3954, %v3928
          %v3958 = vadd.f32 %v3917, %v3955
          %v3959 = vadd.f32 %v3918, %v3956
          %v3960 = vadd.f32 %v3919, %v3957
          %3961 = vrot.lane.b32.xlu0 %v3828, 109
          %v3962 = vpop.permute.xlu0 %3961
          %3963 = vrot.lane.b32.xlu0 %v3831, 109
          %v3964 = vpop.permute.xlu0 %3963
          %3965 = vrot.lane.b32.xlu0 %v3834, 109
          %v3966 = vpop.permute.xlu0 %3965
          %v3967 = vsel %vm424, %v3964, %v3966
          %v3968 = vsel %vm424, %v3962, %v3964
          %v3969 = vsel %vm424, %v3966, %v3962
          %s3970 = sld [smem:[#allocation5 + $0x116]]
          %v3971 = vstv %s3970
          %v3972 = vmul.f32 %v3971, %v3968
          %v3973 = vmul.f32 %v3971, %v3967
          %v3974 = vmul.f32 %v3971, %v3969
          %v3975 = vadd.f32 %v3934, %v3972
          %v3976 = vadd.f32 %v3935, %v3973
          %v3977 = vadd.f32 %v3936, %v3974
          %s3978 = sld [smem:[#allocation5 + $0x316]]
          %v3979 = vstv %s3978
          %v3980 = vmul.f32 %v3979, %v3968
          %v3981 = vmul.f32 %v3979, %v3967
          %v3982 = vmul.f32 %v3979, %v3969
          %v3983 = vadd.f32 %v3942, %v3980
          %v3984 = vadd.f32 %v3943, %v3981
          %v3985 = vadd.f32 %v3944, %v3982
          %s3986 = sld [smem:[#allocation5 + $0x516]]
          %v3987 = vstv %s3986
          %v3988 = vmul.f32 %v3987, %v3968
          %v3989 = vmul.f32 %v3987, %v3967
          %v3990 = vmul.f32 %v3987, %v3969
          %v3991 = vadd.f32 %v3950, %v3988
          %v3992 = vadd.f32 %v3951, %v3989
          %v3993 = vadd.f32 %v3952, %v3990
          %s3994 = sld [smem:[#allocation5 + $0x716]]
          %v3995 = vstv %s3994
          %v3996 = vmul.f32 %v3995, %v3968
          %v3997 = vmul.f32 %v3995, %v3967
          %v3998 = vmul.f32 %v3995, %v3969
          %v3999 = vadd.f32 %v3958, %v3996
          %v4000 = vadd.f32 %v3959, %v3997
          %v4001 = vadd.f32 %v3960, %v3998
          %4002 = vrot.lane.b32.xlu0 %v3828, 108
          %v4003 = vpop.permute.xlu0 %4002
          %4004 = vrot.lane.b32.xlu0 %v3831, 108
          %v4005 = vpop.permute.xlu0 %4004
          %4006 = vrot.lane.b32.xlu0 %v3834, 108
          %v4007 = vpop.permute.xlu0 %4006
          %v4008 = vsel %vm466, %v4005, %v4007
          %v4009 = vsel %vm466, %v4003, %v4005
          %v4010 = vsel %vm466, %v4007, %v4003
          %s4011 = sld [smem:[#allocation5 + $0x117]]
          %v4012 = vstv %s4011
          %v4013 = vmul.f32 %v4012, %v4009
          %v4014 = vmul.f32 %v4012, %v4008
          %v4015 = vmul.f32 %v4012, %v4010
          %v4016 = vadd.f32 %v3975, %v4013
          %v4017 = vadd.f32 %v3976, %v4014
          %v4018 = vadd.f32 %v3977, %v4015
          %s4019 = sld [smem:[#allocation5 + $0x317]]
          %v4020 = vstv %s4019
          %v4021 = vmul.f32 %v4020, %v4009
          %v4022 = vmul.f32 %v4020, %v4008
          %v4023 = vmul.f32 %v4020, %v4010
          %v4024 = vadd.f32 %v3983, %v4021
          %v4025 = vadd.f32 %v3984, %v4022
          %v4026 = vadd.f32 %v3985, %v4023
          %s4027 = sld [smem:[#allocation5 + $0x517]]
          %v4028 = vstv %s4027
          %v4029 = vmul.f32 %v4028, %v4009
          %v4030 = vmul.f32 %v4028, %v4008
          %v4031 = vmul.f32 %v4028, %v4010
          %v4032 = vadd.f32 %v3991, %v4029
          %v4033 = vadd.f32 %v3992, %v4030
          %v4034 = vadd.f32 %v3993, %v4031
          %s4035 = sld [smem:[#allocation5 + $0x717]]
          %v4036 = vstv %s4035
          %v4037 = vmul.f32 %v4036, %v4009
          %v4038 = vmul.f32 %v4036, %v4008
          %v4039 = vmul.f32 %v4036, %v4010
          %v4040 = vadd.f32 %v3999, %v4037
          %v4041 = vadd.f32 %v4000, %v4038
          %v4042 = vadd.f32 %v4001, %v4039
          %4043 = vrot.lane.b32.xlu0 %v3828, 92
          %v4044 = vpop.permute.xlu0 %4043
          %4045 = vrot.lane.b32.xlu0 %v3831, 92
          %v4046 = vpop.permute.xlu0 %4045
          %4047 = vrot.lane.b32.xlu0 %v3834, 92
          %v4048 = vpop.permute.xlu0 %4047
          %v4049 = vsel %vm508, %v4046, %v4048
          %v4050 = vsel %vm508, %v4044, %v4046
          %v4051 = vsel %vm508, %v4048, %v4044
          %s4052 = sld [smem:[#allocation5 + $0x118]]
          %v4053 = vstv %s4052
          %v4054 = vmul.f32 %v4053, %v4050
          %v4055 = vmul.f32 %v4053, %v4049
          %v4056 = vmul.f32 %v4053, %v4051
          %v4057 = vadd.f32 %v4016, %v4054
          %v4058 = vadd.f32 %v4017, %v4055
          %v4059 = vadd.f32 %v4018, %v4056
          %s4060 = sld [smem:[#allocation5 + $0x318]]
          %v4061 = vstv %s4060
          %v4062 = vmul.f32 %v4061, %v4050
          %v4063 = vmul.f32 %v4061, %v4049
          %v4064 = vmul.f32 %v4061, %v4051
          %v4065 = vadd.f32 %v4024, %v4062
          %v4066 = vadd.f32 %v4025, %v4063
          %v4067 = vadd.f32 %v4026, %v4064
          %s4068 = sld [smem:[#allocation5 + $0x518]]
          %v4069 = vstv %s4068
          %v4070 = vmul.f32 %v4069, %v4050
          %v4071 = vmul.f32 %v4069, %v4049
          %v4072 = vmul.f32 %v4069, %v4051
          %v4073 = vadd.f32 %v4032, %v4070
          %v4074 = vadd.f32 %v4033, %v4071
          %v4075 = vadd.f32 %v4034, %v4072
          %s4076 = sld [smem:[#allocation5 + $0x718]]
          %v4077 = vstv %s4076
          %v4078 = vmul.f32 %v4077, %v4050
          %v4079 = vmul.f32 %v4077, %v4049
          %v4080 = vmul.f32 %v4077, %v4051
          %v4081 = vadd.f32 %v4040, %v4078
          %v4082 = vadd.f32 %v4041, %v4079
          %v4083 = vadd.f32 %v4042, %v4080
          %4084 = vrot.lane.b32.xlu0 %v3828, 91
          %v4085 = vpop.permute.xlu0 %4084
          %4086 = vrot.lane.b32.xlu0 %v3831, 91
          %v4087 = vpop.permute.xlu0 %4086
          %4088 = vrot.lane.b32.xlu0 %v3834, 91
          %v4089 = vpop.permute.xlu0 %4088
          %v4090 = vsel %vm550, %v4087, %v4089
          %v4091 = vsel %vm550, %v4085, %v4087
          %v4092 = vsel %vm550, %v4089, %v4085
          %s4093 = sld [smem:[#allocation5 + $0x119]]
          %v4094 = vstv %s4093
          %v4095 = vmul.f32 %v4094, %v4091
          %v4096 = vmul.f32 %v4094, %v4090
          %v4097 = vmul.f32 %v4094, %v4092
          %v4098 = vadd.f32 %v4057, %v4095
          %v4099 = vadd.f32 %v4058, %v4096
          %v4100 = vadd.f32 %v4059, %v4097
          %s4101 = sld [smem:[#allocation5 + $0x319]]
          %v4102 = vstv %s4101
          %v4103 = vmul.f32 %v4102, %v4091
          %v4104 = vmul.f32 %v4102, %v4090
          %v4105 = vmul.f32 %v4102, %v4092
          %v4106 = vadd.f32 %v4065, %v4103
          %v4107 = vadd.f32 %v4066, %v4104
          %v4108 = vadd.f32 %v4067, %v4105
          %s4109 = sld [smem:[#allocation5 + $0x519]]
          %v4110 = vstv %s4109
          %v4111 = vmul.f32 %v4110, %v4091
          %v4112 = vmul.f32 %v4110, %v4090
          %v4113 = vmul.f32 %v4110, %v4092
          %v4114 = vadd.f32 %v4073, %v4111
          %v4115 = vadd.f32 %v4074, %v4112
          %v4116 = vadd.f32 %v4075, %v4113
          %s4117 = sld [smem:[#allocation5 + $0x719]]
          %v4118 = vstv %s4117
          %v4119 = vmul.f32 %v4118, %v4091
          %v4120 = vmul.f32 %v4118, %v4090
          %v4121 = vmul.f32 %v4118, %v4092
          %v4122 = vadd.f32 %v4081, %v4119
          %v4123 = vadd.f32 %v4082, %v4120
          %v4124 = vadd.f32 %v4083, %v4121
          %4125 = vrot.lane.b32.xlu0 %v3828, 90
          %v4126 = vpop.permute.xlu0 %4125
          %4127 = vrot.lane.b32.xlu0 %v3831, 90
          %v4128 = vpop.permute.xlu0 %4127
          %4129 = vrot.lane.b32.xlu0 %v3834, 90
          %v4130 = vpop.permute.xlu0 %4129
          %v4131 = vsel %vm592, %v4128, %v4130
          %v4132 = vsel %vm592, %v4126, %v4128
          %v4133 = vsel %vm592, %v4130, %v4126
          %s4134 = sld [smem:[#allocation5 + $0x11a]]
          %v4135 = vstv %s4134
          %v4136 = vmul.f32 %v4135, %v4132
          %v4137 = vmul.f32 %v4135, %v4131
          %v4138 = vmul.f32 %v4135, %v4133
          %v4139 = vadd.f32 %v4098, %v4136
          %v4140 = vadd.f32 %v4099, %v4137
          %v4141 = vadd.f32 %v4100, %v4138
          %s4142 = sld [smem:[#allocation5 + $0x31a]]
          %v4143 = vstv %s4142
          %v4144 = vmul.f32 %v4143, %v4132
          %v4145 = vmul.f32 %v4143, %v4131
          %v4146 = vmul.f32 %v4143, %v4133
          %v4147 = vadd.f32 %v4106, %v4144
          %v4148 = vadd.f32 %v4107, %v4145
          %v4149 = vadd.f32 %v4108, %v4146
          %s4150 = sld [smem:[#allocation5 + $0x51a]]
          %v4151 = vstv %s4150
          %v4152 = vmul.f32 %v4151, %v4132
          %v4153 = vmul.f32 %v4151, %v4131
          %v4154 = vmul.f32 %v4151, %v4133
          %v4155 = vadd.f32 %v4114, %v4152
          %v4156 = vadd.f32 %v4115, %v4153
          %v4157 = vadd.f32 %v4116, %v4154
          %s4158 = sld [smem:[#allocation5 + $0x71a]]
          %v4159 = vstv %s4158
          %v4160 = vmul.f32 %v4159, %v4132
          %v4161 = vmul.f32 %v4159, %v4131
          %v4162 = vmul.f32 %v4159, %v4133
          %v4163 = vadd.f32 %v4122, %v4160
          %v4164 = vadd.f32 %v4123, %v4161
          %v4165 = vadd.f32 %v4124, %v4162
          %s4166 = scalar_lea.vmem %s241, 144
          %v4167 = vld [vmem:[%s4166] sm:$0xff]
          %v4168 = vld [vmem:[%s4166 + $0x8] sm:$0xff]
          %v4169 = vld [vmem:[%s4166 + $0x10] sm:$0xff]
          %s4170 = sld [smem:[#allocation5 + $0x180]]
          %v4171 = vstv %s4170
          %v4172 = vmul.f32 %v4171, %v4167
          %v4173 = vmul.f32 %v4171, %v4168
          %v4174 = vmul.f32 %v4171, %v4169
          %v4175 = vadd.f32 %v4139, %v4172
          %v4176 = vadd.f32 %v4140, %v4173
          %v4177 = vadd.f32 %v4141, %v4174
          %s4178 = sld [smem:[#allocation5 + $0x380]]
          %v4179 = vstv %s4178
          %v4180 = vmul.f32 %v4179, %v4167
          %v4181 = vmul.f32 %v4179, %v4168
          %v4182 = vmul.f32 %v4179, %v4169
          %v4183 = vadd.f32 %v4147, %v4180
          %v4184 = vadd.f32 %v4148, %v4181
          %v4185 = vadd.f32 %v4149, %v4182
          %s4186 = sld [smem:[#allocation5 + $0x580]]
          %v4187 = vstv %s4186
          %v4188 = vmul.f32 %v4187, %v4167
          %v4189 = vmul.f32 %v4187, %v4168
          %v4190 = vmul.f32 %v4187, %v4169
          %v4191 = vadd.f32 %v4155, %v4188
          %v4192 = vadd.f32 %v4156, %v4189
          %v4193 = vadd.f32 %v4157, %v4190
          %s4194 = sld [smem:[#allocation5 + $0x780]]
          %v4195 = vstv %s4194
          %v4196 = vmul.f32 %v4195, %v4167
          %v4197 = vmul.f32 %v4195, %v4168
          %v4198 = vmul.f32 %v4195, %v4169
          %v4199 = vadd.f32 %v4163, %v4196
          %v4200 = vadd.f32 %v4164, %v4197
          %v4201 = vadd.f32 %v4165, %v4198
          %4202 = vrot.lane.b32.xlu0 %v4167, 127
          %v4203 = vpop.permute.xlu0 %4202
          %4204 = vrot.lane.b32.xlu0 %v4168, 127
          %v4205 = vpop.permute.xlu0 %4204
          %4206 = vrot.lane.b32.xlu0 %v4169, 127
          %v4207 = vpop.permute.xlu0 %4206
          %v4208 = vsel %vm298, %v4205, %v4207
          %v4209 = vsel %vm298, %v4203, %v4205
          %v4210 = vsel %vm298, %v4207, %v4203
          %s4211 = sld [smem:[#allocation5 + $0x181]]
          %v4212 = vstv %s4211
          %v4213 = vmul.f32 %v4212, %v4209
          %v4214 = vmul.f32 %v4212, %v4208
          %v4215 = vmul.f32 %v4212, %v4210
          %v4216 = vadd.f32 %v4175, %v4213
          %v4217 = vadd.f32 %v4176, %v4214
          %v4218 = vadd.f32 %v4177, %v4215
          %s4219 = sld [smem:[#allocation5 + $0x381]]
          %v4220 = vstv %s4219
          %v4221 = vmul.f32 %v4220, %v4209
          %v4222 = vmul.f32 %v4220, %v4208
          %v4223 = vmul.f32 %v4220, %v4210
          %v4224 = vadd.f32 %v4183, %v4221
          %v4225 = vadd.f32 %v4184, %v4222
          %v4226 = vadd.f32 %v4185, %v4223
          %s4227 = sld [smem:[#allocation5 + $0x581]]
          %v4228 = vstv %s4227
          %v4229 = vmul.f32 %v4228, %v4209
          %v4230 = vmul.f32 %v4228, %v4208
          %v4231 = vmul.f32 %v4228, %v4210
          %v4232 = vadd.f32 %v4191, %v4229
          %v4233 = vadd.f32 %v4192, %v4230
          %v4234 = vadd.f32 %v4193, %v4231
          %s4235 = sld [smem:[#allocation5 + $0x781]]
          %v4236 = vstv %s4235
          %v4237 = vmul.f32 %v4236, %v4209
          %v4238 = vmul.f32 %v4236, %v4208
          %v4239 = vmul.f32 %v4236, %v4210
          %v4240 = vadd.f32 %v4199, %v4237
          %v4241 = vadd.f32 %v4200, %v4238
          %v4242 = vadd.f32 %v4201, %v4239
          %4243 = vrot.lane.b32.xlu0 %v4167, 126
          %v4244 = vpop.permute.xlu0 %4243
          %4245 = vrot.lane.b32.xlu0 %v4168, 126
          %v4246 = vpop.permute.xlu0 %4245
          %4247 = vrot.lane.b32.xlu0 %v4169, 126
          %v4248 = vpop.permute.xlu0 %4247
          %v4249 = vsel %vm340, %v4246, %v4248
          %v4250 = vsel %vm340, %v4244, %v4246
          %v4251 = vsel %vm340, %v4248, %v4244
          %s4252 = sld [smem:[#allocation5 + $0x182]]
          %v4253 = vstv %s4252
          %v4254 = vmul.f32 %v4253, %v4250
          %v4255 = vmul.f32 %v4253, %v4249
          %v4256 = vmul.f32 %v4253, %v4251
          %v4257 = vadd.f32 %v4216, %v4254
          %v4258 = vadd.f32 %v4217, %v4255
          %v4259 = vadd.f32 %v4218, %v4256
          %s4260 = sld [smem:[#allocation5 + $0x382]]
          %v4261 = vstv %s4260
          %v4262 = vmul.f32 %v4261, %v4250
          %v4263 = vmul.f32 %v4261, %v4249
          %v4264 = vmul.f32 %v4261, %v4251
          %v4265 = vadd.f32 %v4224, %v4262
          %v4266 = vadd.f32 %v4225, %v4263
          %v4267 = vadd.f32 %v4226, %v4264
          %s4268 = sld [smem:[#allocation5 + $0x582]]
          %v4269 = vstv %s4268
          %v4270 = vmul.f32 %v4269, %v4250
          %v4271 = vmul.f32 %v4269, %v4249
          %v4272 = vmul.f32 %v4269, %v4251
          %v4273 = vadd.f32 %v4232, %v4270
          %v4274 = vadd.f32 %v4233, %v4271
          %v4275 = vadd.f32 %v4234, %v4272
          %s4276 = sld [smem:[#allocation5 + $0x782]]
          %v4277 = vstv %s4276
          %v4278 = vmul.f32 %v4277, %v4250
          %v4279 = vmul.f32 %v4277, %v4249
          %v4280 = vmul.f32 %v4277, %v4251
          %v4281 = vadd.f32 %v4240, %v4278
          %v4282 = vadd.f32 %v4241, %v4279
          %v4283 = vadd.f32 %v4242, %v4280
          %4284 = vrot.lane.b32.xlu0 %v4167, 110
          %v4285 = vpop.permute.xlu0 %4284
          %4286 = vrot.lane.b32.xlu0 %v4168, 110
          %v4287 = vpop.permute.xlu0 %4286
          %4288 = vrot.lane.b32.xlu0 %v4169, 110
          %v4289 = vpop.permute.xlu0 %4288
          %v4290 = vsel %vm382, %v4287, %v4289
          %v4291 = vsel %vm382, %v4285, %v4287
          %v4292 = vsel %vm382, %v4289, %v4285
          %s4293 = sld [smem:[#allocation5 + $0x183]]
          %v4294 = vstv %s4293
          %v4295 = vmul.f32 %v4294, %v4291
          %v4296 = vmul.f32 %v4294, %v4290
          %v4297 = vmul.f32 %v4294, %v4292
          %v4298 = vadd.f32 %v4257, %v4295
          %v4299 = vadd.f32 %v4258, %v4296
          %v4300 = vadd.f32 %v4259, %v4297
          %s4301 = sld [smem:[#allocation5 + $0x383]]
          %v4302 = vstv %s4301
          %v4303 = vmul.f32 %v4302, %v4291
          %v4304 = vmul.f32 %v4302, %v4290
          %v4305 = vmul.f32 %v4302, %v4292
          %v4306 = vadd.f32 %v4265, %v4303
          %v4307 = vadd.f32 %v4266, %v4304
          %v4308 = vadd.f32 %v4267, %v4305
          %s4309 = sld [smem:[#allocation5 + $0x583]]
          %v4310 = vstv %s4309
          %v4311 = vmul.f32 %v4310, %v4291
          %v4312 = vmul.f32 %v4310, %v4290
          %v4313 = vmul.f32 %v4310, %v4292
          %v4314 = vadd.f32 %v4273, %v4311
          %v4315 = vadd.f32 %v4274, %v4312
          %v4316 = vadd.f32 %v4275, %v4313
          %s4317 = sld [smem:[#allocation5 + $0x783]]
          %v4318 = vstv %s4317
          %v4319 = vmul.f32 %v4318, %v4291
          %v4320 = vmul.f32 %v4318, %v4290
          %v4321 = vmul.f32 %v4318, %v4292
          %v4322 = vadd.f32 %v4281, %v4319
          %v4323 = vadd.f32 %v4282, %v4320
          %v4324 = vadd.f32 %v4283, %v4321
          %4325 = vrot.lane.b32.xlu0 %v4167, 109
          %v4326 = vpop.permute.xlu0 %4325
          %4327 = vrot.lane.b32.xlu0 %v4168, 109
          %v4328 = vpop.permute.xlu0 %4327
          %4329 = vrot.lane.b32.xlu0 %v4169, 109
          %v4330 = vpop.permute.xlu0 %4329
          %v4331 = vsel %vm424, %v4328, %v4330
          %v4332 = vsel %vm424, %v4326, %v4328
          %v4333 = vsel %vm424, %v4330, %v4326
          %s4334 = sld [smem:[#allocation5 + $0x184]]
          %v4335 = vstv %s4334
          %v4336 = vmul.f32 %v4335, %v4332
          %v4337 = vmul.f32 %v4335, %v4331
          %v4338 = vmul.f32 %v4335, %v4333
          %v4339 = vadd.f32 %v4298, %v4336
          %v4340 = vadd.f32 %v4299, %v4337
          %v4341 = vadd.f32 %v4300, %v4338
          %s4342 = sld [smem:[#allocation5 + $0x384]]
          %v4343 = vstv %s4342
          %v4344 = vmul.f32 %v4343, %v4332
          %v4345 = vmul.f32 %v4343, %v4331
          %v4346 = vmul.f32 %v4343, %v4333
          %v4347 = vadd.f32 %v4306, %v4344
          %v4348 = vadd.f32 %v4307, %v4345
          %v4349 = vadd.f32 %v4308, %v4346
          %s4350 = sld [smem:[#allocation5 + $0x584]]
          %v4351 = vstv %s4350
          %v4352 = vmul.f32 %v4351, %v4332
          %v4353 = vmul.f32 %v4351, %v4331
          %v4354 = vmul.f32 %v4351, %v4333
          %v4355 = vadd.f32 %v4314, %v4352
          %v4356 = vadd.f32 %v4315, %v4353
          %v4357 = vadd.f32 %v4316, %v4354
          %s4358 = sld [smem:[#allocation5 + $0x784]]
          %v4359 = vstv %s4358
          %v4360 = vmul.f32 %v4359, %v4332
          %v4361 = vmul.f32 %v4359, %v4331
          %v4362 = vmul.f32 %v4359, %v4333
          %v4363 = vadd.f32 %v4322, %v4360
          %v4364 = vadd.f32 %v4323, %v4361
          %v4365 = vadd.f32 %v4324, %v4362
          %4366 = vrot.lane.b32.xlu0 %v4167, 108
          %v4367 = vpop.permute.xlu0 %4366
          %4368 = vrot.lane.b32.xlu0 %v4168, 108
          %v4369 = vpop.permute.xlu0 %4368
          %4370 = vrot.lane.b32.xlu0 %v4169, 108
          %v4371 = vpop.permute.xlu0 %4370
          %v4372 = vsel %vm466, %v4369, %v4371
          %v4373 = vsel %vm466, %v4367, %v4369
          %v4374 = vsel %vm466, %v4371, %v4367
          %s4375 = sld [smem:[#allocation5 + $0x185]]
          %v4376 = vstv %s4375
          %v4377 = vmul.f32 %v4376, %v4373
          %v4378 = vmul.f32 %v4376, %v4372
          %v4379 = vmul.f32 %v4376, %v4374
          %v4380 = vadd.f32 %v4339, %v4377
          %v4381 = vadd.f32 %v4340, %v4378
          %v4382 = vadd.f32 %v4341, %v4379
          %s4383 = sld [smem:[#allocation5 + $0x385]]
          %v4384 = vstv %s4383
          %v4385 = vmul.f32 %v4384, %v4373
          %v4386 = vmul.f32 %v4384, %v4372
          %v4387 = vmul.f32 %v4384, %v4374
          %v4388 = vadd.f32 %v4347, %v4385
          %v4389 = vadd.f32 %v4348, %v4386
          %v4390 = vadd.f32 %v4349, %v4387
          %s4391 = sld [smem:[#allocation5 + $0x585]]
          %v4392 = vstv %s4391
          %v4393 = vmul.f32 %v4392, %v4373
          %v4394 = vmul.f32 %v4392, %v4372
          %v4395 = vmul.f32 %v4392, %v4374
          %v4396 = vadd.f32 %v4355, %v4393
          %v4397 = vadd.f32 %v4356, %v4394
          %v4398 = vadd.f32 %v4357, %v4395
          %s4399 = sld [smem:[#allocation5 + $0x785]]
          %v4400 = vstv %s4399
          %v4401 = vmul.f32 %v4400, %v4373
          %v4402 = vmul.f32 %v4400, %v4372
          %v4403 = vmul.f32 %v4400, %v4374
          %v4404 = vadd.f32 %v4363, %v4401
          %v4405 = vadd.f32 %v4364, %v4402
          %v4406 = vadd.f32 %v4365, %v4403
          %4407 = vrot.lane.b32.xlu0 %v4167, 92
          %v4408 = vpop.permute.xlu0 %4407
          %4409 = vrot.lane.b32.xlu0 %v4168, 92
          %v4410 = vpop.permute.xlu0 %4409
          %4411 = vrot.lane.b32.xlu0 %v4169, 92
          %v4412 = vpop.permute.xlu0 %4411
          %v4413 = vsel %vm508, %v4410, %v4412
          %v4414 = vsel %vm508, %v4408, %v4410
          %v4415 = vsel %vm508, %v4412, %v4408
          %s4416 = sld [smem:[#allocation5 + $0x186]]
          %v4417 = vstv %s4416
          %v4418 = vmul.f32 %v4417, %v4414
          %v4419 = vmul.f32 %v4417, %v4413
          %v4420 = vmul.f32 %v4417, %v4415
          %v4421 = vadd.f32 %v4380, %v4418
          %v4422 = vadd.f32 %v4381, %v4419
          %v4423 = vadd.f32 %v4382, %v4420
          %s4424 = sld [smem:[#allocation5 + $0x386]]
          %v4425 = vstv %s4424
          %v4426 = vmul.f32 %v4425, %v4414
          %v4427 = vmul.f32 %v4425, %v4413
          %v4428 = vmul.f32 %v4425, %v4415
          %v4429 = vadd.f32 %v4388, %v4426
          %v4430 = vadd.f32 %v4389, %v4427
          %v4431 = vadd.f32 %v4390, %v4428
          %s4432 = sld [smem:[#allocation5 + $0x586]]
          %v4433 = vstv %s4432
          %v4434 = vmul.f32 %v4433, %v4414
          %v4435 = vmul.f32 %v4433, %v4413
          %v4436 = vmul.f32 %v4433, %v4415
          %v4437 = vadd.f32 %v4396, %v4434
          %v4438 = vadd.f32 %v4397, %v4435
          %v4439 = vadd.f32 %v4398, %v4436
          %s4440 = sld [smem:[#allocation5 + $0x786]]
          %v4441 = vstv %s4440
          %v4442 = vmul.f32 %v4441, %v4414
          %v4443 = vmul.f32 %v4441, %v4413
          %v4444 = vmul.f32 %v4441, %v4415
          %v4445 = vadd.f32 %v4404, %v4442
          %v4446 = vadd.f32 %v4405, %v4443
          %v4447 = vadd.f32 %v4406, %v4444
          %4448 = vrot.lane.b32.xlu0 %v4167, 91
          %v4449 = vpop.permute.xlu0 %4448
          %4450 = vrot.lane.b32.xlu0 %v4168, 91
          %v4451 = vpop.permute.xlu0 %4450
          %4452 = vrot.lane.b32.xlu0 %v4169, 91
          %v4453 = vpop.permute.xlu0 %4452
          %v4454 = vsel %vm550, %v4451, %v4453
          %v4455 = vsel %vm550, %v4449, %v4451
          %v4456 = vsel %vm550, %v4453, %v4449
          %s4457 = sld [smem:[#allocation5 + $0x187]]
          %v4458 = vstv %s4457
          %v4459 = vmul.f32 %v4458, %v4455
          %v4460 = vmul.f32 %v4458, %v4454
          %v4461 = vmul.f32 %v4458, %v4456
          %v4462 = vadd.f32 %v4421, %v4459
          %v4463 = vadd.f32 %v4422, %v4460
          %v4464 = vadd.f32 %v4423, %v4461
          %s4465 = sld [smem:[#allocation5 + $0x387]]
          %v4466 = vstv %s4465
          %v4467 = vmul.f32 %v4466, %v4455
          %v4468 = vmul.f32 %v4466, %v4454
          %v4469 = vmul.f32 %v4466, %v4456
          %v4470 = vadd.f32 %v4429, %v4467
          %v4471 = vadd.f32 %v4430, %v4468
          %v4472 = vadd.f32 %v4431, %v4469
          %s4473 = sld [smem:[#allocation5 + $0x587]]
          %v4474 = vstv %s4473
          %v4475 = vmul.f32 %v4474, %v4455
          %v4476 = vmul.f32 %v4474, %v4454
          %v4477 = vmul.f32 %v4474, %v4456
          %v4478 = vadd.f32 %v4437, %v4475
          %v4479 = vadd.f32 %v4438, %v4476
          %v4480 = vadd.f32 %v4439, %v4477
          %s4481 = sld [smem:[#allocation5 + $0x787]]
          %v4482 = vstv %s4481
          %v4483 = vmul.f32 %v4482, %v4455
          %v4484 = vmul.f32 %v4482, %v4454
          %v4485 = vmul.f32 %v4482, %v4456
          %v4486 = vadd.f32 %v4445, %v4483
          %v4487 = vadd.f32 %v4446, %v4484
          %v4488 = vadd.f32 %v4447, %v4485
          %4489 = vrot.lane.b32.xlu0 %v4167, 90
          %v4490 = vpop.permute.xlu0 %4489
          %4491 = vrot.lane.b32.xlu0 %v4168, 90
          %v4492 = vpop.permute.xlu0 %4491
          %4493 = vrot.lane.b32.xlu0 %v4169, 90
          %v4494 = vpop.permute.xlu0 %4493
          %v4495 = vsel %vm592, %v4492, %v4494
          %v4496 = vsel %vm592, %v4490, %v4492
          %v4497 = vsel %vm592, %v4494, %v4490
          %s4498 = sld [smem:[#allocation5 + $0x188]]
          %v4499 = vstv %s4498
          %v4500 = vmul.f32 %v4499, %v4496
          %v4501 = vmul.f32 %v4499, %v4495
          %v4502 = vmul.f32 %v4499, %v4497
          %v4503 = vadd.f32 %v4462, %v4500
          %v4504 = vadd.f32 %v4463, %v4501
          %v4505 = vadd.f32 %v4464, %v4502
          %s4506 = sld [smem:[#allocation5 + $0x388]]
          %v4507 = vstv %s4506
          %v4508 = vmul.f32 %v4507, %v4496
          %v4509 = vmul.f32 %v4507, %v4495
          %v4510 = vmul.f32 %v4507, %v4497
          %v4511 = vadd.f32 %v4470, %v4508
          %v4512 = vadd.f32 %v4471, %v4509
          %v4513 = vadd.f32 %v4472, %v4510
          %s4514 = sld [smem:[#allocation5 + $0x588]]
          %v4515 = vstv %s4514
          %v4516 = vmul.f32 %v4515, %v4496
          %v4517 = vmul.f32 %v4515, %v4495
          %v4518 = vmul.f32 %v4515, %v4497
          %v4519 = vadd.f32 %v4478, %v4516
          %v4520 = vadd.f32 %v4479, %v4517
          %v4521 = vadd.f32 %v4480, %v4518
          %s4522 = sld [smem:[#allocation5 + $0x788]]
          %v4523 = vstv %s4522
          %v4524 = vmul.f32 %v4523, %v4496
          %v4525 = vmul.f32 %v4523, %v4495
          %v4526 = vmul.f32 %v4523, %v4497
          %v4527 = vadd.f32 %v4486, %v4524
          %v4528 = vadd.f32 %v4487, %v4525
          %v4529 = vadd.f32 %v4488, %v4526
          %v4530 = vld [vmem:[%s4166] sm:$0xfe]
          %v4531 = vld [vmem:[%s4166 + $0x8] sm:$0xfe]
          %v4532 = vld [vmem:[%s4166 + $0x10] sm:$0xfe]
          %v4533 = vld [vmem:[%s4166 + $0x18] sm:$0x1]
          %v4534 = vld [vmem:[%s4166 + $0x20] sm:$0x1]
          %v4535 = vld [vmem:[%s4166 + $0x28] sm:$0x1]
          %s4536 = sld [smem:[#allocation5 + $0x189]]
          %v4537 = vstv %s4536
          %v4538 = vmul.f32 %v4537, %v4530
          %v4539 = vmul.f32 %v4537, %v4531
          %v4540 = vmul.f32 %v4537, %v4532
          %v4541 = vmul.f32 %v4537, %v4533
          %v4542 = vmul.f32 %v4537, %v4534
          %v4543 = vmul.f32 %v4537, %v4535
          %v4550 = vrot.slane %v4538, 1
          %v4551 = vrot.slane %v4541, 1
          %v4552 = vsel %vm648, %v4550, %v4551
          %v4553 = vrot.slane %v4539, 1
          %v4554 = vrot.slane %v4542, 1
          %v4555 = vsel %vm648, %v4553, %v4554
          %v4556 = vrot.slane %v4540, 1
          %v4557 = vrot.slane %v4543, 1
          %v4558 = vsel %vm648, %v4556, %v4557
          %v4562 = vadd.f32 %v4503, %v4552
          %v4563 = vadd.f32 %v4504, %v4555
          %v4564 = vadd.f32 %v4505, %v4558
          %s4565 = sld [smem:[#allocation5 + $0x389]]
          %v4566 = vstv %s4565
          %v4567 = vmul.f32 %v4566, %v4530
          %v4568 = vmul.f32 %v4566, %v4531
          %v4569 = vmul.f32 %v4566, %v4532
          %v4570 = vmul.f32 %v4566, %v4533
          %v4571 = vmul.f32 %v4566, %v4534
          %v4572 = vmul.f32 %v4566, %v4535
          %v4579 = vrot.slane %v4567, 1
          %v4580 = vrot.slane %v4570, 1
          %v4581 = vsel %vm648, %v4579, %v4580
          %v4582 = vrot.slane %v4568, 1
          %v4583 = vrot.slane %v4571, 1
          %v4584 = vsel %vm648, %v4582, %v4583
          %v4585 = vrot.slane %v4569, 1
          %v4586 = vrot.slane %v4572, 1
          %v4587 = vsel %vm648, %v4585, %v4586
          %v4591 = vadd.f32 %v4511, %v4581
          %v4592 = vadd.f32 %v4512, %v4584
          %v4593 = vadd.f32 %v4513, %v4587
          %s4594 = sld [smem:[#allocation5 + $0x589]]
          %v4595 = vstv %s4594
          %v4596 = vmul.f32 %v4595, %v4530
          %v4597 = vmul.f32 %v4595, %v4531
          %v4598 = vmul.f32 %v4595, %v4532
          %v4599 = vmul.f32 %v4595, %v4533
          %v4600 = vmul.f32 %v4595, %v4534
          %v4601 = vmul.f32 %v4595, %v4535
          %v4608 = vrot.slane %v4596, 1
          %v4609 = vrot.slane %v4599, 1
          %v4610 = vsel %vm648, %v4608, %v4609
          %v4611 = vrot.slane %v4597, 1
          %v4612 = vrot.slane %v4600, 1
          %v4613 = vsel %vm648, %v4611, %v4612
          %v4614 = vrot.slane %v4598, 1
          %v4615 = vrot.slane %v4601, 1
          %v4616 = vsel %vm648, %v4614, %v4615
          %v4620 = vadd.f32 %v4519, %v4610
          %v4621 = vadd.f32 %v4520, %v4613
          %v4622 = vadd.f32 %v4521, %v4616
          %s4623 = sld [smem:[#allocation5 + $0x789]]
          %v4624 = vstv %s4623
          %v4625 = vmul.f32 %v4624, %v4530
          %v4626 = vmul.f32 %v4624, %v4531
          %v4627 = vmul.f32 %v4624, %v4532
          %v4628 = vmul.f32 %v4624, %v4533
          %v4629 = vmul.f32 %v4624, %v4534
          %v4630 = vmul.f32 %v4624, %v4535
          %v4637 = vrot.slane %v4625, 1
          %v4638 = vrot.slane %v4628, 1
          %v4639 = vsel %vm648, %v4637, %v4638
          %v4640 = vrot.slane %v4626, 1
          %v4641 = vrot.slane %v4629, 1
          %v4642 = vsel %vm648, %v4640, %v4641
          %v4643 = vrot.slane %v4627, 1
          %v4644 = vrot.slane %v4630, 1
          %v4645 = vsel %vm648, %v4643, %v4644
          %v4649 = vadd.f32 %v4527, %v4639
          %v4650 = vadd.f32 %v4528, %v4642
          %v4651 = vadd.f32 %v4529, %v4645
          %v4658 = vrot.slane %v4530, 1
          %v4659 = vrot.slane %v4533, 1
          %v4660 = vsel %vm648, %v4658, %v4659
          %v4661 = vrot.slane %v4531, 1
          %v4662 = vrot.slane %v4534, 1
          %v4663 = vsel %vm648, %v4661, %v4662
          %v4664 = vrot.slane %v4532, 1
          %v4665 = vrot.slane %v4535, 1
          %v4666 = vsel %vm648, %v4664, %v4665
          %4670 = vrot.lane.b32.xlu0 %v4660, 127
          %v4671 = vpop.permute.xlu0 %4670
          %4672 = vrot.lane.b32.xlu0 %v4663, 127
          %v4673 = vpop.permute.xlu0 %4672
          %4674 = vrot.lane.b32.xlu0 %v4666, 127
          %v4675 = vpop.permute.xlu0 %4674
          %v4676 = vsel %vm298, %v4673, %v4675
          %v4677 = vsel %vm298, %v4671, %v4673
          %v4678 = vsel %vm298, %v4675, %v4671
          %s4679 = sld [smem:[#allocation5 + $0x18a]]
          %v4680 = vstv %s4679
          %v4681 = vmul.f32 %v4680, %v4677
          %v4682 = vmul.f32 %v4680, %v4676
          %v4683 = vmul.f32 %v4680, %v4678
          %v4684 = vadd.f32 %v4562, %v4681
          %v4685 = vadd.f32 %v4563, %v4682
          %v4686 = vadd.f32 %v4564, %v4683
          %s4687 = sld [smem:[#allocation5 + $0x38a]]
          %v4688 = vstv %s4687
          %v4689 = vmul.f32 %v4688, %v4677
          %v4690 = vmul.f32 %v4688, %v4676
          %v4691 = vmul.f32 %v4688, %v4678
          %v4692 = vadd.f32 %v4591, %v4689
          %v4693 = vadd.f32 %v4592, %v4690
          %v4694 = vadd.f32 %v4593, %v4691
          %s4695 = sld [smem:[#allocation5 + $0x58a]]
          %v4696 = vstv %s4695
          %v4697 = vmul.f32 %v4696, %v4677
          %v4698 = vmul.f32 %v4696, %v4676
          %v4699 = vmul.f32 %v4696, %v4678
          %v4700 = vadd.f32 %v4620, %v4697
          %v4701 = vadd.f32 %v4621, %v4698
          %v4702 = vadd.f32 %v4622, %v4699
          %s4703 = sld [smem:[#allocation5 + $0x78a]]
          %v4704 = vstv %s4703
          %v4705 = vmul.f32 %v4704, %v4677
          %v4706 = vmul.f32 %v4704, %v4676
          %v4707 = vmul.f32 %v4704, %v4678
          %v4708 = vadd.f32 %v4649, %v4705
          %v4709 = vadd.f32 %v4650, %v4706
          %v4710 = vadd.f32 %v4651, %v4707
          %4711 = vrot.lane.b32.xlu0 %v4660, 126
          %v4712 = vpop.permute.xlu0 %4711
          %4713 = vrot.lane.b32.xlu0 %v4663, 126
          %v4714 = vpop.permute.xlu0 %4713
          %4715 = vrot.lane.b32.xlu0 %v4666, 126
          %v4716 = vpop.permute.xlu0 %4715
          %v4717 = vsel %vm340, %v4714, %v4716
          %v4718 = vsel %vm340, %v4712, %v4714
          %v4719 = vsel %vm340, %v4716, %v4712
          %s4720 = sld [smem:[#allocation5 + $0x18b]]
          %v4721 = vstv %s4720
          %v4722 = vmul.f32 %v4721, %v4718
          %v4723 = vmul.f32 %v4721, %v4717
          %v4724 = vmul.f32 %v4721, %v4719
          %v4725 = vadd.f32 %v4684, %v4722
          %v4726 = vadd.f32 %v4685, %v4723
          %v4727 = vadd.f32 %v4686, %v4724
          %s4728 = sld [smem:[#allocation5 + $0x38b]]
          %v4729 = vstv %s4728
          %v4730 = vmul.f32 %v4729, %v4718
          %v4731 = vmul.f32 %v4729, %v4717
          %v4732 = vmul.f32 %v4729, %v4719
          %v4733 = vadd.f32 %v4692, %v4730
          %v4734 = vadd.f32 %v4693, %v4731
          %v4735 = vadd.f32 %v4694, %v4732
          %s4736 = sld [smem:[#allocation5 + $0x58b]]
          %v4737 = vstv %s4736
          %v4738 = vmul.f32 %v4737, %v4718
          %v4739 = vmul.f32 %v4737, %v4717
          %v4740 = vmul.f32 %v4737, %v4719
          %v4741 = vadd.f32 %v4700, %v4738
          %v4742 = vadd.f32 %v4701, %v4739
          %v4743 = vadd.f32 %v4702, %v4740
          %s4744 = sld [smem:[#allocation5 + $0x78b]]
          %v4745 = vstv %s4744
          %v4746 = vmul.f32 %v4745, %v4718
          %v4747 = vmul.f32 %v4745, %v4717
          %v4748 = vmul.f32 %v4745, %v4719
          %v4749 = vadd.f32 %v4708, %v4746
          %v4750 = vadd.f32 %v4709, %v4747
          %v4751 = vadd.f32 %v4710, %v4748
          %4752 = vrot.lane.b32.xlu0 %v4660, 110
          %v4753 = vpop.permute.xlu0 %4752
          %4754 = vrot.lane.b32.xlu0 %v4663, 110
          %v4755 = vpop.permute.xlu0 %4754
          %4756 = vrot.lane.b32.xlu0 %v4666, 110
          %v4757 = vpop.permute.xlu0 %4756
          %v4758 = vsel %vm382, %v4755, %v4757
          %v4759 = vsel %vm382, %v4753, %v4755
          %v4760 = vsel %vm382, %v4757, %v4753
          %s4761 = sld [smem:[#allocation5 + $0x18c]]
          %v4762 = vstv %s4761
          %v4763 = vmul.f32 %v4762, %v4759
          %v4764 = vmul.f32 %v4762, %v4758
          %v4765 = vmul.f32 %v4762, %v4760
          %v4766 = vadd.f32 %v4725, %v4763
          %v4767 = vadd.f32 %v4726, %v4764
          %v4768 = vadd.f32 %v4727, %v4765
          %s4769 = sld [smem:[#allocation5 + $0x38c]]
          %v4770 = vstv %s4769
          %v4771 = vmul.f32 %v4770, %v4759
          %v4772 = vmul.f32 %v4770, %v4758
          %v4773 = vmul.f32 %v4770, %v4760
          %v4774 = vadd.f32 %v4733, %v4771
          %v4775 = vadd.f32 %v4734, %v4772
          %v4776 = vadd.f32 %v4735, %v4773
          %s4777 = sld [smem:[#allocation5 + $0x58c]]
          %v4778 = vstv %s4777
          %v4779 = vmul.f32 %v4778, %v4759
          %v4780 = vmul.f32 %v4778, %v4758
          %v4781 = vmul.f32 %v4778, %v4760
          %v4782 = vadd.f32 %v4741, %v4779
          %v4783 = vadd.f32 %v4742, %v4780
          %v4784 = vadd.f32 %v4743, %v4781
          %s4785 = sld [smem:[#allocation5 + $0x78c]]
          %v4786 = vstv %s4785
          %v4787 = vmul.f32 %v4786, %v4759
          %v4788 = vmul.f32 %v4786, %v4758
          %v4789 = vmul.f32 %v4786, %v4760
          %v4790 = vadd.f32 %v4749, %v4787
          %v4791 = vadd.f32 %v4750, %v4788
          %v4792 = vadd.f32 %v4751, %v4789
          %4793 = vrot.lane.b32.xlu0 %v4660, 109
          %v4794 = vpop.permute.xlu0 %4793
          %4795 = vrot.lane.b32.xlu0 %v4663, 109
          %v4796 = vpop.permute.xlu0 %4795
          %4797 = vrot.lane.b32.xlu0 %v4666, 109
          %v4798 = vpop.permute.xlu0 %4797
          %v4799 = vsel %vm424, %v4796, %v4798
          %v4800 = vsel %vm424, %v4794, %v4796
          %v4801 = vsel %vm424, %v4798, %v4794
          %s4802 = sld [smem:[#allocation5 + $0x18d]]
          %v4803 = vstv %s4802
          %v4804 = vmul.f32 %v4803, %v4800
          %v4805 = vmul.f32 %v4803, %v4799
          %v4806 = vmul.f32 %v4803, %v4801
          %v4807 = vadd.f32 %v4766, %v4804
          %v4808 = vadd.f32 %v4767, %v4805
          %v4809 = vadd.f32 %v4768, %v4806
          %s4810 = sld [smem:[#allocation5 + $0x38d]]
          %v4811 = vstv %s4810
          %v4812 = vmul.f32 %v4811, %v4800
          %v4813 = vmul.f32 %v4811, %v4799
          %v4814 = vmul.f32 %v4811, %v4801
          %v4815 = vadd.f32 %v4774, %v4812
          %v4816 = vadd.f32 %v4775, %v4813
          %v4817 = vadd.f32 %v4776, %v4814
          %s4818 = sld [smem:[#allocation5 + $0x58d]]
          %v4819 = vstv %s4818
          %v4820 = vmul.f32 %v4819, %v4800
          %v4821 = vmul.f32 %v4819, %v4799
          %v4822 = vmul.f32 %v4819, %v4801
          %v4823 = vadd.f32 %v4782, %v4820
          %v4824 = vadd.f32 %v4783, %v4821
          %v4825 = vadd.f32 %v4784, %v4822
          %s4826 = sld [smem:[#allocation5 + $0x78d]]
          %v4827 = vstv %s4826
          %v4828 = vmul.f32 %v4827, %v4800
          %v4829 = vmul.f32 %v4827, %v4799
          %v4830 = vmul.f32 %v4827, %v4801
          %v4831 = vadd.f32 %v4790, %v4828
          %v4832 = vadd.f32 %v4791, %v4829
          %v4833 = vadd.f32 %v4792, %v4830
          %4834 = vrot.lane.b32.xlu0 %v4660, 108
          %v4835 = vpop.permute.xlu0 %4834
          %4836 = vrot.lane.b32.xlu0 %v4663, 108
          %v4837 = vpop.permute.xlu0 %4836
          %4838 = vrot.lane.b32.xlu0 %v4666, 108
          %v4839 = vpop.permute.xlu0 %4838
          %v4840 = vsel %vm466, %v4837, %v4839
          %v4841 = vsel %vm466, %v4835, %v4837
          %v4842 = vsel %vm466, %v4839, %v4835
          %s4843 = sld [smem:[#allocation5 + $0x18e]]
          %v4844 = vstv %s4843
          %v4845 = vmul.f32 %v4844, %v4841
          %v4846 = vmul.f32 %v4844, %v4840
          %v4847 = vmul.f32 %v4844, %v4842
          %v4848 = vadd.f32 %v4807, %v4845
          %v4849 = vadd.f32 %v4808, %v4846
          %v4850 = vadd.f32 %v4809, %v4847
          %s4851 = sld [smem:[#allocation5 + $0x38e]]
          %v4852 = vstv %s4851
          %v4853 = vmul.f32 %v4852, %v4841
          %v4854 = vmul.f32 %v4852, %v4840
          %v4855 = vmul.f32 %v4852, %v4842
          %v4856 = vadd.f32 %v4815, %v4853
          %v4857 = vadd.f32 %v4816, %v4854
          %v4858 = vadd.f32 %v4817, %v4855
          %s4859 = sld [smem:[#allocation5 + $0x58e]]
          %v4860 = vstv %s4859
          %v4861 = vmul.f32 %v4860, %v4841
          %v4862 = vmul.f32 %v4860, %v4840
          %v4863 = vmul.f32 %v4860, %v4842
          %v4864 = vadd.f32 %v4823, %v4861
          %v4865 = vadd.f32 %v4824, %v4862
          %v4866 = vadd.f32 %v4825, %v4863
          %s4867 = sld [smem:[#allocation5 + $0x78e]]
          %v4868 = vstv %s4867
          %v4869 = vmul.f32 %v4868, %v4841
          %v4870 = vmul.f32 %v4868, %v4840
          %v4871 = vmul.f32 %v4868, %v4842
          %v4872 = vadd.f32 %v4831, %v4869
          %v4873 = vadd.f32 %v4832, %v4870
          %v4874 = vadd.f32 %v4833, %v4871
          %4875 = vrot.lane.b32.xlu0 %v4660, 92
          %v4876 = vpop.permute.xlu0 %4875
          %4877 = vrot.lane.b32.xlu0 %v4663, 92
          %v4878 = vpop.permute.xlu0 %4877
          %4879 = vrot.lane.b32.xlu0 %v4666, 92
          %v4880 = vpop.permute.xlu0 %4879
          %v4881 = vsel %vm508, %v4878, %v4880
          %v4882 = vsel %vm508, %v4876, %v4878
          %v4883 = vsel %vm508, %v4880, %v4876
          %s4884 = sld [smem:[#allocation5 + $0x18f]]
          %v4885 = vstv %s4884
          %v4886 = vmul.f32 %v4885, %v4882
          %v4887 = vmul.f32 %v4885, %v4881
          %v4888 = vmul.f32 %v4885, %v4883
          %v4889 = vadd.f32 %v4848, %v4886
          %v4890 = vadd.f32 %v4849, %v4887
          %v4891 = vadd.f32 %v4850, %v4888
          %s4892 = sld [smem:[#allocation5 + $0x38f]]
          %v4893 = vstv %s4892
          %v4894 = vmul.f32 %v4893, %v4882
          %v4895 = vmul.f32 %v4893, %v4881
          %v4896 = vmul.f32 %v4893, %v4883
          %v4897 = vadd.f32 %v4856, %v4894
          %v4898 = vadd.f32 %v4857, %v4895
          %v4899 = vadd.f32 %v4858, %v4896
          %s4900 = sld [smem:[#allocation5 + $0x58f]]
          %v4901 = vstv %s4900
          %v4902 = vmul.f32 %v4901, %v4882
          %v4903 = vmul.f32 %v4901, %v4881
          %v4904 = vmul.f32 %v4901, %v4883
          %v4905 = vadd.f32 %v4864, %v4902
          %v4906 = vadd.f32 %v4865, %v4903
          %v4907 = vadd.f32 %v4866, %v4904
          %s4908 = sld [smem:[#allocation5 + $0x78f]]
          %v4909 = vstv %s4908
          %v4910 = vmul.f32 %v4909, %v4882
          %v4911 = vmul.f32 %v4909, %v4881
          %v4912 = vmul.f32 %v4909, %v4883
          %v4913 = vadd.f32 %v4872, %v4910
          %v4914 = vadd.f32 %v4873, %v4911
          %v4915 = vadd.f32 %v4874, %v4912
          %4916 = vrot.lane.b32.xlu0 %v4660, 91
          %v4917 = vpop.permute.xlu0 %4916
          %4918 = vrot.lane.b32.xlu0 %v4663, 91
          %v4919 = vpop.permute.xlu0 %4918
          %4920 = vrot.lane.b32.xlu0 %v4666, 91
          %v4921 = vpop.permute.xlu0 %4920
          %v4922 = vsel %vm550, %v4919, %v4921
          %v4923 = vsel %vm550, %v4917, %v4919
          %v4924 = vsel %vm550, %v4921, %v4917
          %s4925 = sld [smem:[#allocation5 + $0x190]]
          %v4926 = vstv %s4925
          %v4927 = vmul.f32 %v4926, %v4923
          %v4928 = vmul.f32 %v4926, %v4922
          %v4929 = vmul.f32 %v4926, %v4924
          %v4930 = vadd.f32 %v4889, %v4927
          %v4931 = vadd.f32 %v4890, %v4928
          %v4932 = vadd.f32 %v4891, %v4929
          %s4933 = sld [smem:[#allocation5 + $0x390]]
          %v4934 = vstv %s4933
          %v4935 = vmul.f32 %v4934, %v4923
          %v4936 = vmul.f32 %v4934, %v4922
          %v4937 = vmul.f32 %v4934, %v4924
          %v4938 = vadd.f32 %v4897, %v4935
          %v4939 = vadd.f32 %v4898, %v4936
          %v4940 = vadd.f32 %v4899, %v4937
          %s4941 = sld [smem:[#allocation5 + $0x590]]
          %v4942 = vstv %s4941
          %v4943 = vmul.f32 %v4942, %v4923
          %v4944 = vmul.f32 %v4942, %v4922
          %v4945 = vmul.f32 %v4942, %v4924
          %v4946 = vadd.f32 %v4905, %v4943
          %v4947 = vadd.f32 %v4906, %v4944
          %v4948 = vadd.f32 %v4907, %v4945
          %s4949 = sld [smem:[#allocation5 + $0x790]]
          %v4950 = vstv %s4949
          %v4951 = vmul.f32 %v4950, %v4923
          %v4952 = vmul.f32 %v4950, %v4922
          %v4953 = vmul.f32 %v4950, %v4924
          %v4954 = vadd.f32 %v4913, %v4951
          %v4955 = vadd.f32 %v4914, %v4952
          %v4956 = vadd.f32 %v4915, %v4953
          %4957 = vrot.lane.b32.xlu0 %v4660, 90
          %v4958 = vpop.permute.xlu0 %4957
          %4959 = vrot.lane.b32.xlu0 %v4663, 90
          %v4960 = vpop.permute.xlu0 %4959
          %4961 = vrot.lane.b32.xlu0 %v4666, 90
          %v4962 = vpop.permute.xlu0 %4961
          %v4963 = vsel %vm592, %v4960, %v4962
          %v4964 = vsel %vm592, %v4958, %v4960
          %v4965 = vsel %vm592, %v4962, %v4958
          %s4966 = sld [smem:[#allocation5 + $0x191]]
          %v4967 = vstv %s4966
          %v4968 = vmul.f32 %v4967, %v4964
          %v4969 = vmul.f32 %v4967, %v4963
          %v4970 = vmul.f32 %v4967, %v4965
          %v4971 = vadd.f32 %v4930, %v4968
          %v4972 = vadd.f32 %v4931, %v4969
          %v4973 = vadd.f32 %v4932, %v4970
          %s4974 = sld [smem:[#allocation5 + $0x391]]
          %v4975 = vstv %s4974
          %v4976 = vmul.f32 %v4975, %v4964
          %v4977 = vmul.f32 %v4975, %v4963
          %v4978 = vmul.f32 %v4975, %v4965
          %v4979 = vadd.f32 %v4938, %v4976
          %v4980 = vadd.f32 %v4939, %v4977
          %v4981 = vadd.f32 %v4940, %v4978
          %s4982 = sld [smem:[#allocation5 + $0x591]]
          %v4983 = vstv %s4982
          %v4984 = vmul.f32 %v4983, %v4964
          %v4985 = vmul.f32 %v4983, %v4963
          %v4986 = vmul.f32 %v4983, %v4965
          %v4987 = vadd.f32 %v4946, %v4984
          %v4988 = vadd.f32 %v4947, %v4985
          %v4989 = vadd.f32 %v4948, %v4986
          %s4990 = sld [smem:[#allocation5 + $0x791]]
          %v4991 = vstv %s4990
          %v4992 = vmul.f32 %v4991, %v4964
          %v4993 = vmul.f32 %v4991, %v4963
          %v4994 = vmul.f32 %v4991, %v4965
          %v4995 = vadd.f32 %v4954, %v4992
          %v4996 = vadd.f32 %v4955, %v4993
          %v4997 = vadd.f32 %v4956, %v4994
          %v4998 = vld [vmem:[%s4166] sm:$0xfc]
          %v4999 = vld [vmem:[%s4166 + $0x8] sm:$0xfc]
          %v5000 = vld [vmem:[%s4166 + $0x10] sm:$0xfc]
          %v5001 = vld [vmem:[%s4166 + $0x18] sm:$0x3]
          %v5002 = vld [vmem:[%s4166 + $0x20] sm:$0x3]
          %v5003 = vld [vmem:[%s4166 + $0x28] sm:$0x3]
          %s5004 = sld [smem:[#allocation5 + $0x192]]
          %v5005 = vstv %s5004
          %v5006 = vmul.f32 %v5005, %v4998
          %v5007 = vmul.f32 %v5005, %v4999
          %v5008 = vmul.f32 %v5005, %v5000
          %v5009 = vmul.f32 %v5005, %v5001
          %v5010 = vmul.f32 %v5005, %v5002
          %v5011 = vmul.f32 %v5005, %v5003
          %v5018 = vrot.slane %v5006, 2
          %v5019 = vrot.slane %v5009, 2
          %v5020 = vsel %vm1117, %v5018, %v5019
          %v5021 = vrot.slane %v5007, 2
          %v5022 = vrot.slane %v5010, 2
          %v5023 = vsel %vm1117, %v5021, %v5022
          %v5024 = vrot.slane %v5008, 2
          %v5025 = vrot.slane %v5011, 2
          %v5026 = vsel %vm1117, %v5024, %v5025
          %v5030 = vadd.f32 %v4971, %v5020
          %v5031 = vadd.f32 %v4972, %v5023
          %v5032 = vadd.f32 %v4973, %v5026
          %s5033 = sld [smem:[#allocation5 + $0x392]]
          %v5034 = vstv %s5033
          %v5035 = vmul.f32 %v5034, %v4998
          %v5036 = vmul.f32 %v5034, %v4999
          %v5037 = vmul.f32 %v5034, %v5000
          %v5038 = vmul.f32 %v5034, %v5001
          %v5039 = vmul.f32 %v5034, %v5002
          %v5040 = vmul.f32 %v5034, %v5003
          %v5047 = vrot.slane %v5035, 2
          %v5048 = vrot.slane %v5038, 2
          %v5049 = vsel %vm1117, %v5047, %v5048
          %v5050 = vrot.slane %v5036, 2
          %v5051 = vrot.slane %v5039, 2
          %v5052 = vsel %vm1117, %v5050, %v5051
          %v5053 = vrot.slane %v5037, 2
          %v5054 = vrot.slane %v5040, 2
          %v5055 = vsel %vm1117, %v5053, %v5054
          %v5059 = vadd.f32 %v4979, %v5049
          %v5060 = vadd.f32 %v4980, %v5052
          %v5061 = vadd.f32 %v4981, %v5055
          %s5062 = sld [smem:[#allocation5 + $0x592]]
          %v5063 = vstv %s5062
          %v5064 = vmul.f32 %v5063, %v4998
          %v5065 = vmul.f32 %v5063, %v4999
          %v5066 = vmul.f32 %v5063, %v5000
          %v5067 = vmul.f32 %v5063, %v5001
          %v5068 = vmul.f32 %v5063, %v5002
          %v5069 = vmul.f32 %v5063, %v5003
          %v5076 = vrot.slane %v5064, 2
          %v5077 = vrot.slane %v5067, 2
          %v5078 = vsel %vm1117, %v5076, %v5077
          %v5079 = vrot.slane %v5065, 2
          %v5080 = vrot.slane %v5068, 2
          %v5081 = vsel %vm1117, %v5079, %v5080
          %v5082 = vrot.slane %v5066, 2
          %v5083 = vrot.slane %v5069, 2
          %v5084 = vsel %vm1117, %v5082, %v5083
          %v5088 = vadd.f32 %v4987, %v5078
          %v5089 = vadd.f32 %v4988, %v5081
          %v5090 = vadd.f32 %v4989, %v5084
          %s5091 = sld [smem:[#allocation5 + $0x792]]
          %v5092 = vstv %s5091
          %v5093 = vmul.f32 %v5092, %v4998
          %v5094 = vmul.f32 %v5092, %v4999
          %v5095 = vmul.f32 %v5092, %v5000
          %v5096 = vmul.f32 %v5092, %v5001
          %v5097 = vmul.f32 %v5092, %v5002
          %v5098 = vmul.f32 %v5092, %v5003
          %v5105 = vrot.slane %v5093, 2
          %v5106 = vrot.slane %v5096, 2
          %v5107 = vsel %vm1117, %v5105, %v5106
          %v5108 = vrot.slane %v5094, 2
          %v5109 = vrot.slane %v5097, 2
          %v5110 = vsel %vm1117, %v5108, %v5109
          %v5111 = vrot.slane %v5095, 2
          %v5112 = vrot.slane %v5098, 2
          %v5113 = vsel %vm1117, %v5111, %v5112
          %v5117 = vadd.f32 %v4995, %v5107
          %v5118 = vadd.f32 %v4996, %v5110
          %v5119 = vadd.f32 %v4997, %v5113
          %v5126 = vrot.slane %v4998, 2
          %v5127 = vrot.slane %v5001, 2
          %v5128 = vsel %vm1117, %v5126, %v5127
          %v5129 = vrot.slane %v4999, 2
          %v5130 = vrot.slane %v5002, 2
          %v5131 = vsel %vm1117, %v5129, %v5130
          %v5132 = vrot.slane %v5000, 2
          %v5133 = vrot.slane %v5003, 2
          %v5134 = vsel %vm1117, %v5132, %v5133
          %5138 = vrot.lane.b32.xlu0 %v5128, 127
          %v5139 = vpop.permute.xlu0 %5138
          %5140 = vrot.lane.b32.xlu0 %v5131, 127
          %v5141 = vpop.permute.xlu0 %5140
          %5142 = vrot.lane.b32.xlu0 %v5134, 127
          %v5143 = vpop.permute.xlu0 %5142
          %v5144 = vsel %vm298, %v5141, %v5143
          %v5145 = vsel %vm298, %v5139, %v5141
          %v5146 = vsel %vm298, %v5143, %v5139
          %s5147 = sld [smem:[#allocation5 + $0x193]]
          %v5148 = vstv %s5147
          %v5149 = vmul.f32 %v5148, %v5145
          %v5150 = vmul.f32 %v5148, %v5144
          %v5151 = vmul.f32 %v5148, %v5146
          %v5152 = vadd.f32 %v5030, %v5149
          %v5153 = vadd.f32 %v5031, %v5150
          %v5154 = vadd.f32 %v5032, %v5151
          %s5155 = sld [smem:[#allocation5 + $0x393]]
          %v5156 = vstv %s5155
          %v5157 = vmul.f32 %v5156, %v5145
          %v5158 = vmul.f32 %v5156, %v5144
          %v5159 = vmul.f32 %v5156, %v5146
          %v5160 = vadd.f32 %v5059, %v5157
          %v5161 = vadd.f32 %v5060, %v5158
          %v5162 = vadd.f32 %v5061, %v5159
          %s5163 = sld [smem:[#allocation5 + $0x593]]
          %v5164 = vstv %s5163
          %v5165 = vmul.f32 %v5164, %v5145
          %v5166 = vmul.f32 %v5164, %v5144
          %v5167 = vmul.f32 %v5164, %v5146
          %v5168 = vadd.f32 %v5088, %v5165
          %v5169 = vadd.f32 %v5089, %v5166
          %v5170 = vadd.f32 %v5090, %v5167
          %s5171 = sld [smem:[#allocation5 + $0x793]]
          %v5172 = vstv %s5171
          %v5173 = vmul.f32 %v5172, %v5145
          %v5174 = vmul.f32 %v5172, %v5144
          %v5175 = vmul.f32 %v5172, %v5146
          %v5176 = vadd.f32 %v5117, %v5173
          %v5177 = vadd.f32 %v5118, %v5174
          %v5178 = vadd.f32 %v5119, %v5175
          %5179 = vrot.lane.b32.xlu0 %v5128, 126
          %v5180 = vpop.permute.xlu0 %5179
          %5181 = vrot.lane.b32.xlu0 %v5131, 126
          %v5182 = vpop.permute.xlu0 %5181
          %5183 = vrot.lane.b32.xlu0 %v5134, 126
          %v5184 = vpop.permute.xlu0 %5183
          %v5185 = vsel %vm340, %v5182, %v5184
          %v5186 = vsel %vm340, %v5180, %v5182
          %v5187 = vsel %vm340, %v5184, %v5180
          %s5188 = sld [smem:[#allocation5 + $0x194]]
          %v5189 = vstv %s5188
          %v5190 = vmul.f32 %v5189, %v5186
          %v5191 = vmul.f32 %v5189, %v5185
          %v5192 = vmul.f32 %v5189, %v5187
          %v5193 = vadd.f32 %v5152, %v5190
          %v5194 = vadd.f32 %v5153, %v5191
          %v5195 = vadd.f32 %v5154, %v5192
          %s5196 = sld [smem:[#allocation5 + $0x394]]
          %v5197 = vstv %s5196
          %v5198 = vmul.f32 %v5197, %v5186
          %v5199 = vmul.f32 %v5197, %v5185
          %v5200 = vmul.f32 %v5197, %v5187
          %v5201 = vadd.f32 %v5160, %v5198
          %v5202 = vadd.f32 %v5161, %v5199
          %v5203 = vadd.f32 %v5162, %v5200
          %s5204 = sld [smem:[#allocation5 + $0x594]]
          %v5205 = vstv %s5204
          %v5206 = vmul.f32 %v5205, %v5186
          %v5207 = vmul.f32 %v5205, %v5185
          %v5208 = vmul.f32 %v5205, %v5187
          %v5209 = vadd.f32 %v5168, %v5206
          %v5210 = vadd.f32 %v5169, %v5207
          %v5211 = vadd.f32 %v5170, %v5208
          %s5212 = sld [smem:[#allocation5 + $0x794]]
          %v5213 = vstv %s5212
          %v5214 = vmul.f32 %v5213, %v5186
          %v5215 = vmul.f32 %v5213, %v5185
          %v5216 = vmul.f32 %v5213, %v5187
          %v5217 = vadd.f32 %v5176, %v5214
          %v5218 = vadd.f32 %v5177, %v5215
          %v5219 = vadd.f32 %v5178, %v5216
          %5220 = vrot.lane.b32.xlu0 %v5128, 110
          %v5221 = vpop.permute.xlu0 %5220
          %5222 = vrot.lane.b32.xlu0 %v5131, 110
          %v5223 = vpop.permute.xlu0 %5222
          %5224 = vrot.lane.b32.xlu0 %v5134, 110
          %v5225 = vpop.permute.xlu0 %5224
          %v5226 = vsel %vm382, %v5223, %v5225
          %v5227 = vsel %vm382, %v5221, %v5223
          %v5228 = vsel %vm382, %v5225, %v5221
          %s5229 = sld [smem:[#allocation5 + $0x195]]
          %v5230 = vstv %s5229
          %v5231 = vmul.f32 %v5230, %v5227
          %v5232 = vmul.f32 %v5230, %v5226
          %v5233 = vmul.f32 %v5230, %v5228
          %v5234 = vadd.f32 %v5193, %v5231
          %v5235 = vadd.f32 %v5194, %v5232
          %v5236 = vadd.f32 %v5195, %v5233
          %s5237 = sld [smem:[#allocation5 + $0x395]]
          %v5238 = vstv %s5237
          %v5239 = vmul.f32 %v5238, %v5227
          %v5240 = vmul.f32 %v5238, %v5226
          %v5241 = vmul.f32 %v5238, %v5228
          %v5242 = vadd.f32 %v5201, %v5239
          %v5243 = vadd.f32 %v5202, %v5240
          %v5244 = vadd.f32 %v5203, %v5241
          %s5245 = sld [smem:[#allocation5 + $0x595]]
          %v5246 = vstv %s5245
          %v5247 = vmul.f32 %v5246, %v5227
          %v5248 = vmul.f32 %v5246, %v5226
          %v5249 = vmul.f32 %v5246, %v5228
          %v5250 = vadd.f32 %v5209, %v5247
          %v5251 = vadd.f32 %v5210, %v5248
          %v5252 = vadd.f32 %v5211, %v5249
          %s5253 = sld [smem:[#allocation5 + $0x795]]
          %v5254 = vstv %s5253
          %v5255 = vmul.f32 %v5254, %v5227
          %v5256 = vmul.f32 %v5254, %v5226
          %v5257 = vmul.f32 %v5254, %v5228
          %v5258 = vadd.f32 %v5217, %v5255
          %v5259 = vadd.f32 %v5218, %v5256
          %v5260 = vadd.f32 %v5219, %v5257
          %5261 = vrot.lane.b32.xlu0 %v5128, 109
          %v5262 = vpop.permute.xlu0 %5261
          %5263 = vrot.lane.b32.xlu0 %v5131, 109
          %v5264 = vpop.permute.xlu0 %5263
          %5265 = vrot.lane.b32.xlu0 %v5134, 109
          %v5266 = vpop.permute.xlu0 %5265
          %v5267 = vsel %vm424, %v5264, %v5266
          %v5268 = vsel %vm424, %v5262, %v5264
          %v5269 = vsel %vm424, %v5266, %v5262
          %s5270 = sld [smem:[#allocation5 + $0x196]]
          %v5271 = vstv %s5270
          %v5272 = vmul.f32 %v5271, %v5268
          %v5273 = vmul.f32 %v5271, %v5267
          %v5274 = vmul.f32 %v5271, %v5269
          %v5275 = vadd.f32 %v5234, %v5272
          %v5276 = vadd.f32 %v5235, %v5273
          %v5277 = vadd.f32 %v5236, %v5274
          %s5278 = sld [smem:[#allocation5 + $0x396]]
          %v5279 = vstv %s5278
          %v5280 = vmul.f32 %v5279, %v5268
          %v5281 = vmul.f32 %v5279, %v5267
          %v5282 = vmul.f32 %v5279, %v5269
          %v5283 = vadd.f32 %v5242, %v5280
          %v5284 = vadd.f32 %v5243, %v5281
          %v5285 = vadd.f32 %v5244, %v5282
          %s5286 = sld [smem:[#allocation5 + $0x596]]
          %v5287 = vstv %s5286
          %v5288 = vmul.f32 %v5287, %v5268
          %v5289 = vmul.f32 %v5287, %v5267
          %v5290 = vmul.f32 %v5287, %v5269
          %v5291 = vadd.f32 %v5250, %v5288
          %v5292 = vadd.f32 %v5251, %v5289
          %v5293 = vadd.f32 %v5252, %v5290
          %s5294 = sld [smem:[#allocation5 + $0x796]]
          %v5295 = vstv %s5294
          %v5296 = vmul.f32 %v5295, %v5268
          %v5297 = vmul.f32 %v5295, %v5267
          %v5298 = vmul.f32 %v5295, %v5269
          %v5299 = vadd.f32 %v5258, %v5296
          %v5300 = vadd.f32 %v5259, %v5297
          %v5301 = vadd.f32 %v5260, %v5298
          %5302 = vrot.lane.b32.xlu0 %v5128, 108
          %v5303 = vpop.permute.xlu0 %5302
          %5304 = vrot.lane.b32.xlu0 %v5131, 108
          %v5305 = vpop.permute.xlu0 %5304
          %5306 = vrot.lane.b32.xlu0 %v5134, 108
          %v5307 = vpop.permute.xlu0 %5306
          %v5308 = vsel %vm466, %v5305, %v5307
          %v5309 = vsel %vm466, %v5303, %v5305
          %v5310 = vsel %vm466, %v5307, %v5303
          %s5311 = sld [smem:[#allocation5 + $0x197]]
          %v5312 = vstv %s5311
          %v5313 = vmul.f32 %v5312, %v5309
          %v5314 = vmul.f32 %v5312, %v5308
          %v5315 = vmul.f32 %v5312, %v5310
          %v5316 = vadd.f32 %v5275, %v5313
          %v5317 = vadd.f32 %v5276, %v5314
          %v5318 = vadd.f32 %v5277, %v5315
          %s5319 = sld [smem:[#allocation5 + $0x397]]
          %v5320 = vstv %s5319
          %v5321 = vmul.f32 %v5320, %v5309
          %v5322 = vmul.f32 %v5320, %v5308
          %v5323 = vmul.f32 %v5320, %v5310
          %v5324 = vadd.f32 %v5283, %v5321
          %v5325 = vadd.f32 %v5284, %v5322
          %v5326 = vadd.f32 %v5285, %v5323
          %s5327 = sld [smem:[#allocation5 + $0x597]]
          %v5328 = vstv %s5327
          %v5329 = vmul.f32 %v5328, %v5309
          %v5330 = vmul.f32 %v5328, %v5308
          %v5331 = vmul.f32 %v5328, %v5310
          %v5332 = vadd.f32 %v5291, %v5329
          %v5333 = vadd.f32 %v5292, %v5330
          %v5334 = vadd.f32 %v5293, %v5331
          %s5335 = sld [smem:[#allocation5 + $0x797]]
          %v5336 = vstv %s5335
          %v5337 = vmul.f32 %v5336, %v5309
          %v5338 = vmul.f32 %v5336, %v5308
          %v5339 = vmul.f32 %v5336, %v5310
          %v5340 = vadd.f32 %v5299, %v5337
          %v5341 = vadd.f32 %v5300, %v5338
          %v5342 = vadd.f32 %v5301, %v5339
          %5343 = vrot.lane.b32.xlu0 %v5128, 92
          %v5344 = vpop.permute.xlu0 %5343
          %5345 = vrot.lane.b32.xlu0 %v5131, 92
          %v5346 = vpop.permute.xlu0 %5345
          %5347 = vrot.lane.b32.xlu0 %v5134, 92
          %v5348 = vpop.permute.xlu0 %5347
          %v5349 = vsel %vm508, %v5346, %v5348
          %v5350 = vsel %vm508, %v5344, %v5346
          %v5351 = vsel %vm508, %v5348, %v5344
          %s5352 = sld [smem:[#allocation5 + $0x198]]
          %v5353 = vstv %s5352
          %v5354 = vmul.f32 %v5353, %v5350
          %v5355 = vmul.f32 %v5353, %v5349
          %v5356 = vmul.f32 %v5353, %v5351
          %v5357 = vadd.f32 %v5316, %v5354
          %v5358 = vadd.f32 %v5317, %v5355
          %v5359 = vadd.f32 %v5318, %v5356
          %s5360 = sld [smem:[#allocation5 + $0x398]]
          %v5361 = vstv %s5360
          %v5362 = vmul.f32 %v5361, %v5350
          %v5363 = vmul.f32 %v5361, %v5349
          %v5364 = vmul.f32 %v5361, %v5351
          %v5365 = vadd.f32 %v5324, %v5362
          %v5366 = vadd.f32 %v5325, %v5363
          %v5367 = vadd.f32 %v5326, %v5364
          %s5368 = sld [smem:[#allocation5 + $0x598]]
          %v5369 = vstv %s5368
          %v5370 = vmul.f32 %v5369, %v5350
          %v5371 = vmul.f32 %v5369, %v5349
          %v5372 = vmul.f32 %v5369, %v5351
          %v5373 = vadd.f32 %v5332, %v5370
          %v5374 = vadd.f32 %v5333, %v5371
          %v5375 = vadd.f32 %v5334, %v5372
          %s5376 = sld [smem:[#allocation5 + $0x798]]
          %v5377 = vstv %s5376
          %v5378 = vmul.f32 %v5377, %v5350
          %v5379 = vmul.f32 %v5377, %v5349
          %v5380 = vmul.f32 %v5377, %v5351
          %v5381 = vadd.f32 %v5340, %v5378
          %v5382 = vadd.f32 %v5341, %v5379
          %v5383 = vadd.f32 %v5342, %v5380
          %5384 = vrot.lane.b32.xlu0 %v5128, 91
          %v5385 = vpop.permute.xlu0 %5384
          %5386 = vrot.lane.b32.xlu0 %v5131, 91
          %v5387 = vpop.permute.xlu0 %5386
          %5388 = vrot.lane.b32.xlu0 %v5134, 91
          %v5389 = vpop.permute.xlu0 %5388
          %v5390 = vsel %vm550, %v5387, %v5389
          %v5391 = vsel %vm550, %v5385, %v5387
          %v5392 = vsel %vm550, %v5389, %v5385
          %s5393 = sld [smem:[#allocation5 + $0x199]]
          %v5394 = vstv %s5393
          %v5395 = vmul.f32 %v5394, %v5391
          %v5396 = vmul.f32 %v5394, %v5390
          %v5397 = vmul.f32 %v5394, %v5392
          %v5398 = vadd.f32 %v5357, %v5395
          %v5399 = vadd.f32 %v5358, %v5396
          %v5400 = vadd.f32 %v5359, %v5397
          %s5401 = sld [smem:[#allocation5 + $0x399]]
          %v5402 = vstv %s5401
          %v5403 = vmul.f32 %v5402, %v5391
          %v5404 = vmul.f32 %v5402, %v5390
          %v5405 = vmul.f32 %v5402, %v5392
          %v5406 = vadd.f32 %v5365, %v5403
          %v5407 = vadd.f32 %v5366, %v5404
          %v5408 = vadd.f32 %v5367, %v5405
          %s5409 = sld [smem:[#allocation5 + $0x599]]
          %v5410 = vstv %s5409
          %v5411 = vmul.f32 %v5410, %v5391
          %v5412 = vmul.f32 %v5410, %v5390
          %v5413 = vmul.f32 %v5410, %v5392
          %v5414 = vadd.f32 %v5373, %v5411
          %v5415 = vadd.f32 %v5374, %v5412
          %v5416 = vadd.f32 %v5375, %v5413
          %s5417 = sld [smem:[#allocation5 + $0x799]]
          %v5418 = vstv %s5417
          %v5419 = vmul.f32 %v5418, %v5391
          %v5420 = vmul.f32 %v5418, %v5390
          %v5421 = vmul.f32 %v5418, %v5392
          %v5422 = vadd.f32 %v5381, %v5419
          %v5423 = vadd.f32 %v5382, %v5420
          %v5424 = vadd.f32 %v5383, %v5421
          %5425 = vrot.lane.b32.xlu0 %v5128, 90
          %v5426 = vpop.permute.xlu0 %5425
          %5427 = vrot.lane.b32.xlu0 %v5131, 90
          %v5428 = vpop.permute.xlu0 %5427
          %5429 = vrot.lane.b32.xlu0 %v5134, 90
          %v5430 = vpop.permute.xlu0 %5429
          %v5431 = vsel %vm592, %v5428, %v5430
          %v5432 = vsel %vm592, %v5426, %v5428
          %v5433 = vsel %vm592, %v5430, %v5426
          %s5434 = sld [smem:[#allocation5 + $0x19a]]
          %v5435 = vstv %s5434
          %v5436 = vmul.f32 %v5435, %v5432
          %v5437 = vmul.f32 %v5435, %v5431
          %v5438 = vmul.f32 %v5435, %v5433
          %v5439 = vadd.f32 %v5398, %v5436
          %v5440 = vadd.f32 %v5399, %v5437
          %v5441 = vadd.f32 %v5400, %v5438
          %s5442 = sld [smem:[#allocation5 + $0x39a]]
          %v5443 = vstv %s5442
          %v5444 = vmul.f32 %v5443, %v5432
          %v5445 = vmul.f32 %v5443, %v5431
          %v5446 = vmul.f32 %v5443, %v5433
          %v5447 = vadd.f32 %v5406, %v5444
          %v5448 = vadd.f32 %v5407, %v5445
          %v5449 = vadd.f32 %v5408, %v5446
          %s5450 = sld [smem:[#allocation5 + $0x59a]]
          %v5451 = vstv %s5450
          %v5452 = vmul.f32 %v5451, %v5432
          %v5453 = vmul.f32 %v5451, %v5431
          %v5454 = vmul.f32 %v5451, %v5433
          %v5455 = vadd.f32 %v5414, %v5452
          %v5456 = vadd.f32 %v5415, %v5453
          %v5457 = vadd.f32 %v5416, %v5454
          %s5458 = sld [smem:[#allocation5 + $0x79a]]
          %v5459 = vstv %s5458
          %v5460 = vmul.f32 %v5459, %v5432
          %v5461 = vmul.f32 %v5459, %v5431
          %v5462 = vmul.f32 %v5459, %v5433
          %v5463 = vadd.f32 %v5422, %v5460
          %v5464 = vadd.f32 %v5423, %v5461
          %v5465 = vadd.f32 %v5424, %v5462
          %5467 = vrot.lane.b32.xlu0 %v5439, 126
          %v5468 = vpop.permute.xlu0 %5467
          %5470 = vrot.lane.b32.xlu0 %v5439, 124
          %v5471 = vpop.permute.xlu0 %5470
          %5473 = vrot.lane.b32.xlu0 %v5439, 122
          %v5474 = vpop.permute.xlu0 %5473
          %5476 = vrot.lane.b32.xlu0 %v5439, 120
          %v5477 = vpop.permute.xlu0 %5476
          %5479 = vrot.lane.b32.xlu0 %v5439, 118
          %v5480 = vpop.permute.xlu0 %5479
          %5482 = vrot.lane.b32.xlu0 %v5439, 116
          %v5483 = vpop.permute.xlu0 %5482
          %5486 = vrot.lane.b32.xlu0 %v5439, 114
          %v5487 = vpop.permute.xlu0 %5486
          %5488 = vrot.lane.b32.xlu0 %v5440, 114
          %v5489 = vpop.permute.xlu0 %5488
          %vm5490 = vcmask 932864
          %v5491 = vsel %vm5490, %v5487, %v5489
          %5493 = vrot.lane.b32.xlu0 %v5440, 112
          %v5494 = vpop.permute.xlu0 %5493
          %5496 = vrot.lane.b32.xlu0 %v5440, 110
          %v5497 = vpop.permute.xlu0 %5496
          %5499 = vrot.lane.b32.xlu0 %v5440, 108
          %v5500 = vpop.permute.xlu0 %5499
          %5502 = vrot.lane.b32.xlu0 %v5440, 106
          %v5503 = vpop.permute.xlu0 %5502
          %5505 = vrot.lane.b32.xlu0 %v5440, 104
          %v5506 = vpop.permute.xlu0 %5505
          %5508 = vrot.lane.b32.xlu0 %v5440, 102
          %v5509 = vpop.permute.xlu0 %5508
          %5512 = vrot.lane.b32.xlu0 %v5440, 100
          %v5513 = vpop.permute.xlu0 %5512
          %5514 = vrot.lane.b32.xlu0 %v5441, 100
          %v5515 = vpop.permute.xlu0 %5514
          %vm5516 = vcmask 818176
          %v5517 = vsel %vm5516, %v5513, %v5515
          %5519 = vrot.lane.b32.xlu0 %v5441, 98
          %v5520 = vpop.permute.xlu0 %5519
          %vm5522 = vcmask 130048
          %v5523 = vsel %vm5522, %v5439, %v5468
          %vm5524 = vcmask 261120
          %v5525 = vsel %vm5524, %v5523, %v5471
          %vm5526 = vcmask 392192
          %v5527 = vsel %vm5526, %v5525, %v5474
          %vm5528 = vcmask 523264
          %v5529 = vsel %vm5528, %v5527, %v5477
          %vm5530 = vcmask 654336
          %v5531 = vsel %vm5530, %v5529, %v5480
          %vm5532 = vcmask 785408
          %v5533 = vsel %vm5532, %v5531, %v5483
          %vm5534 = vcmask 916480
          %v5535 = vsel %vm5534, %v5533, %v5491
          %v5536 = vsel %vm5522, %v5494, %v5497
          %v5537 = vsel %vm5524, %v5536, %v5500
          %v5538 = vsel %vm5526, %v5537, %v5503
          %v5539 = vsel %vm5528, %v5538, %v5506
          %v5540 = vsel %vm5530, %v5539, %v5509
          %v5541 = vsel %vm5532, %v5540, %v5517
          %v5542 = vsel %vm5534, %v5541, %v5520
          %s5543 = smul.u32 %s22, 4
          %s5544 = smul.u32 %s5543, 2
          %s5545 = smul.addr %s5544, 8
          %s5546 = scalar_lea.vmem %s4, %s5545
          %5547 = vst [vmem:[%s5546] sm:$0xff] %v5535
          %5548 = vst [vmem:[%s5546 + $0x8] sm:$0xff] %v5542
          %5550 = vrot.lane.b32.xlu0 %v5447, 126
          %v5551 = vpop.permute.xlu0 %5550
          %5553 = vrot.lane.b32.xlu0 %v5447, 124
          %v5554 = vpop.permute.xlu0 %5553
          %5556 = vrot.lane.b32.xlu0 %v5447, 122
          %v5557 = vpop.permute.xlu0 %5556
          %5559 = vrot.lane.b32.xlu0 %v5447, 120
          %v5560 = vpop.permute.xlu0 %5559
          %5562 = vrot.lane.b32.xlu0 %v5447, 118
          %v5563 = vpop.permute.xlu0 %5562
          %5565 = vrot.lane.b32.xlu0 %v5447, 116
          %v5566 = vpop.permute.xlu0 %5565
          %5569 = vrot.lane.b32.xlu0 %v5447, 114
          %v5570 = vpop.permute.xlu0 %5569
          %5571 = vrot.lane.b32.xlu0 %v5448, 114
          %v5572 = vpop.permute.xlu0 %5571
          %v5573 = vsel %vm5490, %v5570, %v5572
          %5575 = vrot.lane.b32.xlu0 %v5448, 112
          %v5576 = vpop.permute.xlu0 %5575
          %5578 = vrot.lane.b32.xlu0 %v5448, 110
          %v5579 = vpop.permute.xlu0 %5578
          %5581 = vrot.lane.b32.xlu0 %v5448, 108
          %v5582 = vpop.permute.xlu0 %5581
          %5584 = vrot.lane.b32.xlu0 %v5448, 106
          %v5585 = vpop.permute.xlu0 %5584
          %5587 = vrot.lane.b32.xlu0 %v5448, 104
          %v5588 = vpop.permute.xlu0 %5587
          %5590 = vrot.lane.b32.xlu0 %v5448, 102
          %v5591 = vpop.permute.xlu0 %5590
          %5594 = vrot.lane.b32.xlu0 %v5448, 100
          %v5595 = vpop.permute.xlu0 %5594
          %5596 = vrot.lane.b32.xlu0 %v5449, 100
          %v5597 = vpop.permute.xlu0 %5596
          %v5598 = vsel %vm5516, %v5595, %v5597
          %5600 = vrot.lane.b32.xlu0 %v5449, 98
          %v5601 = vpop.permute.xlu0 %5600
          %v5603 = vsel %vm5522, %v5447, %v5551
          %v5604 = vsel %vm5524, %v5603, %v5554
          %v5605 = vsel %vm5526, %v5604, %v5557
          %v5606 = vsel %vm5528, %v5605, %v5560
          %v5607 = vsel %vm5530, %v5606, %v5563
          %v5608 = vsel %vm5532, %v5607, %v5566
          %v5609 = vsel %vm5534, %v5608, %v5573
          %v5610 = vsel %vm5522, %v5576, %v5579
          %v5611 = vsel %vm5524, %v5610, %v5582
          %v5612 = vsel %vm5526, %v5611, %v5585
          %v5613 = vsel %vm5528, %v5612, %v5588
          %v5614 = vsel %vm5530, %v5613, %v5591
          %v5615 = vsel %vm5532, %v5614, %v5598
          %v5616 = vsel %vm5534, %v5615, %v5601
          %s5617 = sadd.s32 %s5543, 1
          %s5618 = smul.u32 %s5617, 2
          %s5619 = smul.addr %s5618, 8
          %s5620 = scalar_lea.vmem %s4, %s5619
          %5621 = vst [vmem:[%s5620] sm:$0xff] %v5609
          %5622 = vst [vmem:[%s5620 + $0x8] sm:$0xff] %v5616
          %5624 = vrot.lane.b32.xlu0 %v5455, 126
          %v5625 = vpop.permute.xlu0 %5624
          %5627 = vrot.lane.b32.xlu0 %v5455, 124
          %v5628 = vpop.permute.xlu0 %5627
          %5630 = vrot.lane.b32.xlu0 %v5455, 122
          %v5631 = vpop.permute.xlu0 %5630
          %5633 = vrot.lane.b32.xlu0 %v5455, 120
          %v5634 = vpop.permute.xlu0 %5633
          %5636 = vrot.lane.b32.xlu0 %v5455, 118
          %v5637 = vpop.permute.xlu0 %5636
          %5639 = vrot.lane.b32.xlu0 %v5455, 116
          %v5640 = vpop.permute.xlu0 %5639
          %5643 = vrot.lane.b32.xlu0 %v5455, 114
          %v5644 = vpop.permute.xlu0 %5643
          %5645 = vrot.lane.b32.xlu0 %v5456, 114
          %v5646 = vpop.permute.xlu0 %5645
          %v5647 = vsel %vm5490, %v5644, %v5646
          %5649 = vrot.lane.b32.xlu0 %v5456, 112
          %v5650 = vpop.permute.xlu0 %5649
          %5652 = vrot.lane.b32.xlu0 %v5456, 110
          %v5653 = vpop.permute.xlu0 %5652
          %5655 = vrot.lane.b32.xlu0 %v5456, 108
          %v5656 = vpop.permute.xlu0 %5655
          %5658 = vrot.lane.b32.xlu0 %v5456, 106
          %v5659 = vpop.permute.xlu0 %5658
          %5661 = vrot.lane.b32.xlu0 %v5456, 104
          %v5662 = vpop.permute.xlu0 %5661
          %5664 = vrot.lane.b32.xlu0 %v5456, 102
          %v5665 = vpop.permute.xlu0 %5664
          %5668 = vrot.lane.b32.xlu0 %v5456, 100
          %v5669 = vpop.permute.xlu0 %5668
          %5670 = vrot.lane.b32.xlu0 %v5457, 100
          %v5671 = vpop.permute.xlu0 %5670
          %v5672 = vsel %vm5516, %v5669, %v5671
          %5674 = vrot.lane.b32.xlu0 %v5457, 98
          %v5675 = vpop.permute.xlu0 %5674
          %v5677 = vsel %vm5522, %v5455, %v5625
          %v5678 = vsel %vm5524, %v5677, %v5628
          %v5679 = vsel %vm5526, %v5678, %v5631
          %v5680 = vsel %vm5528, %v5679, %v5634
          %v5681 = vsel %vm5530, %v5680, %v5637
          %v5682 = vsel %vm5532, %v5681, %v5640
          %v5683 = vsel %vm5534, %v5682, %v5647
          %v5684 = vsel %vm5522, %v5650, %v5653
          %v5685 = vsel %vm5524, %v5684, %v5656
          %v5686 = vsel %vm5526, %v5685, %v5659
          %v5687 = vsel %vm5528, %v5686, %v5662
          %v5688 = vsel %vm5530, %v5687, %v5665
          %v5689 = vsel %vm5532, %v5688, %v5672
          %v5690 = vsel %vm5534, %v5689, %v5675
          %s5691 = sadd.s32 %s5543, 2
          %s5692 = smul.u32 %s5691, 2
          %s5693 = smul.addr %s5692, 8
          %s5694 = scalar_lea.vmem %s4, %s5693
          %5695 = vst [vmem:[%s5694] sm:$0xff] %v5683
          %5696 = vst [vmem:[%s5694 + $0x8] sm:$0xff] %v5690
          %5698 = vrot.lane.b32.xlu0 %v5463, 126
          %v5699 = vpop.permute.xlu0 %5698
          %5701 = vrot.lane.b32.xlu0 %v5463, 124
          %v5702 = vpop.permute.xlu0 %5701
          %5704 = vrot.lane.b32.xlu0 %v5463, 122
          %v5705 = vpop.permute.xlu0 %5704
          %5707 = vrot.lane.b32.xlu0 %v5463, 120
          %v5708 = vpop.permute.xlu0 %5707
          %5710 = vrot.lane.b32.xlu0 %v5463, 118
          %v5711 = vpop.permute.xlu0 %5710
          %5713 = vrot.lane.b32.xlu0 %v5463, 116
          %v5714 = vpop.permute.xlu0 %5713
          %5717 = vrot.lane.b32.xlu0 %v5463, 114
          %v5718 = vpop.permute.xlu0 %5717
          %5719 = vrot.lane.b32.xlu0 %v5464, 114
          %v5720 = vpop.permute.xlu0 %5719
          %v5721 = vsel %vm5490, %v5718, %v5720
          %5723 = vrot.lane.b32.xlu0 %v5464, 112
          %v5724 = vpop.permute.xlu0 %5723
          %5726 = vrot.lane.b32.xlu0 %v5464, 110
          %v5727 = vpop.permute.xlu0 %5726
          %5729 = vrot.lane.b32.xlu0 %v5464, 108
          %v5730 = vpop.permute.xlu0 %5729
          %5732 = vrot.lane.b32.xlu0 %v5464, 106
          %v5733 = vpop.permute.xlu0 %5732
          %5735 = vrot.lane.b32.xlu0 %v5464, 104
          %v5736 = vpop.permute.xlu0 %5735
          %5738 = vrot.lane.b32.xlu0 %v5464, 102
          %v5739 = vpop.permute.xlu0 %5738
          %5742 = vrot.lane.b32.xlu0 %v5464, 100
          %v5743 = vpop.permute.xlu0 %5742
          %5744 = vrot.lane.b32.xlu0 %v5465, 100
          %v5745 = vpop.permute.xlu0 %5744
          %v5746 = vsel %vm5516, %v5743, %v5745
          %5748 = vrot.lane.b32.xlu0 %v5465, 98
          %v5749 = vpop.permute.xlu0 %5748
          %v5751 = vsel %vm5522, %v5463, %v5699
          %v5752 = vsel %vm5524, %v5751, %v5702
          %v5753 = vsel %vm5526, %v5752, %v5705
          %v5754 = vsel %vm5528, %v5753, %v5708
          %v5755 = vsel %vm5530, %v5754, %v5711
          %v5756 = vsel %vm5532, %v5755, %v5714
          %v5757 = vsel %vm5534, %v5756, %v5721
          %v5758 = vsel %vm5522, %v5724, %v5727
          %v5759 = vsel %vm5524, %v5758, %v5730
          %v5760 = vsel %vm5526, %v5759, %v5733
          %v5761 = vsel %vm5528, %v5760, %v5736
          %v5762 = vsel %vm5530, %v5761, %v5739
          %v5763 = vsel %vm5532, %v5762, %v5746
          %v5764 = vsel %vm5534, %v5763, %v5749
          %s5765 = sadd.s32 %s5543, 3
          %s5766 = smul.u32 %s5765, 2
          %s5767 = smul.addr %s5766, 8
          %s5768 = scalar_lea.vmem %s4, %s5767
          %5769 = vst [vmem:[%s5768] sm:$0xff] %v5757
          %5770 = vst [vmem:[%s5768 + $0x8] sm:$0xff] %v5764
          %v5771 = vrot.slane %v5535, 4
          %v5772 = vadd.f32 %v5535, %v5771
          %v5773 = vrot.slane %v5772, 2
          %v5774 = vadd.f32 %v5772, %v5773
          %v5775 = vrot.slane %v5774, 1
          %v5776 = vadd.f32 %v5774, %v5775
          %v5777 = vrot.slane %v5542, 4
          %v5778 = vadd.f32 %v5542, %v5777
          %v5779 = vrot.slane %v5778, 2
          %v5780 = vadd.f32 %v5778, %v5779
          %v5781 = vrot.slane %v5780, 1
          %v5782 = vadd.f32 %v5780, %v5781
          %v5783 = vrot.slane %v5609, 4
          %v5784 = vadd.f32 %v5609, %v5783
          %v5785 = vrot.slane %v5784, 2
          %v5786 = vadd.f32 %v5784, %v5785
          %v5787 = vrot.slane %v5786, 1
          %v5788 = vadd.f32 %v5786, %v5787
          %v5789 = vrot.slane %v5616, 4
          %v5790 = vadd.f32 %v5616, %v5789
          %v5791 = vrot.slane %v5790, 2
          %v5792 = vadd.f32 %v5790, %v5791
          %v5793 = vrot.slane %v5792, 1
          %v5794 = vadd.f32 %v5792, %v5793
          %v5795 = vrot.slane %v5683, 4
          %v5796 = vadd.f32 %v5683, %v5795
          %v5797 = vrot.slane %v5796, 2
          %v5798 = vadd.f32 %v5796, %v5797
          %v5799 = vrot.slane %v5798, 1
          %v5800 = vadd.f32 %v5798, %v5799
          %v5801 = vrot.slane %v5690, 4
          %v5802 = vadd.f32 %v5690, %v5801
          %v5803 = vrot.slane %v5802, 2
          %v5804 = vadd.f32 %v5802, %v5803
          %v5805 = vrot.slane %v5804, 1
          %v5806 = vadd.f32 %v5804, %v5805
          %v5807 = vrot.slane %v5757, 4
          %v5808 = vadd.f32 %v5757, %v5807
          %v5809 = vrot.slane %v5808, 2
          %v5810 = vadd.f32 %v5808, %v5809
          %v5811 = vrot.slane %v5810, 1
          %v5812 = vadd.f32 %v5810, %v5811
          %v5813 = vrot.slane %v5764, 4
          %v5814 = vadd.f32 %v5764, %v5813
          %v5815 = vrot.slane %v5814, 2
          %v5816 = vadd.f32 %v5814, %v5815
          %v5817 = vrot.slane %v5816, 1
          %v5818 = vadd.f32 %v5816, %v5817
          %vm5819 = vcmask 1040384
          %v5820 = vsel %vm5819, %v5776, %v5788
          %v5821 = vsel %vm5819, %v5782, %v5794
          %vm5822 = vcmask 1041408
          %v5823 = vsel %vm5822, %v5820, %v5800
          %v5824 = vsel %vm5822, %v5821, %v5806
          %vm5825 = vcmask 1042432
          %v5826 = vsel %vm5825, %v5823, %v5812
          %v5827 = vsel %vm5825, %v5824, %v5818
          %v5828 = vmul.f32 %v5535, %v5535
          %v5829 = vmul.f32 %v5542, %v5542
          %v5830 = vrot.slane %v5828, 4
          %v5831 = vadd.f32 %v5828, %v5830
          %v5832 = vrot.slane %v5831, 2
          %v5833 = vadd.f32 %v5831, %v5832
          %v5834 = vrot.slane %v5833, 1
          %v5835 = vadd.f32 %v5833, %v5834
          %v5836 = vrot.slane %v5829, 4
          %v5837 = vadd.f32 %v5829, %v5836
          %v5838 = vrot.slane %v5837, 2
          %v5839 = vadd.f32 %v5837, %v5838
          %v5840 = vrot.slane %v5839, 1
          %v5841 = vadd.f32 %v5839, %v5840
          %v5842 = vmul.f32 %v5609, %v5609
          %v5843 = vmul.f32 %v5616, %v5616
          %v5844 = vrot.slane %v5842, 4
          %v5845 = vadd.f32 %v5842, %v5844
          %v5846 = vrot.slane %v5845, 2
          %v5847 = vadd.f32 %v5845, %v5846
          %v5848 = vrot.slane %v5847, 1
          %v5849 = vadd.f32 %v5847, %v5848
          %v5850 = vrot.slane %v5843, 4
          %v5851 = vadd.f32 %v5843, %v5850
          %v5852 = vrot.slane %v5851, 2
          %v5853 = vadd.f32 %v5851, %v5852
          %v5854 = vrot.slane %v5853, 1
          %v5855 = vadd.f32 %v5853, %v5854
          %v5856 = vmul.f32 %v5683, %v5683
          %v5857 = vmul.f32 %v5690, %v5690
          %v5858 = vrot.slane %v5856, 4
          %v5859 = vadd.f32 %v5856, %v5858
          %v5860 = vrot.slane %v5859, 2
          %v5861 = vadd.f32 %v5859, %v5860
          %v5862 = vrot.slane %v5861, 1
          %v5863 = vadd.f32 %v5861, %v5862
          %v5864 = vrot.slane %v5857, 4
          %v5865 = vadd.f32 %v5857, %v5864
          %v5866 = vrot.slane %v5865, 2
          %v5867 = vadd.f32 %v5865, %v5866
          %v5868 = vrot.slane %v5867, 1
          %v5869 = vadd.f32 %v5867, %v5868
          %v5870 = vmul.f32 %v5757, %v5757
          %v5871 = vmul.f32 %v5764, %v5764
          %v5872 = vrot.slane %v5870, 4
          %v5873 = vadd.f32 %v5870, %v5872
          %v5874 = vrot.slane %v5873, 2
          %v5875 = vadd.f32 %v5873, %v5874
          %v5876 = vrot.slane %v5875, 1
          %v5877 = vadd.f32 %v5875, %v5876
          %v5878 = vrot.slane %v5871, 4
          %v5879 = vadd.f32 %v5871, %v5878
          %v5880 = vrot.slane %v5879, 2
          %v5881 = vadd.f32 %v5879, %v5880
          %v5882 = vrot.slane %v5881, 1
          %v5883 = vadd.f32 %v5881, %v5882
          %v5884 = vsel %vm5819, %v5835, %v5849
          %v5885 = vsel %vm5819, %v5841, %v5855
          %v5886 = vsel %vm5822, %v5884, %v5863
          %v5887 = vsel %vm5822, %v5885, %v5869
          %v5888 = vsel %vm5825, %v5886, %v5877
          %v5889 = vsel %vm5825, %v5887, %v5883
          %v5890 = vld [vmem:[#allocation2] sm:$0xff]
          %v5893 = vcombine.low %v5826, %v5827
          %v5895 = vadd.f32 %v5890, %v5893
          %5896 = vst [vmem:[#allocation2] sm:$0xff] %v5895
          %v5897 = vld [vmem:[#allocation3] sm:$0xff]
          %v5900 = vcombine.low %v5888, %v5889
          %v5902 = vadd.f32 %v5897, %v5900
          %5903 = vst [vmem:[#allocation3] sm:$0xff] %v5902
        $region48: #{conv_block_3d.1} parent=35 // pred_fallthru
          _
        %p5904 = scmp.eq.s32.totalorder %s21, 1
        // Predicated region
        $region53: #{conv_block_3d.1} parent=35 // pred_check
          %p5905 = pneg %p5904
        $region54: #{conv_block_3d.1} parent=35 // pred_check_branch
          %5907 = sbr.rel (%p5905) target = $region56
        $region55: #{conv_block_3d.1} parent=35 // pred_region
          %p5908 = scmp.eq.s32.totalorder %s22, 0
          // Predicated region
          $region57: #{conv_block_3d.1} parent=55 // pred_check
            %p5909 = pneg %p5908
          $region58: #{conv_block_3d.1} parent=55 // pred_check_branch
            %5911 = sbr.rel (%p5909) target = $region60
          $region59: #{conv_block_3d.1} parent=55 // pred_region
            %v5912 = vld [vmem:[#allocation2] ss:$4 sm:$0x3]
            %v5914 = vlaneseq
            %v5915 = vshrl.u32 %v5914, 7
            %v5916 = vsub.s32 0, %v5915
            %v5917 = vrot.slane %v5912, %v5916
            %v5918 = vlaneseq
            %v5919 = vshrl.u32 %v5918, 7
            %v5920 = vsub.s32 1, %v5919
            %v5921 = vrot.slane %v5912, %v5920
            %vm5924 = vcmask 1040384
            %v5925 = vsel %vm5924, %v5917, 0.0
            %v5926 = vsel %vm5924, %v5921, 0.0
            %v5927 = vadd.f32 %v5925, %v5926
            %5928 = vadd.xlane.f32.xlu0 %v5927
            %v5929 = vpop.xlane.xlu0 %5928
            %v5930 = vrot.slane %v5929, 4
            %v5931 = vadd.f32 %v5929, %v5930
            %v5932 = vrot.slane %v5931, 2
            %v5933 = vadd.f32 %v5931, %v5932
            %v5934 = vrot.slane %v5933, 1
            %v5935 = vadd.f32 %v5933, %v5934
            %s5936 = vtos %v5935
            %v5937 = vld [vmem:[#allocation3] ss:$4 sm:$0x3]
            %v5939 = vlaneseq
            %v5940 = vshrl.u32 %v5939, 7
            %v5941 = vsub.s32 0, %v5940
            %v5942 = vrot.slane %v5937, %v5941
            %v5943 = vlaneseq
            %v5944 = vshrl.u32 %v5943, 7
            %v5945 = vsub.s32 1, %v5944
            %v5946 = vrot.slane %v5937, %v5945
            %v5949 = vsel %vm5924, %v5942, 0.0
            %v5950 = vsel %vm5924, %v5946, 0.0
            %v5951 = vadd.f32 %v5949, %v5950
            %5952 = vadd.xlane.f32.xlu0 %v5951
            %v5953 = vpop.xlane.xlu0 %5952
            %v5954 = vrot.slane %v5953, 4
            %v5955 = vadd.f32 %v5953, %v5954
            %v5956 = vrot.slane %v5955, 2
            %v5957 = vadd.f32 %v5955, %v5956
            %v5958 = vrot.slane %v5957, 1
            %v5959 = vadd.f32 %v5957, %v5958
            %s5960 = vtos %v5959
            %s5961 = smul.f32 %s5936, 0.00024414063
            %s5962 = smul.f32 %s5960, 0.00024414063
            %s5963 = smul.f32 %s5961, %s5961
            %s5964 = ssub.f32 %s5962, %s5963
            %s5965 = smax.f32 %s5964, 0.0
            %s5966 = sadd.f32 %s5965, 1e-05
            %v5967 = vstv %s5966
            %v5968 = vrsqrt.pop %v5967
            %s5969 = vtos %v5968
            %s5970 = sld [smem:[#allocation7]]
            %s5971 = smul.f32 %s5969, %s5970
            %s5972 = scalar_lea.smem [#allocation4], 0
            %5973 = sst [smem:[%s5972]] %s5971
            %s5974 = sld [smem:[#allocation7 + $0x80]]
            %s5975 = smul.f32 %s5961, %s5971
            %s5976 = ssub.f32 %s5974, %s5975
            %s5977 = scalar_lea.smem [#allocation4], 128
            %5978 = sst [smem:[%s5977]] %s5976
            %s5979 = scalar_lea.vmem [#allocation2], 1
            %v5980 = vld [vmem:[%s5979] ss:$4 sm:$0x3]
            %v5982 = vlaneseq
            %v5983 = vshrl.u32 %v5982, 7
            %v5984 = vsub.s32 0, %v5983
            %v5985 = vrot.slane %v5980, %v5984
            %v5986 = vlaneseq
            %v5987 = vshrl.u32 %v5986, 7
            %v5988 = vsub.s32 1, %v5987
            %v5989 = vrot.slane %v5980, %v5988
            %v5992 = vsel %vm5924, %v5985, 0.0
            %v5993 = vsel %vm5924, %v5989, 0.0
            %v5994 = vadd.f32 %v5992, %v5993
            %5995 = vadd.xlane.f32.xlu0 %v5994
            %v5996 = vpop.xlane.xlu0 %5995
            %v5997 = vrot.slane %v5996, 4
            %v5998 = vadd.f32 %v5996, %v5997
            %v5999 = vrot.slane %v5998, 2
            %v6000 = vadd.f32 %v5998, %v5999
            %v6001 = vrot.slane %v6000, 1
            %v6002 = vadd.f32 %v6000, %v6001
            %s6003 = vtos %v6002
            %s6004 = scalar_lea.vmem [#allocation3], 1
            %v6005 = vld [vmem:[%s6004] ss:$4 sm:$0x3]
            %v6007 = vlaneseq
            %v6008 = vshrl.u32 %v6007, 7
            %v6009 = vsub.s32 0, %v6008
            %v6010 = vrot.slane %v6005, %v6009
            %v6011 = vlaneseq
            %v6012 = vshrl.u32 %v6011, 7
            %v6013 = vsub.s32 1, %v6012
            %v6014 = vrot.slane %v6005, %v6013
            %v6017 = vsel %vm5924, %v6010, 0.0
            %v6018 = vsel %vm5924, %v6014, 0.0
            %v6019 = vadd.f32 %v6017, %v6018
            %6020 = vadd.xlane.f32.xlu0 %v6019
            %v6021 = vpop.xlane.xlu0 %6020
            %v6022 = vrot.slane %v6021, 4
            %v6023 = vadd.f32 %v6021, %v6022
            %v6024 = vrot.slane %v6023, 2
            %v6025 = vadd.f32 %v6023, %v6024
            %v6026 = vrot.slane %v6025, 1
            %v6027 = vadd.f32 %v6025, %v6026
            %s6028 = vtos %v6027
            %s6029 = smul.f32 %s6003, 0.00024414063
            %s6030 = smul.f32 %s6028, 0.00024414063
            %s6031 = smul.f32 %s6029, %s6029
            %s6032 = ssub.f32 %s6030, %s6031
            %s6033 = smax.f32 %s6032, 0.0
            %s6034 = sadd.f32 %s6033, 1e-05
            %v6035 = vstv %s6034
            %v6036 = vrsqrt.pop %v6035
            %s6037 = vtos %v6036
            %s6038 = sld [smem:[#allocation7 + $0x1]]
            %s6039 = smul.f32 %s6037, %s6038
            %s6040 = scalar_lea.smem [#allocation4], 1
            %6041 = sst [smem:[%s6040]] %s6039
            %s6042 = sld [smem:[#allocation7 + $0x81]]
            %s6043 = smul.f32 %s6029, %s6039
            %s6044 = ssub.f32 %s6042, %s6043
            %s6045 = scalar_lea.smem [#allocation4], 129
            %6046 = sst [smem:[%s6045]] %s6044
            %s6047 = scalar_lea.vmem [#allocation2], 2
            %v6048 = vld [vmem:[%s6047] ss:$4 sm:$0x3]
            %v6050 = vlaneseq
            %v6051 = vshrl.u32 %v6050, 7
            %v6052 = vsub.s32 0, %v6051
            %v6053 = vrot.slane %v6048, %v6052
            %v6054 = vlaneseq
            %v6055 = vshrl.u32 %v6054, 7
            %v6056 = vsub.s32 1, %v6055
            %v6057 = vrot.slane %v6048, %v6056
            %v6060 = vsel %vm5924, %v6053, 0.0
            %v6061 = vsel %vm5924, %v6057, 0.0
            %v6062 = vadd.f32 %v6060, %v6061
            %6063 = vadd.xlane.f32.xlu0 %v6062
            %v6064 = vpop.xlane.xlu0 %6063
            %v6065 = vrot.slane %v6064, 4
            %v6066 = vadd.f32 %v6064, %v6065
            %v6067 = vrot.slane %v6066, 2
            %v6068 = vadd.f32 %v6066, %v6067
            %v6069 = vrot.slane %v6068, 1
            %v6070 = vadd.f32 %v6068, %v6069
            %s6071 = vtos %v6070
            %s6072 = scalar_lea.vmem [#allocation3], 2
            %v6073 = vld [vmem:[%s6072] ss:$4 sm:$0x3]
            %v6075 = vlaneseq
            %v6076 = vshrl.u32 %v6075, 7
            %v6077 = vsub.s32 0, %v6076
            %v6078 = vrot.slane %v6073, %v6077
            %v6079 = vlaneseq
            %v6080 = vshrl.u32 %v6079, 7
            %v6081 = vsub.s32 1, %v6080
            %v6082 = vrot.slane %v6073, %v6081
            %v6085 = vsel %vm5924, %v6078, 0.0
            %v6086 = vsel %vm5924, %v6082, 0.0
            %v6087 = vadd.f32 %v6085, %v6086
            %6088 = vadd.xlane.f32.xlu0 %v6087
            %v6089 = vpop.xlane.xlu0 %6088
            %v6090 = vrot.slane %v6089, 4
            %v6091 = vadd.f32 %v6089, %v6090
            %v6092 = vrot.slane %v6091, 2
            %v6093 = vadd.f32 %v6091, %v6092
            %v6094 = vrot.slane %v6093, 1
            %v6095 = vadd.f32 %v6093, %v6094
            %s6096 = vtos %v6095
            %s6097 = smul.f32 %s6071, 0.00024414063
            %s6098 = smul.f32 %s6096, 0.00024414063
            %s6099 = smul.f32 %s6097, %s6097
            %s6100 = ssub.f32 %s6098, %s6099
            %s6101 = smax.f32 %s6100, 0.0
            %s6102 = sadd.f32 %s6101, 1e-05
            %v6103 = vstv %s6102
            %v6104 = vrsqrt.pop %v6103
            %s6105 = vtos %v6104
            %s6106 = sld [smem:[#allocation7 + $0x2]]
            %s6107 = smul.f32 %s6105, %s6106
            %s6108 = scalar_lea.smem [#allocation4], 2
            %6109 = sst [smem:[%s6108]] %s6107
            %s6110 = sld [smem:[#allocation7 + $0x82]]
            %s6111 = smul.f32 %s6097, %s6107
            %s6112 = ssub.f32 %s6110, %s6111
            %s6113 = scalar_lea.smem [#allocation4], 130
            %6114 = sst [smem:[%s6113]] %s6112
            %s6115 = scalar_lea.vmem [#allocation2], 3
            %v6116 = vld [vmem:[%s6115] ss:$4 sm:$0x3]
            %v6118 = vlaneseq
            %v6119 = vshrl.u32 %v6118, 7
            %v6120 = vsub.s32 0, %v6119
            %v6121 = vrot.slane %v6116, %v6120
            %v6122 = vlaneseq
            %v6123 = vshrl.u32 %v6122, 7
            %v6124 = vsub.s32 1, %v6123
            %v6125 = vrot.slane %v6116, %v6124
            %v6128 = vsel %vm5924, %v6121, 0.0
            %v6129 = vsel %vm5924, %v6125, 0.0
            %v6130 = vadd.f32 %v6128, %v6129
            %6131 = vadd.xlane.f32.xlu0 %v6130
            %v6132 = vpop.xlane.xlu0 %6131
            %v6133 = vrot.slane %v6132, 4
            %v6134 = vadd.f32 %v6132, %v6133
            %v6135 = vrot.slane %v6134, 2
            %v6136 = vadd.f32 %v6134, %v6135
            %v6137 = vrot.slane %v6136, 1
            %v6138 = vadd.f32 %v6136, %v6137
            %s6139 = vtos %v6138
            %s6140 = scalar_lea.vmem [#allocation3], 3
            %v6141 = vld [vmem:[%s6140] ss:$4 sm:$0x3]
            %v6143 = vlaneseq
            %v6144 = vshrl.u32 %v6143, 7
            %v6145 = vsub.s32 0, %v6144
            %v6146 = vrot.slane %v6141, %v6145
            %v6147 = vlaneseq
            %v6148 = vshrl.u32 %v6147, 7
            %v6149 = vsub.s32 1, %v6148
            %v6150 = vrot.slane %v6141, %v6149
            %v6153 = vsel %vm5924, %v6146, 0.0
            %v6154 = vsel %vm5924, %v6150, 0.0
            %v6155 = vadd.f32 %v6153, %v6154
            %6156 = vadd.xlane.f32.xlu0 %v6155
            %v6157 = vpop.xlane.xlu0 %6156
            %v6158 = vrot.slane %v6157, 4
            %v6159 = vadd.f32 %v6157, %v6158
            %v6160 = vrot.slane %v6159, 2
            %v6161 = vadd.f32 %v6159, %v6160
            %v6162 = vrot.slane %v6161, 1
            %v6163 = vadd.f32 %v6161, %v6162
            %s6164 = vtos %v6163
            %s6165 = smul.f32 %s6139, 0.00024414063
            %s6166 = smul.f32 %s6164, 0.00024414063
            %s6167 = smul.f32 %s6165, %s6165
            %s6168 = ssub.f32 %s6166, %s6167
            %s6169 = smax.f32 %s6168, 0.0
            %s6170 = sadd.f32 %s6169, 1e-05
            %v6171 = vstv %s6170
            %v6172 = vrsqrt.pop %v6171
            %s6173 = vtos %v6172
            %s6174 = sld [smem:[#allocation7 + $0x3]]
            %s6175 = smul.f32 %s6173, %s6174
            %s6176 = scalar_lea.smem [#allocation4], 3
            %6177 = sst [smem:[%s6176]] %s6175
            %s6178 = sld [smem:[#allocation7 + $0x83]]
            %s6179 = smul.f32 %s6165, %s6175
            %s6180 = ssub.f32 %s6178, %s6179
            %s6181 = scalar_lea.smem [#allocation4], 131
            %6182 = sst [smem:[%s6181]] %s6180
          $region60: #{conv_block_3d.1} parent=55 // pred_fallthru
            _
          %s6183 = smul.u32 %s22, 4
          %s6184 = smul.u32 %s6183, 2
          %s6185 = smul.addr %s6184, 8
          %s6186 = scalar_lea.vmem %s4, %s6185
          %v6187 = vld [vmem:[%s6186] sm:$0xff]
          %v6188 = vld [vmem:[%s6186 + $0x8] sm:$0xff]
          %s6189 = sld [smem:[#allocation4]]
          %v6190 = vstv %s6189
          %v6191 = vmul.f32 %v6187, %v6190
          %v6192 = vmul.f32 %v6188, %v6190
          %s6193 = sld [smem:[#allocation4 + $0x80]]
          %v6194 = vstv %s6193
          %v6195 = vadd.f32 %v6191, %v6194
          %v6196 = vadd.f32 %v6192, %v6194
          %s6197 = smul.addr %s6184, 8
          %s6198 = scalar_lea.vmem %s1, %s6197
          %v6199 = vld [vmem:[%s6198] sm:$0xff]
          %v6200 = vld [vmem:[%s6198 + $0x8] sm:$0xff]
          %v6201 = vadd.f32 %v6195, %v6199
          %v6202 = vadd.f32 %v6196, %v6200
          %v6203 = vmax.f32 %v6201, 0.0
          %v6204 = vmax.f32 %v6202, 0.0
          %6205 = vst [vmem:[%s6186] sm:$0xff] %v6203
          %6206 = vst [vmem:[%s6186 + $0x8] sm:$0xff] %v6204
          %s6207 = sadd.s32 %s6183, 1
          %s6208 = smul.u32 %s6207, 2
          %s6209 = smul.addr %s6208, 8
          %s6210 = scalar_lea.vmem %s4, %s6209
          %v6211 = vld [vmem:[%s6210] sm:$0xff]
          %v6212 = vld [vmem:[%s6210 + $0x8] sm:$0xff]
          %s6213 = sld [smem:[#allocation4 + $0x1]]
          %v6214 = vstv %s6213
          %v6215 = vmul.f32 %v6211, %v6214
          %v6216 = vmul.f32 %v6212, %v6214
          %s6217 = sld [smem:[#allocation4 + $0x81]]
          %v6218 = vstv %s6217
          %v6219 = vadd.f32 %v6215, %v6218
          %v6220 = vadd.f32 %v6216, %v6218
          %s6221 = smul.addr %s6208, 8
          %s6222 = scalar_lea.vmem %s1, %s6221
          %v6223 = vld [vmem:[%s6222] sm:$0xff]
          %v6224 = vld [vmem:[%s6222 + $0x8] sm:$0xff]
          %v6225 = vadd.f32 %v6219, %v6223
          %v6226 = vadd.f32 %v6220, %v6224
          %v6227 = vmax.f32 %v6225, 0.0
          %v6228 = vmax.f32 %v6226, 0.0
          %6229 = vst [vmem:[%s6210] sm:$0xff] %v6227
          %6230 = vst [vmem:[%s6210 + $0x8] sm:$0xff] %v6228
          %s6231 = sadd.s32 %s6183, 2
          %s6232 = smul.u32 %s6231, 2
          %s6233 = smul.addr %s6232, 8
          %s6234 = scalar_lea.vmem %s4, %s6233
          %v6235 = vld [vmem:[%s6234] sm:$0xff]
          %v6236 = vld [vmem:[%s6234 + $0x8] sm:$0xff]
          %s6237 = sld [smem:[#allocation4 + $0x2]]
          %v6238 = vstv %s6237
          %v6239 = vmul.f32 %v6235, %v6238
          %v6240 = vmul.f32 %v6236, %v6238
          %s6241 = sld [smem:[#allocation4 + $0x82]]
          %v6242 = vstv %s6241
          %v6243 = vadd.f32 %v6239, %v6242
          %v6244 = vadd.f32 %v6240, %v6242
          %s6245 = smul.addr %s6232, 8
          %s6246 = scalar_lea.vmem %s1, %s6245
          %v6247 = vld [vmem:[%s6246] sm:$0xff]
          %v6248 = vld [vmem:[%s6246 + $0x8] sm:$0xff]
          %v6249 = vadd.f32 %v6243, %v6247
          %v6250 = vadd.f32 %v6244, %v6248
          %v6251 = vmax.f32 %v6249, 0.0
          %v6252 = vmax.f32 %v6250, 0.0
          %6253 = vst [vmem:[%s6234] sm:$0xff] %v6251
          %6254 = vst [vmem:[%s6234 + $0x8] sm:$0xff] %v6252
          %s6255 = sadd.s32 %s6183, 3
          %s6256 = smul.u32 %s6255, 2
          %s6257 = smul.addr %s6256, 8
          %s6258 = scalar_lea.vmem %s4, %s6257
          %v6259 = vld [vmem:[%s6258] sm:$0xff]
          %v6260 = vld [vmem:[%s6258 + $0x8] sm:$0xff]
          %s6261 = sld [smem:[#allocation4 + $0x3]]
          %v6262 = vstv %s6261
          %v6263 = vmul.f32 %v6259, %v6262
          %v6264 = vmul.f32 %v6260, %v6262
          %s6265 = sld [smem:[#allocation4 + $0x83]]
          %v6266 = vstv %s6265
          %v6267 = vadd.f32 %v6263, %v6266
          %v6268 = vadd.f32 %v6264, %v6266
          %s6269 = smul.addr %s6256, 8
          %s6270 = scalar_lea.vmem %s1, %s6269
          %v6271 = vld [vmem:[%s6270] sm:$0xff]
          %v6272 = vld [vmem:[%s6270 + $0x8] sm:$0xff]
          %v6273 = vadd.f32 %v6267, %v6271
          %v6274 = vadd.f32 %v6268, %v6272
          %v6275 = vmax.f32 %v6273, 0.0
          %v6276 = vmax.f32 %v6274, 0.0
          %6277 = vst [vmem:[%s6258] sm:$0xff] %v6275
          %6278 = vst [vmem:[%s6258 + $0x8] sm:$0xff] %v6276
        $region56: #{conv_block_3d.1} parent=35 // pred_fallthru
          _
        // Predicated region
        $region61: #{conv_block_3d.1} parent=35 // pred_check
          %p6279 = pneg %p137
        $region62: #{conv_block_3d.1} parent=35 // pred_check_branch
          %6281 = sbr.rel (%p6279) target = $region64
        $region63: #{conv_block_3d.1} parent=35 // pred_region
          _
        $region64: #{conv_block_3d.1} parent=35 // pred_fallthru
          _
        // Predicated region
        $region65: #{conv_block_3d.1} parent=35 // pred_check
          %p6282 = pneg %p137
        $region66: #{conv_block_3d.1} parent=35 // pred_check_branch
          %6284 = sbr.rel (%p6282) target = $region68
        $region67: #{conv_block_3d.1} parent=35 // pred_region
          _
        $region68: #{conv_block_3d.1} parent=35 // pred_fallthru
          _
      $region36: #{conv_block_3d.1} parent=5 // pred_fallthru
        _
      %p6285 = scmp.le.s32.totalorder 2, %s12
      // Predicated region
      $region69: #{conv_block_3d.1} parent=5 // pred_check
        %p6286 = pneg %p6285
      $region70: #{conv_block_3d.1} parent=5 // pred_check_branch
        %6288 = sbr.rel (%p6286) target = $region72
      $region71: #{conv_block_3d.1} parent=5 // pred_region
        %s6289 = ssub.s32 %s12, 2
      $region72: #{conv_block_3d.1} parent=5 // pred_fallthru
        _
    $region6: #{conv_block_3d.1} parent=1 // loop_footer
      %s16 = sadd.s32 1, %s12
    $region7: #{conv_block_3d.1} parent=1 // loop_footer_branch
      %11 = sbr.rel target = $region3
    $region8: #{conv_block_3d.1} parent=1 // loop_exit
      _
    %6290 = vsyncpa [#allocation6], 1
    %s6291 = scalar_lea.sflag [#allocation6], 1
    %6292 = vsyncpa %s6291, 1
    %6293 = vsyncpa [#allocation8], 1

</llo_original>
